<compile_context>
chip_gen: v7x
topology: tpu7x:2x2x1
jax: 0.10.0
libtpu: 0.0.40
codegen_flags: <defaults>
</compile_context>

<pallas_src>
import jax
import jax.numpy as jnp
from jax import lax
from jax.experimental import pallas as pl
from jax.experimental.pallas import tpu as pltpu

# Hyper-parameters (small but structurally identical to DepNet defaults).
B = 32           # demo batch: picks bb=16 (256-row matmuls) and g=2 grid steps
C = 8            # num_channels
T = 128          # num_samples (must be a multiple of 32)
F1 = 8
D = 2
F2 = 16
K1 = 64          # kernel_1
K2 = 16          # kernel_2
NUM_CLASSES = 2
BN_EPS = 1e-3

F1D = F1 * D
PAD1_L, PAD1_R = K1 // 2 - 1, K1 // 2
PAD2_L, PAD2_R = K2 // 2 - 1, K2 // 2
TP1 = T + K1 - 1                 # time length after "same" zero-padding for the K1 conv
TPAD = -(-TP1 // 128) * 128      # lane-aligned padded time length (191 -> 256)
T1 = T // 4                      # after AvgPool2d((1, 4))
T1P = T1 + K2 - 1                # pooled length incl. zero-padding for the K2 conv
T2 = T1 // 8                     # after AvgPool2d((1, 8))  == T // 32
FEAT = F2 * T2                   # == F1 * D * num_samples // 32

# DEFAULT lets Mosaic use the fastest MXU path (bf16 operand rounding, f32
# accumulate) -- the review's top compute lever.  Use lax.Precision.HIGHEST to
# recover full-f32 matmuls (validates to ~1e-5) at ~6x the MXU passes.
MATMUL_PRECISION = lax.Precision.DEFAULT


def _elu(x):
    return jnp.where(x > 0, x, jnp.exp(jnp.minimum(x, 0.0)) - 1.0)


def _pool_matrix(n, w):
    """(n, n//w) matrix whose right-matmul implements AvgPool1d(window=w, stride=w)."""
    r = lax.broadcasted_iota(jnp.int32, (n, n // w), 0)
    c = lax.broadcasted_iota(jnp.int32, (n, n // w), 1)
    return jnp.where(r // w == c, 1.0 / w, 0.0).astype(jnp.float32)


def _fold_bn(gamma, beta, mean, var):
    scale = gamma / jnp.sqrt(var + BN_EPS)
    return scale, beta - mean * scale


def _pick_bb(b):
    """Largest divisor of b that is <= 16 (so bb*F1D <= 256 matmul rows), but
    prefer one that leaves g = b // bb >= 2 so the 'parallel' grid axis can
    shard across both v7x TensorCores.  Works for any batch size."""
    divs = [d for d in (16, 8, 4, 2, 1) if b % d == 0]
    for d in divs:
        if b // d >= 2:
            return d
    return divs[0]


def depnet_kernel(x_ref, w2blk_ref, m1_ref, b2_ref, l3_ref, b3f_ref, amat_ref,
                  out_ref):
    prec = MATMUL_PRECISION
    xs = x_ref[...]                                   # (bb*C, TPAD), rows are (c, b)
    bb = xs.shape[0] // C
    gb = bb * D                                       # rows per temporal-filter group

    # 1) Spatial grouped conv over EEG channels (BN2 scale folded), block-diag
    #    over the batch block; rows come out fd-major -> (bb*F1D, TPAD).
    y = jnp.dot(w2blk_ref[...], xs,
                preferred_element_type=jnp.float32, precision=prec)

    # 2) Temporal conv (BN1 scale folded) for all F1 filters at once as a
    #    single Toeplitz matmul; K = TPAD = 256 is lane-aligned.
    z = jnp.dot(y, m1_ref[...],
                preferred_element_type=jnp.float32, precision=prec)   # (bb*F1D, F1*T)

    # 3) Group selection: rows are fd-major, so temporal-filter group f owns the
    #    contiguous row block [f*gb, (f+1)*gb) and the lane-tile-aligned column
    #    block [f*T, (f+1)*T).  Add BN shifts, ELU.
    h2 = jnp.concatenate(
        [z[f * gb:(f + 1) * gb, f * T:(f + 1) * T] for f in range(F1)], axis=0)
    h2 = _elu(h2 + b2_ref[...])                       # (bb*F1D, T)

    # 4) AvgPool(4) + "same"-padded depthwise K2 conv + pointwise conv (+BN3
    #    scale) folded into one (T, F2*T1) matrix per fd; accumulate per-sample
    #    flattened feature rows on the MXU (no VPU tap loop).
    h4 = jnp.dot(h2[0:bb, :], l3_ref[0],
                 preferred_element_type=jnp.float32, precision=prec)
    for fd in range(1, F1D):
        h4 = h4 + jnp.dot(h2[fd * bb:(fd + 1) * bb, :], l3_ref[fd],
                          preferred_element_type=jnp.float32, precision=prec)
    h4 = _elu(h4 + b3f_ref[...])                      # (bb, F2*T1)

    # 5) AvgPool(8) + Flatten + Linear folded into one classifier matrix.
    logits = jnp.dot(h4, amat_ref[...],
                     preferred_element_type=jnp.float32, precision=prec)
    out_ref[0, :, :] = logits                         # (bb, NUM_CLASSES)


def _full_spec(shape):
    nd = len(shape)
    return pl.BlockSpec(tuple(int(s) for s in shape),
                        lambda i, _nd=nd: (0,) * _nd)


def depnet_forward(x_nchw, p):
    """x_nchw: (B, 1, C, T) float32 (PyTorch NCHW). Returns (B, NUM_CLASSES)."""
    b = x_nchw.shape[0]
    bb = _pick_bb(b)
    g = b // bb

    # ---- parameter preparation (plain JAX, done once per call) ----
    s1, b1 = _fold_bn(*p['bn1'])                       # (F1,)
    s2, b2 = _fold_bn(*p['bn2'])                       # (F1D,)
    s3, b3 = _fold_bn(*p['bn3'])                       # (F2,)

    w1eff = p['w1'] * s1[:, None]                      # BN1 scale into temporal taps
    w2eff = p['w2'] * s2[:, None]                      # BN2 scale into spatial conv
    w4eff = p['w4'] * s3[:, None]                      # BN3 scale into pointwise conv

    group = jnp.arange(F1D) // D
    bias2 = s2 * b1[group] * jnp.sum(p['w2'], axis=1) + b2   # BN1 shift folded through
    bias3 = b3

    # Toeplitz / conv matrix for all F1 temporal filters, lane-aligned to TPAD
    # rows: m1[s, f*T + t] = w1eff[f, s - t]; rows >= TP1 are all zero.
    s_idx = jnp.arange(TPAD)[:, None]
    col = jnp.arange(F1 * T)[None, :]
    f_col, t_col = col // T, col % T
    k_rel = s_idx - t_col
    valid = (k_rel >= 0) & (k_rel < K1)
    m1 = jnp.where(valid, w1eff[f_col, jnp.clip(k_rel, 0, K1 - 1)],
                   0.0).astype(jnp.float32)            # (TPAD, F1*T)

    # Block-diagonal spatial conv for fd-major rows / c-major columns.
    w2blk = jnp.kron(w2eff, jnp.eye(bb, dtype=jnp.float32))   # (bb*F1D, bb*C)
    b2rows = jnp.repeat(bias2, bb)[:, None]                    # (bb*F1D, 1)

    # Pool4 (with K2 "same" zero-padding folded in) composed with the depthwise
    # K2 conv and the pointwise conv (+BN3 scale): one (T, F2*T1) map per fd.
    p4 = _pool_matrix(T, 4)                                    # (T, T1)
    p4pad = jnp.zeros((T, T1P), jnp.float32).at[:, PAD2_L:PAD2_L + T1].set(p4)
    t1_idx = jnp.arange(T1)[:, None] + jnp.arange(K2)[None, :]       # (T1, K2)
    p4win = p4pad[:, t1_idx]                                          # (T, T1, K2)
    q = jnp.einsum('stk,fk->fst', p4win, p['w3'])                     # (F1D, T, T1)
    l3 = jnp.einsum('fst,gf->fsgt', q, w4eff).reshape(F1D, T, F2 * T1)
    b3f = jnp.repeat(bias3, T1)[None, :]                              # (1, F2*T1)

    # Pool8 + torch channel-major flatten + Linear folded into one matrix.
    p8 = _pool_matrix(T1, 8)                                          # (T1, T2)
    wlinr = p['wlin'].reshape(NUM_CLASSES, F2, T2)
    amat = jnp.einsum('nfz,tz->nft', wlinr, p8).reshape(
        NUM_CLASSES, F2 * T1).T                                       # (F2*T1, NC)

    # ---- input preparation: zero-pad time to a lane-aligned TPAD, rows are
    #      channel-major within each batch block (matches the kron ordering) ----
    x2d = x_nchw[:, 0]                                                # (B, C, T)
    x_pad = jnp.pad(x2d, ((0, 0), (0, 0),
                          (PAD1_L, PAD1_R + TPAD - TP1)))             # (B, C, TPAD)
    x_rows = x_pad.reshape(g, bb, C, TPAD).transpose(0, 2, 1, 3).reshape(
        g * C * bb, TPAD)

    args = (x_rows, w2blk, m1, b2rows, l3, b3f, amat)
    in_specs = [pl.BlockSpec((C * bb, TPAD), lambda i: (i, 0))]
    # Constant operands: full-array blocks whose index never changes -> they
    # are DMA'd once and stay VMEM-resident across the batch grid.
    in_specs += [_full_spec(a.shape) for a in args[1:]]

    out = pl.pallas_call(
        depnet_kernel,
        out_shape=jax.ShapeDtypeStruct((g, bb, NUM_CLASSES), jnp.float32),
        grid_spec=pltpu.PrefetchScalarGridSpec(
            num_scalar_prefetch=0,
            grid=(g,),
            in_specs=in_specs,
            out_specs=pl.BlockSpec((1, bb, NUM_CLASSES), lambda i: (i, 0, 0)),
        ),
        compiler_params=pltpu.CompilerParams(
            dimension_semantics=("parallel",),
            vmem_limit_bytes=48 * 1024 * 1024),
    )(*args)
    return out.reshape(b, NUM_CLASSES)


def ref_forward(x_nchw, p):
    """Pure-JAX (XLA conv) reference of the same eval-mode forward pass."""
    prec = lax.Precision.HIGHEST
    dn = ('NCHW', 'OIHW', 'NCHW')
    bn1s, bn1b = _fold_bn(*p['bn1'])
    bn2s, bn2b = _fold_bn(*p['bn2'])
    bn3s, bn3b = _fold_bn(*p['bn3'])

    h = lax.conv_general_dilated(
        x_nchw, p['w1'].reshape(F1, 1, 1, K1), (1, 1),
        [(0, 0), (PAD1_L, PAD1_R)], dimension_numbers=dn, precision=prec)
    h = h * bn1s.reshape(1, F1, 1, 1) + bn1b.reshape(1, F1, 1, 1)
    h = lax.conv_general_dilated(
        h, p['w2'].reshape(F1D, 1, C, 1), (1, 1), [(0, 0), (0, 0)],
        dimension_numbers=dn, feature_group_count=F1, precision=prec)
    h = h * bn2s.reshape(1, F1D, 1, 1) + bn2b.reshape(1, F1D, 1, 1)
    h = _elu(h)
    h = h.reshape(h.shape[0], F1D, 1, T1, 4).mean(axis=-1)
    h = lax.conv_general_dilated(
        h, p['w3'].reshape(F1D, 1, 1, K2), (1, 1),
        [(0, 0), (PAD2_L, PAD2_R)], dimension_numbers=dn,
        feature_group_count=F1D, precision=prec)
    h = lax.conv_general_dilated(
        h, p['w4'].reshape(F2, F1D, 1, 1), (1, 1), [(0, 0), (0, 0)],
        dimension_numbers=dn, precision=prec)
    h = h * bn3s.reshape(1, F2, 1, 1) + bn3b.reshape(1, F2, 1, 1)
    h = _elu(h)
    h = h.reshape(h.shape[0], F2, 1, T2, 8).mean(axis=-1)
    feat = h.reshape(h.shape[0], -1)
    return jnp.dot(feat, p['wlin'].T, precision=prec)


if __name__ == "__main__":
    key = jax.random.PRNGKey(0)
    ks = jax.random.split(key, 9)

    def bn_params(k, n):
        k1, k2, k3, k4 = jax.random.split(k, 4)
        gamma = 1.0 + 0.1 * jax.random.normal(k1, (n,), jnp.float32)
        beta = 0.1 * jax.random.normal(k2, (n,), jnp.float32)
        mean = 0.1 * jax.random.normal(k3, (n,), jnp.float32)
        var = 0.5 + jax.random.uniform(k4, (n,), jnp.float32)
        return gamma, beta, mean, var

    params = {
        'w1': 0.1 * jax.random.normal(ks[0], (F1, K1), jnp.float32),
        'w2': 0.1 * jax.random.normal(ks[1], (F1D, C), jnp.float32),
        'w3': 0.1 * jax.random.normal(ks[2], (F1D, K2), jnp.float32),
        'w4': 0.1 * jax.random.normal(ks[3], (F2, F1D), jnp.float32),
        'wlin': 0.1 * jax.random.normal(ks[4], (NUM_CLASSES, FEAT), jnp.float32),
        'bn1': bn_params(ks[5], F1),
        'bn2': bn_params(ks[6], F1D),
        'bn3': bn_params(ks[7], F2),
    }

    x = jax.random.normal(ks[8], (B, 1, C, T), jnp.float32)

    out = jax.block_until_ready(depnet_forward(x, params))
    ref = jax.block_until_ready(ref_forward(x, params))

    assert out.shape == (B, NUM_CLASSES)
    assert bool(jnp.all(jnp.isfinite(out)))
    # Tolerance accounts for bf16 operand rounding under Precision.DEFAULT on
    # the MXU; with MATMUL_PRECISION = HIGHEST the match is ~1e-5.
    assert jnp.allclose(out, ref, rtol=2e-2, atol=2e-2), (out, ref)
    print("KERNEL_OK")
</pallas_src>

<mosaic_0001>
module attributes {stable_mosaic.version = 11 : i64} {
  func.func @depnet_kernel(%arg0: i32, %arg1: memref<128x256xf32, #tpu.memory_space<vmem>>, %arg2: memref<256x128xf32, #tpu.memory_space<vmem>>, %arg3: memref<256x1024xf32, #tpu.memory_space<vmem>>, %arg4: memref<256x1xf32, #tpu.memory_space<vmem>>, %arg5: memref<16x128x512xf32, #tpu.memory_space<vmem>>, %arg6: memref<1x512xf32, #tpu.memory_space<vmem>>, %arg7: memref<512x2xf32, #tpu.memory_space<vmem>>, %arg8: memref<1x16x2xf32, #tpu.memory_space<vmem>>) attributes {dimension_semantics = [#tpu.dimension_semantics<parallel>], iteration_bounds = array<i64: 2>, scalar_prefetch = 0 : i64, scratch_operands = 0 : i64, tpu.core_type = #tpu.core_type<tc>, window_params = [{transform_indices = @transform_0, window_bounds = array<i64: 128, 256>}, {pipeline_mode = #tpu.pipeline_mode<synchronous>, transform_indices = @transform_1, window_bounds = array<i64: 256, 128>}, {pipeline_mode = #tpu.pipeline_mode<synchronous>, transform_indices = @transform_2, window_bounds = array<i64: 256, 1024>}, {pipeline_mode = #tpu.pipeline_mode<synchronous>, transform_indices = @transform_3, window_bounds = array<i64: 256, 1>}, {pipeline_mode = #tpu.pipeline_mode<synchronous>, transform_indices = @transform_4, window_bounds = array<i64: 16, 128, 512>}, {pipeline_mode = #tpu.pipeline_mode<synchronous>, transform_indices = @transform_5, window_bounds = array<i64: 1, 512>}, {pipeline_mode = #tpu.pipeline_mode<synchronous>, transform_indices = @transform_6, window_bounds = array<i64: 512, 2>}, {transform_indices = @transform_7, window_bounds = array<i64: 1, 16, 2>}]} {
    %c0 = arith.constant 0 : index
    %c0_0 = arith.constant 0 : index
    %0 = vector.load %arg1[%c0, %c0_0] : memref<128x256xf32, #tpu.memory_space<vmem>>, vector<128x256xf32>
    %c0_1 = arith.constant 0 : index
    %c0_2 = arith.constant 0 : index
    %1 = vector.load %arg2[%c0_1, %c0_2] : memref<256x128xf32, #tpu.memory_space<vmem>>, vector<256x128xf32>
    %cst = arith.constant dense<0.000000e+00> : vector<256x256xf32>
    %2 = tpu.matmul %1, %0, %cst {dimension_numbers = #tpu.dot_dimension_numbers<[1], [0], [0], [1], [0, 0, 1, 1], [], []>} : vector<256x128xf32>, vector<128x256xf32>, vector<256x256xf32> -> vector<256x256xf32>
    %c0_3 = arith.constant 0 : index
    %c0_4 = arith.constant 0 : index
    %3 = vector.load %arg3[%c0_3, %c0_4] : memref<256x1024xf32, #tpu.memory_space<vmem>>, vector<256x1024xf32>
    %cst_5 = arith.constant dense<0.000000e+00> : vector<256x1024xf32>
    %4 = tpu.matmul %2, %3, %cst_5 {dimension_numbers = #tpu.dot_dimension_numbers<[1], [0], [0], [1], [0, 0, 1, 1], [], []>} : vector<256x256xf32>, vector<256x1024xf32>, vector<256x1024xf32> -> vector<256x1024xf32>
    %5 = vector.extract_strided_slice %4 {offsets = [0, 0], sizes = [32, 128], strides = [1, 1]} : vector<256x1024xf32> to vector<32x128xf32>
    %6 = vector.extract_strided_slice %4 {offsets = [32, 128], sizes = [32, 128], strides = [1, 1]} : vector<256x1024xf32> to vector<32x128xf32>
    %7 = vector.extract_strided_slice %4 {offsets = [64, 256], sizes = [32, 128], strides = [1, 1]} : vector<256x1024xf32> to vector<32x128xf32>
    %8 = vector.extract_strided_slice %4 {offsets = [96, 384], sizes = [32, 128], strides = [1, 1]} : vector<256x1024xf32> to vector<32x128xf32>
    %9 = vector.extract_strided_slice %4 {offsets = [128, 512], sizes = [32, 128], strides = [1, 1]} : vector<256x1024xf32> to vector<32x128xf32>
    %10 = vector.extract_strided_slice %4 {offsets = [160, 640], sizes = [32, 128], strides = [1, 1]} : vector<256x1024xf32> to vector<32x128xf32>
    %11 = vector.extract_strided_slice %4 {offsets = [192, 768], sizes = [32, 128], strides = [1, 1]} : vector<256x1024xf32> to vector<32x128xf32>
    %12 = vector.extract_strided_slice %4 {offsets = [224, 896], sizes = [32, 128], strides = [1, 1]} : vector<256x1024xf32> to vector<32x128xf32>
    %13 = tpu.concatenate %5, %6, %7, %8, %9, %10, %11, %12 in 0 : vector<32x128xf32>, vector<32x128xf32>, vector<32x128xf32>, vector<32x128xf32>, vector<32x128xf32>, vector<32x128xf32>, vector<32x128xf32>, vector<32x128xf32> -> vector<256x128xf32>
    %c0_6 = arith.constant 0 : index
    %c0_7 = arith.constant 0 : index
    %14 = vector.load %arg4[%c0_6, %c0_7] : memref<256x1xf32, #tpu.memory_space<vmem>>, vector<256x1xf32>
    %15 = vector.broadcast %14 : vector<256x1xf32> to vector<256x128xf32>
    %16 = arith.addf %13, %15 : vector<256x128xf32>
    %cst_8 = arith.constant 0.000000e+00 : f32
    %17 = vector.broadcast %cst_8 : f32 to vector<256x128xf32>
    %18 = arith.cmpf ogt, %16, %17 : vector<256x128xf32>
    %cst_9 = arith.constant 0.000000e+00 : f32
    %19 = vector.broadcast %cst_9 : f32 to vector<256x128xf32>
    %20 = arith.minimumf %16, %19 : vector<256x128xf32>
    %21 = math.exp %20 : vector<256x128xf32>
    %cst_10 = arith.constant 1.000000e+00 : f32
    %22 = vector.broadcast %cst_10 : f32 to vector<256x128xf32>
    %23 = arith.subf %21, %22 : vector<256x128xf32>
    %24 = arith.select %18, %16, %23 : vector<256x128xi1>, vector<256x128xf32>
    %25 = vector.extract_strided_slice %24 {offsets = [0, 0], sizes = [16, 128], strides = [1, 1]} : vector<256x128xf32> to vector<16x128xf32>
    %c0_11 = arith.constant 0 : index
    %c0_12 = arith.constant 0 : index
    %c0_13 = arith.constant 0 : index
    %26 = vector.load %arg5[%c0_11, %c0_12, %c0_13] : memref<16x128x512xf32, #tpu.memory_space<vmem>>, vector<1x128x512xf32>
    %27 = vector.shape_cast %26 : vector<1x128x512xf32> to vector<128x512xf32>
    %cst_14 = arith.constant dense<0.000000e+00> : vector<16x512xf32>
    %28 = tpu.matmul %25, %27, %cst_14 {dimension_numbers = #tpu.dot_dimension_numbers<[1], [0], [0], [1], [0, 0, 1, 1], [], []>} : vector<16x128xf32>, vector<128x512xf32>, vector<16x512xf32> -> vector<16x512xf32>
    %29 = vector.extract_strided_slice %24 {offsets = [16, 0], sizes = [16, 128], strides = [1, 1]} : vector<256x128xf32> to vector<16x128xf32>
    %c1 = arith.constant 1 : index
    %c0_15 = arith.constant 0 : index
    %c0_16 = arith.constant 0 : index
    %30 = vector.load %arg5[%c1, %c0_15, %c0_16] : memref<16x128x512xf32, #tpu.memory_space<vmem>>, vector<1x128x512xf32>
    %31 = vector.shape_cast %30 : vector<1x128x512xf32> to vector<128x512xf32>
    %cst_17 = arith.constant dense<0.000000e+00> : vector<16x512xf32>
    %32 = tpu.matmul %29, %31, %cst_17 {dimension_numbers = #tpu.dot_dimension_numbers<[1], [0], [0], [1], [0, 0, 1, 1], [], []>} : vector<16x128xf32>, vector<128x512xf32>, vector<16x512xf32> -> vector<16x512xf32>
    %33 = arith.addf %28, %32 : vector<16x512xf32>
    %34 = vector.extract_strided_slice %24 {offsets = [32, 0], sizes = [16, 128], strides = [1, 1]} : vector<256x128xf32> to vector<16x128xf32>
    %c2 = arith.constant 2 : index
    %c0_18 = arith.constant 0 : index
    %c0_19 = arith.constant 0 : index
    %35 = vector.load %arg5[%c2, %c0_18, %c0_19] : memref<16x128x512xf32, #tpu.memory_space<vmem>>, vector<1x128x512xf32>
    %36 = vector.shape_cast %35 : vector<1x128x512xf32> to vector<128x512xf32>
    %cst_20 = arith.constant dense<0.000000e+00> : vector<16x512xf32>
    %37 = tpu.matmul %34, %36, %cst_20 {dimension_numbers = #tpu.dot_dimension_numbers<[1], [0], [0], [1], [0, 0, 1, 1], [], []>} : vector<16x128xf32>, vector<128x512xf32>, vector<16x512xf32> -> vector<16x512xf32>
    %38 = arith.addf %33, %37 : vector<16x512xf32>
    %39 = vector.extract_strided_slice %24 {offsets = [48, 0], sizes = [16, 128], strides = [1, 1]} : vector<256x128xf32> to vector<16x128xf32>
    %c3 = arith.constant 3 : index
    %c0_21 = arith.constant 0 : index
    %c0_22 = arith.constant 0 : index
    %40 = vector.load %arg5[%c3, %c0_21, %c0_22] : memref<16x128x512xf32, #tpu.memory_space<vmem>>, vector<1x128x512xf32>
    %41 = vector.shape_cast %40 : vector<1x128x512xf32> to vector<128x512xf32>
    %cst_23 = arith.constant dense<0.000000e+00> : vector<16x512xf32>
    %42 = tpu.matmul %39, %41, %cst_23 {dimension_numbers = #tpu.dot_dimension_numbers<[1], [0], [0], [1], [0, 0, 1, 1], [], []>} : vector<16x128xf32>, vector<128x512xf32>, vector<16x512xf32> -> vector<16x512xf32>
    %43 = arith.addf %38, %42 : vector<16x512xf32>
    %44 = vector.extract_strided_slice %24 {offsets = [64, 0], sizes = [16, 128], strides = [1, 1]} : vector<256x128xf32> to vector<16x128xf32>
    %c4 = arith.constant 4 : index
    %c0_24 = arith.constant 0 : index
    %c0_25 = arith.constant 0 : index
    %45 = vector.load %arg5[%c4, %c0_24, %c0_25] : memref<16x128x512xf32, #tpu.memory_space<vmem>>, vector<1x128x512xf32>
    %46 = vector.shape_cast %45 : vector<1x128x512xf32> to vector<128x512xf32>
    %cst_26 = arith.constant dense<0.000000e+00> : vector<16x512xf32>
    %47 = tpu.matmul %44, %46, %cst_26 {dimension_numbers = #tpu.dot_dimension_numbers<[1], [0], [0], [1], [0, 0, 1, 1], [], []>} : vector<16x128xf32>, vector<128x512xf32>, vector<16x512xf32> -> vector<16x512xf32>
    %48 = arith.addf %43, %47 : vector<16x512xf32>
    %49 = vector.extract_strided_slice %24 {offsets = [80, 0], sizes = [16, 128], strides = [1, 1]} : vector<256x128xf32> to vector<16x128xf32>
    %c5 = arith.constant 5 : index
    %c0_27 = arith.constant 0 : index
    %c0_28 = arith.constant 0 : index
    %50 = vector.load %arg5[%c5, %c0_27, %c0_28] : memref<16x128x512xf32, #tpu.memory_space<vmem>>, vector<1x128x512xf32>
    %51 = vector.shape_cast %50 : vector<1x128x512xf32> to vector<128x512xf32>
    %cst_29 = arith.constant dense<0.000000e+00> : vector<16x512xf32>
    %52 = tpu.matmul %49, %51, %cst_29 {dimension_numbers = #tpu.dot_dimension_numbers<[1], [0], [0], [1], [0, 0, 1, 1], [], []>} : vector<16x128xf32>, vector<128x512xf32>, vector<16x512xf32> -> vector<16x512xf32>
    %53 = arith.addf %48, %52 : vector<16x512xf32>
    %54 = vector.extract_strided_slice %24 {offsets = [96, 0], sizes = [16, 128], strides = [1, 1]} : vector<256x128xf32> to vector<16x128xf32>
    %c6 = arith.constant 6 : index
    %c0_30 = arith.constant 0 : index
    %c0_31 = arith.constant 0 : index
    %55 = vector.load %arg5[%c6, %c0_30, %c0_31] : memref<16x128x512xf32, #tpu.memory_space<vmem>>, vector<1x128x512xf32>
    %56 = vector.shape_cast %55 : vector<1x128x512xf32> to vector<128x512xf32>
    %cst_32 = arith.constant dense<0.000000e+00> : vector<16x512xf32>
    %57 = tpu.matmul %54, %56, %cst_32 {dimension_numbers = #tpu.dot_dimension_numbers<[1], [0], [0], [1], [0, 0, 1, 1], [], []>} : vector<16x128xf32>, vector<128x512xf32>, vector<16x512xf32> -> vector<16x512xf32>
    %58 = arith.addf %53, %57 : vector<16x512xf32>
    %59 = vector.extract_strided_slice %24 {offsets = [112, 0], sizes = [16, 128], strides = [1, 1]} : vector<256x128xf32> to vector<16x128xf32>
    %c7 = arith.constant 7 : index
    %c0_33 = arith.constant 0 : index
    %c0_34 = arith.constant 0 : index
    %60 = vector.load %arg5[%c7, %c0_33, %c0_34] : memref<16x128x512xf32, #tpu.memory_space<vmem>>, vector<1x128x512xf32>
    %61 = vector.shape_cast %60 : vector<1x128x512xf32> to vector<128x512xf32>
    %cst_35 = arith.constant dense<0.000000e+00> : vector<16x512xf32>
    %62 = tpu.matmul %59, %61, %cst_35 {dimension_numbers = #tpu.dot_dimension_numbers<[1], [0], [0], [1], [0, 0, 1, 1], [], []>} : vector<16x128xf32>, vector<128x512xf32>, vector<16x512xf32> -> vector<16x512xf32>
    %63 = arith.addf %58, %62 : vector<16x512xf32>
    %64 = vector.extract_strided_slice %24 {offsets = [128, 0], sizes = [16, 128], strides = [1, 1]} : vector<256x128xf32> to vector<16x128xf32>
    %c8 = arith.constant 8 : index
    %c0_36 = arith.constant 0 : index
    %c0_37 = arith.constant 0 : index
    %65 = vector.load %arg5[%c8, %c0_36, %c0_37] : memref<16x128x512xf32, #tpu.memory_space<vmem>>, vector<1x128x512xf32>
    %66 = vector.shape_cast %65 : vector<1x128x512xf32> to vector<128x512xf32>
    %cst_38 = arith.constant dense<0.000000e+00> : vector<16x512xf32>
    %67 = tpu.matmul %64, %66, %cst_38 {dimension_numbers = #tpu.dot_dimension_numbers<[1], [0], [0], [1], [0, 0, 1, 1], [], []>} : vector<16x128xf32>, vector<128x512xf32>, vector<16x512xf32> -> vector<16x512xf32>
    %68 = arith.addf %63, %67 : vector<16x512xf32>
    %69 = vector.extract_strided_slice %24 {offsets = [144, 0], sizes = [16, 128], strides = [1, 1]} : vector<256x128xf32> to vector<16x128xf32>
    %c9 = arith.constant 9 : index
    %c0_39 = arith.constant 0 : index
    %c0_40 = arith.constant 0 : index
    %70 = vector.load %arg5[%c9, %c0_39, %c0_40] : memref<16x128x512xf32, #tpu.memory_space<vmem>>, vector<1x128x512xf32>
    %71 = vector.shape_cast %70 : vector<1x128x512xf32> to vector<128x512xf32>
    %cst_41 = arith.constant dense<0.000000e+00> : vector<16x512xf32>
    %72 = tpu.matmul %69, %71, %cst_41 {dimension_numbers = #tpu.dot_dimension_numbers<[1], [0], [0], [1], [0, 0, 1, 1], [], []>} : vector<16x128xf32>, vector<128x512xf32>, vector<16x512xf32> -> vector<16x512xf32>
    %73 = arith.addf %68, %72 : vector<16x512xf32>
    %74 = vector.extract_strided_slice %24 {offsets = [160, 0], sizes = [16, 128], strides = [1, 1]} : vector<256x128xf32> to vector<16x128xf32>
    %c10 = arith.constant 10 : index
    %c0_42 = arith.constant 0 : index
    %c0_43 = arith.constant 0 : index
    %75 = vector.load %arg5[%c10, %c0_42, %c0_43] : memref<16x128x512xf32, #tpu.memory_space<vmem>>, vector<1x128x512xf32>
    %76 = vector.shape_cast %75 : vector<1x128x512xf32> to vector<128x512xf32>
    %cst_44 = arith.constant dense<0.000000e+00> : vector<16x512xf32>
    %77 = tpu.matmul %74, %76, %cst_44 {dimension_numbers = #tpu.dot_dimension_numbers<[1], [0], [0], [1], [0, 0, 1, 1], [], []>} : vector<16x128xf32>, vector<128x512xf32>, vector<16x512xf32> -> vector<16x512xf32>
    %78 = arith.addf %73, %77 : vector<16x512xf32>
    %79 = vector.extract_strided_slice %24 {offsets = [176, 0], sizes = [16, 128], strides = [1, 1]} : vector<256x128xf32> to vector<16x128xf32>
    %c11 = arith.constant 11 : index
    %c0_45 = arith.constant 0 : index
    %c0_46 = arith.constant 0 : index
    %80 = vector.load %arg5[%c11, %c0_45, %c0_46] : memref<16x128x512xf32, #tpu.memory_space<vmem>>, vector<1x128x512xf32>
    %81 = vector.shape_cast %80 : vector<1x128x512xf32> to vector<128x512xf32>
    %cst_47 = arith.constant dense<0.000000e+00> : vector<16x512xf32>
    %82 = tpu.matmul %79, %81, %cst_47 {dimension_numbers = #tpu.dot_dimension_numbers<[1], [0], [0], [1], [0, 0, 1, 1], [], []>} : vector<16x128xf32>, vector<128x512xf32>, vector<16x512xf32> -> vector<16x512xf32>
    %83 = arith.addf %78, %82 : vector<16x512xf32>
    %84 = vector.extract_strided_slice %24 {offsets = [192, 0], sizes = [16, 128], strides = [1, 1]} : vector<256x128xf32> to vector<16x128xf32>
    %c12 = arith.constant 12 : index
    %c0_48 = arith.constant 0 : index
    %c0_49 = arith.constant 0 : index
    %85 = vector.load %arg5[%c12, %c0_48, %c0_49] : memref<16x128x512xf32, #tpu.memory_space<vmem>>, vector<1x128x512xf32>
    %86 = vector.shape_cast %85 : vector<1x128x512xf32> to vector<128x512xf32>
    %cst_50 = arith.constant dense<0.000000e+00> : vector<16x512xf32>
    %87 = tpu.matmul %84, %86, %cst_50 {dimension_numbers = #tpu.dot_dimension_numbers<[1], [0], [0], [1], [0, 0, 1, 1], [], []>} : vector<16x128xf32>, vector<128x512xf32>, vector<16x512xf32> -> vector<16x512xf32>
    %88 = arith.addf %83, %87 : vector<16x512xf32>
    %89 = vector.extract_strided_slice %24 {offsets = [208, 0], sizes = [16, 128], strides = [1, 1]} : vector<256x128xf32> to vector<16x128xf32>
    %c13 = arith.constant 13 : index
    %c0_51 = arith.constant 0 : index
    %c0_52 = arith.constant 0 : index
    %90 = vector.load %arg5[%c13, %c0_51, %c0_52] : memref<16x128x512xf32, #tpu.memory_space<vmem>>, vector<1x128x512xf32>
    %91 = vector.shape_cast %90 : vector<1x128x512xf32> to vector<128x512xf32>
    %cst_53 = arith.constant dense<0.000000e+00> : vector<16x512xf32>
    %92 = tpu.matmul %89, %91, %cst_53 {dimension_numbers = #tpu.dot_dimension_numbers<[1], [0], [0], [1], [0, 0, 1, 1], [], []>} : vector<16x128xf32>, vector<128x512xf32>, vector<16x512xf32> -> vector<16x512xf32>
    %93 = arith.addf %88, %92 : vector<16x512xf32>
    %94 = vector.extract_strided_slice %24 {offsets = [224, 0], sizes = [16, 128], strides = [1, 1]} : vector<256x128xf32> to vector<16x128xf32>
    %c14 = arith.constant 14 : index
    %c0_54 = arith.constant 0 : index
    %c0_55 = arith.constant 0 : index
    %95 = vector.load %arg5[%c14, %c0_54, %c0_55] : memref<16x128x512xf32, #tpu.memory_space<vmem>>, vector<1x128x512xf32>
    %96 = vector.shape_cast %95 : vector<1x128x512xf32> to vector<128x512xf32>
    %cst_56 = arith.constant dense<0.000000e+00> : vector<16x512xf32>
    %97 = tpu.matmul %94, %96, %cst_56 {dimension_numbers = #tpu.dot_dimension_numbers<[1], [0], [0], [1], [0, 0, 1, 1], [], []>} : vector<16x128xf32>, vector<128x512xf32>, vector<16x512xf32> -> vector<16x512xf32>
    %98 = arith.addf %93, %97 : vector<16x512xf32>
    %99 = vector.extract_strided_slice %24 {offsets = [240, 0], sizes = [16, 128], strides = [1, 1]} : vector<256x128xf32> to vector<16x128xf32>
    %c15 = arith.constant 15 : index
    %c0_57 = arith.constant 0 : index
    %c0_58 = arith.constant 0 : index
    %100 = vector.load %arg5[%c15, %c0_57, %c0_58] : memref<16x128x512xf32, #tpu.memory_space<vmem>>, vector<1x128x512xf32>
    %101 = vector.shape_cast %100 : vector<1x128x512xf32> to vector<128x512xf32>
    %cst_59 = arith.constant dense<0.000000e+00> : vector<16x512xf32>
    %102 = tpu.matmul %99, %101, %cst_59 {dimension_numbers = #tpu.dot_dimension_numbers<[1], [0], [0], [1], [0, 0, 1, 1], [], []>} : vector<16x128xf32>, vector<128x512xf32>, vector<16x512xf32> -> vector<16x512xf32>
    %103 = arith.addf %98, %102 : vector<16x512xf32>
    %c0_60 = arith.constant 0 : index
    %c0_61 = arith.constant 0 : index
    %104 = vector.load %arg6[%c0_60, %c0_61] : memref<1x512xf32, #tpu.memory_space<vmem>>, vector<1x512xf32>
    %105 = vector.broadcast %104 : vector<1x512xf32> to vector<16x512xf32>
    %106 = arith.addf %103, %105 : vector<16x512xf32>
    %cst_62 = arith.constant 0.000000e+00 : f32
    %107 = vector.broadcast %cst_62 : f32 to vector<16x512xf32>
    %108 = arith.cmpf ogt, %106, %107 : vector<16x512xf32>
    %cst_63 = arith.constant 0.000000e+00 : f32
    %109 = vector.broadcast %cst_63 : f32 to vector<16x512xf32>
    %110 = arith.minimumf %106, %109 : vector<16x512xf32>
    %111 = math.exp %110 : vector<16x512xf32>
    %cst_64 = arith.constant 1.000000e+00 : f32
    %112 = vector.broadcast %cst_64 : f32 to vector<16x512xf32>
    %113 = arith.subf %111, %112 : vector<16x512xf32>
    %114 = arith.select %108, %106, %113 : vector<16x512xi1>, vector<16x512xf32>
    %c0_65 = arith.constant 0 : index
    %c0_66 = arith.constant 0 : index
    %115 = vector.load %arg7[%c0_65, %c0_66] : memref<512x2xf32, #tpu.memory_space<vmem>>, vector<512x2xf32>
    %cst_67 = arith.constant dense<0.000000e+00> : vector<16x2xf32>
    %116 = tpu.matmul %114, %115, %cst_67 {dimension_numbers = #tpu.dot_dimension_numbers<[1], [0], [0], [1], [0, 0, 1, 1], [], []>} : vector<16x512xf32>, vector<512x2xf32>, vector<16x2xf32> -> vector<16x2xf32>
    %c0_68 = arith.constant 0 : index
    %c0_69 = arith.constant 0 : index
    %c0_70 = arith.constant 0 : index
    %117 = vector.load %arg8[%c0_68, %c0_69, %c0_70] : memref<1x16x2xf32, #tpu.memory_space<vmem>>, vector<1x16x2xf32>
    %118 = vector.shape_cast %117 : vector<1x16x2xf32> to vector<16x2xf32>
    %119 = vector.shape_cast %116 : vector<16x2xf32> to vector<1x16x2xf32>
    tpu.vector_store %arg8[%c0_68, %c0_69, %c0_70], %119 {strides = array<i32>} : memref<1x16x2xf32, #tpu.memory_space<vmem>>, vector<1x16x2xf32>,
    return
  }
  func.func @transform_0(%arg0: i32) -> (i32, i32) {
    %c0_i32 = arith.constant 0 : i32
    %c0_i32_0 = arith.constant 0 : i32
    return %arg0, %c0_i32 : i32, i32
  }
  func.func @transform_1(%arg0: i32) -> (i32, i32) {
    %c0_i32 = arith.constant 0 : i32
    %c0_i32_0 = arith.constant 0 : i32
    %c0_i32_1 = arith.constant 0 : i32
    return %c0_i32, %c0_i32_0 : i32, i32
  }
  func.func @transform_2(%arg0: i32) -> (i32, i32) {
    %c0_i32 = arith.constant 0 : i32
    %c0_i32_0 = arith.constant 0 : i32
    %c0_i32_1 = arith.constant 0 : i32
    return %c0_i32, %c0_i32_0 : i32, i32
  }
  func.func @transform_3(%arg0: i32) -> (i32, i32) {
    %c0_i32 = arith.constant 0 : i32
    %c0_i32_0 = arith.constant 0 : i32
    %c0_i32_1 = arith.constant 0 : i32
    return %c0_i32, %c0_i32_0 : i32, i32
  }
  func.func @transform_4(%arg0: i32) -> (i32, i32, i32) {
    %c0_i32 = arith.constant 0 : i32
    %c0_i32_0 = arith.constant 0 : i32
    %c0_i32_1 = arith.constant 0 : i32
    %c0_i32_2 = arith.constant 0 : i32
    return %c0_i32, %c0_i32_0, %c0_i32_1 : i32, i32, i32
  }
  func.func @transform_5(%arg0: i32) -> (i32, i32) {
    %c0_i32 = arith.constant 0 : i32
    %c0_i32_0 = arith.constant 0 : i32
    %c0_i32_1 = arith.constant 0 : i32
    return %c0_i32, %c0_i32_0 : i32, i32
  }
  func.func @transform_6(%arg0: i32) -> (i32, i32) {
    %c0_i32 = arith.constant 0 : i32
    %c0_i32_0 = arith.constant 0 : i32
    %c0_i32_1 = arith.constant 0 : i32
    return %c0_i32, %c0_i32_0 : i32, i32
  }
  func.func @transform_7(%arg0: i32) -> (i32, i32, i32) {
    %c0_i32 = arith.constant 0 : i32
    %c0_i32_0 = arith.constant 0 : i32
    %c0_i32_1 = arith.constant 0 : i32
    return %arg0, %c0_i32, %c0_i32_0 : i32, i32, i32
  }
}

</mosaic_0001>

<llo_original>
// kernel: tpu_custom_call.1
$region0: #{tpu_custom_call.1}
  #allocation0 [shape = 'u32[]', space=smem, size = 0x4, offset = 0x4, fixed_abs, tag = 'smem constant byte address 0x4 - core index']
  #allocation1 [shape = 'u32[144,128]{1,0:T(1,128)}', space=vmem, size = 0x12000, scoped, tag = 'internal scratch']
  %s0 = inlined_call_operand.hbm [shape: f32[256,256], index: 0, kind: input, shape index: {}]
  %s1 = inlined_call_operand.hbm [shape: f32[256,128], index: 1, kind: input, shape index: {}]
  %s2 = inlined_call_operand.hbm [shape: f32[256,1024], index: 2, kind: input, shape index: {}]
  %s3 = inlined_call_operand.vmem [shape: f32[256,1], index: 3, kind: input, shape index: {}]
  %s4 = inlined_call_operand.hbm [shape: f32[16,128,512], index: 4, kind: input, shape index: {}]
  %s5 = inlined_call_operand.hbm [shape: f32[1,512], index: 5, kind: input, shape index: {}]
  %s6 = inlined_call_operand.vmem [shape: f32[512,2], index: 6, kind: input, shape index: {}]
  %s7 = inlined_call_operand.vmem [shape: f32[2,16,2], index: 7, kind: output, shape index: {}]
  %s8 = sld [smem:[#allocation0]]
  $region81: #{tpu_custom_call.1} parent=0
    _
  %s10 = ssub.s32 1, %s8
  %s11 = scalar_select 0, %s10, %s8
  $region1: #{tpu_custom_call.1} parent=0
    #allocation2 [shape = 'u8[262144]{0}', space=vmem, size = 0x40000, scoped, tag = 'input window, operand 0']
    #allocation3 [shape = 's32[2]{0}', space=sflag, size = 0x8, scoped, tag = 'scoped memory for tpu_custom_call.1']
    #allocation4 [shape = 'u8[131072]{0}', space=vmem, size = 0x20000, scoped, tag = 'input window, operand 1, single buffered']
    #allocation5 [shape = 's32[1]{0}', space=sflag, size = 0x4, scoped, tag = 'scoped memory for tpu_custom_call.1']
    #allocation6 [shape = 'u8[1048576]{0}', space=vmem, size = 0x100000, scoped, tag = 'input window, operand 2, single buffered']
    #allocation7 [shape = 'u8[4194304]{0}', space=vmem, size = 0x400000, scoped, tag = 'input window, operand 4, single buffered']
    #allocation8 [shape = 's32[1]{0}', space=sflag, size = 0x4, scoped, tag = 'scoped memory for tpu_custom_call.1']
    #allocation9 [shape = 'u8[2048]{0}', space=vmem, size = 0x800, scoped, tag = 'input window, operand 5, single buffered']
    %12 = vsyncpa [#allocation3], 0
    %s13 = scalar_lea.sflag [#allocation3], 1
    %14 = vsyncpa %s13, 0
    %15 = vsyncpa [#allocation5], 0
    %16 = vsyncpa [#allocation8], 0
    loop: start=0, step=1, limit=4
    $region2: #{tpu_custom_call.1} parent=1 // loop_pre_header
      _
    $region3: #{tpu_custom_call.1} parent=1 // loop_header
      %s18 = sphi 0, %s22
      %p19 = scmp.ge.s32.totalorder %s18, 4
      %s28 = sphi 0, %s30
      %s31 = sphi 0, %s28
      %s32 = sphi 0, %s31
      %s48 = sphi 0, %s32
      %s52 = sphi 0, %s52
      %s54 = sphi 0, %s52
      %s55 = sphi 0, %s54
      %s69 = sphi 0, %s55
      %s73 = sphi 0, %s73
      %s75 = sphi 0, %s73
      %s76 = sphi 0, %s75
      %s90 = sphi 0, %s76
      %s94 = sphi 0, %s94
      %s96 = sphi 0, %s94
      %s97 = sphi 0, %s96
      %s111 = sphi 0, %s97
      %s115 = sphi 0, %s115
      %s117 = sphi 0, %s115
      %s118 = sphi 0, %s117
      %s132 = sphi 0, %s118
      %s136 = sphi 0, %s136
      %s138 = sphi 0, %s136
      %s139 = sphi 0, %s138
      %s153 = sphi 0, %s139
      %s157 = sphi 0, %s157
      %s159 = sphi 0, %s157
      %s160 = sphi 0, %s159
      %s174 = sphi 0, %s160
      %s180 = sphi 0, %s182
      %s183 = sphi 0, %s180
      %s184 = sphi 0, %s183
      %s200 = sphi 0, %s184
    $region4: #{tpu_custom_call.1} parent=1 // loop_header_branch
      %21 = sbr.rel (%p19) target = $region8
    $region5: #{tpu_custom_call.1} parent=1 // loop_body
      %s23 = ssub.s32 %s18, 1
      %s24 = ssub.s32 %s18, 2
      %s25 = sadd.s32 %s18, 1
      %s26 = ssub.s32 %s18, %s25
      %p27 = scmp.eq.s32.totalorder %s26, 0
      %s29 = sadd.s32 %s28, 1
      %s30 = scalar_select %p27, %s28, %s29
      %p33 = pneg %p27
      %p34 = scmp.eq.s32.totalorder %s18, 1
      %p35 = por %p33, %p34
      %p36 = scmp.ne.s32.totalorder %s28, %s31
      %p37 = scmp.eq.s32.totalorder %s18, 0
      %p38 = por %p36, %p37
      %p39 = scmp.ne.s32.totalorder %s28, %s31
      %p40 = scmp.eq.s32.totalorder %s23, 1
      %p41 = por %p39, %p40
      %p42 = scmp.ne.s32.totalorder %s31, %s32
      %p43 = scmp.eq.s32.totalorder %s23, 0
      %p44 = por %p42, %p43
      %p45 = scmp.ne.s32.totalorder %s31, %s32
      %p46 = scmp.eq.s32.totalorder %s24, 1
      %p47 = por %p45, %p46
      %p49 = scmp.ne.s32.totalorder %s32, %s48
      %p50 = scmp.eq.s32.totalorder %s24, 0
      %p51 = por %p49, %p50
      %s53 = sadd.s32 %s52, 1
      %p56 = scmp.eq.s32.totalorder %s18, 1
      %p57 = scmp.ne.s32.totalorder %s52, %s54
      %p58 = scmp.eq.s32.totalorder %s18, 0
      %p59 = por %p57, %p58
      %p60 = scmp.ne.s32.totalorder %s52, %s54
      %p61 = scmp.eq.s32.totalorder %s23, 1
      %p62 = por %p60, %p61
      %p63 = scmp.ne.s32.totalorder %s54, %s55
      %p64 = scmp.eq.s32.totalorder %s23, 0
      %p65 = por %p63, %p64
      %p66 = scmp.ne.s32.totalorder %s54, %s55
      %p67 = scmp.eq.s32.totalorder %s24, 1
      %p68 = por %p66, %p67
      %p70 = scmp.ne.s32.totalorder %s55, %s69
      %p71 = scmp.eq.s32.totalorder %s24, 0
      %p72 = por %p70, %p71
      %s74 = sadd.s32 %s73, 1
      %p77 = scmp.eq.s32.totalorder %s18, 1
      %p78 = scmp.ne.s32.totalorder %s73, %s75
      %p79 = scmp.eq.s32.totalorder %s18, 0
      %p80 = por %p78, %p79
      %p81 = scmp.ne.s32.totalorder %s73, %s75
      %p82 = scmp.eq.s32.totalorder %s23, 1
      %p83 = por %p81, %p82
      %p84 = scmp.ne.s32.totalorder %s75, %s76
      %p85 = scmp.eq.s32.totalorder %s23, 0
      %p86 = por %p84, %p85
      %p87 = scmp.ne.s32.totalorder %s75, %s76
      %p88 = scmp.eq.s32.totalorder %s24, 1
      %p89 = por %p87, %p88
      %p91 = scmp.ne.s32.totalorder %s76, %s90
      %p92 = scmp.eq.s32.totalorder %s24, 0
      %p93 = por %p91, %p92
      %s95 = sadd.s32 %s94, 1
      %p98 = scmp.eq.s32.totalorder %s18, 1
      %p99 = scmp.ne.s32.totalorder %s94, %s96
      %p100 = scmp.eq.s32.totalorder %s18, 0
      %p101 = por %p99, %p100
      %p102 = scmp.ne.s32.totalorder %s94, %s96
      %p103 = scmp.eq.s32.totalorder %s23, 1
      %p104 = por %p102, %p103
      %p105 = scmp.ne.s32.totalorder %s96, %s97
      %p106 = scmp.eq.s32.totalorder %s23, 0
      %p107 = por %p105, %p106
      %p108 = scmp.ne.s32.totalorder %s96, %s97
      %p109 = scmp.eq.s32.totalorder %s24, 1
      %p110 = por %p108, %p109
      %p112 = scmp.ne.s32.totalorder %s97, %s111
      %p113 = scmp.eq.s32.totalorder %s24, 0
      %p114 = por %p112, %p113
      %s116 = sadd.s32 %s115, 1
      %p119 = scmp.eq.s32.totalorder %s18, 1
      %p120 = scmp.ne.s32.totalorder %s115, %s117
      %p121 = scmp.eq.s32.totalorder %s18, 0
      %p122 = por %p120, %p121
      %p123 = scmp.ne.s32.totalorder %s115, %s117
      %p124 = scmp.eq.s32.totalorder %s23, 1
      %p125 = por %p123, %p124
      %p126 = scmp.ne.s32.totalorder %s117, %s118
      %p127 = scmp.eq.s32.totalorder %s23, 0
      %p128 = por %p126, %p127
      %p129 = scmp.ne.s32.totalorder %s117, %s118
      %p130 = scmp.eq.s32.totalorder %s24, 1
      %p131 = por %p129, %p130
      %p133 = scmp.ne.s32.totalorder %s118, %s132
      %p134 = scmp.eq.s32.totalorder %s24, 0
      %p135 = por %p133, %p134
      %s137 = sadd.s32 %s136, 1
      %p140 = scmp.eq.s32.totalorder %s18, 1
      %p141 = scmp.ne.s32.totalorder %s136, %s138
      %p142 = scmp.eq.s32.totalorder %s18, 0
      %p143 = por %p141, %p142
      %p144 = scmp.ne.s32.totalorder %s136, %s138
      %p145 = scmp.eq.s32.totalorder %s23, 1
      %p146 = por %p144, %p145
      %p147 = scmp.ne.s32.totalorder %s138, %s139
      %p148 = scmp.eq.s32.totalorder %s23, 0
      %p149 = por %p147, %p148
      %p150 = scmp.ne.s32.totalorder %s138, %s139
      %p151 = scmp.eq.s32.totalorder %s24, 1
      %p152 = por %p150, %p151
      %p154 = scmp.ne.s32.totalorder %s139, %s153
      %p155 = scmp.eq.s32.totalorder %s24, 0
      %p156 = por %p154, %p155
      %s158 = sadd.s32 %s157, 1
      %p161 = scmp.eq.s32.totalorder %s18, 1
      %p162 = scmp.ne.s32.totalorder %s157, %s159
      %p163 = scmp.eq.s32.totalorder %s18, 0
      %p164 = por %p162, %p163
      %p165 = scmp.ne.s32.totalorder %s157, %s159
      %p166 = scmp.eq.s32.totalorder %s23, 1
      %p167 = por %p165, %p166
      %p168 = scmp.ne.s32.totalorder %s159, %s160
      %p169 = scmp.eq.s32.totalorder %s23, 0
      %p170 = por %p168, %p169
      %p171 = scmp.ne.s32.totalorder %s159, %s160
      %p172 = scmp.eq.s32.totalorder %s24, 1
      %p173 = por %p171, %p172
      %p175 = scmp.ne.s32.totalorder %s160, %s174
      %p176 = scmp.eq.s32.totalorder %s24, 0
      %p177 = por %p175, %p176
      %s178 = ssub.s32 %s18, %s25
      %p179 = scmp.eq.s32.totalorder %s178, 0
      %s181 = sadd.s32 %s180, 1
      %s182 = scalar_select %p179, %s180, %s181
      %p185 = pneg %p179
      %p186 = scmp.eq.s32.totalorder %s18, 1
      %p187 = por %p185, %p186
      %p188 = scmp.ne.s32.totalorder %s180, %s183
      %p189 = scmp.eq.s32.totalorder %s18, 0
      %p190 = por %p188, %p189
      %p191 = scmp.ne.s32.totalorder %s180, %s183
      %p192 = scmp.eq.s32.totalorder %s23, 1
      %p193 = por %p191, %p192
      %p194 = scmp.ne.s32.totalorder %s183, %s184
      %p195 = scmp.eq.s32.totalorder %s23, 0
      %p196 = por %p194, %p195
      %p197 = scmp.ne.s32.totalorder %s183, %s184
      %p198 = scmp.eq.s32.totalorder %s24, 1
      %p199 = por %p197, %p198
      %p201 = scmp.ne.s32.totalorder %s184, %s200
      %p202 = scmp.eq.s32.totalorder %s24, 0
      %p203 = por %p201, %p202
      %p204 = scmp.le.s32.totalorder 1, %s18
      %p205 = scmp.lt.s32.totalorder %s18, 3
      %p206 = pnand %p204, %p205
      %p207 = pneg %p206
      // Predicated region
      $region9: #{tpu_custom_call.1} parent=5 // pred_check
        _
      $region10: #{tpu_custom_call.1} parent=5 // pred_check_branch
        %209 = sbr.rel (%p206) target = $region12
      $region11: #{tpu_custom_call.1} parent=5 // pred_region
        %s210 = ssub.s32 %s18, 1
        // Predicated region
        $region13: #{tpu_custom_call.1} parent=11 // pred_check
          %p211 = pneg %p65
        $region14: #{tpu_custom_call.1} parent=11 // pred_check_branch
          %213 = sbr.rel (%p211) target = $region16
        $region15: #{tpu_custom_call.1} parent=11 // pred_region
          %s215 = ssub.s32 4096, 4096
          %216 = vsyncadd [#allocation5], %s215
          %s217 = sshll.u32 [#allocation4], 4
          %s218 = int_to_ptr.vmem [resolvable:$true] %s217
          %223 = dma.hbm_to_vmem [thread:$0]  %s1, 4096, %s218, [#allocation5], 128, 128, 8
        $region16: #{tpu_custom_call.1} parent=11 // pred_fallthru
          _
        // Predicated region
        $region17: #{tpu_custom_call.1} parent=11 // pred_check
          %p224 = pneg %p86
        $region18: #{tpu_custom_call.1} parent=11 // pred_check_branch
          %226 = sbr.rel (%p224) target = $region20
        $region19: #{tpu_custom_call.1} parent=11 // pred_region
          %s228 = ssub.s32 32768, 32768
          %229 = vsyncadd [#allocation5], %s228
          %s230 = sshll.u32 [#allocation6], 4
          %s231 = int_to_ptr.vmem [resolvable:$true] %s230
          %236 = dma.hbm_to_vmem [thread:$0]  %s2, 32768, %s231, [#allocation5], 1024, 1024, 64
        $region20: #{tpu_custom_call.1} parent=11 // pred_fallthru
          _
        // Predicated region
        $region21: #{tpu_custom_call.1} parent=11 // pred_check
          %p237 = pneg %p107
        $region22: #{tpu_custom_call.1} parent=11 // pred_check_branch
          %239 = sbr.rel (%p237) target = $region24
        $region23: #{tpu_custom_call.1} parent=11 // pred_region
          _
        $region24: #{tpu_custom_call.1} parent=11 // pred_fallthru
          _
        // Predicated region
        $region25: #{tpu_custom_call.1} parent=11 // pred_check
          %p240 = pneg %p128
        $region26: #{tpu_custom_call.1} parent=11 // pred_check_branch
          %242 = sbr.rel (%p240) target = $region28
        $region27: #{tpu_custom_call.1} parent=11 // pred_region
          %s244 = ssub.s32 131072, 131072
          %245 = vsyncadd [#allocation8], %s244
          %s246 = sshll.u32 [#allocation7], 4
          %s247 = int_to_ptr.vmem [resolvable:$true] %s246
          %252 = dma.hbm_to_vmem [thread:$0]  %s4, 131072, %s247, [#allocation8], 512, 512, 32
        $region28: #{tpu_custom_call.1} parent=11 // pred_fallthru
          _
        // Predicated region
        $region29: #{tpu_custom_call.1} parent=11 // pred_check
          %p253 = pneg %p149
        $region30: #{tpu_custom_call.1} parent=11 // pred_check_branch
          %255 = sbr.rel (%p253) target = $region32
        $region31: #{tpu_custom_call.1} parent=11 // pred_region
          %s257 = ssub.s32 64, 64
          %258 = vsyncadd [#allocation8], %s257
          %s260 = sshll.u32 [#allocation9], 4
          %s261 = int_to_ptr.vmem [resolvable:$true] %s260
          %263 = dma.hbm_to_vmem [thread:$0]  %s5, 64, %s261, [#allocation8]
        $region32: #{tpu_custom_call.1} parent=11 // pred_fallthru
          _
        // Predicated region
        $region33: #{tpu_custom_call.1} parent=11 // pred_check
          %p264 = pneg %p170
        $region34: #{tpu_custom_call.1} parent=11 // pred_check_branch
          %266 = sbr.rel (%p264) target = $region36
        $region35: #{tpu_custom_call.1} parent=11 // pred_region
          _
        $region36: #{tpu_custom_call.1} parent=11 // pred_fallthru
          _
      $region12: #{tpu_custom_call.1} parent=5 // pred_fallthru
        _
      %p267 = scmp.lt.s32.totalorder %s18, 2
      // Predicated region
      $region37: #{tpu_custom_call.1} parent=5 // pred_check
        %p268 = pneg %p267
      $region38: #{tpu_custom_call.1} parent=5 // pred_check_branch
        %270 = sbr.rel (%p268) target = $region40
      $region39: #{tpu_custom_call.1} parent=5 // pred_region
        // Predicated region
        $region41: #{tpu_custom_call.1} parent=39 // pred_check
          %p271 = pneg %p38
        $region42: #{tpu_custom_call.1} parent=39 // pred_check_branch
          %273 = sbr.rel (%p271) target = $region44
        $region43: #{tpu_custom_call.1} parent=39 // pred_region
          %s274 = sand.u32 %s28, 1
          %s275 = scalar_lea.sflag [#allocation3], %s274
          %s276 = sand.u32 %s28, 1
          %s277 = smul.addr %s276, 256
          %s278 = scalar_lea.vmem [#allocation2], %s277
          %s279 = smul.u32 16, %s18
          %s281 = ssub.s32 4096, 4096
          %282 = vsyncadd %s275, %s281
          %s283 = smul.addr %s279, 2
          %s284 = smul.addr %s283, 128
          %s285 = scalar_lea.hbm %s0, %s284
          %s286 = sshll.u32 %s278, 4
          %s287 = int_to_ptr.vmem [resolvable:$true] %s286
          %292 = dma.hbm_to_vmem [thread:$0]  %s285, 4096, %s287, %s275, 256, 256, 16
        $region44: #{tpu_custom_call.1} parent=39 // pred_fallthru
          _
      $region40: #{tpu_custom_call.1} parent=5 // pred_fallthru
        _
      %p293 = scmp.le.s32.totalorder 1, %s18
      %p294 = scmp.lt.s32.totalorder %s18, 3
      %p295 = pnand %p293, %p294
      %p296 = pneg %p295
      // Predicated region
      $region45: #{tpu_custom_call.1} parent=5 // pred_check
        _
      $region46: #{tpu_custom_call.1} parent=5 // pred_check_branch
        %298 = sbr.rel (%p295) target = $region48
      $region47: #{tpu_custom_call.1} parent=5 // pred_region
        %s299 = ssub.s32 %s18, 1
        %s300 = sand.u32 %s31, 1
        %s301 = scalar_lea.sflag [#allocation3], %s300
        %s302 = sand.u32 %s31, 1
        %s303 = smul.addr %s302, 256
        %s304 = scalar_lea.vmem [#allocation2], %s303
        // Predicated region
        $region49: #{tpu_custom_call.1} parent=47 // pred_check
          %p305 = pneg %p44
        $region50: #{tpu_custom_call.1} parent=47 // pred_check_branch
          %307 = sbr.rel (%p305) target = $region52
        $region51: #{tpu_custom_call.1} parent=47 // pred_region
          %308 = dma.done %s301, 4096
        $region52: #{tpu_custom_call.1} parent=47 // pred_fallthru
          _
        // Predicated region
        $region53: #{tpu_custom_call.1} parent=47 // pred_check
          %p309 = pneg %p65
        $region54: #{tpu_custom_call.1} parent=47 // pred_check_branch
          %311 = sbr.rel (%p309) target = $region56
        $region55: #{tpu_custom_call.1} parent=47 // pred_region
          %312 = dma.done [#allocation5], 4096
        $region56: #{tpu_custom_call.1} parent=47 // pred_fallthru
          _
        // Predicated region
        $region57: #{tpu_custom_call.1} parent=47 // pred_check
          %p313 = pneg %p86
        $region58: #{tpu_custom_call.1} parent=47 // pred_check_branch
          %315 = sbr.rel (%p313) target = $region60
        $region59: #{tpu_custom_call.1} parent=47 // pred_region
          %316 = dma.done [#allocation5], 32768
        $region60: #{tpu_custom_call.1} parent=47 // pred_fallthru
          _
        // Predicated region
        $region61: #{tpu_custom_call.1} parent=47 // pred_check
          %p317 = pneg %p128
        $region62: #{tpu_custom_call.1} parent=47 // pred_check_branch
          %319 = sbr.rel (%p317) target = $region64
        $region63: #{tpu_custom_call.1} parent=47 // pred_region
          %320 = dma.done [#allocation8], 131072
        $region64: #{tpu_custom_call.1} parent=47 // pred_fallthru
          _
        // Predicated region
        $region65: #{tpu_custom_call.1} parent=47 // pred_check
          %p321 = pneg %p149
        $region66: #{tpu_custom_call.1} parent=47 // pred_check_branch
          %323 = sbr.rel (%p321) target = $region68
        $region67: #{tpu_custom_call.1} parent=47 // pred_region
          %324 = dma.done [#allocation8], 64
        $region68: #{tpu_custom_call.1} parent=47 // pred_fallthru
          _
        %s325 = sand.u32 %s31, 1
        %s326 = scalar_lea.sflag [#allocation3], %s325
        %s327 = sand.u32 %s31, 1
        %s328 = smul.addr %s327, 256
        %s329 = scalar_lea.vmem [#allocation2], %s328
        %p330 = pneg %p44
        %p331 = pneg %p41
        %p332 = pneg %p65
        %p333 = pneg %p62
        %p334 = pneg %p86
        %p335 = pneg %p83
        %p336 = pneg %p107
        %p337 = pneg %p104
        %p338 = pneg %p128
        %p339 = pneg %p125
        %p340 = pneg %p149
        %p341 = pneg %p146
        %p342 = pneg %p170
        %p343 = pneg %p167
        %p344 = pneg %p196
        %p345 = pneg %p193
        %p346 = scmp.lt.s32.totalorder %s23, 1
        %s347 = scalar_select %p346, %s23, 1
        %s348 = smul.addr %s347, 2
        %s349 = smul.addr %s348, 8
        %s350 = scalar_lea.vmem %s7, %s349
        %s351 = smul.u32 16, %s23
        %p352 = scmp.lt.s32.totalorder %s23, 1
        %s353 = scalar_select %p352, %s23, 1
        %s354 = smul.addr %s353, 2
        %s355 = smul.addr %s354, 8
        %s356 = scalar_lea.vmem %s7, %s355
        %v357 = vld [vmem:[%s304] sm:$0xff]
        %v358 = vld [vmem:[%s304 + $0x8] sm:$0xff]
        %v359 = vld [vmem:[%s304 + $0x10] sm:$0xff]
        %v360 = vld [vmem:[%s304 + $0x18] sm:$0xff]
        %v361 = vld [vmem:[%s304 + $0x20] sm:$0xff]
        %v362 = vld [vmem:[%s304 + $0x28] sm:$0xff]
        %v363 = vld [vmem:[%s304 + $0x30] sm:$0xff]
        %v364 = vld [vmem:[%s304 + $0x38] sm:$0xff]
        %v365 = vld [vmem:[%s304 + $0x40] sm:$0xff]
        %v366 = vld [vmem:[%s304 + $0x48] sm:$0xff]
        %v367 = vld [vmem:[%s304 + $0x50] sm:$0xff]
        %v368 = vld [vmem:[%s304 + $0x58] sm:$0xff]
        %v369 = vld [vmem:[%s304 + $0x60] sm:$0xff]
        %v370 = vld [vmem:[%s304 + $0x68] sm:$0xff]
        %v371 = vld [vmem:[%s304 + $0x70] sm:$0xff]
        %v372 = vld [vmem:[%s304 + $0x78] sm:$0xff]
        %v373 = vld [vmem:[%s304 + $0x80] sm:$0xff]
        %v374 = vld [vmem:[%s304 + $0x88] sm:$0xff]
        %v375 = vld [vmem:[%s304 + $0x90] sm:$0xff]
        %v376 = vld [vmem:[%s304 + $0x98] sm:$0xff]
        %v377 = vld [vmem:[%s304 + $0xa0] sm:$0xff]
        %v378 = vld [vmem:[%s304 + $0xa8] sm:$0xff]
        %v379 = vld [vmem:[%s304 + $0xb0] sm:$0xff]
        %v380 = vld [vmem:[%s304 + $0xb8] sm:$0xff]
        %v381 = vld [vmem:[%s304 + $0xc0] sm:$0xff]
        %v382 = vld [vmem:[%s304 + $0xc8] sm:$0xff]
        %v383 = vld [vmem:[%s304 + $0xd0] sm:$0xff]
        %v384 = vld [vmem:[%s304 + $0xd8] sm:$0xff]
        %v385 = vld [vmem:[%s304 + $0xe0] sm:$0xff]
        %v386 = vld [vmem:[%s304 + $0xe8] sm:$0xff]
        %v387 = vld [vmem:[%s304 + $0xf0] sm:$0xff]
        %v388 = vld [vmem:[%s304 + $0xf8] sm:$0xff]
        %v389 = vld [vmem:[#allocation4] sm:$0xff]
        %v390 = vld [vmem:[#allocation4 + $0x8] sm:$0xff]
        %v391 = vld [vmem:[#allocation4 + $0x10] sm:$0xff]
        %v392 = vld [vmem:[#allocation4 + $0x18] sm:$0xff]
        %v393 = vld [vmem:[#allocation4 + $0x20] sm:$0xff]
        %v394 = vld [vmem:[#allocation4 + $0x28] sm:$0xff]
        %v395 = vld [vmem:[#allocation4 + $0x30] sm:$0xff]
        %v396 = vld [vmem:[#allocation4 + $0x38] sm:$0xff]
        %v397 = vld [vmem:[#allocation4 + $0x40] sm:$0xff]
        %v398 = vld [vmem:[#allocation4 + $0x48] sm:$0xff]
        %v399 = vld [vmem:[#allocation4 + $0x50] sm:$0xff]
        %v400 = vld [vmem:[#allocation4 + $0x58] sm:$0xff]
        %v401 = vld [vmem:[#allocation4 + $0x60] sm:$0xff]
        %v402 = vld [vmem:[#allocation4 + $0x68] sm:$0xff]
        %v403 = vld [vmem:[#allocation4 + $0x70] sm:$0xff]
        %v404 = vld [vmem:[#allocation4 + $0x78] sm:$0xff]
        %v405 = vld [vmem:[#allocation4 + $0x80] sm:$0xff]
        %v406 = vld [vmem:[#allocation4 + $0x88] sm:$0xff]
        %v407 = vld [vmem:[#allocation4 + $0x90] sm:$0xff]
        %v408 = vld [vmem:[#allocation4 + $0x98] sm:$0xff]
        %v409 = vld [vmem:[#allocation4 + $0xa0] sm:$0xff]
        %v410 = vld [vmem:[#allocation4 + $0xa8] sm:$0xff]
        %v411 = vld [vmem:[#allocation4 + $0xb0] sm:$0xff]
        %v412 = vld [vmem:[#allocation4 + $0xb8] sm:$0xff]
        %v413 = vld [vmem:[#allocation4 + $0xc0] sm:$0xff]
        %v414 = vld [vmem:[#allocation4 + $0xc8] sm:$0xff]
        %v415 = vld [vmem:[#allocation4 + $0xd0] sm:$0xff]
        %v416 = vld [vmem:[#allocation4 + $0xd8] sm:$0xff]
        %v417 = vld [vmem:[#allocation4 + $0xe0] sm:$0xff]
        %v418 = vld [vmem:[#allocation4 + $0xe8] sm:$0xff]
        %v419 = vld [vmem:[#allocation4 + $0xf0] sm:$0xff]
        %v420 = vld [vmem:[#allocation4 + $0xf8] sm:$0xff]
        %421 = vmatprep.subr.mxu0 %v358
        %422 = vmatpush1.msra.mxu0 %v357
        %423 = vmatprep.subr.mxu0 %v360
        %424 = vmatpush1.msra.mxu0 %v359
        %425 = vmatprep.subr.mxu0 %v362
        %426 = vmatpush1.msra.mxu0 %v361
        %427 = vmatprep.subr.mxu0 %v364
        %428 = vmatpush1.msra.mxu0 %v363
        %429 = vmatprep.subr.mxu0 %v366
        %430 = vmatpush1.msra.mxu0 %v365
        %431 = vmatprep.subr.mxu0 %v368
        %432 = vmatpush1.msra.mxu0 %v367
        %433 = vmatprep.subr.mxu0 %v370
        %434 = vmatpush1.msra.mxu0 %v369
        %435 = vmatprep.subr.mxu0 %v372
        %436 = vmatpush1.msra.mxu0 %v371
        %437 = vmatprep.subr.mxu0 %v374
        %438 = vmatpush1.msra.mxu0 %v373
        %439 = vmatprep.subr.mxu0 %v376
        %440 = vmatpush1.msra.mxu0 %v375
        %441 = vmatprep.subr.mxu0 %v378
        %442 = vmatpush1.msra.mxu0 %v377
        %443 = vmatprep.subr.mxu0 %v380
        %444 = vmatpush1.msra.mxu0 %v379
        %445 = vmatprep.subr.mxu0 %v382
        %446 = vmatpush1.msra.mxu0 %v381
        %447 = vmatprep.subr.mxu0 %v384
        %448 = vmatpush1.msra.mxu0 %v383
        %449 = vmatprep.subr.mxu0 %v386
        %450 = vmatpush1.msra.mxu0 %v385
        %451 = vmatprep.subr.mxu0 %v388
        %452 = vmatpush1.msra.mxu0 %v387
        %453 = vmatprep.subr.mxu0 0.0
        %454 = vmatpush1.msra.mxu0 0.0
        %455 = vmatprep.subr.mxu0 0.0
        %456 = vmatpush1.msra.mxu0 0.0
        %457 = vmatprep.subr.mxu0 0.0
        %458 = vmatpush1.msra.mxu0 0.0
        %459 = vmatprep.subr.mxu0 0.0
        %460 = vmatpush1.msra.mxu0 0.0
        %461 = vmatprep.subr.mxu0 0.0
        %462 = vmatpush1.msra.mxu0 0.0
        %463 = vmatprep.subr.mxu0 0.0
        %464 = vmatpush1.msra.mxu0 0.0
        %465 = vmatprep.subr.mxu0 0.0
        %466 = vmatpush1.msra.mxu0 0.0
        %467 = vmatprep.subr.mxu0 0.0
        %468 = vmatpush1.msra.mxu0 0.0
        %469 = vmatprep.subr.mxu0 0.0
        %470 = vmatpush1.msra.mxu0 0.0
        %471 = vmatprep.subr.mxu0 0.0
        %472 = vmatpush1.msra.mxu0 0.0
        %473 = vmatprep.subr.mxu0 0.0
        %474 = vmatpush1.msra.mxu0 0.0
        %475 = vmatprep.subr.mxu0 0.0
        %476 = vmatpush1.msra.mxu0 0.0
        %477 = vmatprep.subr.mxu0 0.0
        %478 = vmatpush1.msra.mxu0 0.0
        %479 = vmatprep.subr.mxu0 0.0
        %480 = vmatpush1.msra.mxu0 0.0
        %481 = vmatprep.subr.mxu0 0.0
        %482 = vmatpush1.msra.mxu0 0.0
        %483 = vmatprep.subr.mxu0 0.0
        %484 = vmatpush1.msra.mxu0 0.0
        %485 = vmatprep.mubr.f32.mxu0 0.0
        %486 = vmatmul.mubr.f32.gmra.mrb[0].mxu0 %v389
        %v487 = vpop.f32.mrb[0].mxu0
        %v488 = vadd.f32 0.0, %v487
        %v489 = vpop.f32.mrb[0].mxu0
        %v490 = vadd.f32 0.0, %v489
        %491 = vmatprep.mubr.f32.mxu0 0.0
        %492 = vmatmul.mubr.f32.gmra.mrb[0].mxu0 %v390
        %v493 = vpop.f32.mrb[0].mxu0
        %v494 = vadd.f32 0.0, %v493
        %v495 = vpop.f32.mrb[0].mxu0
        %v496 = vadd.f32 0.0, %v495
        %497 = vmatprep.mubr.f32.mxu0 0.0
        %498 = vmatmul.mubr.f32.gmra.mrb[0].mxu0 %v391
        %v499 = vpop.f32.mrb[0].mxu0
        %v500 = vadd.f32 0.0, %v499
        %v501 = vpop.f32.mrb[0].mxu0
        %v502 = vadd.f32 0.0, %v501
        %503 = vmatprep.mubr.f32.mxu0 0.0
        %504 = vmatmul.mubr.f32.gmra.mrb[0].mxu0 %v392
        %v505 = vpop.f32.mrb[0].mxu0
        %v506 = vadd.f32 0.0, %v505
        %v507 = vpop.f32.mrb[0].mxu0
        %v508 = vadd.f32 0.0, %v507
        %509 = vmatprep.mubr.f32.mxu0 0.0
        %510 = vmatmul.mubr.f32.gmra.mrb[0].mxu0 %v393
        %v511 = vpop.f32.mrb[0].mxu0
        %v512 = vadd.f32 0.0, %v511
        %v513 = vpop.f32.mrb[0].mxu0
        %v514 = vadd.f32 0.0, %v513
        %515 = vmatprep.mubr.f32.mxu0 0.0
        %516 = vmatmul.mubr.f32.gmra.mrb[0].mxu0 %v394
        %v517 = vpop.f32.mrb[0].mxu0
        %v518 = vadd.f32 0.0, %v517
        %v519 = vpop.f32.mrb[0].mxu0
        %v520 = vadd.f32 0.0, %v519
        %521 = vmatprep.mubr.f32.mxu0 0.0
        %522 = vmatmul.mubr.f32.gmra.mrb[0].mxu0 %v395
        %v523 = vpop.f32.mrb[0].mxu0
        %v524 = vadd.f32 0.0, %v523
        %v525 = vpop.f32.mrb[0].mxu0
        %v526 = vadd.f32 0.0, %v525
        %527 = vmatprep.mubr.f32.mxu0 0.0
        %528 = vmatmul.mubr.f32.gmra.mrb[0].mxu0 %v396
        %v529 = vpop.f32.mrb[0].mxu0
        %v530 = vadd.f32 0.0, %v529
        %v531 = vpop.f32.mrb[0].mxu0
        %v532 = vadd.f32 0.0, %v531
        %533 = vmatprep.mubr.f32.mxu0 0.0
        %534 = vmatmul.mubr.f32.gmra.mrb[0].mxu0 %v397
        %v535 = vpop.f32.mrb[0].mxu0
        %v536 = vadd.f32 0.0, %v535
        %v537 = vpop.f32.mrb[0].mxu0
        %v538 = vadd.f32 0.0, %v537
        %539 = vmatprep.mubr.f32.mxu0 0.0
        %540 = vmatmul.mubr.f32.gmra.mrb[0].mxu0 %v398
        %v541 = vpop.f32.mrb[0].mxu0
        %v542 = vadd.f32 0.0, %v541
        %v543 = vpop.f32.mrb[0].mxu0
        %v544 = vadd.f32 0.0, %v543
        %545 = vmatprep.mubr.f32.mxu0 0.0
        %546 = vmatmul.mubr.f32.gmra.mrb[0].mxu0 %v399
        %v547 = vpop.f32.mrb[0].mxu0
        %v548 = vadd.f32 0.0, %v547
        %v549 = vpop.f32.mrb[0].mxu0
        %v550 = vadd.f32 0.0, %v549
        %551 = vmatprep.mubr.f32.mxu0 0.0
        %552 = vmatmul.mubr.f32.gmra.mrb[0].mxu0 %v400
        %v553 = vpop.f32.mrb[0].mxu0
        %v554 = vadd.f32 0.0, %v553
        %v555 = vpop.f32.mrb[0].mxu0
        %v556 = vadd.f32 0.0, %v555
        %557 = vmatprep.mubr.f32.mxu0 0.0
        %558 = vmatmul.mubr.f32.gmra.mrb[0].mxu0 %v401
        %v559 = vpop.f32.mrb[0].mxu0
        %v560 = vadd.f32 0.0, %v559
        %v561 = vpop.f32.mrb[0].mxu0
        %v562 = vadd.f32 0.0, %v561
        %563 = vmatprep.mubr.f32.mxu0 0.0
        %564 = vmatmul.mubr.f32.gmra.mrb[0].mxu0 %v402
        %v565 = vpop.f32.mrb[0].mxu0
        %v566 = vadd.f32 0.0, %v565
        %v567 = vpop.f32.mrb[0].mxu0
        %v568 = vadd.f32 0.0, %v567
        %569 = vmatprep.mubr.f32.mxu0 0.0
        %570 = vmatmul.mubr.f32.gmra.mrb[0].mxu0 %v403
        %v571 = vpop.f32.mrb[0].mxu0
        %v572 = vadd.f32 0.0, %v571
        %v573 = vpop.f32.mrb[0].mxu0
        %v574 = vadd.f32 0.0, %v573
        %575 = vmatprep.mubr.f32.mxu0 0.0
        %576 = vmatmul.mubr.f32.gmra.mrb[0].mxu0 %v404
        %v577 = vpop.f32.mrb[0].mxu0
        %v578 = vadd.f32 0.0, %v577
        %v579 = vpop.f32.mrb[0].mxu0
        %v580 = vadd.f32 0.0, %v579
        %581 = vmatprep.mubr.f32.mxu0 0.0
        %582 = vmatmul.mubr.f32.gmra.mrb[0].mxu0 %v405
        %v583 = vpop.f32.mrb[0].mxu0
        %v584 = vadd.f32 0.0, %v583
        %v585 = vpop.f32.mrb[0].mxu0
        %v586 = vadd.f32 0.0, %v585
        %587 = vmatprep.mubr.f32.mxu0 0.0
        %588 = vmatmul.mubr.f32.gmra.mrb[0].mxu0 %v406
        %v589 = vpop.f32.mrb[0].mxu0
        %v590 = vadd.f32 0.0, %v589
        %v591 = vpop.f32.mrb[0].mxu0
        %v592 = vadd.f32 0.0, %v591
        %593 = vmatprep.mubr.f32.mxu0 0.0
        %594 = vmatmul.mubr.f32.gmra.mrb[0].mxu0 %v407
        %v595 = vpop.f32.mrb[0].mxu0
        %v596 = vadd.f32 0.0, %v595
        %v597 = vpop.f32.mrb[0].mxu0
        %v598 = vadd.f32 0.0, %v597
        %599 = vmatprep.mubr.f32.mxu0 0.0
        %600 = vmatmul.mubr.f32.gmra.mrb[0].mxu0 %v408
        %v601 = vpop.f32.mrb[0].mxu0
        %v602 = vadd.f32 0.0, %v601
        %v603 = vpop.f32.mrb[0].mxu0
        %v604 = vadd.f32 0.0, %v603
        %605 = vmatprep.mubr.f32.mxu0 0.0
        %606 = vmatmul.mubr.f32.gmra.mrb[0].mxu0 %v409
        %v607 = vpop.f32.mrb[0].mxu0
        %v608 = vadd.f32 0.0, %v607
        %v609 = vpop.f32.mrb[0].mxu0
        %v610 = vadd.f32 0.0, %v609
        %611 = vmatprep.mubr.f32.mxu0 0.0
        %612 = vmatmul.mubr.f32.gmra.mrb[0].mxu0 %v410
        %v613 = vpop.f32.mrb[0].mxu0
        %v614 = vadd.f32 0.0, %v613
        %v615 = vpop.f32.mrb[0].mxu0
        %v616 = vadd.f32 0.0, %v615
        %617 = vmatprep.mubr.f32.mxu0 0.0
        %618 = vmatmul.mubr.f32.gmra.mrb[0].mxu0 %v411
        %v619 = vpop.f32.mrb[0].mxu0
        %v620 = vadd.f32 0.0, %v619
        %v621 = vpop.f32.mrb[0].mxu0
        %v622 = vadd.f32 0.0, %v621
        %623 = vmatprep.mubr.f32.mxu0 0.0
        %624 = vmatmul.mubr.f32.gmra.mrb[0].mxu0 %v412
        %v625 = vpop.f32.mrb[0].mxu0
        %v626 = vadd.f32 0.0, %v625
        %v627 = vpop.f32.mrb[0].mxu0
        %v628 = vadd.f32 0.0, %v627
        %629 = vmatprep.mubr.f32.mxu0 0.0
        %630 = vmatmul.mubr.f32.gmra.mrb[0].mxu0 %v413
        %v631 = vpop.f32.mrb[0].mxu0
        %v632 = vadd.f32 0.0, %v631
        %v633 = vpop.f32.mrb[0].mxu0
        %v634 = vadd.f32 0.0, %v633
        %635 = vmatprep.mubr.f32.mxu0 0.0
        %636 = vmatmul.mubr.f32.gmra.mrb[0].mxu0 %v414
        %v637 = vpop.f32.mrb[0].mxu0
        %v638 = vadd.f32 0.0, %v637
        %v639 = vpop.f32.mrb[0].mxu0
        %v640 = vadd.f32 0.0, %v639
        %641 = vmatprep.mubr.f32.mxu0 0.0
        %642 = vmatmul.mubr.f32.gmra.mrb[0].mxu0 %v415
        %v643 = vpop.f32.mrb[0].mxu0
        %v644 = vadd.f32 0.0, %v643
        %v645 = vpop.f32.mrb[0].mxu0
        %v646 = vadd.f32 0.0, %v645
        %647 = vmatprep.mubr.f32.mxu0 0.0
        %648 = vmatmul.mubr.f32.gmra.mrb[0].mxu0 %v416
        %v649 = vpop.f32.mrb[0].mxu0
        %v650 = vadd.f32 0.0, %v649
        %v651 = vpop.f32.mrb[0].mxu0
        %v652 = vadd.f32 0.0, %v651
        %653 = vmatprep.mubr.f32.mxu0 0.0
        %654 = vmatmul.mubr.f32.gmra.mrb[0].mxu0 %v417
        %v655 = vpop.f32.mrb[0].mxu0
        %v656 = vadd.f32 0.0, %v655
        %v657 = vpop.f32.mrb[0].mxu0
        %v658 = vadd.f32 0.0, %v657
        %659 = vmatprep.mubr.f32.mxu0 0.0
        %660 = vmatmul.mubr.f32.gmra.mrb[0].mxu0 %v418
        %v661 = vpop.f32.mrb[0].mxu0
        %v662 = vadd.f32 0.0, %v661
        %v663 = vpop.f32.mrb[0].mxu0
        %v664 = vadd.f32 0.0, %v663
        %665 = vmatprep.mubr.f32.mxu0 0.0
        %666 = vmatmul.mubr.f32.gmra.mrb[0].mxu0 %v419
        %v667 = vpop.f32.mrb[0].mxu0
        %v668 = vadd.f32 0.0, %v667
        %v669 = vpop.f32.mrb[0].mxu0
        %v670 = vadd.f32 0.0, %v669
        %671 = vmatprep.mubr.f32.mxu0 0.0
        %672 = vmatmul.mubr.f32.gmra.mrb[0].mxu0 %v420
        %v673 = vpop.f32.mrb[0].mxu0
        %v674 = vadd.f32 0.0, %v673
        %v675 = vpop.f32.mrb[0].mxu0
        %v676 = vadd.f32 0.0, %v675
        %677 = vdwg.mxu0
        %v678 = vld [vmem:[#allocation6] sm:$0xff]
        %v679 = vld [vmem:[#allocation6 + $0x8] sm:$0xff]
        %v680 = vld [vmem:[#allocation6 + $0x10] sm:$0xff]
        %v681 = vld [vmem:[#allocation6 + $0x18] sm:$0xff]
        %v682 = vld [vmem:[#allocation6 + $0x20] sm:$0xff]
        %v683 = vld [vmem:[#allocation6 + $0x28] sm:$0xff]
        %v684 = vld [vmem:[#allocation6 + $0x30] sm:$0xff]
        %v685 = vld [vmem:[#allocation6 + $0x38] sm:$0xff]
        %v686 = vld [vmem:[#allocation6 + $0x40] sm:$0xff]
        %v687 = vld [vmem:[#allocation6 + $0x48] sm:$0xff]
        %v688 = vld [vmem:[#allocation6 + $0x50] sm:$0xff]
        %v689 = vld [vmem:[#allocation6 + $0x58] sm:$0xff]
        %v690 = vld [vmem:[#allocation6 + $0x60] sm:$0xff]
        %v691 = vld [vmem:[#allocation6 + $0x68] sm:$0xff]
        %v692 = vld [vmem:[#allocation6 + $0x70] sm:$0xff]
        %v693 = vld [vmem:[#allocation6 + $0x78] sm:$0xff]
        %v694 = vld [vmem:[#allocation6 + $0x80] sm:$0xff]
        %v695 = vld [vmem:[#allocation6 + $0x88] sm:$0xff]
        %v696 = vld [vmem:[#allocation6 + $0x90] sm:$0xff]
        %v697 = vld [vmem:[#allocation6 + $0x98] sm:$0xff]
        %v698 = vld [vmem:[#allocation6 + $0xa0] sm:$0xff]
        %v699 = vld [vmem:[#allocation6 + $0xa8] sm:$0xff]
        %v700 = vld [vmem:[#allocation6 + $0xb0] sm:$0xff]
        %v701 = vld [vmem:[#allocation6 + $0xb8] sm:$0xff]
        %v702 = vld [vmem:[#allocation6 + $0xc0] sm:$0xff]
        %v703 = vld [vmem:[#allocation6 + $0xc8] sm:$0xff]
        %v704 = vld [vmem:[#allocation6 + $0xd0] sm:$0xff]
        %v705 = vld [vmem:[#allocation6 + $0xd8] sm:$0xff]
        %v706 = vld [vmem:[#allocation6 + $0xe0] sm:$0xff]
        %v707 = vld [vmem:[#allocation6 + $0xe8] sm:$0xff]
        %v708 = vld [vmem:[#allocation6 + $0xf0] sm:$0xff]
        %v709 = vld [vmem:[#allocation6 + $0xf8] sm:$0xff]
        %v710 = vld [vmem:[#allocation6 + $0x100] sm:$0xff]
        %v711 = vld [vmem:[#allocation6 + $0x108] sm:$0xff]
        %v712 = vld [vmem:[#allocation6 + $0x110] sm:$0xff]
        %v713 = vld [vmem:[#allocation6 + $0x118] sm:$0xff]
        %v714 = vld [vmem:[#allocation6 + $0x120] sm:$0xff]
        %v715 = vld [vmem:[#allocation6 + $0x128] sm:$0xff]
        %v716 = vld [vmem:[#allocation6 + $0x130] sm:$0xff]
        %v717 = vld [vmem:[#allocation6 + $0x138] sm:$0xff]
        %v718 = vld [vmem:[#allocation6 + $0x140] sm:$0xff]
        %v719 = vld [vmem:[#allocation6 + $0x148] sm:$0xff]
        %v720 = vld [vmem:[#allocation6 + $0x150] sm:$0xff]
        %v721 = vld [vmem:[#allocation6 + $0x158] sm:$0xff]
        %v722 = vld [vmem:[#allocation6 + $0x160] sm:$0xff]
        %v723 = vld [vmem:[#allocation6 + $0x168] sm:$0xff]
        %v724 = vld [vmem:[#allocation6 + $0x170] sm:$0xff]
        %v725 = vld [vmem:[#allocation6 + $0x178] sm:$0xff]
        %v726 = vld [vmem:[#allocation6 + $0x180] sm:$0xff]
        %v727 = vld [vmem:[#allocation6 + $0x188] sm:$0xff]
        %v728 = vld [vmem:[#allocation6 + $0x190] sm:$0xff]
        %v729 = vld [vmem:[#allocation6 + $0x198] sm:$0xff]
        %v730 = vld [vmem:[#allocation6 + $0x1a0] sm:$0xff]
        %v731 = vld [vmem:[#allocation6 + $0x1a8] sm:$0xff]
        %v732 = vld [vmem:[#allocation6 + $0x1b0] sm:$0xff]
        %v733 = vld [vmem:[#allocation6 + $0x1b8] sm:$0xff]
        %v734 = vld [vmem:[#allocation6 + $0x1c0] sm:$0xff]
        %v735 = vld [vmem:[#allocation6 + $0x1c8] sm:$0xff]
        %v736 = vld [vmem:[#allocation6 + $0x1d0] sm:$0xff]
        %v737 = vld [vmem:[#allocation6 + $0x1d8] sm:$0xff]
        %v738 = vld [vmem:[#allocation6 + $0x1e0] sm:$0xff]
        %v739 = vld [vmem:[#allocation6 + $0x1e8] sm:$0xff]
        %v740 = vld [vmem:[#allocation6 + $0x1f0] sm:$0xff]
        %v741 = vld [vmem:[#allocation6 + $0x1f8] sm:$0xff]
        %v742 = vld [vmem:[#allocation6 + $0x200] sm:$0xff]
        %v743 = vld [vmem:[#allocation6 + $0x208] sm:$0xff]
        %v744 = vld [vmem:[#allocation6 + $0x210] sm:$0xff]
        %v745 = vld [vmem:[#allocation6 + $0x218] sm:$0xff]
        %v746 = vld [vmem:[#allocation6 + $0x220] sm:$0xff]
        %v747 = vld [vmem:[#allocation6 + $0x228] sm:$0xff]
        %v748 = vld [vmem:[#allocation6 + $0x230] sm:$0xff]
        %v749 = vld [vmem:[#allocation6 + $0x238] sm:$0xff]
        %v750 = vld [vmem:[#allocation6 + $0x240] sm:$0xff]
        %v751 = vld [vmem:[#allocation6 + $0x248] sm:$0xff]
        %v752 = vld [vmem:[#allocation6 + $0x250] sm:$0xff]
        %v753 = vld [vmem:[#allocation6 + $0x258] sm:$0xff]
        %v754 = vld [vmem:[#allocation6 + $0x260] sm:$0xff]
        %v755 = vld [vmem:[#allocation6 + $0x268] sm:$0xff]
        %v756 = vld [vmem:[#allocation6 + $0x270] sm:$0xff]
        %v757 = vld [vmem:[#allocation6 + $0x278] sm:$0xff]
        %v758 = vld [vmem:[#allocation6 + $0x280] sm:$0xff]
        %v759 = vld [vmem:[#allocation6 + $0x288] sm:$0xff]
        %v760 = vld [vmem:[#allocation6 + $0x290] sm:$0xff]
        %v761 = vld [vmem:[#allocation6 + $0x298] sm:$0xff]
        %v762 = vld [vmem:[#allocation6 + $0x2a0] sm:$0xff]
        %v763 = vld [vmem:[#allocation6 + $0x2a8] sm:$0xff]
        %v764 = vld [vmem:[#allocation6 + $0x2b0] sm:$0xff]
        %v765 = vld [vmem:[#allocation6 + $0x2b8] sm:$0xff]
        %v766 = vld [vmem:[#allocation6 + $0x2c0] sm:$0xff]
        %v767 = vld [vmem:[#allocation6 + $0x2c8] sm:$0xff]
        %v768 = vld [vmem:[#allocation6 + $0x2d0] sm:$0xff]
        %v769 = vld [vmem:[#allocation6 + $0x2d8] sm:$0xff]
        %v770 = vld [vmem:[#allocation6 + $0x2e0] sm:$0xff]
        %v771 = vld [vmem:[#allocation6 + $0x2e8] sm:$0xff]
        %v772 = vld [vmem:[#allocation6 + $0x2f0] sm:$0xff]
        %v773 = vld [vmem:[#allocation6 + $0x2f8] sm:$0xff]
        %v774 = vld [vmem:[#allocation6 + $0x300] sm:$0xff]
        %v775 = vld [vmem:[#allocation6 + $0x308] sm:$0xff]
        %v776 = vld [vmem:[#allocation6 + $0x310] sm:$0xff]
        %v777 = vld [vmem:[#allocation6 + $0x318] sm:$0xff]
        %v778 = vld [vmem:[#allocation6 + $0x320] sm:$0xff]
        %v779 = vld [vmem:[#allocation6 + $0x328] sm:$0xff]
        %v780 = vld [vmem:[#allocation6 + $0x330] sm:$0xff]
        %v781 = vld [vmem:[#allocation6 + $0x338] sm:$0xff]
        %v782 = vld [vmem:[#allocation6 + $0x340] sm:$0xff]
        %v783 = vld [vmem:[#allocation6 + $0x348] sm:$0xff]
        %v784 = vld [vmem:[#allocation6 + $0x350] sm:$0xff]
        %v785 = vld [vmem:[#allocation6 + $0x358] sm:$0xff]
        %v786 = vld [vmem:[#allocation6 + $0x360] sm:$0xff]
        %v787 = vld [vmem:[#allocation6 + $0x368] sm:$0xff]
        %v788 = vld [vmem:[#allocation6 + $0x370] sm:$0xff]
        %v789 = vld [vmem:[#allocation6 + $0x378] sm:$0xff]
        %v790 = vld [vmem:[#allocation6 + $0x380] sm:$0xff]
        %v791 = vld [vmem:[#allocation6 + $0x388] sm:$0xff]
        %v792 = vld [vmem:[#allocation6 + $0x390] sm:$0xff]
        %v793 = vld [vmem:[#allocation6 + $0x398] sm:$0xff]
        %v794 = vld [vmem:[#allocation6 + $0x3a0] sm:$0xff]
        %v795 = vld [vmem:[#allocation6 + $0x3a8] sm:$0xff]
        %v796 = vld [vmem:[#allocation6 + $0x3b0] sm:$0xff]
        %v797 = vld [vmem:[#allocation6 + $0x3b8] sm:$0xff]
        %v798 = vld [vmem:[#allocation6 + $0x3c0] sm:$0xff]
        %v799 = vld [vmem:[#allocation6 + $0x3c8] sm:$0xff]
        %v800 = vld [vmem:[#allocation6 + $0x3d0] sm:$0xff]
        %v801 = vld [vmem:[#allocation6 + $0x3d8] sm:$0xff]
        %v802 = vld [vmem:[#allocation6 + $0x3e0] sm:$0xff]
        %v803 = vld [vmem:[#allocation6 + $0x3e8] sm:$0xff]
        %v804 = vld [vmem:[#allocation6 + $0x3f0] sm:$0xff]
        %v805 = vld [vmem:[#allocation6 + $0x3f8] sm:$0xff]
        %v806 = vld [vmem:[#allocation6 + $0x400] sm:$0xff]
        %v807 = vld [vmem:[#allocation6 + $0x408] sm:$0xff]
        %v808 = vld [vmem:[#allocation6 + $0x410] sm:$0xff]
        %v809 = vld [vmem:[#allocation6 + $0x418] sm:$0xff]
        %v810 = vld [vmem:[#allocation6 + $0x420] sm:$0xff]
        %v811 = vld [vmem:[#allocation6 + $0x428] sm:$0xff]
        %v812 = vld [vmem:[#allocation6 + $0x430] sm:$0xff]
        %v813 = vld [vmem:[#allocation6 + $0x438] sm:$0xff]
        %v814 = vld [vmem:[#allocation6 + $0x440] sm:$0xff]
        %v815 = vld [vmem:[#allocation6 + $0x448] sm:$0xff]
        %v816 = vld [vmem:[#allocation6 + $0x450] sm:$0xff]
        %v817 = vld [vmem:[#allocation6 + $0x458] sm:$0xff]
        %v818 = vld [vmem:[#allocation6 + $0x460] sm:$0xff]
        %v819 = vld [vmem:[#allocation6 + $0x468] sm:$0xff]
        %v820 = vld [vmem:[#allocation6 + $0x470] sm:$0xff]
        %v821 = vld [vmem:[#allocation6 + $0x478] sm:$0xff]
        %v822 = vld [vmem:[#allocation6 + $0x480] sm:$0xff]
        %v823 = vld [vmem:[#allocation6 + $0x488] sm:$0xff]
        %v824 = vld [vmem:[#allocation6 + $0x490] sm:$0xff]
        %v825 = vld [vmem:[#allocation6 + $0x498] sm:$0xff]
        %v826 = vld [vmem:[#allocation6 + $0x4a0] sm:$0xff]
        %v827 = vld [vmem:[#allocation6 + $0x4a8] sm:$0xff]
        %v828 = vld [vmem:[#allocation6 + $0x4b0] sm:$0xff]
        %v829 = vld [vmem:[#allocation6 + $0x4b8] sm:$0xff]
        %v830 = vld [vmem:[#allocation6 + $0x4c0] sm:$0xff]
        %v831 = vld [vmem:[#allocation6 + $0x4c8] sm:$0xff]
        %v832 = vld [vmem:[#allocation6 + $0x4d0] sm:$0xff]
        %v833 = vld [vmem:[#allocation6 + $0x4d8] sm:$0xff]
        %v834 = vld [vmem:[#allocation6 + $0x4e0] sm:$0xff]
        %v835 = vld [vmem:[#allocation6 + $0x4e8] sm:$0xff]
        %v836 = vld [vmem:[#allocation6 + $0x4f0] sm:$0xff]
        %v837 = vld [vmem:[#allocation6 + $0x4f8] sm:$0xff]
        %v838 = vld [vmem:[#allocation6 + $0x500] sm:$0xff]
        %v839 = vld [vmem:[#allocation6 + $0x508] sm:$0xff]
        %v840 = vld [vmem:[#allocation6 + $0x510] sm:$0xff]
        %v841 = vld [vmem:[#allocation6 + $0x518] sm:$0xff]
        %v842 = vld [vmem:[#allocation6 + $0x520] sm:$0xff]
        %v843 = vld [vmem:[#allocation6 + $0x528] sm:$0xff]
        %v844 = vld [vmem:[#allocation6 + $0x530] sm:$0xff]
        %v845 = vld [vmem:[#allocation6 + $0x538] sm:$0xff]
        %v846 = vld [vmem:[#allocation6 + $0x540] sm:$0xff]
        %v847 = vld [vmem:[#allocation6 + $0x548] sm:$0xff]
        %v848 = vld [vmem:[#allocation6 + $0x550] sm:$0xff]
        %v849 = vld [vmem:[#allocation6 + $0x558] sm:$0xff]
        %v850 = vld [vmem:[#allocation6 + $0x560] sm:$0xff]
        %v851 = vld [vmem:[#allocation6 + $0x568] sm:$0xff]
        %v852 = vld [vmem:[#allocation6 + $0x570] sm:$0xff]
        %v853 = vld [vmem:[#allocation6 + $0x578] sm:$0xff]
        %v854 = vld [vmem:[#allocation6 + $0x580] sm:$0xff]
        %v855 = vld [vmem:[#allocation6 + $0x588] sm:$0xff]
        %v856 = vld [vmem:[#allocation6 + $0x590] sm:$0xff]
        %v857 = vld [vmem:[#allocation6 + $0x598] sm:$0xff]
        %v858 = vld [vmem:[#allocation6 + $0x5a0] sm:$0xff]
        %v859 = vld [vmem:[#allocation6 + $0x5a8] sm:$0xff]
        %v860 = vld [vmem:[#allocation6 + $0x5b0] sm:$0xff]
        %v861 = vld [vmem:[#allocation6 + $0x5b8] sm:$0xff]
        %v862 = vld [vmem:[#allocation6 + $0x5c0] sm:$0xff]
        %v863 = vld [vmem:[#allocation6 + $0x5c8] sm:$0xff]
        %v864 = vld [vmem:[#allocation6 + $0x5d0] sm:$0xff]
        %v865 = vld [vmem:[#allocation6 + $0x5d8] sm:$0xff]
        %v866 = vld [vmem:[#allocation6 + $0x5e0] sm:$0xff]
        %v867 = vld [vmem:[#allocation6 + $0x5e8] sm:$0xff]
        %v868 = vld [vmem:[#allocation6 + $0x5f0] sm:$0xff]
        %v869 = vld [vmem:[#allocation6 + $0x5f8] sm:$0xff]
        %v870 = vld [vmem:[#allocation6 + $0x600] sm:$0xff]
        %v871 = vld [vmem:[#allocation6 + $0x608] sm:$0xff]
        %v872 = vld [vmem:[#allocation6 + $0x610] sm:$0xff]
        %v873 = vld [vmem:[#allocation6 + $0x618] sm:$0xff]
        %v874 = vld [vmem:[#allocation6 + $0x620] sm:$0xff]
        %v875 = vld [vmem:[#allocation6 + $0x628] sm:$0xff]
        %v876 = vld [vmem:[#allocation6 + $0x630] sm:$0xff]
        %v877 = vld [vmem:[#allocation6 + $0x638] sm:$0xff]
        %v878 = vld [vmem:[#allocation6 + $0x640] sm:$0xff]
        %v879 = vld [vmem:[#allocation6 + $0x648] sm:$0xff]
        %v880 = vld [vmem:[#allocation6 + $0x650] sm:$0xff]
        %v881 = vld [vmem:[#allocation6 + $0x658] sm:$0xff]
        %v882 = vld [vmem:[#allocation6 + $0x660] sm:$0xff]
        %v883 = vld [vmem:[#allocation6 + $0x668] sm:$0xff]
        %v884 = vld [vmem:[#allocation6 + $0x670] sm:$0xff]
        %v885 = vld [vmem:[#allocation6 + $0x678] sm:$0xff]
        %v886 = vld [vmem:[#allocation6 + $0x680] sm:$0xff]
        %v887 = vld [vmem:[#allocation6 + $0x688] sm:$0xff]
        %v888 = vld [vmem:[#allocation6 + $0x690] sm:$0xff]
        %v889 = vld [vmem:[#allocation6 + $0x698] sm:$0xff]
        %v890 = vld [vmem:[#allocation6 + $0x6a0] sm:$0xff]
        %v891 = vld [vmem:[#allocation6 + $0x6a8] sm:$0xff]
        %v892 = vld [vmem:[#allocation6 + $0x6b0] sm:$0xff]
        %v893 = vld [vmem:[#allocation6 + $0x6b8] sm:$0xff]
        %v894 = vld [vmem:[#allocation6 + $0x6c0] sm:$0xff]
        %v895 = vld [vmem:[#allocation6 + $0x6c8] sm:$0xff]
        %v896 = vld [vmem:[#allocation6 + $0x6d0] sm:$0xff]
        %v897 = vld [vmem:[#allocation6 + $0x6d8] sm:$0xff]
        %v898 = vld [vmem:[#allocation6 + $0x6e0] sm:$0xff]
        %v899 = vld [vmem:[#allocation6 + $0x6e8] sm:$0xff]
        %v900 = vld [vmem:[#allocation6 + $0x6f0] sm:$0xff]
        %v901 = vld [vmem:[#allocation6 + $0x6f8] sm:$0xff]
        %v902 = vld [vmem:[#allocation6 + $0x700] sm:$0xff]
        %v903 = vld [vmem:[#allocation6 + $0x708] sm:$0xff]
        %v904 = vld [vmem:[#allocation6 + $0x710] sm:$0xff]
        %v905 = vld [vmem:[#allocation6 + $0x718] sm:$0xff]
        %v906 = vld [vmem:[#allocation6 + $0x720] sm:$0xff]
        %v907 = vld [vmem:[#allocation6 + $0x728] sm:$0xff]
        %v908 = vld [vmem:[#allocation6 + $0x730] sm:$0xff]
        %v909 = vld [vmem:[#allocation6 + $0x738] sm:$0xff]
        %v910 = vld [vmem:[#allocation6 + $0x740] sm:$0xff]
        %v911 = vld [vmem:[#allocation6 + $0x748] sm:$0xff]
        %v912 = vld [vmem:[#allocation6 + $0x750] sm:$0xff]
        %v913 = vld [vmem:[#allocation6 + $0x758] sm:$0xff]
        %v914 = vld [vmem:[#allocation6 + $0x760] sm:$0xff]
        %v915 = vld [vmem:[#allocation6 + $0x768] sm:$0xff]
        %v916 = vld [vmem:[#allocation6 + $0x770] sm:$0xff]
        %v917 = vld [vmem:[#allocation6 + $0x778] sm:$0xff]
        %v918 = vld [vmem:[#allocation6 + $0x780] sm:$0xff]
        %v919 = vld [vmem:[#allocation6 + $0x788] sm:$0xff]
        %v920 = vld [vmem:[#allocation6 + $0x790] sm:$0xff]
        %v921 = vld [vmem:[#allocation6 + $0x798] sm:$0xff]
        %v922 = vld [vmem:[#allocation6 + $0x7a0] sm:$0xff]
        %v923 = vld [vmem:[#allocation6 + $0x7a8] sm:$0xff]
        %v924 = vld [vmem:[#allocation6 + $0x7b0] sm:$0xff]
        %v925 = vld [vmem:[#allocation6 + $0x7b8] sm:$0xff]
        %v926 = vld [vmem:[#allocation6 + $0x7c0] sm:$0xff]
        %v927 = vld [vmem:[#allocation6 + $0x7c8] sm:$0xff]
        %v928 = vld [vmem:[#allocation6 + $0x7d0] sm:$0xff]
        %v929 = vld [vmem:[#allocation6 + $0x7d8] sm:$0xff]
        %v930 = vld [vmem:[#allocation6 + $0x7e0] sm:$0xff]
        %v931 = vld [vmem:[#allocation6 + $0x7e8] sm:$0xff]
        %v932 = vld [vmem:[#allocation6 + $0x7f0] sm:$0xff]
        %v933 = vld [vmem:[#allocation6 + $0x7f8] sm:$0xff]
        %934 = vmatprep.subr.mxu0 %v679
        %935 = vmatpush1.msra.mxu0 %v678
        %936 = vmatprep.subr.mxu0 %v687
        %937 = vmatpush1.msra.mxu0 %v686
        %938 = vmatprep.subr.mxu0 %v695
        %939 = vmatpush1.msra.mxu0 %v694
        %940 = vmatprep.subr.mxu0 %v703
        %941 = vmatpush1.msra.mxu0 %v702
        %942 = vmatprep.subr.mxu0 %v711
        %943 = vmatpush1.msra.mxu0 %v710
        %944 = vmatprep.subr.mxu0 %v719
        %945 = vmatpush1.msra.mxu0 %v718
        %946 = vmatprep.subr.mxu0 %v727
        %947 = vmatpush1.msra.mxu0 %v726
        %948 = vmatprep.subr.mxu0 %v735
        %949 = vmatpush1.msra.mxu0 %v734
        %950 = vmatprep.subr.mxu0 %v743
        %951 = vmatpush1.msra.mxu0 %v742
        %952 = vmatprep.subr.mxu0 %v751
        %953 = vmatpush1.msra.mxu0 %v750
        %954 = vmatprep.subr.mxu0 %v759
        %955 = vmatpush1.msra.mxu0 %v758
        %956 = vmatprep.subr.mxu0 %v767
        %957 = vmatpush1.msra.mxu0 %v766
        %958 = vmatprep.subr.mxu0 %v775
        %959 = vmatpush1.msra.mxu0 %v774
        %960 = vmatprep.subr.mxu0 %v783
        %961 = vmatpush1.msra.mxu0 %v782
        %962 = vmatprep.subr.mxu0 %v791
        %963 = vmatpush1.msra.mxu0 %v790
        %964 = vmatprep.subr.mxu0 %v799
        %965 = vmatpush1.msra.mxu0 %v798
        %966 = vmatprep.subr.mxu0 %v807
        %967 = vmatpush1.msra.mxu0 %v806
        %968 = vmatprep.subr.mxu0 %v815
        %969 = vmatpush1.msra.mxu0 %v814
        %970 = vmatprep.subr.mxu0 %v823
        %971 = vmatpush1.msra.mxu0 %v822
        %972 = vmatprep.subr.mxu0 %v831
        %973 = vmatpush1.msra.mxu0 %v830
        %974 = vmatprep.subr.mxu0 %v839
        %975 = vmatpush1.msra.mxu0 %v838
        %976 = vmatprep.subr.mxu0 %v847
        %977 = vmatpush1.msra.mxu0 %v846
        %978 = vmatprep.subr.mxu0 %v855
        %979 = vmatpush1.msra.mxu0 %v854
        %980 = vmatprep.subr.mxu0 %v863
        %981 = vmatpush1.msra.mxu0 %v862
        %982 = vmatprep.subr.mxu0 %v871
        %983 = vmatpush1.msra.mxu0 %v870
        %984 = vmatprep.subr.mxu0 %v879
        %985 = vmatpush1.msra.mxu0 %v878
        %986 = vmatprep.subr.mxu0 %v887
        %987 = vmatpush1.msra.mxu0 %v886
        %988 = vmatprep.subr.mxu0 %v895
        %989 = vmatpush1.msra.mxu0 %v894
        %990 = vmatprep.subr.mxu0 %v903
        %991 = vmatpush1.msra.mxu0 %v902
        %992 = vmatprep.subr.mxu0 %v911
        %993 = vmatpush1.msra.mxu0 %v910
        %994 = vmatprep.subr.mxu0 %v919
        %995 = vmatpush1.msra.mxu0 %v918
        %996 = vmatprep.subr.mxu0 %v927
        %997 = vmatpush1.msra.mxu0 %v926
        %998 = vmatprep.mubr.f32.mxu0 %v490
        %999 = vmatmul.mubr.f32.gmra.mrb[0].mxu0 %v488
        %v1000 = vpop.f32.mrb[0].mxu0
        %v1001 = vadd.f32 0.0, %v1000
        %v1002 = vpop.f32.mrb[0].mxu0
        %1003 = vmatprep.mubr.f32.mxu0 %v496
        %1004 = vmatmul.mubr.f32.gmra.mrb[0].mxu0 %v494
        %v1005 = vpop.f32.mrb[0].mxu0
        %v1006 = vadd.f32 0.0, %v1005
        %v1007 = vpop.f32.mrb[0].mxu0
        %1008 = vmatprep.mubr.f32.mxu0 %v502
        %1009 = vmatmul.mubr.f32.gmra.mrb[0].mxu0 %v500
        %v1010 = vpop.f32.mrb[0].mxu0
        %v1011 = vadd.f32 0.0, %v1010
        %v1012 = vpop.f32.mrb[0].mxu0
        %1013 = vmatprep.mubr.f32.mxu0 %v508
        %1014 = vmatmul.mubr.f32.gmra.mrb[0].mxu0 %v506
        %v1015 = vpop.f32.mrb[0].mxu0
        %v1016 = vadd.f32 0.0, %v1015
        %v1017 = vpop.f32.mrb[0].mxu0
        %1018 = vmatprep.mubr.f32.mxu0 %v514
        %1019 = vmatmul.mubr.f32.gmra.mrb[0].mxu0 %v512
        %v1020 = vpop.f32.mrb[0].mxu0
        %v1021 = vpop.f32.mrb[0].mxu0
        %v1022 = vadd.f32 0.0, %v1021
        %1023 = vmatprep.mubr.f32.mxu0 %v520
        %1024 = vmatmul.mubr.f32.gmra.mrb[0].mxu0 %v518
        %v1025 = vpop.f32.mrb[0].mxu0
        %v1026 = vpop.f32.mrb[0].mxu0
        %v1027 = vadd.f32 0.0, %v1026
        %1028 = vmatprep.mubr.f32.mxu0 %v526
        %1029 = vmatmul.mubr.f32.gmra.mrb[0].mxu0 %v524
        %v1030 = vpop.f32.mrb[0].mxu0
        %v1031 = vpop.f32.mrb[0].mxu0
        %v1032 = vadd.f32 0.0, %v1031
        %1033 = vmatprep.mubr.f32.mxu0 %v532
        %1034 = vmatmul.mubr.f32.gmra.mrb[0].mxu0 %v530
        %v1035 = vpop.f32.mrb[0].mxu0
        %v1036 = vpop.f32.mrb[0].mxu0
        %v1037 = vadd.f32 0.0, %v1036
        %1038 = vmatprep.mubr.f32.mxu0 %v538
        %1039 = vmatmul.mubr.f32.gmra.mrb[0].mxu0 %v536
        %v1040 = vpop.f32.mrb[0].mxu0
        %v1041 = vpop.f32.mrb[0].mxu0
        %1042 = vmatprep.mubr.f32.mxu0 %v544
        %1043 = vmatmul.mubr.f32.gmra.mrb[0].mxu0 %v542
        %v1044 = vpop.f32.mrb[0].mxu0
        %v1045 = vpop.f32.mrb[0].mxu0
        %1046 = vmatprep.mubr.f32.mxu0 %v550
        %1047 = vmatmul.mubr.f32.gmra.mrb[0].mxu0 %v548
        %v1048 = vpop.f32.mrb[0].mxu0
        %v1049 = vpop.f32.mrb[0].mxu0
        %1050 = vmatprep.mubr.f32.mxu0 %v556
        %1051 = vmatmul.mubr.f32.gmra.mrb[0].mxu0 %v554
        %v1052 = vpop.f32.mrb[0].mxu0
        %v1053 = vpop.f32.mrb[0].mxu0
        %1054 = vmatprep.mubr.f32.mxu0 %v562
        %1055 = vmatmul.mubr.f32.gmra.mrb[0].mxu0 %v560
        %v1056 = vpop.f32.mrb[0].mxu0
        %v1057 = vpop.f32.mrb[0].mxu0
        %1058 = vmatprep.mubr.f32.mxu0 %v568
        %1059 = vmatmul.mubr.f32.gmra.mrb[0].mxu0 %v566
        %v1060 = vpop.f32.mrb[0].mxu0
        %v1061 = vpop.f32.mrb[0].mxu0
        %1062 = vmatprep.mubr.f32.mxu0 %v574
        %1063 = vmatmul.mubr.f32.gmra.mrb[0].mxu0 %v572
        %v1064 = vpop.f32.mrb[0].mxu0
        %v1065 = vpop.f32.mrb[0].mxu0
        %1066 = vmatprep.mubr.f32.mxu0 %v580
        %1067 = vmatmul.mubr.f32.gmra.mrb[0].mxu0 %v578
        %v1068 = vpop.f32.mrb[0].mxu0
        %v1069 = vpop.f32.mrb[0].mxu0
        %1070 = vmatprep.mubr.f32.mxu0 %v586
        %1071 = vmatmul.mubr.f32.gmra.mrb[0].mxu0 %v584
        %v1072 = vpop.f32.mrb[0].mxu0
        %v1073 = vpop.f32.mrb[0].mxu0
        %1074 = vmatprep.mubr.f32.mxu0 %v592
        %1075 = vmatmul.mubr.f32.gmra.mrb[0].mxu0 %v590
        %v1076 = vpop.f32.mrb[0].mxu0
        %v1077 = vpop.f32.mrb[0].mxu0
        %1078 = vmatprep.mubr.f32.mxu0 %v598
        %1079 = vmatmul.mubr.f32.gmra.mrb[0].mxu0 %v596
        %v1080 = vpop.f32.mrb[0].mxu0
        %v1081 = vpop.f32.mrb[0].mxu0
        %1082 = vmatprep.mubr.f32.mxu0 %v604
        %1083 = vmatmul.mubr.f32.gmra.mrb[0].mxu0 %v602
        %v1084 = vpop.f32.mrb[0].mxu0
        %v1085 = vpop.f32.mrb[0].mxu0
        %1086 = vmatprep.mubr.f32.mxu0 %v610
        %1087 = vmatmul.mubr.f32.gmra.mrb[0].mxu0 %v608
        %v1088 = vpop.f32.mrb[0].mxu0
        %v1089 = vpop.f32.mrb[0].mxu0
        %1090 = vmatprep.mubr.f32.mxu0 %v616
        %1091 = vmatmul.mubr.f32.gmra.mrb[0].mxu0 %v614
        %v1092 = vpop.f32.mrb[0].mxu0
        %v1093 = vpop.f32.mrb[0].mxu0
        %1094 = vmatprep.mubr.f32.mxu0 %v622
        %1095 = vmatmul.mubr.f32.gmra.mrb[0].mxu0 %v620
        %v1096 = vpop.f32.mrb[0].mxu0
        %v1097 = vpop.f32.mrb[0].mxu0
        %1098 = vmatprep.mubr.f32.mxu0 %v628
        %1099 = vmatmul.mubr.f32.gmra.mrb[0].mxu0 %v626
        %v1100 = vpop.f32.mrb[0].mxu0
        %v1101 = vpop.f32.mrb[0].mxu0
        %1102 = vmatprep.mubr.f32.mxu0 %v634
        %1103 = vmatmul.mubr.f32.gmra.mrb[0].mxu0 %v632
        %v1104 = vpop.f32.mrb[0].mxu0
        %v1105 = vpop.f32.mrb[0].mxu0
        %1106 = vmatprep.mubr.f32.mxu0 %v640
        %1107 = vmatmul.mubr.f32.gmra.mrb[0].mxu0 %v638
        %v1108 = vpop.f32.mrb[0].mxu0
        %v1109 = vpop.f32.mrb[0].mxu0
        %1110 = vmatprep.mubr.f32.mxu0 %v646
        %1111 = vmatmul.mubr.f32.gmra.mrb[0].mxu0 %v644
        %v1112 = vpop.f32.mrb[0].mxu0
        %v1113 = vpop.f32.mrb[0].mxu0
        %1114 = vmatprep.mubr.f32.mxu0 %v652
        %1115 = vmatmul.mubr.f32.gmra.mrb[0].mxu0 %v650
        %v1116 = vpop.f32.mrb[0].mxu0
        %v1117 = vpop.f32.mrb[0].mxu0
        %1118 = vmatprep.mubr.f32.mxu0 %v658
        %1119 = vmatmul.mubr.f32.gmra.mrb[0].mxu0 %v656
        %v1120 = vpop.f32.mrb[0].mxu0
        %v1121 = vpop.f32.mrb[0].mxu0
        %1122 = vmatprep.mubr.f32.mxu0 %v664
        %1123 = vmatmul.mubr.f32.gmra.mrb[0].mxu0 %v662
        %v1124 = vpop.f32.mrb[0].mxu0
        %v1125 = vpop.f32.mrb[0].mxu0
        %1126 = vmatprep.mubr.f32.mxu0 %v670
        %1127 = vmatmul.mubr.f32.gmra.mrb[0].mxu0 %v668
        %v1128 = vpop.f32.mrb[0].mxu0
        %v1129 = vpop.f32.mrb[0].mxu0
        %1130 = vmatprep.mubr.f32.mxu0 %v676
        %1131 = vmatmul.mubr.f32.gmra.mrb[0].mxu0 %v674
        %v1132 = vpop.f32.mrb[0].mxu0
        %v1133 = vpop.f32.mrb[0].mxu0
        %1134 = vdwg.mxu0
        %1135 = vmatprep.subr.mxu0 %v681
        %1136 = vmatpush1.msra.mxu0 %v680
        %1137 = vmatprep.subr.mxu0 %v689
        %1138 = vmatpush1.msra.mxu0 %v688
        %1139 = vmatprep.subr.mxu0 %v697
        %1140 = vmatpush1.msra.mxu0 %v696
        %1141 = vmatprep.subr.mxu0 %v705
        %1142 = vmatpush1.msra.mxu0 %v704
        %1143 = vmatprep.subr.mxu0 %v713
        %1144 = vmatpush1.msra.mxu0 %v712
        %1145 = vmatprep.subr.mxu0 %v721
        %1146 = vmatpush1.msra.mxu0 %v720
        %1147 = vmatprep.subr.mxu0 %v729
        %1148 = vmatpush1.msra.mxu0 %v728
        %1149 = vmatprep.subr.mxu0 %v737
        %1150 = vmatpush1.msra.mxu0 %v736
        %1151 = vmatprep.subr.mxu0 %v745
        %1152 = vmatpush1.msra.mxu0 %v744
        %1153 = vmatprep.subr.mxu0 %v753
        %1154 = vmatpush1.msra.mxu0 %v752
        %1155 = vmatprep.subr.mxu0 %v761
        %1156 = vmatpush1.msra.mxu0 %v760
        %1157 = vmatprep.subr.mxu0 %v769
        %1158 = vmatpush1.msra.mxu0 %v768
        %1159 = vmatprep.subr.mxu0 %v777
        %1160 = vmatpush1.msra.mxu0 %v776
        %1161 = vmatprep.subr.mxu0 %v785
        %1162 = vmatpush1.msra.mxu0 %v784
        %1163 = vmatprep.subr.mxu0 %v793
        %1164 = vmatpush1.msra.mxu0 %v792
        %1165 = vmatprep.subr.mxu0 %v801
        %1166 = vmatpush1.msra.mxu0 %v800
        %1167 = vmatprep.subr.mxu0 %v809
        %1168 = vmatpush1.msra.mxu0 %v808
        %1169 = vmatprep.subr.mxu0 %v817
        %1170 = vmatpush1.msra.mxu0 %v816
        %1171 = vmatprep.subr.mxu0 %v825
        %1172 = vmatpush1.msra.mxu0 %v824
        %1173 = vmatprep.subr.mxu0 %v833
        %1174 = vmatpush1.msra.mxu0 %v832
        %1175 = vmatprep.subr.mxu0 %v841
        %1176 = vmatpush1.msra.mxu0 %v840
        %1177 = vmatprep.subr.mxu0 %v849
        %1178 = vmatpush1.msra.mxu0 %v848
        %1179 = vmatprep.subr.mxu0 %v857
        %1180 = vmatpush1.msra.mxu0 %v856
        %1181 = vmatprep.subr.mxu0 %v865
        %1182 = vmatpush1.msra.mxu0 %v864
        %1183 = vmatprep.subr.mxu0 %v873
        %1184 = vmatpush1.msra.mxu0 %v872
        %1185 = vmatprep.subr.mxu0 %v881
        %1186 = vmatpush1.msra.mxu0 %v880
        %1187 = vmatprep.subr.mxu0 %v889
        %1188 = vmatpush1.msra.mxu0 %v888
        %1189 = vmatprep.subr.mxu0 %v897
        %1190 = vmatpush1.msra.mxu0 %v896
        %1191 = vmatprep.subr.mxu0 %v905
        %1192 = vmatpush1.msra.mxu0 %v904
        %1193 = vmatprep.subr.mxu0 %v913
        %1194 = vmatpush1.msra.mxu0 %v912
        %1195 = vmatprep.subr.mxu0 %v921
        %1196 = vmatpush1.msra.mxu0 %v920
        %1197 = vmatprep.subr.mxu0 %v929
        %1198 = vmatpush1.msra.mxu0 %v928
        %1199 = vmatprep.mubr.f32.mxu0 %v490
        %1200 = vmatmul.mubr.f32.gmra.mrb[0].mxu0 %v488
        %v1201 = vpop.f32.mrb[0].mxu0
        %v1202 = vpop.f32.mrb[0].mxu0
        %1203 = vmatprep.mubr.f32.mxu0 %v496
        %1204 = vmatmul.mubr.f32.gmra.mrb[0].mxu0 %v494
        %v1205 = vpop.f32.mrb[0].mxu0
        %v1206 = vpop.f32.mrb[0].mxu0
        %1207 = vmatprep.mubr.f32.mxu0 %v502
        %1208 = vmatmul.mubr.f32.gmra.mrb[0].mxu0 %v500
        %v1209 = vpop.f32.mrb[0].mxu0
        %v1210 = vpop.f32.mrb[0].mxu0
        %1211 = vmatprep.mubr.f32.mxu0 %v508
        %1212 = vmatmul.mubr.f32.gmra.mrb[0].mxu0 %v506
        %v1213 = vpop.f32.mrb[0].mxu0
        %v1214 = vpop.f32.mrb[0].mxu0
        %1215 = vmatprep.mubr.f32.mxu0 %v514
        %1216 = vmatmul.mubr.f32.gmra.mrb[0].mxu0 %v512
        %v1217 = vpop.f32.mrb[0].mxu0
        %v1218 = vpop.f32.mrb[0].mxu0
        %1219 = vmatprep.mubr.f32.mxu0 %v520
        %1220 = vmatmul.mubr.f32.gmra.mrb[0].mxu0 %v518
        %v1221 = vpop.f32.mrb[0].mxu0
        %v1222 = vpop.f32.mrb[0].mxu0
        %1223 = vmatprep.mubr.f32.mxu0 %v526
        %1224 = vmatmul.mubr.f32.gmra.mrb[0].mxu0 %v524
        %v1225 = vpop.f32.mrb[0].mxu0
        %v1226 = vpop.f32.mrb[0].mxu0
        %1227 = vmatprep.mubr.f32.mxu0 %v532
        %1228 = vmatmul.mubr.f32.gmra.mrb[0].mxu0 %v530
        %v1229 = vpop.f32.mrb[0].mxu0
        %v1230 = vpop.f32.mrb[0].mxu0
        %1231 = vmatprep.mubr.f32.mxu0 %v538
        %1232 = vmatmul.mubr.f32.gmra.mrb[0].mxu0 %v536
        %v1233 = vpop.f32.mrb[0].mxu0
        %v1234 = vadd.f32 0.0, %v1233
        %v1235 = vpop.f32.mrb[0].mxu0
        %1236 = vmatprep.mubr.f32.mxu0 %v544
        %1237 = vmatmul.mubr.f32.gmra.mrb[0].mxu0 %v542
        %v1238 = vpop.f32.mrb[0].mxu0
        %v1239 = vadd.f32 0.0, %v1238
        %v1240 = vpop.f32.mrb[0].mxu0
        %1241 = vmatprep.mubr.f32.mxu0 %v550
        %1242 = vmatmul.mubr.f32.gmra.mrb[0].mxu0 %v548
        %v1243 = vpop.f32.mrb[0].mxu0
        %v1244 = vadd.f32 0.0, %v1243
        %v1245 = vpop.f32.mrb[0].mxu0
        %1246 = vmatprep.mubr.f32.mxu0 %v556
        %1247 = vmatmul.mubr.f32.gmra.mrb[0].mxu0 %v554
        %v1248 = vpop.f32.mrb[0].mxu0
        %v1249 = vadd.f32 0.0, %v1248
        %v1250 = vpop.f32.mrb[0].mxu0
        %1251 = vmatprep.mubr.f32.mxu0 %v562
        %1252 = vmatmul.mubr.f32.gmra.mrb[0].mxu0 %v560
        %v1253 = vpop.f32.mrb[0].mxu0
        %v1254 = vpop.f32.mrb[0].mxu0
        %v1255 = vadd.f32 0.0, %v1254
        %1256 = vmatprep.mubr.f32.mxu0 %v568
        %1257 = vmatmul.mubr.f32.gmra.mrb[0].mxu0 %v566
        %v1258 = vpop.f32.mrb[0].mxu0
        %v1259 = vpop.f32.mrb[0].mxu0
        %v1260 = vadd.f32 0.0, %v1259
        %1261 = vmatprep.mubr.f32.mxu0 %v574
        %1262 = vmatmul.mubr.f32.gmra.mrb[0].mxu0 %v572
        %v1263 = vpop.f32.mrb[0].mxu0
        %v1264 = vpop.f32.mrb[0].mxu0
        %v1265 = vadd.f32 0.0, %v1264
        %1266 = vmatprep.mubr.f32.mxu0 %v580
        %1267 = vmatmul.mubr.f32.gmra.mrb[0].mxu0 %v578
        %v1268 = vpop.f32.mrb[0].mxu0
        %v1269 = vpop.f32.mrb[0].mxu0
        %v1270 = vadd.f32 0.0, %v1269
        %1271 = vmatprep.mubr.f32.mxu0 %v586
        %1272 = vmatmul.mubr.f32.gmra.mrb[0].mxu0 %v584
        %v1273 = vpop.f32.mrb[0].mxu0
        %v1274 = vpop.f32.mrb[0].mxu0
        %1275 = vmatprep.mubr.f32.mxu0 %v592
        %1276 = vmatmul.mubr.f32.gmra.mrb[0].mxu0 %v590
        %v1277 = vpop.f32.mrb[0].mxu0
        %v1278 = vpop.f32.mrb[0].mxu0
        %1279 = vmatprep.mubr.f32.mxu0 %v598
        %1280 = vmatmul.mubr.f32.gmra.mrb[0].mxu0 %v596
        %v1281 = vpop.f32.mrb[0].mxu0
        %v1282 = vpop.f32.mrb[0].mxu0
        %1283 = vmatprep.mubr.f32.mxu0 %v604
        %1284 = vmatmul.mubr.f32.gmra.mrb[0].mxu0 %v602
        %v1285 = vpop.f32.mrb[0].mxu0
        %v1286 = vpop.f32.mrb[0].mxu0
        %1287 = vmatprep.mubr.f32.mxu0 %v610
        %1288 = vmatmul.mubr.f32.gmra.mrb[0].mxu0 %v608
        %v1289 = vpop.f32.mrb[0].mxu0
        %v1290 = vpop.f32.mrb[0].mxu0
        %1291 = vmatprep.mubr.f32.mxu0 %v616
        %1292 = vmatmul.mubr.f32.gmra.mrb[0].mxu0 %v614
        %v1293 = vpop.f32.mrb[0].mxu0
        %v1294 = vpop.f32.mrb[0].mxu0
        %1295 = vmatprep.mubr.f32.mxu0 %v622
        %1296 = vmatmul.mubr.f32.gmra.mrb[0].mxu0 %v620
        %v1297 = vpop.f32.mrb[0].mxu0
        %v1298 = vpop.f32.mrb[0].mxu0
        %1299 = vmatprep.mubr.f32.mxu0 %v628
        %1300 = vmatmul.mubr.f32.gmra.mrb[0].mxu0 %v626
        %v1301 = vpop.f32.mrb[0].mxu0
        %v1302 = vpop.f32.mrb[0].mxu0
        %1303 = vmatprep.mubr.f32.mxu0 %v634
        %1304 = vmatmul.mubr.f32.gmra.mrb[0].mxu0 %v632
        %v1305 = vpop.f32.mrb[0].mxu0
        %v1306 = vpop.f32.mrb[0].mxu0
        %1307 = vmatprep.mubr.f32.mxu0 %v640
        %1308 = vmatmul.mubr.f32.gmra.mrb[0].mxu0 %v638
        %v1309 = vpop.f32.mrb[0].mxu0
        %v1310 = vpop.f32.mrb[0].mxu0
        %1311 = vmatprep.mubr.f32.mxu0 %v646
        %1312 = vmatmul.mubr.f32.gmra.mrb[0].mxu0 %v644
        %v1313 = vpop.f32.mrb[0].mxu0
        %v1314 = vpop.f32.mrb[0].mxu0
        %1315 = vmatprep.mubr.f32.mxu0 %v652
        %1316 = vmatmul.mubr.f32.gmra.mrb[0].mxu0 %v650
        %v1317 = vpop.f32.mrb[0].mxu0
        %v1318 = vpop.f32.mrb[0].mxu0
        %1319 = vmatprep.mubr.f32.mxu0 %v658
        %1320 = vmatmul.mubr.f32.gmra.mrb[0].mxu0 %v656
        %v1321 = vpop.f32.mrb[0].mxu0
        %v1322 = vpop.f32.mrb[0].mxu0
        %1323 = vmatprep.mubr.f32.mxu0 %v664
        %1324 = vmatmul.mubr.f32.gmra.mrb[0].mxu0 %v662
        %v1325 = vpop.f32.mrb[0].mxu0
        %v1326 = vpop.f32.mrb[0].mxu0
        %1327 = vmatprep.mubr.f32.mxu0 %v670
        %1328 = vmatmul.mubr.f32.gmra.mrb[0].mxu0 %v668
        %v1329 = vpop.f32.mrb[0].mxu0
        %v1330 = vpop.f32.mrb[0].mxu0
        %1331 = vmatprep.mubr.f32.mxu0 %v676
        %1332 = vmatmul.mubr.f32.gmra.mrb[0].mxu0 %v674
        %v1333 = vpop.f32.mrb[0].mxu0
        %v1334 = vpop.f32.mrb[0].mxu0
        %1335 = vdwg.mxu0
        %1336 = vmatprep.subr.mxu0 %v683
        %1337 = vmatpush1.msra.mxu0 %v682
        %1338 = vmatprep.subr.mxu0 %v691
        %1339 = vmatpush1.msra.mxu0 %v690
        %1340 = vmatprep.subr.mxu0 %v699
        %1341 = vmatpush1.msra.mxu0 %v698
        %1342 = vmatprep.subr.mxu0 %v707
        %1343 = vmatpush1.msra.mxu0 %v706
        %1344 = vmatprep.subr.mxu0 %v715
        %1345 = vmatpush1.msra.mxu0 %v714
        %1346 = vmatprep.subr.mxu0 %v723
        %1347 = vmatpush1.msra.mxu0 %v722
        %1348 = vmatprep.subr.mxu0 %v731
        %1349 = vmatpush1.msra.mxu0 %v730
        %1350 = vmatprep.subr.mxu0 %v739
        %1351 = vmatpush1.msra.mxu0 %v738
        %1352 = vmatprep.subr.mxu0 %v747
        %1353 = vmatpush1.msra.mxu0 %v746
        %1354 = vmatprep.subr.mxu0 %v755
        %1355 = vmatpush1.msra.mxu0 %v754
        %1356 = vmatprep.subr.mxu0 %v763
        %1357 = vmatpush1.msra.mxu0 %v762
        %1358 = vmatprep.subr.mxu0 %v771
        %1359 = vmatpush1.msra.mxu0 %v770
        %1360 = vmatprep.subr.mxu0 %v779
        %1361 = vmatpush1.msra.mxu0 %v778
        %1362 = vmatprep.subr.mxu0 %v787
        %1363 = vmatpush1.msra.mxu0 %v786
        %1364 = vmatprep.subr.mxu0 %v795
        %1365 = vmatpush1.msra.mxu0 %v794
        %1366 = vmatprep.subr.mxu0 %v803
        %1367 = vmatpush1.msra.mxu0 %v802
        %1368 = vmatprep.subr.mxu0 %v811
        %1369 = vmatpush1.msra.mxu0 %v810
        %1370 = vmatprep.subr.mxu0 %v819
        %1371 = vmatpush1.msra.mxu0 %v818
        %1372 = vmatprep.subr.mxu0 %v827
        %1373 = vmatpush1.msra.mxu0 %v826
        %1374 = vmatprep.subr.mxu0 %v835
        %1375 = vmatpush1.msra.mxu0 %v834
        %1376 = vmatprep.subr.mxu0 %v843
        %1377 = vmatpush1.msra.mxu0 %v842
        %1378 = vmatprep.subr.mxu0 %v851
        %1379 = vmatpush1.msra.mxu0 %v850
        %1380 = vmatprep.subr.mxu0 %v859
        %1381 = vmatpush1.msra.mxu0 %v858
        %1382 = vmatprep.subr.mxu0 %v867
        %1383 = vmatpush1.msra.mxu0 %v866
        %1384 = vmatprep.subr.mxu0 %v875
        %1385 = vmatpush1.msra.mxu0 %v874
        %1386 = vmatprep.subr.mxu0 %v883
        %1387 = vmatpush1.msra.mxu0 %v882
        %1388 = vmatprep.subr.mxu0 %v891
        %1389 = vmatpush1.msra.mxu0 %v890
        %1390 = vmatprep.subr.mxu0 %v899
        %1391 = vmatpush1.msra.mxu0 %v898
        %1392 = vmatprep.subr.mxu0 %v907
        %1393 = vmatpush1.msra.mxu0 %v906
        %1394 = vmatprep.subr.mxu0 %v915
        %1395 = vmatpush1.msra.mxu0 %v914
        %1396 = vmatprep.subr.mxu0 %v923
        %1397 = vmatpush1.msra.mxu0 %v922
        %1398 = vmatprep.subr.mxu0 %v931
        %1399 = vmatpush1.msra.mxu0 %v930
        %1400 = vmatprep.mubr.f32.mxu0 %v490
        %1401 = vmatmul.mubr.f32.gmra.mrb[0].mxu0 %v488
        %v1402 = vpop.f32.mrb[0].mxu0
        %v1403 = vpop.f32.mrb[0].mxu0
        %1404 = vmatprep.mubr.f32.mxu0 %v496
        %1405 = vmatmul.mubr.f32.gmra.mrb[0].mxu0 %v494
        %v1406 = vpop.f32.mrb[0].mxu0
        %v1407 = vpop.f32.mrb[0].mxu0
        %1408 = vmatprep.mubr.f32.mxu0 %v502
        %1409 = vmatmul.mubr.f32.gmra.mrb[0].mxu0 %v500
        %v1410 = vpop.f32.mrb[0].mxu0
        %v1411 = vpop.f32.mrb[0].mxu0
        %1412 = vmatprep.mubr.f32.mxu0 %v508
        %1413 = vmatmul.mubr.f32.gmra.mrb[0].mxu0 %v506
        %v1414 = vpop.f32.mrb[0].mxu0
        %v1415 = vpop.f32.mrb[0].mxu0
        %1416 = vmatprep.mubr.f32.mxu0 %v514
        %1417 = vmatmul.mubr.f32.gmra.mrb[0].mxu0 %v512
        %v1418 = vpop.f32.mrb[0].mxu0
        %v1419 = vpop.f32.mrb[0].mxu0
        %1420 = vmatprep.mubr.f32.mxu0 %v520
        %1421 = vmatmul.mubr.f32.gmra.mrb[0].mxu0 %v518
        %v1422 = vpop.f32.mrb[0].mxu0
        %v1423 = vpop.f32.mrb[0].mxu0
        %1424 = vmatprep.mubr.f32.mxu0 %v526
        %1425 = vmatmul.mubr.f32.gmra.mrb[0].mxu0 %v524
        %v1426 = vpop.f32.mrb[0].mxu0
        %v1427 = vpop.f32.mrb[0].mxu0
        %1428 = vmatprep.mubr.f32.mxu0 %v532
        %1429 = vmatmul.mubr.f32.gmra.mrb[0].mxu0 %v530
        %v1430 = vpop.f32.mrb[0].mxu0
        %v1431 = vpop.f32.mrb[0].mxu0
        %1432 = vmatprep.mubr.f32.mxu0 %v538
        %1433 = vmatmul.mubr.f32.gmra.mrb[0].mxu0 %v536
        %v1434 = vpop.f32.mrb[0].mxu0
        %v1435 = vpop.f32.mrb[0].mxu0
        %1436 = vmatprep.mubr.f32.mxu0 %v544
        %1437 = vmatmul.mubr.f32.gmra.mrb[0].mxu0 %v542
        %v1438 = vpop.f32.mrb[0].mxu0
        %v1439 = vpop.f32.mrb[0].mxu0
        %1440 = vmatprep.mubr.f32.mxu0 %v550
        %1441 = vmatmul.mubr.f32.gmra.mrb[0].mxu0 %v548
        %v1442 = vpop.f32.mrb[0].mxu0
        %v1443 = vpop.f32.mrb[0].mxu0
        %1444 = vmatprep.mubr.f32.mxu0 %v556
        %1445 = vmatmul.mubr.f32.gmra.mrb[0].mxu0 %v554
        %v1446 = vpop.f32.mrb[0].mxu0
        %v1447 = vpop.f32.mrb[0].mxu0
        %1448 = vmatprep.mubr.f32.mxu0 %v562
        %1449 = vmatmul.mubr.f32.gmra.mrb[0].mxu0 %v560
        %v1450 = vpop.f32.mrb[0].mxu0
        %v1451 = vpop.f32.mrb[0].mxu0
        %1452 = vmatprep.mubr.f32.mxu0 %v568
        %1453 = vmatmul.mubr.f32.gmra.mrb[0].mxu0 %v566
        %v1454 = vpop.f32.mrb[0].mxu0
        %v1455 = vpop.f32.mrb[0].mxu0
        %1456 = vmatprep.mubr.f32.mxu0 %v574
        %1457 = vmatmul.mubr.f32.gmra.mrb[0].mxu0 %v572
        %v1458 = vpop.f32.mrb[0].mxu0
        %v1459 = vpop.f32.mrb[0].mxu0
        %1460 = vmatprep.mubr.f32.mxu0 %v580
        %1461 = vmatmul.mubr.f32.gmra.mrb[0].mxu0 %v578
        %v1462 = vpop.f32.mrb[0].mxu0
        %v1463 = vpop.f32.mrb[0].mxu0
        %1464 = vmatprep.mubr.f32.mxu0 %v586
        %1465 = vmatmul.mubr.f32.gmra.mrb[0].mxu0 %v584
        %v1466 = vpop.f32.mrb[0].mxu0
        %v1467 = vadd.f32 0.0, %v1466
        %v1468 = vpop.f32.mrb[0].mxu0
        %1469 = vmatprep.mubr.f32.mxu0 %v592
        %1470 = vmatmul.mubr.f32.gmra.mrb[0].mxu0 %v590
        %v1471 = vpop.f32.mrb[0].mxu0
        %v1472 = vadd.f32 0.0, %v1471
        %v1473 = vpop.f32.mrb[0].mxu0
        %1474 = vmatprep.mubr.f32.mxu0 %v598
        %1475 = vmatmul.mubr.f32.gmra.mrb[0].mxu0 %v596
        %v1476 = vpop.f32.mrb[0].mxu0
        %v1477 = vadd.f32 0.0, %v1476
        %v1478 = vpop.f32.mrb[0].mxu0
        %1479 = vmatprep.mubr.f32.mxu0 %v604
        %1480 = vmatmul.mubr.f32.gmra.mrb[0].mxu0 %v602
        %v1481 = vpop.f32.mrb[0].mxu0
        %v1482 = vadd.f32 0.0, %v1481
        %v1483 = vpop.f32.mrb[0].mxu0
        %1484 = vmatprep.mubr.f32.mxu0 %v610
        %1485 = vmatmul.mubr.f32.gmra.mrb[0].mxu0 %v608
        %v1486 = vpop.f32.mrb[0].mxu0
        %v1487 = vpop.f32.mrb[0].mxu0
        %v1488 = vadd.f32 0.0, %v1487
        %1489 = vmatprep.mubr.f32.mxu0 %v616
        %1490 = vmatmul.mubr.f32.gmra.mrb[0].mxu0 %v614
        %v1491 = vpop.f32.mrb[0].mxu0
        %v1492 = vpop.f32.mrb[0].mxu0
        %v1493 = vadd.f32 0.0, %v1492
        %1494 = vmatprep.mubr.f32.mxu0 %v622
        %1495 = vmatmul.mubr.f32.gmra.mrb[0].mxu0 %v620
        %v1496 = vpop.f32.mrb[0].mxu0
        %v1497 = vpop.f32.mrb[0].mxu0
        %v1498 = vadd.f32 0.0, %v1497
        %1499 = vmatprep.mubr.f32.mxu0 %v628
        %1500 = vmatmul.mubr.f32.gmra.mrb[0].mxu0 %v626
        %v1501 = vpop.f32.mrb[0].mxu0
        %v1502 = vpop.f32.mrb[0].mxu0
        %v1503 = vadd.f32 0.0, %v1502
        %1504 = vmatprep.mubr.f32.mxu0 %v634
        %1505 = vmatmul.mubr.f32.gmra.mrb[0].mxu0 %v632
        %v1506 = vpop.f32.mrb[0].mxu0
        %v1507 = vpop.f32.mrb[0].mxu0
        %1508 = vmatprep.mubr.f32.mxu0 %v640
        %1509 = vmatmul.mubr.f32.gmra.mrb[0].mxu0 %v638
        %v1510 = vpop.f32.mrb[0].mxu0
        %v1511 = vpop.f32.mrb[0].mxu0
        %1512 = vmatprep.mubr.f32.mxu0 %v646
        %1513 = vmatmul.mubr.f32.gmra.mrb[0].mxu0 %v644
        %v1514 = vpop.f32.mrb[0].mxu0
        %v1515 = vpop.f32.mrb[0].mxu0
        %1516 = vmatprep.mubr.f32.mxu0 %v652
        %1517 = vmatmul.mubr.f32.gmra.mrb[0].mxu0 %v650
        %v1518 = vpop.f32.mrb[0].mxu0
        %v1519 = vpop.f32.mrb[0].mxu0
        %1520 = vmatprep.mubr.f32.mxu0 %v658
        %1521 = vmatmul.mubr.f32.gmra.mrb[0].mxu0 %v656
        %v1522 = vpop.f32.mrb[0].mxu0
        %v1523 = vpop.f32.mrb[0].mxu0
        %1524 = vmatprep.mubr.f32.mxu0 %v664
        %1525 = vmatmul.mubr.f32.gmra.mrb[0].mxu0 %v662
        %v1526 = vpop.f32.mrb[0].mxu0
        %v1527 = vpop.f32.mrb[0].mxu0
        %1528 = vmatprep.mubr.f32.mxu0 %v670
        %1529 = vmatmul.mubr.f32.gmra.mrb[0].mxu0 %v668
        %v1530 = vpop.f32.mrb[0].mxu0
        %v1531 = vpop.f32.mrb[0].mxu0
        %1532 = vmatprep.mubr.f32.mxu0 %v676
        %1533 = vmatmul.mubr.f32.gmra.mrb[0].mxu0 %v674
        %v1534 = vpop.f32.mrb[0].mxu0
        %v1535 = vpop.f32.mrb[0].mxu0
        %1536 = vdwg.mxu0
        %1537 = vmatprep.subr.mxu0 %v685
        %1538 = vmatpush1.msra.mxu0 %v684
        %1539 = vmatprep.subr.mxu0 %v693
        %1540 = vmatpush1.msra.mxu0 %v692
        %1541 = vmatprep.subr.mxu0 %v701
        %1542 = vmatpush1.msra.mxu0 %v700
        %1543 = vmatprep.subr.mxu0 %v709
        %1544 = vmatpush1.msra.mxu0 %v708
        %1545 = vmatprep.subr.mxu0 %v717
        %1546 = vmatpush1.msra.mxu0 %v716
        %1547 = vmatprep.subr.mxu0 %v725
        %1548 = vmatpush1.msra.mxu0 %v724
        %1549 = vmatprep.subr.mxu0 %v733
        %1550 = vmatpush1.msra.mxu0 %v732
        %1551 = vmatprep.subr.mxu0 %v741
        %1552 = vmatpush1.msra.mxu0 %v740
        %1553 = vmatprep.subr.mxu0 %v749
        %1554 = vmatpush1.msra.mxu0 %v748
        %1555 = vmatprep.subr.mxu0 %v757
        %1556 = vmatpush1.msra.mxu0 %v756
        %1557 = vmatprep.subr.mxu0 %v765
        %1558 = vmatpush1.msra.mxu0 %v764
        %1559 = vmatprep.subr.mxu0 %v773
        %1560 = vmatpush1.msra.mxu0 %v772
        %1561 = vmatprep.subr.mxu0 %v781
        %1562 = vmatpush1.msra.mxu0 %v780
        %1563 = vmatprep.subr.mxu0 %v789
        %1564 = vmatpush1.msra.mxu0 %v788
        %1565 = vmatprep.subr.mxu0 %v797
        %1566 = vmatpush1.msra.mxu0 %v796
        %1567 = vmatprep.subr.mxu0 %v805
        %1568 = vmatpush1.msra.mxu0 %v804
        %1569 = vmatprep.subr.mxu0 %v813
        %1570 = vmatpush1.msra.mxu0 %v812
        %1571 = vmatprep.subr.mxu0 %v821
        %1572 = vmatpush1.msra.mxu0 %v820
        %1573 = vmatprep.subr.mxu0 %v829
        %1574 = vmatpush1.msra.mxu0 %v828
        %1575 = vmatprep.subr.mxu0 %v837
        %1576 = vmatpush1.msra.mxu0 %v836
        %1577 = vmatprep.subr.mxu0 %v845
        %1578 = vmatpush1.msra.mxu0 %v844
        %1579 = vmatprep.subr.mxu0 %v853
        %1580 = vmatpush1.msra.mxu0 %v852
        %1581 = vmatprep.subr.mxu0 %v861
        %1582 = vmatpush1.msra.mxu0 %v860
        %1583 = vmatprep.subr.mxu0 %v869
        %1584 = vmatpush1.msra.mxu0 %v868
        %1585 = vmatprep.subr.mxu0 %v877
        %1586 = vmatpush1.msra.mxu0 %v876
        %1587 = vmatprep.subr.mxu0 %v885
        %1588 = vmatpush1.msra.mxu0 %v884
        %1589 = vmatprep.subr.mxu0 %v893
        %1590 = vmatpush1.msra.mxu0 %v892
        %1591 = vmatprep.subr.mxu0 %v901
        %1592 = vmatpush1.msra.mxu0 %v900
        %1593 = vmatprep.subr.mxu0 %v909
        %1594 = vmatpush1.msra.mxu0 %v908
        %1595 = vmatprep.subr.mxu0 %v917
        %1596 = vmatpush1.msra.mxu0 %v916
        %1597 = vmatprep.subr.mxu0 %v925
        %1598 = vmatpush1.msra.mxu0 %v924
        %1599 = vmatprep.subr.mxu0 %v933
        %1600 = vmatpush1.msra.mxu0 %v932
        %1601 = vmatprep.mubr.f32.mxu0 %v490
        %1602 = vmatmul.mubr.f32.gmra.mrb[0].mxu0 %v488
        %v1603 = vpop.f32.mrb[0].mxu0
        %v1604 = vpop.f32.mrb[0].mxu0
        %1605 = vmatprep.mubr.f32.mxu0 %v496
        %1606 = vmatmul.mubr.f32.gmra.mrb[0].mxu0 %v494
        %v1607 = vpop.f32.mrb[0].mxu0
        %v1608 = vpop.f32.mrb[0].mxu0
        %1609 = vmatprep.mubr.f32.mxu0 %v502
        %1610 = vmatmul.mubr.f32.gmra.mrb[0].mxu0 %v500
        %v1611 = vpop.f32.mrb[0].mxu0
        %v1612 = vpop.f32.mrb[0].mxu0
        %1613 = vmatprep.mubr.f32.mxu0 %v508
        %1614 = vmatmul.mubr.f32.gmra.mrb[0].mxu0 %v506
        %v1615 = vpop.f32.mrb[0].mxu0
        %v1616 = vpop.f32.mrb[0].mxu0
        %1617 = vmatprep.mubr.f32.mxu0 %v514
        %1618 = vmatmul.mubr.f32.gmra.mrb[0].mxu0 %v512
        %v1619 = vpop.f32.mrb[0].mxu0
        %v1620 = vpop.f32.mrb[0].mxu0
        %1621 = vmatprep.mubr.f32.mxu0 %v520
        %1622 = vmatmul.mubr.f32.gmra.mrb[0].mxu0 %v518
        %v1623 = vpop.f32.mrb[0].mxu0
        %v1624 = vpop.f32.mrb[0].mxu0
        %1625 = vmatprep.mubr.f32.mxu0 %v526
        %1626 = vmatmul.mubr.f32.gmra.mrb[0].mxu0 %v524
        %v1627 = vpop.f32.mrb[0].mxu0
        %v1628 = vpop.f32.mrb[0].mxu0
        %1629 = vmatprep.mubr.f32.mxu0 %v532
        %1630 = vmatmul.mubr.f32.gmra.mrb[0].mxu0 %v530
        %v1631 = vpop.f32.mrb[0].mxu0
        %v1632 = vpop.f32.mrb[0].mxu0
        %1633 = vmatprep.mubr.f32.mxu0 %v538
        %1634 = vmatmul.mubr.f32.gmra.mrb[0].mxu0 %v536
        %v1635 = vpop.f32.mrb[0].mxu0
        %v1636 = vpop.f32.mrb[0].mxu0
        %1637 = vmatprep.mubr.f32.mxu0 %v544
        %1638 = vmatmul.mubr.f32.gmra.mrb[0].mxu0 %v542
        %v1639 = vpop.f32.mrb[0].mxu0
        %v1640 = vpop.f32.mrb[0].mxu0
        %1641 = vmatprep.mubr.f32.mxu0 %v550
        %1642 = vmatmul.mubr.f32.gmra.mrb[0].mxu0 %v548
        %v1643 = vpop.f32.mrb[0].mxu0
        %v1644 = vpop.f32.mrb[0].mxu0
        %1645 = vmatprep.mubr.f32.mxu0 %v556
        %1646 = vmatmul.mubr.f32.gmra.mrb[0].mxu0 %v554
        %v1647 = vpop.f32.mrb[0].mxu0
        %v1648 = vpop.f32.mrb[0].mxu0
        %1649 = vmatprep.mubr.f32.mxu0 %v562
        %1650 = vmatmul.mubr.f32.gmra.mrb[0].mxu0 %v560
        %v1651 = vpop.f32.mrb[0].mxu0
        %v1652 = vpop.f32.mrb[0].mxu0
        %1653 = vmatprep.mubr.f32.mxu0 %v568
        %1654 = vmatmul.mubr.f32.gmra.mrb[0].mxu0 %v566
        %v1655 = vpop.f32.mrb[0].mxu0
        %v1656 = vpop.f32.mrb[0].mxu0
        %1657 = vmatprep.mubr.f32.mxu0 %v574
        %1658 = vmatmul.mubr.f32.gmra.mrb[0].mxu0 %v572
        %v1659 = vpop.f32.mrb[0].mxu0
        %v1660 = vpop.f32.mrb[0].mxu0
        %1661 = vmatprep.mubr.f32.mxu0 %v580
        %1662 = vmatmul.mubr.f32.gmra.mrb[0].mxu0 %v578
        %v1663 = vpop.f32.mrb[0].mxu0
        %v1664 = vpop.f32.mrb[0].mxu0
        %1665 = vmatprep.mubr.f32.mxu0 %v586
        %1666 = vmatmul.mubr.f32.gmra.mrb[0].mxu0 %v584
        %v1667 = vpop.f32.mrb[0].mxu0
        %v1668 = vpop.f32.mrb[0].mxu0
        %1669 = vmatprep.mubr.f32.mxu0 %v592
        %1670 = vmatmul.mubr.f32.gmra.mrb[0].mxu0 %v590
        %v1671 = vpop.f32.mrb[0].mxu0
        %v1672 = vpop.f32.mrb[0].mxu0
        %1673 = vmatprep.mubr.f32.mxu0 %v598
        %1674 = vmatmul.mubr.f32.gmra.mrb[0].mxu0 %v596
        %v1675 = vpop.f32.mrb[0].mxu0
        %v1676 = vpop.f32.mrb[0].mxu0
        %1677 = vmatprep.mubr.f32.mxu0 %v604
        %1678 = vmatmul.mubr.f32.gmra.mrb[0].mxu0 %v602
        %v1679 = vpop.f32.mrb[0].mxu0
        %v1680 = vpop.f32.mrb[0].mxu0
        %1681 = vmatprep.mubr.f32.mxu0 %v610
        %1682 = vmatmul.mubr.f32.gmra.mrb[0].mxu0 %v608
        %v1683 = vpop.f32.mrb[0].mxu0
        %v1684 = vpop.f32.mrb[0].mxu0
        %1685 = vmatprep.mubr.f32.mxu0 %v616
        %1686 = vmatmul.mubr.f32.gmra.mrb[0].mxu0 %v614
        %v1687 = vpop.f32.mrb[0].mxu0
        %v1688 = vpop.f32.mrb[0].mxu0
        %1689 = vmatprep.mubr.f32.mxu0 %v622
        %1690 = vmatmul.mubr.f32.gmra.mrb[0].mxu0 %v620
        %v1691 = vpop.f32.mrb[0].mxu0
        %v1692 = vpop.f32.mrb[0].mxu0
        %1693 = vmatprep.mubr.f32.mxu0 %v628
        %1694 = vmatmul.mubr.f32.gmra.mrb[0].mxu0 %v626
        %v1695 = vpop.f32.mrb[0].mxu0
        %v1696 = vpop.f32.mrb[0].mxu0
        %1697 = vmatprep.mubr.f32.mxu0 %v634
        %1698 = vmatmul.mubr.f32.gmra.mrb[0].mxu0 %v632
        %v1699 = vpop.f32.mrb[0].mxu0
        %v1700 = vadd.f32 0.0, %v1699
        %v1701 = vpop.f32.mrb[0].mxu0
        %1702 = vmatprep.mubr.f32.mxu0 %v640
        %1703 = vmatmul.mubr.f32.gmra.mrb[0].mxu0 %v638
        %v1704 = vpop.f32.mrb[0].mxu0
        %v1705 = vadd.f32 0.0, %v1704
        %v1706 = vpop.f32.mrb[0].mxu0
        %1707 = vmatprep.mubr.f32.mxu0 %v646
        %1708 = vmatmul.mubr.f32.gmra.mrb[0].mxu0 %v644
        %v1709 = vpop.f32.mrb[0].mxu0
        %v1710 = vadd.f32 0.0, %v1709
        %v1711 = vpop.f32.mrb[0].mxu0
        %1712 = vmatprep.mubr.f32.mxu0 %v652
        %1713 = vmatmul.mubr.f32.gmra.mrb[0].mxu0 %v650
        %v1714 = vpop.f32.mrb[0].mxu0
        %v1715 = vadd.f32 0.0, %v1714
        %v1716 = vpop.f32.mrb[0].mxu0
        %1717 = vmatprep.mubr.f32.mxu0 %v658
        %1718 = vmatmul.mubr.f32.gmra.mrb[0].mxu0 %v656
        %v1719 = vpop.f32.mrb[0].mxu0
        %v1720 = vpop.f32.mrb[0].mxu0
        %v1721 = vadd.f32 0.0, %v1720
        %1722 = vmatprep.mubr.f32.mxu0 %v664
        %1723 = vmatmul.mubr.f32.gmra.mrb[0].mxu0 %v662
        %v1724 = vpop.f32.mrb[0].mxu0
        %v1725 = vpop.f32.mrb[0].mxu0
        %v1726 = vadd.f32 0.0, %v1725
        %1727 = vmatprep.mubr.f32.mxu0 %v670
        %1728 = vmatmul.mubr.f32.gmra.mrb[0].mxu0 %v668
        %v1729 = vpop.f32.mrb[0].mxu0
        %v1730 = vpop.f32.mrb[0].mxu0
        %v1731 = vadd.f32 0.0, %v1730
        %1732 = vmatprep.mubr.f32.mxu0 %v676
        %1733 = vmatmul.mubr.f32.gmra.mrb[0].mxu0 %v674
        %v1734 = vpop.f32.mrb[0].mxu0
        %v1735 = vpop.f32.mrb[0].mxu0
        %v1736 = vadd.f32 0.0, %v1735
        %1737 = vdwg.mxu0
        %v1738 = vld [vmem:[%s3] sm:$0xff]
        %v1739 = vld [vmem:[%s3 + $0x8] sm:$0xff]
        %v1740 = vld [vmem:[%s3 + $0x10] sm:$0xff]
        %v1741 = vld [vmem:[%s3 + $0x18] sm:$0xff]
        %v1742 = vld [vmem:[%s3 + $0x20] sm:$0xff]
        %v1743 = vld [vmem:[%s3 + $0x28] sm:$0xff]
        %v1744 = vld [vmem:[%s3 + $0x30] sm:$0xff]
        %v1745 = vld [vmem:[%s3 + $0x38] sm:$0xff]
        %v1746 = vld [vmem:[%s3 + $0x40] sm:$0xff]
        %v1747 = vld [vmem:[%s3 + $0x48] sm:$0xff]
        %v1748 = vld [vmem:[%s3 + $0x50] sm:$0xff]
        %v1749 = vld [vmem:[%s3 + $0x58] sm:$0xff]
        %v1750 = vld [vmem:[%s3 + $0x60] sm:$0xff]
        %v1751 = vld [vmem:[%s3 + $0x68] sm:$0xff]
        %v1752 = vld [vmem:[%s3 + $0x70] sm:$0xff]
        %v1753 = vld [vmem:[%s3 + $0x78] sm:$0xff]
        %v1754 = vld [vmem:[%s3 + $0x80] sm:$0xff]
        %v1755 = vld [vmem:[%s3 + $0x88] sm:$0xff]
        %v1756 = vld [vmem:[%s3 + $0x90] sm:$0xff]
        %v1757 = vld [vmem:[%s3 + $0x98] sm:$0xff]
        %v1758 = vld [vmem:[%s3 + $0xa0] sm:$0xff]
        %v1759 = vld [vmem:[%s3 + $0xa8] sm:$0xff]
        %v1760 = vld [vmem:[%s3 + $0xb0] sm:$0xff]
        %v1761 = vld [vmem:[%s3 + $0xb8] sm:$0xff]
        %v1762 = vld [vmem:[%s3 + $0xc0] sm:$0xff]
        %v1763 = vld [vmem:[%s3 + $0xc8] sm:$0xff]
        %v1764 = vld [vmem:[%s3 + $0xd0] sm:$0xff]
        %v1765 = vld [vmem:[%s3 + $0xd8] sm:$0xff]
        %v1766 = vld [vmem:[%s3 + $0xe0] sm:$0xff]
        %v1767 = vld [vmem:[%s3 + $0xe8] sm:$0xff]
        %v1768 = vld [vmem:[%s3 + $0xf0] sm:$0xff]
        %v1769 = vld [vmem:[%s3 + $0xf8] sm:$0xff]
        %1771 = vset.pattern.permute.xlu0 0
        %1772 = vperm.xlu0 %1771, %v1738
        %v1773 = vpop.permute.xlu0 %1772
        %1776 = vset.pattern.permute.xlu0 0
        %1777 = vperm.xlu0 %1776, %v1739
        %v1778 = vpop.permute.xlu0 %1777
        %1781 = vset.pattern.permute.xlu0 0
        %1782 = vperm.xlu0 %1781, %v1740
        %v1783 = vpop.permute.xlu0 %1782
        %1786 = vset.pattern.permute.xlu0 0
        %1787 = vperm.xlu0 %1786, %v1741
        %v1788 = vpop.permute.xlu0 %1787
        %1791 = vset.pattern.permute.xlu0 0
        %1792 = vperm.xlu0 %1791, %v1742
        %v1793 = vpop.permute.xlu0 %1792
        %1796 = vset.pattern.permute.xlu0 0
        %1797 = vperm.xlu0 %1796, %v1743
        %v1798 = vpop.permute.xlu0 %1797
        %1801 = vset.pattern.permute.xlu0 0
        %1802 = vperm.xlu0 %1801, %v1744
        %v1803 = vpop.permute.xlu0 %1802
        %1806 = vset.pattern.permute.xlu0 0
        %1807 = vperm.xlu0 %1806, %v1745
        %v1808 = vpop.permute.xlu0 %1807
        %1811 = vset.pattern.permute.xlu0 0
        %1812 = vperm.xlu0 %1811, %v1746
        %v1813 = vpop.permute.xlu0 %1812
        %1816 = vset.pattern.permute.xlu0 0
        %1817 = vperm.xlu0 %1816, %v1747
        %v1818 = vpop.permute.xlu0 %1817
        %1821 = vset.pattern.permute.xlu0 0
        %1822 = vperm.xlu0 %1821, %v1748
        %v1823 = vpop.permute.xlu0 %1822
        %1826 = vset.pattern.permute.xlu0 0
        %1827 = vperm.xlu0 %1826, %v1749
        %v1828 = vpop.permute.xlu0 %1827
        %1831 = vset.pattern.permute.xlu0 0
        %1832 = vperm.xlu0 %1831, %v1750
        %v1833 = vpop.permute.xlu0 %1832
        %1836 = vset.pattern.permute.xlu0 0
        %1837 = vperm.xlu0 %1836, %v1751
        %v1838 = vpop.permute.xlu0 %1837
        %1841 = vset.pattern.permute.xlu0 0
        %1842 = vperm.xlu0 %1841, %v1752
        %v1843 = vpop.permute.xlu0 %1842
        %1846 = vset.pattern.permute.xlu0 0
        %1847 = vperm.xlu0 %1846, %v1753
        %v1848 = vpop.permute.xlu0 %1847
        %1851 = vset.pattern.permute.xlu0 0
        %1852 = vperm.xlu0 %1851, %v1754
        %v1853 = vpop.permute.xlu0 %1852
        %1856 = vset.pattern.permute.xlu0 0
        %1857 = vperm.xlu0 %1856, %v1755
        %v1858 = vpop.permute.xlu0 %1857
        %1861 = vset.pattern.permute.xlu0 0
        %1862 = vperm.xlu0 %1861, %v1756
        %v1863 = vpop.permute.xlu0 %1862
        %1866 = vset.pattern.permute.xlu0 0
        %1867 = vperm.xlu0 %1866, %v1757
        %v1868 = vpop.permute.xlu0 %1867
        %1871 = vset.pattern.permute.xlu0 0
        %1872 = vperm.xlu0 %1871, %v1758
        %v1873 = vpop.permute.xlu0 %1872
        %1876 = vset.pattern.permute.xlu0 0
        %1877 = vperm.xlu0 %1876, %v1759
        %v1878 = vpop.permute.xlu0 %1877
        %1881 = vset.pattern.permute.xlu0 0
        %1882 = vperm.xlu0 %1881, %v1760
        %v1883 = vpop.permute.xlu0 %1882
        %1886 = vset.pattern.permute.xlu0 0
        %1887 = vperm.xlu0 %1886, %v1761
        %v1888 = vpop.permute.xlu0 %1887
        %1891 = vset.pattern.permute.xlu0 0
        %1892 = vperm.xlu0 %1891, %v1762
        %v1893 = vpop.permute.xlu0 %1892
        %1896 = vset.pattern.permute.xlu0 0
        %1897 = vperm.xlu0 %1896, %v1763
        %v1898 = vpop.permute.xlu0 %1897
        %1901 = vset.pattern.permute.xlu0 0
        %1902 = vperm.xlu0 %1901, %v1764
        %v1903 = vpop.permute.xlu0 %1902
        %1906 = vset.pattern.permute.xlu0 0
        %1907 = vperm.xlu0 %1906, %v1765
        %v1908 = vpop.permute.xlu0 %1907
        %1911 = vset.pattern.permute.xlu0 0
        %1912 = vperm.xlu0 %1911, %v1766
        %v1913 = vpop.permute.xlu0 %1912
        %1916 = vset.pattern.permute.xlu0 0
        %1917 = vperm.xlu0 %1916, %v1767
        %v1918 = vpop.permute.xlu0 %1917
        %1921 = vset.pattern.permute.xlu0 0
        %1922 = vperm.xlu0 %1921, %v1768
        %v1923 = vpop.permute.xlu0 %1922
        %1926 = vset.pattern.permute.xlu0 0
        %1927 = vperm.xlu0 %1926, %v1769
        %v1928 = vpop.permute.xlu0 %1927
        %v1930 = vadd.f32 %v1001, %v1773
        %v1931 = vadd.f32 %v1006, %v1778
        %v1932 = vadd.f32 %v1011, %v1783
        %v1933 = vadd.f32 %v1016, %v1788
        %v1934 = vadd.f32 %v1022, %v1793
        %v1935 = vadd.f32 %v1027, %v1798
        %v1936 = vadd.f32 %v1032, %v1803
        %v1937 = vadd.f32 %v1037, %v1808
        %v1938 = vadd.f32 %v1234, %v1813
        %v1939 = vadd.f32 %v1239, %v1818
        %v1940 = vadd.f32 %v1244, %v1823
        %v1941 = vadd.f32 %v1249, %v1828
        %v1942 = vadd.f32 %v1255, %v1833
        %v1943 = vadd.f32 %v1260, %v1838
        %v1944 = vadd.f32 %v1265, %v1843
        %v1945 = vadd.f32 %v1270, %v1848
        %v1946 = vadd.f32 %v1467, %v1853
        %v1947 = vadd.f32 %v1472, %v1858
        %v1948 = vadd.f32 %v1477, %v1863
        %v1949 = vadd.f32 %v1482, %v1868
        %v1950 = vadd.f32 %v1488, %v1873
        %v1951 = vadd.f32 %v1493, %v1878
        %v1952 = vadd.f32 %v1498, %v1883
        %v1953 = vadd.f32 %v1503, %v1888
        %v1954 = vadd.f32 %v1700, %v1893
        %v1955 = vadd.f32 %v1705, %v1898
        %v1956 = vadd.f32 %v1710, %v1903
        %v1957 = vadd.f32 %v1715, %v1908
        %v1958 = vadd.f32 %v1721, %v1913
        %v1959 = vadd.f32 %v1726, %v1918
        %v1960 = vadd.f32 %v1731, %v1923
        %v1961 = vadd.f32 %v1736, %v1928
        %vm1962 = vcmp.gt.f32.partialorder %v1930, 0.0
        %vm1963 = vcmp.gt.f32.partialorder %v1931, 0.0
        %vm1964 = vcmp.gt.f32.partialorder %v1932, 0.0
        %vm1965 = vcmp.gt.f32.partialorder %v1933, 0.0
        %vm1966 = vcmp.gt.f32.partialorder %v1934, 0.0
        %vm1967 = vcmp.gt.f32.partialorder %v1935, 0.0
        %vm1968 = vcmp.gt.f32.partialorder %v1936, 0.0
        %vm1969 = vcmp.gt.f32.partialorder %v1937, 0.0
        %vm1970 = vcmp.gt.f32.partialorder %v1938, 0.0
        %vm1971 = vcmp.gt.f32.partialorder %v1939, 0.0
        %vm1972 = vcmp.gt.f32.partialorder %v1940, 0.0
        %vm1973 = vcmp.gt.f32.partialorder %v1941, 0.0
        %vm1974 = vcmp.gt.f32.partialorder %v1942, 0.0
        %vm1975 = vcmp.gt.f32.partialorder %v1943, 0.0
        %vm1976 = vcmp.gt.f32.partialorder %v1944, 0.0
        %vm1977 = vcmp.gt.f32.partialorder %v1945, 0.0
        %vm1978 = vcmp.gt.f32.partialorder %v1946, 0.0
        %vm1979 = vcmp.gt.f32.partialorder %v1947, 0.0
        %vm1980 = vcmp.gt.f32.partialorder %v1948, 0.0
        %vm1981 = vcmp.gt.f32.partialorder %v1949, 0.0
        %vm1982 = vcmp.gt.f32.partialorder %v1950, 0.0
        %vm1983 = vcmp.gt.f32.partialorder %v1951, 0.0
        %vm1984 = vcmp.gt.f32.partialorder %v1952, 0.0
        %vm1985 = vcmp.gt.f32.partialorder %v1953, 0.0
        %vm1986 = vcmp.gt.f32.partialorder %v1954, 0.0
        %vm1987 = vcmp.gt.f32.partialorder %v1955, 0.0
        %vm1988 = vcmp.gt.f32.partialorder %v1956, 0.0
        %vm1989 = vcmp.gt.f32.partialorder %v1957, 0.0
        %vm1990 = vcmp.gt.f32.partialorder %v1958, 0.0
        %vm1991 = vcmp.gt.f32.partialorder %v1959, 0.0
        %vm1992 = vcmp.gt.f32.partialorder %v1960, 0.0
        %vm1993 = vcmp.gt.f32.partialorder %v1961, 0.0
        %v1994 = vmin.f32 %v1930, 0.0
        %v1995 = vmin.f32 %v1931, 0.0
        %v1996 = vmin.f32 %v1932, 0.0
        %v1997 = vmin.f32 %v1933, 0.0
        %v1998 = vmin.f32 %v1934, 0.0
        %v1999 = vmin.f32 %v1935, 0.0
        %v2000 = vmin.f32 %v1936, 0.0
        %v2001 = vmin.f32 %v1937, 0.0
        %v2002 = vmin.f32 %v1938, 0.0
        %v2003 = vmin.f32 %v1939, 0.0
        %v2004 = vmin.f32 %v1940, 0.0
        %v2005 = vmin.f32 %v1941, 0.0
        %v2006 = vmin.f32 %v1942, 0.0
        %v2007 = vmin.f32 %v1943, 0.0
        %v2008 = vmin.f32 %v1944, 0.0
        %v2009 = vmin.f32 %v1945, 0.0
        %v2010 = vmin.f32 %v1946, 0.0
        %v2011 = vmin.f32 %v1947, 0.0
        %v2012 = vmin.f32 %v1948, 0.0
        %v2013 = vmin.f32 %v1949, 0.0
        %v2014 = vmin.f32 %v1950, 0.0
        %v2015 = vmin.f32 %v1951, 0.0
        %v2016 = vmin.f32 %v1952, 0.0
        %v2017 = vmin.f32 %v1953, 0.0
        %v2018 = vmin.f32 %v1954, 0.0
        %v2019 = vmin.f32 %v1955, 0.0
        %v2020 = vmin.f32 %v1956, 0.0
        %v2021 = vmin.f32 %v1957, 0.0
        %v2022 = vmin.f32 %v1958, 0.0
        %v2023 = vmin.f32 %v1959, 0.0
        %v2024 = vmin.f32 %v1960, 0.0
        %v2025 = vmin.f32 %v1961, 0.0
        %v2026 = vmul.f32 %v1994, 1.442695
        %v2027 = vpow.pop %v2026
        %v2028 = vmul.f32 %v1995, 1.442695
        %v2029 = vpow.pop %v2028
        %v2030 = vmul.f32 %v1996, 1.442695
        %v2031 = vpow.pop %v2030
        %v2032 = vmul.f32 %v1997, 1.442695
        %v2033 = vpow.pop %v2032
        %v2034 = vmul.f32 %v1998, 1.442695
        %v2035 = vpow.pop %v2034
        %v2036 = vmul.f32 %v1999, 1.442695
        %v2037 = vpow.pop %v2036
        %v2038 = vmul.f32 %v2000, 1.442695
        %v2039 = vpow.pop %v2038
        %v2040 = vmul.f32 %v2001, 1.442695
        %v2041 = vpow.pop %v2040
        %v2042 = vmul.f32 %v2002, 1.442695
        %v2043 = vpow.pop %v2042
        %v2044 = vmul.f32 %v2003, 1.442695
        %v2045 = vpow.pop %v2044
        %v2046 = vmul.f32 %v2004, 1.442695
        %v2047 = vpow.pop %v2046
        %v2048 = vmul.f32 %v2005, 1.442695
        %v2049 = vpow.pop %v2048
        %v2050 = vmul.f32 %v2006, 1.442695
        %v2051 = vpow.pop %v2050
        %v2052 = vmul.f32 %v2007, 1.442695
        %v2053 = vpow.pop %v2052
        %v2054 = vmul.f32 %v2008, 1.442695
        %v2055 = vpow.pop %v2054
        %v2056 = vmul.f32 %v2009, 1.442695
        %v2057 = vpow.pop %v2056
        %v2058 = vmul.f32 %v2010, 1.442695
        %v2059 = vpow.pop %v2058
        %v2060 = vmul.f32 %v2011, 1.442695
        %v2061 = vpow.pop %v2060
        %v2062 = vmul.f32 %v2012, 1.442695
        %v2063 = vpow.pop %v2062
        %v2064 = vmul.f32 %v2013, 1.442695
        %v2065 = vpow.pop %v2064
        %v2066 = vmul.f32 %v2014, 1.442695
        %v2067 = vpow.pop %v2066
        %v2068 = vmul.f32 %v2015, 1.442695
        %v2069 = vpow.pop %v2068
        %v2070 = vmul.f32 %v2016, 1.442695
        %v2071 = vpow.pop %v2070
        %v2072 = vmul.f32 %v2017, 1.442695
        %v2073 = vpow.pop %v2072
        %v2074 = vmul.f32 %v2018, 1.442695
        %v2075 = vpow.pop %v2074
        %v2076 = vmul.f32 %v2019, 1.442695
        %v2077 = vpow.pop %v2076
        %v2078 = vmul.f32 %v2020, 1.442695
        %v2079 = vpow.pop %v2078
        %v2080 = vmul.f32 %v2021, 1.442695
        %v2081 = vpow.pop %v2080
        %v2082 = vmul.f32 %v2022, 1.442695
        %v2083 = vpow.pop %v2082
        %v2084 = vmul.f32 %v2023, 1.442695
        %v2085 = vpow.pop %v2084
        %v2086 = vmul.f32 %v2024, 1.442695
        %v2087 = vpow.pop %v2086
        %v2088 = vmul.f32 %v2025, 1.442695
        %v2089 = vpow.pop %v2088
        %v2090 = vsub.f32 %v2027, 1.0
        %v2091 = vsub.f32 %v2029, 1.0
        %v2092 = vsub.f32 %v2031, 1.0
        %v2093 = vsub.f32 %v2033, 1.0
        %v2094 = vsub.f32 %v2035, 1.0
        %v2095 = vsub.f32 %v2037, 1.0
        %v2096 = vsub.f32 %v2039, 1.0
        %v2097 = vsub.f32 %v2041, 1.0
        %v2098 = vsub.f32 %v2043, 1.0
        %v2099 = vsub.f32 %v2045, 1.0
        %v2100 = vsub.f32 %v2047, 1.0
        %v2101 = vsub.f32 %v2049, 1.0
        %v2102 = vsub.f32 %v2051, 1.0
        %v2103 = vsub.f32 %v2053, 1.0
        %v2104 = vsub.f32 %v2055, 1.0
        %v2105 = vsub.f32 %v2057, 1.0
        %v2106 = vsub.f32 %v2059, 1.0
        %v2107 = vsub.f32 %v2061, 1.0
        %v2108 = vsub.f32 %v2063, 1.0
        %v2109 = vsub.f32 %v2065, 1.0
        %v2110 = vsub.f32 %v2067, 1.0
        %v2111 = vsub.f32 %v2069, 1.0
        %v2112 = vsub.f32 %v2071, 1.0
        %v2113 = vsub.f32 %v2073, 1.0
        %v2114 = vsub.f32 %v2075, 1.0
        %v2115 = vsub.f32 %v2077, 1.0
        %v2116 = vsub.f32 %v2079, 1.0
        %v2117 = vsub.f32 %v2081, 1.0
        %v2118 = vsub.f32 %v2083, 1.0
        %v2119 = vsub.f32 %v2085, 1.0
        %v2120 = vsub.f32 %v2087, 1.0
        %v2121 = vsub.f32 %v2089, 1.0
        %v2122 = vsel %vm1962, %v1930, %v2090
        %v2123 = vsel %vm1963, %v1931, %v2091
        %v2124 = vsel %vm1964, %v1932, %v2092
        %v2125 = vsel %vm1965, %v1933, %v2093
        %v2126 = vsel %vm1966, %v1934, %v2094
        %v2127 = vsel %vm1967, %v1935, %v2095
        %v2128 = vsel %vm1968, %v1936, %v2096
        %v2129 = vsel %vm1969, %v1937, %v2097
        %v2130 = vsel %vm1970, %v1938, %v2098
        %v2131 = vsel %vm1971, %v1939, %v2099
        %v2132 = vsel %vm1972, %v1940, %v2100
        %v2133 = vsel %vm1973, %v1941, %v2101
        %v2134 = vsel %vm1974, %v1942, %v2102
        %v2135 = vsel %vm1975, %v1943, %v2103
        %v2136 = vsel %vm1976, %v1944, %v2104
        %v2137 = vsel %vm1977, %v1945, %v2105
        %v2138 = vsel %vm1978, %v1946, %v2106
        %v2139 = vsel %vm1979, %v1947, %v2107
        %v2140 = vsel %vm1980, %v1948, %v2108
        %v2141 = vsel %vm1981, %v1949, %v2109
        %v2142 = vsel %vm1982, %v1950, %v2110
        %v2143 = vsel %vm1983, %v1951, %v2111
        %v2144 = vsel %vm1984, %v1952, %v2112
        %v2145 = vsel %vm1985, %v1953, %v2113
        %v2146 = vsel %vm1986, %v1954, %v2114
        %v2147 = vsel %vm1987, %v1955, %v2115
        %v2148 = vsel %vm1988, %v1956, %v2116
        %v2149 = vsel %vm1989, %v1957, %v2117
        %v2150 = vsel %vm1990, %v1958, %v2118
        %v2151 = vsel %vm1991, %v1959, %v2119
        %v2152 = vsel %vm1992, %v1960, %v2120
        %v2153 = vsel %vm1993, %v1961, %v2121
        %v2154 = vld [vmem:[#allocation7] sm:$0xff]
        %v2155 = vld [vmem:[#allocation7 + $0x8] sm:$0xff]
        %v2156 = vld [vmem:[#allocation7 + $0x10] sm:$0xff]
        %v2157 = vld [vmem:[#allocation7 + $0x18] sm:$0xff]
        %v2158 = vld [vmem:[#allocation7 + $0x20] sm:$0xff]
        %v2159 = vld [vmem:[#allocation7 + $0x28] sm:$0xff]
        %v2160 = vld [vmem:[#allocation7 + $0x30] sm:$0xff]
        %v2161 = vld [vmem:[#allocation7 + $0x38] sm:$0xff]
        %v2162 = vld [vmem:[#allocation7 + $0x40] sm:$0xff]
        %v2163 = vld [vmem:[#allocation7 + $0x48] sm:$0xff]
        %v2164 = vld [vmem:[#allocation7 + $0x50] sm:$0xff]
        %v2165 = vld [vmem:[#allocation7 + $0x58] sm:$0xff]
        %v2166 = vld [vmem:[#allocation7 + $0x60] sm:$0xff]
        %v2167 = vld [vmem:[#allocation7 + $0x68] sm:$0xff]
        %v2168 = vld [vmem:[#allocation7 + $0x70] sm:$0xff]
        %v2169 = vld [vmem:[#allocation7 + $0x78] sm:$0xff]
        %v2170 = vld [vmem:[#allocation7 + $0x80] sm:$0xff]
        %v2171 = vld [vmem:[#allocation7 + $0x88] sm:$0xff]
        %v2172 = vld [vmem:[#allocation7 + $0x90] sm:$0xff]
        %v2173 = vld [vmem:[#allocation7 + $0x98] sm:$0xff]
        %v2174 = vld [vmem:[#allocation7 + $0xa0] sm:$0xff]
        %v2175 = vld [vmem:[#allocation7 + $0xa8] sm:$0xff]
        %v2176 = vld [vmem:[#allocation7 + $0xb0] sm:$0xff]
        %v2177 = vld [vmem:[#allocation7 + $0xb8] sm:$0xff]
        %v2178 = vld [vmem:[#allocation7 + $0xc0] sm:$0xff]
        %v2179 = vld [vmem:[#allocation7 + $0xc8] sm:$0xff]
        %v2180 = vld [vmem:[#allocation7 + $0xd0] sm:$0xff]
        %v2181 = vld [vmem:[#allocation7 + $0xd8] sm:$0xff]
        %v2182 = vld [vmem:[#allocation7 + $0xe0] sm:$0xff]
        %v2183 = vld [vmem:[#allocation7 + $0xe8] sm:$0xff]
        %v2184 = vld [vmem:[#allocation7 + $0xf0] sm:$0xff]
        %v2185 = vld [vmem:[#allocation7 + $0xf8] sm:$0xff]
        %v2186 = vld [vmem:[#allocation7 + $0x100] sm:$0xff]
        %v2187 = vld [vmem:[#allocation7 + $0x108] sm:$0xff]
        %v2188 = vld [vmem:[#allocation7 + $0x110] sm:$0xff]
        %v2189 = vld [vmem:[#allocation7 + $0x118] sm:$0xff]
        %v2190 = vld [vmem:[#allocation7 + $0x120] sm:$0xff]
        %v2191 = vld [vmem:[#allocation7 + $0x128] sm:$0xff]
        %v2192 = vld [vmem:[#allocation7 + $0x130] sm:$0xff]
        %v2193 = vld [vmem:[#allocation7 + $0x138] sm:$0xff]
        %v2194 = vld [vmem:[#allocation7 + $0x140] sm:$0xff]
        %v2195 = vld [vmem:[#allocation7 + $0x148] sm:$0xff]
        %v2196 = vld [vmem:[#allocation7 + $0x150] sm:$0xff]
        %v2197 = vld [vmem:[#allocation7 + $0x158] sm:$0xff]
        %v2198 = vld [vmem:[#allocation7 + $0x160] sm:$0xff]
        %v2199 = vld [vmem:[#allocation7 + $0x168] sm:$0xff]
        %v2200 = vld [vmem:[#allocation7 + $0x170] sm:$0xff]
        %v2201 = vld [vmem:[#allocation7 + $0x178] sm:$0xff]
        %v2202 = vld [vmem:[#allocation7 + $0x180] sm:$0xff]
        %v2203 = vld [vmem:[#allocation7 + $0x188] sm:$0xff]
        %v2204 = vld [vmem:[#allocation7 + $0x190] sm:$0xff]
        %v2205 = vld [vmem:[#allocation7 + $0x198] sm:$0xff]
        %v2206 = vld [vmem:[#allocation7 + $0x1a0] sm:$0xff]
        %v2207 = vld [vmem:[#allocation7 + $0x1a8] sm:$0xff]
        %v2208 = vld [vmem:[#allocation7 + $0x1b0] sm:$0xff]
        %v2209 = vld [vmem:[#allocation7 + $0x1b8] sm:$0xff]
        %v2210 = vld [vmem:[#allocation7 + $0x1c0] sm:$0xff]
        %v2211 = vld [vmem:[#allocation7 + $0x1c8] sm:$0xff]
        %v2212 = vld [vmem:[#allocation7 + $0x1d0] sm:$0xff]
        %v2213 = vld [vmem:[#allocation7 + $0x1d8] sm:$0xff]
        %v2214 = vld [vmem:[#allocation7 + $0x1e0] sm:$0xff]
        %v2215 = vld [vmem:[#allocation7 + $0x1e8] sm:$0xff]
        %v2216 = vld [vmem:[#allocation7 + $0x1f0] sm:$0xff]
        %v2217 = vld [vmem:[#allocation7 + $0x1f8] sm:$0xff]
        %s2218 = scalar_lea.vmem [#allocation7], 512
        %v2219 = vld [vmem:[%s2218] sm:$0xff]
        %v2220 = vld [vmem:[%s2218 + $0x8] sm:$0xff]
        %v2221 = vld [vmem:[%s2218 + $0x10] sm:$0xff]
        %v2222 = vld [vmem:[%s2218 + $0x18] sm:$0xff]
        %v2223 = vld [vmem:[%s2218 + $0x20] sm:$0xff]
        %v2224 = vld [vmem:[%s2218 + $0x28] sm:$0xff]
        %v2225 = vld [vmem:[%s2218 + $0x30] sm:$0xff]
        %v2226 = vld [vmem:[%s2218 + $0x38] sm:$0xff]
        %v2227 = vld [vmem:[%s2218 + $0x40] sm:$0xff]
        %v2228 = vld [vmem:[%s2218 + $0x48] sm:$0xff]
        %v2229 = vld [vmem:[%s2218 + $0x50] sm:$0xff]
        %v2230 = vld [vmem:[%s2218 + $0x58] sm:$0xff]
        %v2231 = vld [vmem:[%s2218 + $0x60] sm:$0xff]
        %v2232 = vld [vmem:[%s2218 + $0x68] sm:$0xff]
        %v2233 = vld [vmem:[%s2218 + $0x70] sm:$0xff]
        %v2234 = vld [vmem:[%s2218 + $0x78] sm:$0xff]
        %v2235 = vld [vmem:[%s2218 + $0x80] sm:$0xff]
        %v2236 = vld [vmem:[%s2218 + $0x88] sm:$0xff]
        %v2237 = vld [vmem:[%s2218 + $0x90] sm:$0xff]
        %v2238 = vld [vmem:[%s2218 + $0x98] sm:$0xff]
        %v2239 = vld [vmem:[%s2218 + $0xa0] sm:$0xff]
        %v2240 = vld [vmem:[%s2218 + $0xa8] sm:$0xff]
        %v2241 = vld [vmem:[%s2218 + $0xb0] sm:$0xff]
        %v2242 = vld [vmem:[%s2218 + $0xb8] sm:$0xff]
        %v2243 = vld [vmem:[%s2218 + $0xc0] sm:$0xff]
        %v2244 = vld [vmem:[%s2218 + $0xc8] sm:$0xff]
        %v2245 = vld [vmem:[%s2218 + $0xd0] sm:$0xff]
        %v2246 = vld [vmem:[%s2218 + $0xd8] sm:$0xff]
        %v2247 = vld [vmem:[%s2218 + $0xe0] sm:$0xff]
        %v2248 = vld [vmem:[%s2218 + $0xe8] sm:$0xff]
        %v2249 = vld [vmem:[%s2218 + $0xf0] sm:$0xff]
        %v2250 = vld [vmem:[%s2218 + $0xf8] sm:$0xff]
        %v2251 = vld [vmem:[%s2218 + $0x100] sm:$0xff]
        %v2252 = vld [vmem:[%s2218 + $0x108] sm:$0xff]
        %v2253 = vld [vmem:[%s2218 + $0x110] sm:$0xff]
        %v2254 = vld [vmem:[%s2218 + $0x118] sm:$0xff]
        %v2255 = vld [vmem:[%s2218 + $0x120] sm:$0xff]
        %v2256 = vld [vmem:[%s2218 + $0x128] sm:$0xff]
        %v2257 = vld [vmem:[%s2218 + $0x130] sm:$0xff]
        %v2258 = vld [vmem:[%s2218 + $0x138] sm:$0xff]
        %v2259 = vld [vmem:[%s2218 + $0x140] sm:$0xff]
        %v2260 = vld [vmem:[%s2218 + $0x148] sm:$0xff]
        %v2261 = vld [vmem:[%s2218 + $0x150] sm:$0xff]
        %v2262 = vld [vmem:[%s2218 + $0x158] sm:$0xff]
        %v2263 = vld [vmem:[%s2218 + $0x160] sm:$0xff]
        %v2264 = vld [vmem:[%s2218 + $0x168] sm:$0xff]
        %v2265 = vld [vmem:[%s2218 + $0x170] sm:$0xff]
        %v2266 = vld [vmem:[%s2218 + $0x178] sm:$0xff]
        %v2267 = vld [vmem:[%s2218 + $0x180] sm:$0xff]
        %v2268 = vld [vmem:[%s2218 + $0x188] sm:$0xff]
        %v2269 = vld [vmem:[%s2218 + $0x190] sm:$0xff]
        %v2270 = vld [vmem:[%s2218 + $0x198] sm:$0xff]
        %v2271 = vld [vmem:[%s2218 + $0x1a0] sm:$0xff]
        %v2272 = vld [vmem:[%s2218 + $0x1a8] sm:$0xff]
        %v2273 = vld [vmem:[%s2218 + $0x1b0] sm:$0xff]
        %v2274 = vld [vmem:[%s2218 + $0x1b8] sm:$0xff]
        %v2275 = vld [vmem:[%s2218 + $0x1c0] sm:$0xff]
        %v2276 = vld [vmem:[%s2218 + $0x1c8] sm:$0xff]
        %v2277 = vld [vmem:[%s2218 + $0x1d0] sm:$0xff]
        %v2278 = vld [vmem:[%s2218 + $0x1d8] sm:$0xff]
        %v2279 = vld [vmem:[%s2218 + $0x1e0] sm:$0xff]
        %v2280 = vld [vmem:[%s2218 + $0x1e8] sm:$0xff]
        %v2281 = vld [vmem:[%s2218 + $0x1f0] sm:$0xff]
        %v2282 = vld [vmem:[%s2218 + $0x1f8] sm:$0xff]
        %2283 = vmatprep.subr.mxu0 %v2220
        %2284 = vmatpush1.msra.mxu0 %v2219
        %2285 = vmatprep.subr.mxu0 %v2224
        %2286 = vmatpush1.msra.mxu0 %v2223
        %2287 = vmatprep.subr.mxu0 %v2228
        %2288 = vmatpush1.msra.mxu0 %v2227
        %2289 = vmatprep.subr.mxu0 %v2232
        %2290 = vmatpush1.msra.mxu0 %v2231
        %2291 = vmatprep.subr.mxu0 %v2236
        %2292 = vmatpush1.msra.mxu0 %v2235
        %2293 = vmatprep.subr.mxu0 %v2240
        %2294 = vmatpush1.msra.mxu0 %v2239
        %2295 = vmatprep.subr.mxu0 %v2244
        %2296 = vmatpush1.msra.mxu0 %v2243
        %2297 = vmatprep.subr.mxu0 %v2248
        %2298 = vmatpush1.msra.mxu0 %v2247
        %2299 = vmatprep.subr.mxu0 %v2252
        %2300 = vmatpush1.msra.mxu0 %v2251
        %2301 = vmatprep.subr.mxu0 %v2256
        %2302 = vmatpush1.msra.mxu0 %v2255
        %2303 = vmatprep.subr.mxu0 %v2260
        %2304 = vmatpush1.msra.mxu0 %v2259
        %2305 = vmatprep.subr.mxu0 %v2264
        %2306 = vmatpush1.msra.mxu0 %v2263
        %2307 = vmatprep.subr.mxu0 %v2268
        %2308 = vmatpush1.msra.mxu0 %v2267
        %2309 = vmatprep.subr.mxu0 %v2272
        %2310 = vmatpush1.msra.mxu0 %v2271
        %2311 = vmatprep.subr.mxu0 %v2276
        %2312 = vmatpush1.msra.mxu0 %v2275
        %2313 = vmatprep.subr.mxu0 %v2280
        %2314 = vmatpush1.msra.mxu0 %v2279
        %2315 = vmatprep.subr.mxu0 0.0
        %2316 = vmatpush1.msra.mxu0 0.0
        %2317 = vmatprep.subr.mxu0 0.0
        %2318 = vmatpush1.msra.mxu0 0.0
        %2319 = vmatprep.subr.mxu0 0.0
        %2320 = vmatpush1.msra.mxu0 0.0
        %2321 = vmatprep.subr.mxu0 0.0
        %2322 = vmatpush1.msra.mxu0 0.0
        %2323 = vmatprep.subr.mxu0 0.0
        %2324 = vmatpush1.msra.mxu0 0.0
        %2325 = vmatprep.subr.mxu0 0.0
        %2326 = vmatpush1.msra.mxu0 0.0
        %2327 = vmatprep.subr.mxu0 0.0
        %2328 = vmatpush1.msra.mxu0 0.0
        %2329 = vmatprep.subr.mxu0 0.0
        %2330 = vmatpush1.msra.mxu0 0.0
        %2331 = vmatprep.subr.mxu0 0.0
        %2332 = vmatpush1.msra.mxu0 0.0
        %2333 = vmatprep.subr.mxu0 0.0
        %2334 = vmatpush1.msra.mxu0 0.0
        %2335 = vmatprep.subr.mxu0 0.0
        %2336 = vmatpush1.msra.mxu0 0.0
        %2337 = vmatprep.subr.mxu0 0.0
        %2338 = vmatpush1.msra.mxu0 0.0
        %2339 = vmatprep.subr.mxu0 0.0
        %2340 = vmatpush1.msra.mxu0 0.0
        %2341 = vmatprep.subr.mxu0 0.0
        %2342 = vmatpush1.msra.mxu0 0.0
        %2343 = vmatprep.subr.mxu0 0.0
        %2344 = vmatpush1.msra.mxu0 0.0
        %2345 = vmatprep.subr.mxu0 0.0
        %2346 = vmatpush1.msra.mxu0 0.0
        %2347 = vmatprep.mubr.f32.mxu0 0.0
        %2348 = vmatmul.mubr.f32.gmra.mrb[0].mxu0 %v2124
        %v2349 = vpop.f32.mrb[0].mxu0
        %v2350 = vadd.f32 0.0, %v2349
        %v2351 = vpop.f32.mrb[0].mxu0
        %v2352 = vadd.f32 0.0, %v2351
        %2353 = vmatprep.mubr.f32.mxu0 0.0
        %2354 = vmatmul.mubr.f32.gmra.mrb[0].mxu0 %v2125
        %v2355 = vpop.f32.mrb[0].mxu0
        %v2356 = vadd.f32 0.0, %v2355
        %v2357 = vpop.f32.mrb[0].mxu0
        %v2358 = vadd.f32 0.0, %v2357
        %2359 = vdwg.mxu0
        %2360 = vmatprep.subr.mxu0 %v2222
        %2361 = vmatpush1.msra.mxu0 %v2221
        %2362 = vmatprep.subr.mxu0 %v2226
        %2363 = vmatpush1.msra.mxu0 %v2225
        %2364 = vmatprep.subr.mxu0 %v2230
        %2365 = vmatpush1.msra.mxu0 %v2229
        %2366 = vmatprep.subr.mxu0 %v2234
        %2367 = vmatpush1.msra.mxu0 %v2233
        %2368 = vmatprep.subr.mxu0 %v2238
        %2369 = vmatpush1.msra.mxu0 %v2237
        %2370 = vmatprep.subr.mxu0 %v2242
        %2371 = vmatpush1.msra.mxu0 %v2241
        %2372 = vmatprep.subr.mxu0 %v2246
        %2373 = vmatpush1.msra.mxu0 %v2245
        %2374 = vmatprep.subr.mxu0 %v2250
        %2375 = vmatpush1.msra.mxu0 %v2249
        %2376 = vmatprep.subr.mxu0 %v2254
        %2377 = vmatpush1.msra.mxu0 %v2253
        %2378 = vmatprep.subr.mxu0 %v2258
        %2379 = vmatpush1.msra.mxu0 %v2257
        %2380 = vmatprep.subr.mxu0 %v2262
        %2381 = vmatpush1.msra.mxu0 %v2261
        %2382 = vmatprep.subr.mxu0 %v2266
        %2383 = vmatpush1.msra.mxu0 %v2265
        %2384 = vmatprep.subr.mxu0 %v2270
        %2385 = vmatpush1.msra.mxu0 %v2269
        %2386 = vmatprep.subr.mxu0 %v2274
        %2387 = vmatpush1.msra.mxu0 %v2273
        %2388 = vmatprep.subr.mxu0 %v2278
        %2389 = vmatpush1.msra.mxu0 %v2277
        %2390 = vmatprep.subr.mxu0 %v2282
        %2391 = vmatpush1.msra.mxu0 %v2281
        %2392 = vmatprep.subr.mxu0 0.0
        %2393 = vmatpush1.msra.mxu0 0.0
        %2394 = vmatprep.subr.mxu0 0.0
        %2395 = vmatpush1.msra.mxu0 0.0
        %2396 = vmatprep.subr.mxu0 0.0
        %2397 = vmatpush1.msra.mxu0 0.0
        %2398 = vmatprep.subr.mxu0 0.0
        %2399 = vmatpush1.msra.mxu0 0.0
        %2400 = vmatprep.subr.mxu0 0.0
        %2401 = vmatpush1.msra.mxu0 0.0
        %2402 = vmatprep.subr.mxu0 0.0
        %2403 = vmatpush1.msra.mxu0 0.0
        %2404 = vmatprep.subr.mxu0 0.0
        %2405 = vmatpush1.msra.mxu0 0.0
        %2406 = vmatprep.subr.mxu0 0.0
        %2407 = vmatpush1.msra.mxu0 0.0
        %2408 = vmatprep.subr.mxu0 0.0
        %2409 = vmatpush1.msra.mxu0 0.0
        %2410 = vmatprep.subr.mxu0 0.0
        %2411 = vmatpush1.msra.mxu0 0.0
        %2412 = vmatprep.subr.mxu0 0.0
        %2413 = vmatpush1.msra.mxu0 0.0
        %2414 = vmatprep.subr.mxu0 0.0
        %2415 = vmatpush1.msra.mxu0 0.0
        %2416 = vmatprep.subr.mxu0 0.0
        %2417 = vmatpush1.msra.mxu0 0.0
        %2418 = vmatprep.subr.mxu0 0.0
        %2419 = vmatpush1.msra.mxu0 0.0
        %2420 = vmatprep.subr.mxu0 0.0
        %2421 = vmatpush1.msra.mxu0 0.0
        %2422 = vmatprep.subr.mxu0 0.0
        %2423 = vmatpush1.msra.mxu0 0.0
        %2424 = vmatprep.mubr.f32.mxu0 0.0
        %2425 = vmatmul.mubr.f32.gmra.mrb[0].mxu0 %v2124
        %v2426 = vpop.f32.mrb[0].mxu0
        %v2427 = vadd.f32 0.0, %v2426
        %v2428 = vpop.f32.mrb[0].mxu0
        %v2429 = vadd.f32 0.0, %v2428
        %2430 = vmatprep.mubr.f32.mxu0 0.0
        %2431 = vmatmul.mubr.f32.gmra.mrb[0].mxu0 %v2125
        %v2432 = vpop.f32.mrb[0].mxu0
        %v2433 = vadd.f32 0.0, %v2432
        %v2434 = vpop.f32.mrb[0].mxu0
        %v2435 = vadd.f32 0.0, %v2434
        %2436 = vdwg.mxu0
        %2437 = vmatprep.subr.mxu0 %v2155
        %2438 = vmatpush1.msra.mxu0 %v2154
        %2439 = vmatprep.subr.mxu0 %v2159
        %2440 = vmatpush1.msra.mxu0 %v2158
        %2441 = vmatprep.subr.mxu0 %v2163
        %2442 = vmatpush1.msra.mxu0 %v2162
        %2443 = vmatprep.subr.mxu0 %v2167
        %2444 = vmatpush1.msra.mxu0 %v2166
        %2445 = vmatprep.subr.mxu0 %v2171
        %2446 = vmatpush1.msra.mxu0 %v2170
        %2447 = vmatprep.subr.mxu0 %v2175
        %2448 = vmatpush1.msra.mxu0 %v2174
        %2449 = vmatprep.subr.mxu0 %v2179
        %2450 = vmatpush1.msra.mxu0 %v2178
        %2451 = vmatprep.subr.mxu0 %v2183
        %2452 = vmatpush1.msra.mxu0 %v2182
        %2453 = vmatprep.subr.mxu0 %v2187
        %2454 = vmatpush1.msra.mxu0 %v2186
        %2455 = vmatprep.subr.mxu0 %v2191
        %2456 = vmatpush1.msra.mxu0 %v2190
        %2457 = vmatprep.subr.mxu0 %v2195
        %2458 = vmatpush1.msra.mxu0 %v2194
        %2459 = vmatprep.subr.mxu0 %v2199
        %2460 = vmatpush1.msra.mxu0 %v2198
        %2461 = vmatprep.subr.mxu0 %v2203
        %2462 = vmatpush1.msra.mxu0 %v2202
        %2463 = vmatprep.subr.mxu0 %v2207
        %2464 = vmatpush1.msra.mxu0 %v2206
        %2465 = vmatprep.subr.mxu0 %v2211
        %2466 = vmatpush1.msra.mxu0 %v2210
        %2467 = vmatprep.subr.mxu0 %v2215
        %2468 = vmatpush1.msra.mxu0 %v2214
        %2469 = vmatprep.subr.mxu0 0.0
        %2470 = vmatpush1.msra.mxu0 0.0
        %2471 = vmatprep.subr.mxu0 0.0
        %2472 = vmatpush1.msra.mxu0 0.0
        %2473 = vmatprep.subr.mxu0 0.0
        %2474 = vmatpush1.msra.mxu0 0.0
        %2475 = vmatprep.subr.mxu0 0.0
        %2476 = vmatpush1.msra.mxu0 0.0
        %2477 = vmatprep.subr.mxu0 0.0
        %2478 = vmatpush1.msra.mxu0 0.0
        %2479 = vmatprep.subr.mxu0 0.0
        %2480 = vmatpush1.msra.mxu0 0.0
        %2481 = vmatprep.subr.mxu0 0.0
        %2482 = vmatpush1.msra.mxu0 0.0
        %2483 = vmatprep.subr.mxu0 0.0
        %2484 = vmatpush1.msra.mxu0 0.0
        %2485 = vmatprep.subr.mxu0 0.0
        %2486 = vmatpush1.msra.mxu0 0.0
        %2487 = vmatprep.subr.mxu0 0.0
        %2488 = vmatpush1.msra.mxu0 0.0
        %2489 = vmatprep.subr.mxu0 0.0
        %2490 = vmatpush1.msra.mxu0 0.0
        %2491 = vmatprep.subr.mxu0 0.0
        %2492 = vmatpush1.msra.mxu0 0.0
        %2493 = vmatprep.subr.mxu0 0.0
        %2494 = vmatpush1.msra.mxu0 0.0
        %2495 = vmatprep.subr.mxu0 0.0
        %2496 = vmatpush1.msra.mxu0 0.0
        %2497 = vmatprep.subr.mxu0 0.0
        %2498 = vmatpush1.msra.mxu0 0.0
        %2499 = vmatprep.subr.mxu0 0.0
        %2500 = vmatpush1.msra.mxu0 0.0
        %2501 = vmatprep.mubr.f32.mxu0 0.0
        %2502 = vmatmul.mubr.f32.gmra.mrb[0].mxu0 %v2122
        %v2503 = vpop.f32.mrb[0].mxu0
        %v2504 = vadd.f32 %v2350, %v2503
        %v2505 = vpop.f32.mrb[0].mxu0
        %v2506 = vadd.f32 %v2352, %v2505
        %2507 = vmatprep.mubr.f32.mxu0 0.0
        %2508 = vmatmul.mubr.f32.gmra.mrb[0].mxu0 %v2123
        %v2509 = vpop.f32.mrb[0].mxu0
        %v2510 = vadd.f32 %v2356, %v2509
        %v2511 = vpop.f32.mrb[0].mxu0
        %v2512 = vadd.f32 %v2358, %v2511
        %2513 = vdwg.mxu0
        %2514 = vmatprep.subr.mxu0 %v2157
        %2515 = vmatpush1.msra.mxu0 %v2156
        %2516 = vmatprep.subr.mxu0 %v2161
        %2517 = vmatpush1.msra.mxu0 %v2160
        %2518 = vmatprep.subr.mxu0 %v2165
        %2519 = vmatpush1.msra.mxu0 %v2164
        %2520 = vmatprep.subr.mxu0 %v2169
        %2521 = vmatpush1.msra.mxu0 %v2168
        %2522 = vmatprep.subr.mxu0 %v2173
        %2523 = vmatpush1.msra.mxu0 %v2172
        %2524 = vmatprep.subr.mxu0 %v2177
        %2525 = vmatpush1.msra.mxu0 %v2176
        %2526 = vmatprep.subr.mxu0 %v2181
        %2527 = vmatpush1.msra.mxu0 %v2180
        %2528 = vmatprep.subr.mxu0 %v2185
        %2529 = vmatpush1.msra.mxu0 %v2184
        %2530 = vmatprep.subr.mxu0 %v2189
        %2531 = vmatpush1.msra.mxu0 %v2188
        %2532 = vmatprep.subr.mxu0 %v2193
        %2533 = vmatpush1.msra.mxu0 %v2192
        %2534 = vmatprep.subr.mxu0 %v2197
        %2535 = vmatpush1.msra.mxu0 %v2196
        %2536 = vmatprep.subr.mxu0 %v2201
        %2537 = vmatpush1.msra.mxu0 %v2200
        %2538 = vmatprep.subr.mxu0 %v2205
        %2539 = vmatpush1.msra.mxu0 %v2204
        %2540 = vmatprep.subr.mxu0 %v2209
        %2541 = vmatpush1.msra.mxu0 %v2208
        %2542 = vmatprep.subr.mxu0 %v2213
        %2543 = vmatpush1.msra.mxu0 %v2212
        %2544 = vmatprep.subr.mxu0 %v2217
        %2545 = vmatpush1.msra.mxu0 %v2216
        %2546 = vmatprep.subr.mxu0 0.0
        %2547 = vmatpush1.msra.mxu0 0.0
        %2548 = vmatprep.subr.mxu0 0.0
        %2549 = vmatpush1.msra.mxu0 0.0
        %2550 = vmatprep.subr.mxu0 0.0
        %2551 = vmatpush1.msra.mxu0 0.0
        %2552 = vmatprep.subr.mxu0 0.0
        %2553 = vmatpush1.msra.mxu0 0.0
        %2554 = vmatprep.subr.mxu0 0.0
        %2555 = vmatpush1.msra.mxu0 0.0
        %2556 = vmatprep.subr.mxu0 0.0
        %2557 = vmatpush1.msra.mxu0 0.0
        %2558 = vmatprep.subr.mxu0 0.0
        %2559 = vmatpush1.msra.mxu0 0.0
        %2560 = vmatprep.subr.mxu0 0.0
        %2561 = vmatpush1.msra.mxu0 0.0
        %2562 = vmatprep.subr.mxu0 0.0
        %2563 = vmatpush1.msra.mxu0 0.0
        %2564 = vmatprep.subr.mxu0 0.0
        %2565 = vmatpush1.msra.mxu0 0.0
        %2566 = vmatprep.subr.mxu0 0.0
        %2567 = vmatpush1.msra.mxu0 0.0
        %2568 = vmatprep.subr.mxu0 0.0
        %2569 = vmatpush1.msra.mxu0 0.0
        %2570 = vmatprep.subr.mxu0 0.0
        %2571 = vmatpush1.msra.mxu0 0.0
        %2572 = vmatprep.subr.mxu0 0.0
        %2573 = vmatpush1.msra.mxu0 0.0
        %2574 = vmatprep.subr.mxu0 0.0
        %2575 = vmatpush1.msra.mxu0 0.0
        %2576 = vmatprep.subr.mxu0 0.0
        %2577 = vmatpush1.msra.mxu0 0.0
        %2578 = vmatprep.mubr.f32.mxu0 0.0
        %2579 = vmatmul.mubr.f32.gmra.mrb[0].mxu0 %v2122
        %v2580 = vpop.f32.mrb[0].mxu0
        %v2581 = vadd.f32 %v2427, %v2580
        %v2582 = vpop.f32.mrb[0].mxu0
        %v2583 = vadd.f32 %v2429, %v2582
        %2584 = vmatprep.mubr.f32.mxu0 0.0
        %2585 = vmatmul.mubr.f32.gmra.mrb[0].mxu0 %v2123
        %v2586 = vpop.f32.mrb[0].mxu0
        %v2587 = vadd.f32 %v2433, %v2586
        %v2588 = vpop.f32.mrb[0].mxu0
        %v2589 = vadd.f32 %v2435, %v2588
        %2590 = vdwg.mxu0
        %s2591 = scalar_lea.vmem [#allocation7], 1024
        %v2592 = vld [vmem:[%s2591] sm:$0xff]
        %v2593 = vld [vmem:[%s2591 + $0x8] sm:$0xff]
        %v2594 = vld [vmem:[%s2591 + $0x10] sm:$0xff]
        %v2595 = vld [vmem:[%s2591 + $0x18] sm:$0xff]
        %v2596 = vld [vmem:[%s2591 + $0x20] sm:$0xff]
        %v2597 = vld [vmem:[%s2591 + $0x28] sm:$0xff]
        %v2598 = vld [vmem:[%s2591 + $0x30] sm:$0xff]
        %v2599 = vld [vmem:[%s2591 + $0x38] sm:$0xff]
        %v2600 = vld [vmem:[%s2591 + $0x40] sm:$0xff]
        %v2601 = vld [vmem:[%s2591 + $0x48] sm:$0xff]
        %v2602 = vld [vmem:[%s2591 + $0x50] sm:$0xff]
        %v2603 = vld [vmem:[%s2591 + $0x58] sm:$0xff]
        %v2604 = vld [vmem:[%s2591 + $0x60] sm:$0xff]
        %v2605 = vld [vmem:[%s2591 + $0x68] sm:$0xff]
        %v2606 = vld [vmem:[%s2591 + $0x70] sm:$0xff]
        %v2607 = vld [vmem:[%s2591 + $0x78] sm:$0xff]
        %v2608 = vld [vmem:[%s2591 + $0x80] sm:$0xff]
        %v2609 = vld [vmem:[%s2591 + $0x88] sm:$0xff]
        %v2610 = vld [vmem:[%s2591 + $0x90] sm:$0xff]
        %v2611 = vld [vmem:[%s2591 + $0x98] sm:$0xff]
        %v2612 = vld [vmem:[%s2591 + $0xa0] sm:$0xff]
        %v2613 = vld [vmem:[%s2591 + $0xa8] sm:$0xff]
        %v2614 = vld [vmem:[%s2591 + $0xb0] sm:$0xff]
        %v2615 = vld [vmem:[%s2591 + $0xb8] sm:$0xff]
        %v2616 = vld [vmem:[%s2591 + $0xc0] sm:$0xff]
        %v2617 = vld [vmem:[%s2591 + $0xc8] sm:$0xff]
        %v2618 = vld [vmem:[%s2591 + $0xd0] sm:$0xff]
        %v2619 = vld [vmem:[%s2591 + $0xd8] sm:$0xff]
        %v2620 = vld [vmem:[%s2591 + $0xe0] sm:$0xff]
        %v2621 = vld [vmem:[%s2591 + $0xe8] sm:$0xff]
        %v2622 = vld [vmem:[%s2591 + $0xf0] sm:$0xff]
        %v2623 = vld [vmem:[%s2591 + $0xf8] sm:$0xff]
        %v2624 = vld [vmem:[%s2591 + $0x100] sm:$0xff]
        %v2625 = vld [vmem:[%s2591 + $0x108] sm:$0xff]
        %v2626 = vld [vmem:[%s2591 + $0x110] sm:$0xff]
        %v2627 = vld [vmem:[%s2591 + $0x118] sm:$0xff]
        %v2628 = vld [vmem:[%s2591 + $0x120] sm:$0xff]
        %v2629 = vld [vmem:[%s2591 + $0x128] sm:$0xff]
        %v2630 = vld [vmem:[%s2591 + $0x130] sm:$0xff]
        %v2631 = vld [vmem:[%s2591 + $0x138] sm:$0xff]
        %v2632 = vld [vmem:[%s2591 + $0x140] sm:$0xff]
        %v2633 = vld [vmem:[%s2591 + $0x148] sm:$0xff]
        %v2634 = vld [vmem:[%s2591 + $0x150] sm:$0xff]
        %v2635 = vld [vmem:[%s2591 + $0x158] sm:$0xff]
        %v2636 = vld [vmem:[%s2591 + $0x160] sm:$0xff]
        %v2637 = vld [vmem:[%s2591 + $0x168] sm:$0xff]
        %v2638 = vld [vmem:[%s2591 + $0x170] sm:$0xff]
        %v2639 = vld [vmem:[%s2591 + $0x178] sm:$0xff]
        %v2640 = vld [vmem:[%s2591 + $0x180] sm:$0xff]
        %v2641 = vld [vmem:[%s2591 + $0x188] sm:$0xff]
        %v2642 = vld [vmem:[%s2591 + $0x190] sm:$0xff]
        %v2643 = vld [vmem:[%s2591 + $0x198] sm:$0xff]
        %v2644 = vld [vmem:[%s2591 + $0x1a0] sm:$0xff]
        %v2645 = vld [vmem:[%s2591 + $0x1a8] sm:$0xff]
        %v2646 = vld [vmem:[%s2591 + $0x1b0] sm:$0xff]
        %v2647 = vld [vmem:[%s2591 + $0x1b8] sm:$0xff]
        %v2648 = vld [vmem:[%s2591 + $0x1c0] sm:$0xff]
        %v2649 = vld [vmem:[%s2591 + $0x1c8] sm:$0xff]
        %v2650 = vld [vmem:[%s2591 + $0x1d0] sm:$0xff]
        %v2651 = vld [vmem:[%s2591 + $0x1d8] sm:$0xff]
        %v2652 = vld [vmem:[%s2591 + $0x1e0] sm:$0xff]
        %v2653 = vld [vmem:[%s2591 + $0x1e8] sm:$0xff]
        %v2654 = vld [vmem:[%s2591 + $0x1f0] sm:$0xff]
        %v2655 = vld [vmem:[%s2591 + $0x1f8] sm:$0xff]
        %2656 = vmatprep.subr.mxu0 %v2593
        %2657 = vmatpush1.msra.mxu0 %v2592
        %2658 = vmatprep.subr.mxu0 %v2597
        %2659 = vmatpush1.msra.mxu0 %v2596
        %2660 = vmatprep.subr.mxu0 %v2601
        %2661 = vmatpush1.msra.mxu0 %v2600
        %2662 = vmatprep.subr.mxu0 %v2605
        %2663 = vmatpush1.msra.mxu0 %v2604
        %2664 = vmatprep.subr.mxu0 %v2609
        %2665 = vmatpush1.msra.mxu0 %v2608
        %2666 = vmatprep.subr.mxu0 %v2613
        %2667 = vmatpush1.msra.mxu0 %v2612
        %2668 = vmatprep.subr.mxu0 %v2617
        %2669 = vmatpush1.msra.mxu0 %v2616
        %2670 = vmatprep.subr.mxu0 %v2621
        %2671 = vmatpush1.msra.mxu0 %v2620
        %2672 = vmatprep.subr.mxu0 %v2625
        %2673 = vmatpush1.msra.mxu0 %v2624
        %2674 = vmatprep.subr.mxu0 %v2629
        %2675 = vmatpush1.msra.mxu0 %v2628
        %2676 = vmatprep.subr.mxu0 %v2633
        %2677 = vmatpush1.msra.mxu0 %v2632
        %2678 = vmatprep.subr.mxu0 %v2637
        %2679 = vmatpush1.msra.mxu0 %v2636
        %2680 = vmatprep.subr.mxu0 %v2641
        %2681 = vmatpush1.msra.mxu0 %v2640
        %2682 = vmatprep.subr.mxu0 %v2645
        %2683 = vmatpush1.msra.mxu0 %v2644
        %2684 = vmatprep.subr.mxu0 %v2649
        %2685 = vmatpush1.msra.mxu0 %v2648
        %2686 = vmatprep.subr.mxu0 %v2653
        %2687 = vmatpush1.msra.mxu0 %v2652
        %2688 = vmatprep.subr.mxu0 0.0
        %2689 = vmatpush1.msra.mxu0 0.0
        %2690 = vmatprep.subr.mxu0 0.0
        %2691 = vmatpush1.msra.mxu0 0.0
        %2692 = vmatprep.subr.mxu0 0.0
        %2693 = vmatpush1.msra.mxu0 0.0
        %2694 = vmatprep.subr.mxu0 0.0
        %2695 = vmatpush1.msra.mxu0 0.0
        %2696 = vmatprep.subr.mxu0 0.0
        %2697 = vmatpush1.msra.mxu0 0.0
        %2698 = vmatprep.subr.mxu0 0.0
        %2699 = vmatpush1.msra.mxu0 0.0
        %2700 = vmatprep.subr.mxu0 0.0
        %2701 = vmatpush1.msra.mxu0 0.0
        %2702 = vmatprep.subr.mxu0 0.0
        %2703 = vmatpush1.msra.mxu0 0.0
        %2704 = vmatprep.subr.mxu0 0.0
        %2705 = vmatpush1.msra.mxu0 0.0
        %2706 = vmatprep.subr.mxu0 0.0
        %2707 = vmatpush1.msra.mxu0 0.0
        %2708 = vmatprep.subr.mxu0 0.0
        %2709 = vmatpush1.msra.mxu0 0.0
        %2710 = vmatprep.subr.mxu0 0.0
        %2711 = vmatpush1.msra.mxu0 0.0
        %2712 = vmatprep.subr.mxu0 0.0
        %2713 = vmatpush1.msra.mxu0 0.0
        %2714 = vmatprep.subr.mxu0 0.0
        %2715 = vmatpush1.msra.mxu0 0.0
        %2716 = vmatprep.subr.mxu0 0.0
        %2717 = vmatpush1.msra.mxu0 0.0
        %2718 = vmatprep.subr.mxu0 0.0
        %2719 = vmatpush1.msra.mxu0 0.0
        %2720 = vmatprep.mubr.f32.mxu0 0.0
        %2721 = vmatmul.mubr.f32.gmra.mrb[0].mxu0 %v2126
        %v2722 = vpop.f32.mrb[0].mxu0
        %v2723 = vadd.f32 0.0, %v2722
        %v2724 = vpop.f32.mrb[0].mxu0
        %v2725 = vadd.f32 0.0, %v2724
        %2726 = vmatprep.mubr.f32.mxu0 0.0
        %2727 = vmatmul.mubr.f32.gmra.mrb[0].mxu0 %v2127
        %v2728 = vpop.f32.mrb[0].mxu0
        %v2729 = vadd.f32 0.0, %v2728
        %v2730 = vpop.f32.mrb[0].mxu0
        %v2731 = vadd.f32 0.0, %v2730
        %2732 = vdwg.mxu0
        %2733 = vmatprep.subr.mxu0 %v2595
        %2734 = vmatpush1.msra.mxu0 %v2594
        %2735 = vmatprep.subr.mxu0 %v2599
        %2736 = vmatpush1.msra.mxu0 %v2598
        %2737 = vmatprep.subr.mxu0 %v2603
        %2738 = vmatpush1.msra.mxu0 %v2602
        %2739 = vmatprep.subr.mxu0 %v2607
        %2740 = vmatpush1.msra.mxu0 %v2606
        %2741 = vmatprep.subr.mxu0 %v2611
        %2742 = vmatpush1.msra.mxu0 %v2610
        %2743 = vmatprep.subr.mxu0 %v2615
        %2744 = vmatpush1.msra.mxu0 %v2614
        %2745 = vmatprep.subr.mxu0 %v2619
        %2746 = vmatpush1.msra.mxu0 %v2618
        %2747 = vmatprep.subr.mxu0 %v2623
        %2748 = vmatpush1.msra.mxu0 %v2622
        %2749 = vmatprep.subr.mxu0 %v2627
        %2750 = vmatpush1.msra.mxu0 %v2626
        %2751 = vmatprep.subr.mxu0 %v2631
        %2752 = vmatpush1.msra.mxu0 %v2630
        %2753 = vmatprep.subr.mxu0 %v2635
        %2754 = vmatpush1.msra.mxu0 %v2634
        %2755 = vmatprep.subr.mxu0 %v2639
        %2756 = vmatpush1.msra.mxu0 %v2638
        %2757 = vmatprep.subr.mxu0 %v2643
        %2758 = vmatpush1.msra.mxu0 %v2642
        %2759 = vmatprep.subr.mxu0 %v2647
        %2760 = vmatpush1.msra.mxu0 %v2646
        %2761 = vmatprep.subr.mxu0 %v2651
        %2762 = vmatpush1.msra.mxu0 %v2650
        %2763 = vmatprep.subr.mxu0 %v2655
        %2764 = vmatpush1.msra.mxu0 %v2654
        %2765 = vmatprep.subr.mxu0 0.0
        %2766 = vmatpush1.msra.mxu0 0.0
        %2767 = vmatprep.subr.mxu0 0.0
        %2768 = vmatpush1.msra.mxu0 0.0
        %2769 = vmatprep.subr.mxu0 0.0
        %2770 = vmatpush1.msra.mxu0 0.0
        %2771 = vmatprep.subr.mxu0 0.0
        %2772 = vmatpush1.msra.mxu0 0.0
        %2773 = vmatprep.subr.mxu0 0.0
        %2774 = vmatpush1.msra.mxu0 0.0
        %2775 = vmatprep.subr.mxu0 0.0
        %2776 = vmatpush1.msra.mxu0 0.0
        %2777 = vmatprep.subr.mxu0 0.0
        %2778 = vmatpush1.msra.mxu0 0.0
        %2779 = vmatprep.subr.mxu0 0.0
        %2780 = vmatpush1.msra.mxu0 0.0
        %2781 = vmatprep.subr.mxu0 0.0
        %2782 = vmatpush1.msra.mxu0 0.0
        %2783 = vmatprep.subr.mxu0 0.0
        %2784 = vmatpush1.msra.mxu0 0.0
        %2785 = vmatprep.subr.mxu0 0.0
        %2786 = vmatpush1.msra.mxu0 0.0
        %2787 = vmatprep.subr.mxu0 0.0
        %2788 = vmatpush1.msra.mxu0 0.0
        %2789 = vmatprep.subr.mxu0 0.0
        %2790 = vmatpush1.msra.mxu0 0.0
        %2791 = vmatprep.subr.mxu0 0.0
        %2792 = vmatpush1.msra.mxu0 0.0
        %2793 = vmatprep.subr.mxu0 0.0
        %2794 = vmatpush1.msra.mxu0 0.0
        %2795 = vmatprep.subr.mxu0 0.0
        %2796 = vmatpush1.msra.mxu0 0.0
        %2797 = vmatprep.mubr.f32.mxu0 0.0
        %2798 = vmatmul.mubr.f32.gmra.mrb[0].mxu0 %v2126
        %v2799 = vpop.f32.mrb[0].mxu0
        %v2800 = vadd.f32 0.0, %v2799
        %v2801 = vpop.f32.mrb[0].mxu0
        %v2802 = vadd.f32 0.0, %v2801
        %2803 = vmatprep.mubr.f32.mxu0 0.0
        %2804 = vmatmul.mubr.f32.gmra.mrb[0].mxu0 %v2127
        %v2805 = vpop.f32.mrb[0].mxu0
        %v2806 = vadd.f32 0.0, %v2805
        %v2807 = vpop.f32.mrb[0].mxu0
        %v2808 = vadd.f32 0.0, %v2807
        %2809 = vdwg.mxu0
        %v2810 = vadd.f32 %v2504, %v2723
        %v2811 = vadd.f32 %v2506, %v2725
        %v2812 = vadd.f32 %v2581, %v2800
        %v2813 = vadd.f32 %v2583, %v2802
        %v2814 = vadd.f32 %v2510, %v2729
        %v2815 = vadd.f32 %v2512, %v2731
        %v2816 = vadd.f32 %v2587, %v2806
        %v2817 = vadd.f32 %v2589, %v2808
        %s2818 = scalar_lea.vmem [#allocation7], 1536
        %v2819 = vld [vmem:[%s2818] sm:$0xff]
        %v2820 = vld [vmem:[%s2818 + $0x8] sm:$0xff]
        %v2821 = vld [vmem:[%s2818 + $0x10] sm:$0xff]
        %v2822 = vld [vmem:[%s2818 + $0x18] sm:$0xff]
        %v2823 = vld [vmem:[%s2818 + $0x20] sm:$0xff]
        %v2824 = vld [vmem:[%s2818 + $0x28] sm:$0xff]
        %v2825 = vld [vmem:[%s2818 + $0x30] sm:$0xff]
        %v2826 = vld [vmem:[%s2818 + $0x38] sm:$0xff]
        %v2827 = vld [vmem:[%s2818 + $0x40] sm:$0xff]
        %v2828 = vld [vmem:[%s2818 + $0x48] sm:$0xff]
        %v2829 = vld [vmem:[%s2818 + $0x50] sm:$0xff]
        %v2830 = vld [vmem:[%s2818 + $0x58] sm:$0xff]
        %v2831 = vld [vmem:[%s2818 + $0x60] sm:$0xff]
        %v2832 = vld [vmem:[%s2818 + $0x68] sm:$0xff]
        %v2833 = vld [vmem:[%s2818 + $0x70] sm:$0xff]
        %v2834 = vld [vmem:[%s2818 + $0x78] sm:$0xff]
        %v2835 = vld [vmem:[%s2818 + $0x80] sm:$0xff]
        %v2836 = vld [vmem:[%s2818 + $0x88] sm:$0xff]
        %v2837 = vld [vmem:[%s2818 + $0x90] sm:$0xff]
        %v2838 = vld [vmem:[%s2818 + $0x98] sm:$0xff]
        %v2839 = vld [vmem:[%s2818 + $0xa0] sm:$0xff]
        %v2840 = vld [vmem:[%s2818 + $0xa8] sm:$0xff]
        %v2841 = vld [vmem:[%s2818 + $0xb0] sm:$0xff]
        %v2842 = vld [vmem:[%s2818 + $0xb8] sm:$0xff]
        %v2843 = vld [vmem:[%s2818 + $0xc0] sm:$0xff]
        %v2844 = vld [vmem:[%s2818 + $0xc8] sm:$0xff]
        %v2845 = vld [vmem:[%s2818 + $0xd0] sm:$0xff]
        %v2846 = vld [vmem:[%s2818 + $0xd8] sm:$0xff]
        %v2847 = vld [vmem:[%s2818 + $0xe0] sm:$0xff]
        %v2848 = vld [vmem:[%s2818 + $0xe8] sm:$0xff]
        %v2849 = vld [vmem:[%s2818 + $0xf0] sm:$0xff]
        %v2850 = vld [vmem:[%s2818 + $0xf8] sm:$0xff]
        %v2851 = vld [vmem:[%s2818 + $0x100] sm:$0xff]
        %v2852 = vld [vmem:[%s2818 + $0x108] sm:$0xff]
        %v2853 = vld [vmem:[%s2818 + $0x110] sm:$0xff]
        %v2854 = vld [vmem:[%s2818 + $0x118] sm:$0xff]
        %v2855 = vld [vmem:[%s2818 + $0x120] sm:$0xff]
        %v2856 = vld [vmem:[%s2818 + $0x128] sm:$0xff]
        %v2857 = vld [vmem:[%s2818 + $0x130] sm:$0xff]
        %v2858 = vld [vmem:[%s2818 + $0x138] sm:$0xff]
        %v2859 = vld [vmem:[%s2818 + $0x140] sm:$0xff]
        %v2860 = vld [vmem:[%s2818 + $0x148] sm:$0xff]
        %v2861 = vld [vmem:[%s2818 + $0x150] sm:$0xff]
        %v2862 = vld [vmem:[%s2818 + $0x158] sm:$0xff]
        %v2863 = vld [vmem:[%s2818 + $0x160] sm:$0xff]
        %v2864 = vld [vmem:[%s2818 + $0x168] sm:$0xff]
        %v2865 = vld [vmem:[%s2818 + $0x170] sm:$0xff]
        %v2866 = vld [vmem:[%s2818 + $0x178] sm:$0xff]
        %v2867 = vld [vmem:[%s2818 + $0x180] sm:$0xff]
        %v2868 = vld [vmem:[%s2818 + $0x188] sm:$0xff]
        %v2869 = vld [vmem:[%s2818 + $0x190] sm:$0xff]
        %v2870 = vld [vmem:[%s2818 + $0x198] sm:$0xff]
        %v2871 = vld [vmem:[%s2818 + $0x1a0] sm:$0xff]
        %v2872 = vld [vmem:[%s2818 + $0x1a8] sm:$0xff]
        %v2873 = vld [vmem:[%s2818 + $0x1b0] sm:$0xff]
        %v2874 = vld [vmem:[%s2818 + $0x1b8] sm:$0xff]
        %v2875 = vld [vmem:[%s2818 + $0x1c0] sm:$0xff]
        %v2876 = vld [vmem:[%s2818 + $0x1c8] sm:$0xff]
        %v2877 = vld [vmem:[%s2818 + $0x1d0] sm:$0xff]
        %v2878 = vld [vmem:[%s2818 + $0x1d8] sm:$0xff]
        %v2879 = vld [vmem:[%s2818 + $0x1e0] sm:$0xff]
        %v2880 = vld [vmem:[%s2818 + $0x1e8] sm:$0xff]
        %v2881 = vld [vmem:[%s2818 + $0x1f0] sm:$0xff]
        %v2882 = vld [vmem:[%s2818 + $0x1f8] sm:$0xff]
        %2883 = vmatprep.subr.mxu0 %v2820
        %2884 = vmatpush1.msra.mxu0 %v2819
        %2885 = vmatprep.subr.mxu0 %v2824
        %2886 = vmatpush1.msra.mxu0 %v2823
        %2887 = vmatprep.subr.mxu0 %v2828
        %2888 = vmatpush1.msra.mxu0 %v2827
        %2889 = vmatprep.subr.mxu0 %v2832
        %2890 = vmatpush1.msra.mxu0 %v2831
        %2891 = vmatprep.subr.mxu0 %v2836
        %2892 = vmatpush1.msra.mxu0 %v2835
        %2893 = vmatprep.subr.mxu0 %v2840
        %2894 = vmatpush1.msra.mxu0 %v2839
        %2895 = vmatprep.subr.mxu0 %v2844
        %2896 = vmatpush1.msra.mxu0 %v2843
        %2897 = vmatprep.subr.mxu0 %v2848
        %2898 = vmatpush1.msra.mxu0 %v2847
        %2899 = vmatprep.subr.mxu0 %v2852
        %2900 = vmatpush1.msra.mxu0 %v2851
        %2901 = vmatprep.subr.mxu0 %v2856
        %2902 = vmatpush1.msra.mxu0 %v2855
        %2903 = vmatprep.subr.mxu0 %v2860
        %2904 = vmatpush1.msra.mxu0 %v2859
        %2905 = vmatprep.subr.mxu0 %v2864
        %2906 = vmatpush1.msra.mxu0 %v2863
        %2907 = vmatprep.subr.mxu0 %v2868
        %2908 = vmatpush1.msra.mxu0 %v2867
        %2909 = vmatprep.subr.mxu0 %v2872
        %2910 = vmatpush1.msra.mxu0 %v2871
        %2911 = vmatprep.subr.mxu0 %v2876
        %2912 = vmatpush1.msra.mxu0 %v2875
        %2913 = vmatprep.subr.mxu0 %v2880
        %2914 = vmatpush1.msra.mxu0 %v2879
        %2915 = vmatprep.subr.mxu0 0.0
        %2916 = vmatpush1.msra.mxu0 0.0
        %2917 = vmatprep.subr.mxu0 0.0
        %2918 = vmatpush1.msra.mxu0 0.0
        %2919 = vmatprep.subr.mxu0 0.0
        %2920 = vmatpush1.msra.mxu0 0.0
        %2921 = vmatprep.subr.mxu0 0.0
        %2922 = vmatpush1.msra.mxu0 0.0
        %2923 = vmatprep.subr.mxu0 0.0
        %2924 = vmatpush1.msra.mxu0 0.0
        %2925 = vmatprep.subr.mxu0 0.0
        %2926 = vmatpush1.msra.mxu0 0.0
        %2927 = vmatprep.subr.mxu0 0.0
        %2928 = vmatpush1.msra.mxu0 0.0
        %2929 = vmatprep.subr.mxu0 0.0
        %2930 = vmatpush1.msra.mxu0 0.0
        %2931 = vmatprep.subr.mxu0 0.0
        %2932 = vmatpush1.msra.mxu0 0.0
        %2933 = vmatprep.subr.mxu0 0.0
        %2934 = vmatpush1.msra.mxu0 0.0
        %2935 = vmatprep.subr.mxu0 0.0
        %2936 = vmatpush1.msra.mxu0 0.0
        %2937 = vmatprep.subr.mxu0 0.0
        %2938 = vmatpush1.msra.mxu0 0.0
        %2939 = vmatprep.subr.mxu0 0.0
        %2940 = vmatpush1.msra.mxu0 0.0
        %2941 = vmatprep.subr.mxu0 0.0
        %2942 = vmatpush1.msra.mxu0 0.0
        %2943 = vmatprep.subr.mxu0 0.0
        %2944 = vmatpush1.msra.mxu0 0.0
        %2945 = vmatprep.subr.mxu0 0.0
        %2946 = vmatpush1.msra.mxu0 0.0
        %2947 = vmatprep.mubr.f32.mxu0 0.0
        %2948 = vmatmul.mubr.f32.gmra.mrb[0].mxu0 %v2128
        %v2949 = vpop.f32.mrb[0].mxu0
        %v2950 = vadd.f32 0.0, %v2949
        %v2951 = vpop.f32.mrb[0].mxu0
        %v2952 = vadd.f32 0.0, %v2951
        %2953 = vmatprep.mubr.f32.mxu0 0.0
        %2954 = vmatmul.mubr.f32.gmra.mrb[0].mxu0 %v2129
        %v2955 = vpop.f32.mrb[0].mxu0
        %v2956 = vadd.f32 0.0, %v2955
        %v2957 = vpop.f32.mrb[0].mxu0
        %v2958 = vadd.f32 0.0, %v2957
        %2959 = vdwg.mxu0
        %2960 = vmatprep.subr.mxu0 %v2822
        %2961 = vmatpush1.msra.mxu0 %v2821
        %2962 = vmatprep.subr.mxu0 %v2826
        %2963 = vmatpush1.msra.mxu0 %v2825
        %2964 = vmatprep.subr.mxu0 %v2830
        %2965 = vmatpush1.msra.mxu0 %v2829
        %2966 = vmatprep.subr.mxu0 %v2834
        %2967 = vmatpush1.msra.mxu0 %v2833
        %2968 = vmatprep.subr.mxu0 %v2838
        %2969 = vmatpush1.msra.mxu0 %v2837
        %2970 = vmatprep.subr.mxu0 %v2842
        %2971 = vmatpush1.msra.mxu0 %v2841
        %2972 = vmatprep.subr.mxu0 %v2846
        %2973 = vmatpush1.msra.mxu0 %v2845
        %2974 = vmatprep.subr.mxu0 %v2850
        %2975 = vmatpush1.msra.mxu0 %v2849
        %2976 = vmatprep.subr.mxu0 %v2854
        %2977 = vmatpush1.msra.mxu0 %v2853
        %2978 = vmatprep.subr.mxu0 %v2858
        %2979 = vmatpush1.msra.mxu0 %v2857
        %2980 = vmatprep.subr.mxu0 %v2862
        %2981 = vmatpush1.msra.mxu0 %v2861
        %2982 = vmatprep.subr.mxu0 %v2866
        %2983 = vmatpush1.msra.mxu0 %v2865
        %2984 = vmatprep.subr.mxu0 %v2870
        %2985 = vmatpush1.msra.mxu0 %v2869
        %2986 = vmatprep.subr.mxu0 %v2874
        %2987 = vmatpush1.msra.mxu0 %v2873
        %2988 = vmatprep.subr.mxu0 %v2878
        %2989 = vmatpush1.msra.mxu0 %v2877
        %2990 = vmatprep.subr.mxu0 %v2882
        %2991 = vmatpush1.msra.mxu0 %v2881
        %2992 = vmatprep.subr.mxu0 0.0
        %2993 = vmatpush1.msra.mxu0 0.0
        %2994 = vmatprep.subr.mxu0 0.0
        %2995 = vmatpush1.msra.mxu0 0.0
        %2996 = vmatprep.subr.mxu0 0.0
        %2997 = vmatpush1.msra.mxu0 0.0
        %2998 = vmatprep.subr.mxu0 0.0
        %2999 = vmatpush1.msra.mxu0 0.0
        %3000 = vmatprep.subr.mxu0 0.0
        %3001 = vmatpush1.msra.mxu0 0.0
        %3002 = vmatprep.subr.mxu0 0.0
        %3003 = vmatpush1.msra.mxu0 0.0
        %3004 = vmatprep.subr.mxu0 0.0
        %3005 = vmatpush1.msra.mxu0 0.0
        %3006 = vmatprep.subr.mxu0 0.0
        %3007 = vmatpush1.msra.mxu0 0.0
        %3008 = vmatprep.subr.mxu0 0.0
        %3009 = vmatpush1.msra.mxu0 0.0
        %3010 = vmatprep.subr.mxu0 0.0
        %3011 = vmatpush1.msra.mxu0 0.0
        %3012 = vmatprep.subr.mxu0 0.0
        %3013 = vmatpush1.msra.mxu0 0.0
        %3014 = vmatprep.subr.mxu0 0.0
        %3015 = vmatpush1.msra.mxu0 0.0
        %3016 = vmatprep.subr.mxu0 0.0
        %3017 = vmatpush1.msra.mxu0 0.0
        %3018 = vmatprep.subr.mxu0 0.0
        %3019 = vmatpush1.msra.mxu0 0.0
        %3020 = vmatprep.subr.mxu0 0.0
        %3021 = vmatpush1.msra.mxu0 0.0
        %3022 = vmatprep.subr.mxu0 0.0
        %3023 = vmatpush1.msra.mxu0 0.0
        %3024 = vmatprep.mubr.f32.mxu0 0.0
        %3025 = vmatmul.mubr.f32.gmra.mrb[0].mxu0 %v2128
        %v3026 = vpop.f32.mrb[0].mxu0
        %v3027 = vadd.f32 0.0, %v3026
        %v3028 = vpop.f32.mrb[0].mxu0
        %v3029 = vadd.f32 0.0, %v3028
        %3030 = vmatprep.mubr.f32.mxu0 0.0
        %3031 = vmatmul.mubr.f32.gmra.mrb[0].mxu0 %v2129
        %v3032 = vpop.f32.mrb[0].mxu0
        %v3033 = vadd.f32 0.0, %v3032
        %v3034 = vpop.f32.mrb[0].mxu0
        %v3035 = vadd.f32 0.0, %v3034
        %3036 = vdwg.mxu0
        %v3037 = vadd.f32 %v2810, %v2950
        %v3038 = vadd.f32 %v2811, %v2952
        %v3039 = vadd.f32 %v2812, %v3027
        %v3040 = vadd.f32 %v2813, %v3029
        %v3041 = vadd.f32 %v2814, %v2956
        %v3042 = vadd.f32 %v2815, %v2958
        %v3043 = vadd.f32 %v2816, %v3033
        %v3044 = vadd.f32 %v2817, %v3035
        %s3045 = scalar_lea.vmem [#allocation7], 2048
        %v3046 = vld [vmem:[%s3045] sm:$0xff]
        %v3047 = vld [vmem:[%s3045 + $0x8] sm:$0xff]
        %v3048 = vld [vmem:[%s3045 + $0x10] sm:$0xff]
        %v3049 = vld [vmem:[%s3045 + $0x18] sm:$0xff]
        %v3050 = vld [vmem:[%s3045 + $0x20] sm:$0xff]
        %v3051 = vld [vmem:[%s3045 + $0x28] sm:$0xff]
        %v3052 = vld [vmem:[%s3045 + $0x30] sm:$0xff]
        %v3053 = vld [vmem:[%s3045 + $0x38] sm:$0xff]
        %v3054 = vld [vmem:[%s3045 + $0x40] sm:$0xff]
        %v3055 = vld [vmem:[%s3045 + $0x48] sm:$0xff]
        %v3056 = vld [vmem:[%s3045 + $0x50] sm:$0xff]
        %v3057 = vld [vmem:[%s3045 + $0x58] sm:$0xff]
        %v3058 = vld [vmem:[%s3045 + $0x60] sm:$0xff]
        %v3059 = vld [vmem:[%s3045 + $0x68] sm:$0xff]
        %v3060 = vld [vmem:[%s3045 + $0x70] sm:$0xff]
        %v3061 = vld [vmem:[%s3045 + $0x78] sm:$0xff]
        %v3062 = vld [vmem:[%s3045 + $0x80] sm:$0xff]
        %v3063 = vld [vmem:[%s3045 + $0x88] sm:$0xff]
        %v3064 = vld [vmem:[%s3045 + $0x90] sm:$0xff]
        %v3065 = vld [vmem:[%s3045 + $0x98] sm:$0xff]
        %v3066 = vld [vmem:[%s3045 + $0xa0] sm:$0xff]
        %v3067 = vld [vmem:[%s3045 + $0xa8] sm:$0xff]
        %v3068 = vld [vmem:[%s3045 + $0xb0] sm:$0xff]
        %v3069 = vld [vmem:[%s3045 + $0xb8] sm:$0xff]
        %v3070 = vld [vmem:[%s3045 + $0xc0] sm:$0xff]
        %v3071 = vld [vmem:[%s3045 + $0xc8] sm:$0xff]
        %v3072 = vld [vmem:[%s3045 + $0xd0] sm:$0xff]
        %v3073 = vld [vmem:[%s3045 + $0xd8] sm:$0xff]
        %v3074 = vld [vmem:[%s3045 + $0xe0] sm:$0xff]
        %v3075 = vld [vmem:[%s3045 + $0xe8] sm:$0xff]
        %v3076 = vld [vmem:[%s3045 + $0xf0] sm:$0xff]
        %v3077 = vld [vmem:[%s3045 + $0xf8] sm:$0xff]
        %v3078 = vld [vmem:[%s3045 + $0x100] sm:$0xff]
        %v3079 = vld [vmem:[%s3045 + $0x108] sm:$0xff]
        %v3080 = vld [vmem:[%s3045 + $0x110] sm:$0xff]
        %v3081 = vld [vmem:[%s3045 + $0x118] sm:$0xff]
        %v3082 = vld [vmem:[%s3045 + $0x120] sm:$0xff]
        %v3083 = vld [vmem:[%s3045 + $0x128] sm:$0xff]
        %v3084 = vld [vmem:[%s3045 + $0x130] sm:$0xff]
        %v3085 = vld [vmem:[%s3045 + $0x138] sm:$0xff]
        %v3086 = vld [vmem:[%s3045 + $0x140] sm:$0xff]
        %v3087 = vld [vmem:[%s3045 + $0x148] sm:$0xff]
        %v3088 = vld [vmem:[%s3045 + $0x150] sm:$0xff]
        %v3089 = vld [vmem:[%s3045 + $0x158] sm:$0xff]
        %v3090 = vld [vmem:[%s3045 + $0x160] sm:$0xff]
        %v3091 = vld [vmem:[%s3045 + $0x168] sm:$0xff]
        %v3092 = vld [vmem:[%s3045 + $0x170] sm:$0xff]
        %v3093 = vld [vmem:[%s3045 + $0x178] sm:$0xff]
        %v3094 = vld [vmem:[%s3045 + $0x180] sm:$0xff]
        %v3095 = vld [vmem:[%s3045 + $0x188] sm:$0xff]
        %v3096 = vld [vmem:[%s3045 + $0x190] sm:$0xff]
        %v3097 = vld [vmem:[%s3045 + $0x198] sm:$0xff]
        %v3098 = vld [vmem:[%s3045 + $0x1a0] sm:$0xff]
        %v3099 = vld [vmem:[%s3045 + $0x1a8] sm:$0xff]
        %v3100 = vld [vmem:[%s3045 + $0x1b0] sm:$0xff]
        %v3101 = vld [vmem:[%s3045 + $0x1b8] sm:$0xff]
        %v3102 = vld [vmem:[%s3045 + $0x1c0] sm:$0xff]
        %v3103 = vld [vmem:[%s3045 + $0x1c8] sm:$0xff]
        %v3104 = vld [vmem:[%s3045 + $0x1d0] sm:$0xff]
        %v3105 = vld [vmem:[%s3045 + $0x1d8] sm:$0xff]
        %v3106 = vld [vmem:[%s3045 + $0x1e0] sm:$0xff]
        %v3107 = vld [vmem:[%s3045 + $0x1e8] sm:$0xff]
        %v3108 = vld [vmem:[%s3045 + $0x1f0] sm:$0xff]
        %v3109 = vld [vmem:[%s3045 + $0x1f8] sm:$0xff]
        %3110 = vmatprep.subr.mxu0 %v3047
        %3111 = vmatpush1.msra.mxu0 %v3046
        %3112 = vmatprep.subr.mxu0 %v3051
        %3113 = vmatpush1.msra.mxu0 %v3050
        %3114 = vmatprep.subr.mxu0 %v3055
        %3115 = vmatpush1.msra.mxu0 %v3054
        %3116 = vmatprep.subr.mxu0 %v3059
        %3117 = vmatpush1.msra.mxu0 %v3058
        %3118 = vmatprep.subr.mxu0 %v3063
        %3119 = vmatpush1.msra.mxu0 %v3062
        %3120 = vmatprep.subr.mxu0 %v3067
        %3121 = vmatpush1.msra.mxu0 %v3066
        %3122 = vmatprep.subr.mxu0 %v3071
        %3123 = vmatpush1.msra.mxu0 %v3070
        %3124 = vmatprep.subr.mxu0 %v3075
        %3125 = vmatpush1.msra.mxu0 %v3074
        %3126 = vmatprep.subr.mxu0 %v3079
        %3127 = vmatpush1.msra.mxu0 %v3078
        %3128 = vmatprep.subr.mxu0 %v3083
        %3129 = vmatpush1.msra.mxu0 %v3082
        %3130 = vmatprep.subr.mxu0 %v3087
        %3131 = vmatpush1.msra.mxu0 %v3086
        %3132 = vmatprep.subr.mxu0 %v3091
        %3133 = vmatpush1.msra.mxu0 %v3090
        %3134 = vmatprep.subr.mxu0 %v3095
        %3135 = vmatpush1.msra.mxu0 %v3094
        %3136 = vmatprep.subr.mxu0 %v3099
        %3137 = vmatpush1.msra.mxu0 %v3098
        %3138 = vmatprep.subr.mxu0 %v3103
        %3139 = vmatpush1.msra.mxu0 %v3102
        %3140 = vmatprep.subr.mxu0 %v3107
        %3141 = vmatpush1.msra.mxu0 %v3106
        %3142 = vmatprep.subr.mxu0 0.0
        %3143 = vmatpush1.msra.mxu0 0.0
        %3144 = vmatprep.subr.mxu0 0.0
        %3145 = vmatpush1.msra.mxu0 0.0
        %3146 = vmatprep.subr.mxu0 0.0
        %3147 = vmatpush1.msra.mxu0 0.0
        %3148 = vmatprep.subr.mxu0 0.0
        %3149 = vmatpush1.msra.mxu0 0.0
        %3150 = vmatprep.subr.mxu0 0.0
        %3151 = vmatpush1.msra.mxu0 0.0
        %3152 = vmatprep.subr.mxu0 0.0
        %3153 = vmatpush1.msra.mxu0 0.0
        %3154 = vmatprep.subr.mxu0 0.0
        %3155 = vmatpush1.msra.mxu0 0.0
        %3156 = vmatprep.subr.mxu0 0.0
        %3157 = vmatpush1.msra.mxu0 0.0
        %3158 = vmatprep.subr.mxu0 0.0
        %3159 = vmatpush1.msra.mxu0 0.0
        %3160 = vmatprep.subr.mxu0 0.0
        %3161 = vmatpush1.msra.mxu0 0.0
        %3162 = vmatprep.subr.mxu0 0.0
        %3163 = vmatpush1.msra.mxu0 0.0
        %3164 = vmatprep.subr.mxu0 0.0
        %3165 = vmatpush1.msra.mxu0 0.0
        %3166 = vmatprep.subr.mxu0 0.0
        %3167 = vmatpush1.msra.mxu0 0.0
        %3168 = vmatprep.subr.mxu0 0.0
        %3169 = vmatpush1.msra.mxu0 0.0
        %3170 = vmatprep.subr.mxu0 0.0
        %3171 = vmatpush1.msra.mxu0 0.0
        %3172 = vmatprep.subr.mxu0 0.0
        %3173 = vmatpush1.msra.mxu0 0.0
        %3174 = vmatprep.mubr.f32.mxu0 0.0
        %3175 = vmatmul.mubr.f32.gmra.mrb[0].mxu0 %v2130
        %v3176 = vpop.f32.mrb[0].mxu0
        %v3177 = vadd.f32 0.0, %v3176
        %v3178 = vpop.f32.mrb[0].mxu0
        %v3179 = vadd.f32 0.0, %v3178
        %3180 = vmatprep.mubr.f32.mxu0 0.0
        %3181 = vmatmul.mubr.f32.gmra.mrb[0].mxu0 %v2131
        %v3182 = vpop.f32.mrb[0].mxu0
        %v3183 = vadd.f32 0.0, %v3182
        %v3184 = vpop.f32.mrb[0].mxu0
        %v3185 = vadd.f32 0.0, %v3184
        %3186 = vdwg.mxu0
        %3187 = vmatprep.subr.mxu0 %v3049
        %3188 = vmatpush1.msra.mxu0 %v3048
        %3189 = vmatprep.subr.mxu0 %v3053
        %3190 = vmatpush1.msra.mxu0 %v3052
        %3191 = vmatprep.subr.mxu0 %v3057
        %3192 = vmatpush1.msra.mxu0 %v3056
        %3193 = vmatprep.subr.mxu0 %v3061
        %3194 = vmatpush1.msra.mxu0 %v3060
        %3195 = vmatprep.subr.mxu0 %v3065
        %3196 = vmatpush1.msra.mxu0 %v3064
        %3197 = vmatprep.subr.mxu0 %v3069
        %3198 = vmatpush1.msra.mxu0 %v3068
        %3199 = vmatprep.subr.mxu0 %v3073
        %3200 = vmatpush1.msra.mxu0 %v3072
        %3201 = vmatprep.subr.mxu0 %v3077
        %3202 = vmatpush1.msra.mxu0 %v3076
        %3203 = vmatprep.subr.mxu0 %v3081
        %3204 = vmatpush1.msra.mxu0 %v3080
        %3205 = vmatprep.subr.mxu0 %v3085
        %3206 = vmatpush1.msra.mxu0 %v3084
        %3207 = vmatprep.subr.mxu0 %v3089
        %3208 = vmatpush1.msra.mxu0 %v3088
        %3209 = vmatprep.subr.mxu0 %v3093
        %3210 = vmatpush1.msra.mxu0 %v3092
        %3211 = vmatprep.subr.mxu0 %v3097
        %3212 = vmatpush1.msra.mxu0 %v3096
        %3213 = vmatprep.subr.mxu0 %v3101
        %3214 = vmatpush1.msra.mxu0 %v3100
        %3215 = vmatprep.subr.mxu0 %v3105
        %3216 = vmatpush1.msra.mxu0 %v3104
        %3217 = vmatprep.subr.mxu0 %v3109
        %3218 = vmatpush1.msra.mxu0 %v3108
        %3219 = vmatprep.subr.mxu0 0.0
        %3220 = vmatpush1.msra.mxu0 0.0
        %3221 = vmatprep.subr.mxu0 0.0
        %3222 = vmatpush1.msra.mxu0 0.0
        %3223 = vmatprep.subr.mxu0 0.0
        %3224 = vmatpush1.msra.mxu0 0.0
        %3225 = vmatprep.subr.mxu0 0.0
        %3226 = vmatpush1.msra.mxu0 0.0
        %3227 = vmatprep.subr.mxu0 0.0
        %3228 = vmatpush1.msra.mxu0 0.0
        %3229 = vmatprep.subr.mxu0 0.0
        %3230 = vmatpush1.msra.mxu0 0.0
        %3231 = vmatprep.subr.mxu0 0.0
        %3232 = vmatpush1.msra.mxu0 0.0
        %3233 = vmatprep.subr.mxu0 0.0
        %3234 = vmatpush1.msra.mxu0 0.0
        %3235 = vmatprep.subr.mxu0 0.0
        %3236 = vmatpush1.msra.mxu0 0.0
        %3237 = vmatprep.subr.mxu0 0.0
        %3238 = vmatpush1.msra.mxu0 0.0
        %3239 = vmatprep.subr.mxu0 0.0
        %3240 = vmatpush1.msra.mxu0 0.0
        %3241 = vmatprep.subr.mxu0 0.0
        %3242 = vmatpush1.msra.mxu0 0.0
        %3243 = vmatprep.subr.mxu0 0.0
        %3244 = vmatpush1.msra.mxu0 0.0
        %3245 = vmatprep.subr.mxu0 0.0
        %3246 = vmatpush1.msra.mxu0 0.0
        %3247 = vmatprep.subr.mxu0 0.0
        %3248 = vmatpush1.msra.mxu0 0.0
        %3249 = vmatprep.subr.mxu0 0.0
        %3250 = vmatpush1.msra.mxu0 0.0
        %3251 = vmatprep.mubr.f32.mxu0 0.0
        %3252 = vmatmul.mubr.f32.gmra.mrb[0].mxu0 %v2130
        %v3253 = vpop.f32.mrb[0].mxu0
        %v3254 = vadd.f32 0.0, %v3253
        %v3255 = vpop.f32.mrb[0].mxu0
        %v3256 = vadd.f32 0.0, %v3255
        %3257 = vmatprep.mubr.f32.mxu0 0.0
        %3258 = vmatmul.mubr.f32.gmra.mrb[0].mxu0 %v2131
        %v3259 = vpop.f32.mrb[0].mxu0
        %v3260 = vadd.f32 0.0, %v3259
        %v3261 = vpop.f32.mrb[0].mxu0
        %v3262 = vadd.f32 0.0, %v3261
        %3263 = vdwg.mxu0
        %v3264 = vadd.f32 %v3037, %v3177
        %v3265 = vadd.f32 %v3038, %v3179
        %v3266 = vadd.f32 %v3039, %v3254
        %v3267 = vadd.f32 %v3040, %v3256
        %v3268 = vadd.f32 %v3041, %v3183
        %v3269 = vadd.f32 %v3042, %v3185
        %v3270 = vadd.f32 %v3043, %v3260
        %v3271 = vadd.f32 %v3044, %v3262
        %s3272 = scalar_lea.vmem [#allocation7], 2560
        %v3273 = vld [vmem:[%s3272] sm:$0xff]
        %v3274 = vld [vmem:[%s3272 + $0x8] sm:$0xff]
        %v3275 = vld [vmem:[%s3272 + $0x10] sm:$0xff]
        %v3276 = vld [vmem:[%s3272 + $0x18] sm:$0xff]
        %v3277 = vld [vmem:[%s3272 + $0x20] sm:$0xff]
        %v3278 = vld [vmem:[%s3272 + $0x28] sm:$0xff]
        %v3279 = vld [vmem:[%s3272 + $0x30] sm:$0xff]
        %v3280 = vld [vmem:[%s3272 + $0x38] sm:$0xff]
        %v3281 = vld [vmem:[%s3272 + $0x40] sm:$0xff]
        %v3282 = vld [vmem:[%s3272 + $0x48] sm:$0xff]
        %v3283 = vld [vmem:[%s3272 + $0x50] sm:$0xff]
        %v3284 = vld [vmem:[%s3272 + $0x58] sm:$0xff]
        %v3285 = vld [vmem:[%s3272 + $0x60] sm:$0xff]
        %v3286 = vld [vmem:[%s3272 + $0x68] sm:$0xff]
        %v3287 = vld [vmem:[%s3272 + $0x70] sm:$0xff]
        %v3288 = vld [vmem:[%s3272 + $0x78] sm:$0xff]
        %v3289 = vld [vmem:[%s3272 + $0x80] sm:$0xff]
        %v3290 = vld [vmem:[%s3272 + $0x88] sm:$0xff]
        %v3291 = vld [vmem:[%s3272 + $0x90] sm:$0xff]
        %v3292 = vld [vmem:[%s3272 + $0x98] sm:$0xff]
        %v3293 = vld [vmem:[%s3272 + $0xa0] sm:$0xff]
        %v3294 = vld [vmem:[%s3272 + $0xa8] sm:$0xff]
        %v3295 = vld [vmem:[%s3272 + $0xb0] sm:$0xff]
        %v3296 = vld [vmem:[%s3272 + $0xb8] sm:$0xff]
        %v3297 = vld [vmem:[%s3272 + $0xc0] sm:$0xff]
        %v3298 = vld [vmem:[%s3272 + $0xc8] sm:$0xff]
        %v3299 = vld [vmem:[%s3272 + $0xd0] sm:$0xff]
        %v3300 = vld [vmem:[%s3272 + $0xd8] sm:$0xff]
        %v3301 = vld [vmem:[%s3272 + $0xe0] sm:$0xff]
        %v3302 = vld [vmem:[%s3272 + $0xe8] sm:$0xff]
        %v3303 = vld [vmem:[%s3272 + $0xf0] sm:$0xff]
        %v3304 = vld [vmem:[%s3272 + $0xf8] sm:$0xff]
        %v3305 = vld [vmem:[%s3272 + $0x100] sm:$0xff]
        %v3306 = vld [vmem:[%s3272 + $0x108] sm:$0xff]
        %v3307 = vld [vmem:[%s3272 + $0x110] sm:$0xff]
        %v3308 = vld [vmem:[%s3272 + $0x118] sm:$0xff]
        %v3309 = vld [vmem:[%s3272 + $0x120] sm:$0xff]
        %v3310 = vld [vmem:[%s3272 + $0x128] sm:$0xff]
        %v3311 = vld [vmem:[%s3272 + $0x130] sm:$0xff]
        %v3312 = vld [vmem:[%s3272 + $0x138] sm:$0xff]
        %v3313 = vld [vmem:[%s3272 + $0x140] sm:$0xff]
        %v3314 = vld [vmem:[%s3272 + $0x148] sm:$0xff]
        %v3315 = vld [vmem:[%s3272 + $0x150] sm:$0xff]
        %v3316 = vld [vmem:[%s3272 + $0x158] sm:$0xff]
        %v3317 = vld [vmem:[%s3272 + $0x160] sm:$0xff]
        %v3318 = vld [vmem:[%s3272 + $0x168] sm:$0xff]
        %v3319 = vld [vmem:[%s3272 + $0x170] sm:$0xff]
        %v3320 = vld [vmem:[%s3272 + $0x178] sm:$0xff]
        %v3321 = vld [vmem:[%s3272 + $0x180] sm:$0xff]
        %v3322 = vld [vmem:[%s3272 + $0x188] sm:$0xff]
        %v3323 = vld [vmem:[%s3272 + $0x190] sm:$0xff]
        %v3324 = vld [vmem:[%s3272 + $0x198] sm:$0xff]
        %v3325 = vld [vmem:[%s3272 + $0x1a0] sm:$0xff]
        %v3326 = vld [vmem:[%s3272 + $0x1a8] sm:$0xff]
        %v3327 = vld [vmem:[%s3272 + $0x1b0] sm:$0xff]
        %v3328 = vld [vmem:[%s3272 + $0x1b8] sm:$0xff]
        %v3329 = vld [vmem:[%s3272 + $0x1c0] sm:$0xff]
        %v3330 = vld [vmem:[%s3272 + $0x1c8] sm:$0xff]
        %v3331 = vld [vmem:[%s3272 + $0x1d0] sm:$0xff]
        %v3332 = vld [vmem:[%s3272 + $0x1d8] sm:$0xff]
        %v3333 = vld [vmem:[%s3272 + $0x1e0] sm:$0xff]
        %v3334 = vld [vmem:[%s3272 + $0x1e8] sm:$0xff]
        %v3335 = vld [vmem:[%s3272 + $0x1f0] sm:$0xff]
        %v3336 = vld [vmem:[%s3272 + $0x1f8] sm:$0xff]
        %3337 = vmatprep.subr.mxu0 %v3274
        %3338 = vmatpush1.msra.mxu0 %v3273
        %3339 = vmatprep.subr.mxu0 %v3278
        %3340 = vmatpush1.msra.mxu0 %v3277
        %3341 = vmatprep.subr.mxu0 %v3282
        %3342 = vmatpush1.msra.mxu0 %v3281
        %3343 = vmatprep.subr.mxu0 %v3286
        %3344 = vmatpush1.msra.mxu0 %v3285
        %3345 = vmatprep.subr.mxu0 %v3290
        %3346 = vmatpush1.msra.mxu0 %v3289
        %3347 = vmatprep.subr.mxu0 %v3294
        %3348 = vmatpush1.msra.mxu0 %v3293
        %3349 = vmatprep.subr.mxu0 %v3298
        %3350 = vmatpush1.msra.mxu0 %v3297
        %3351 = vmatprep.subr.mxu0 %v3302
        %3352 = vmatpush1.msra.mxu0 %v3301
        %3353 = vmatprep.subr.mxu0 %v3306
        %3354 = vmatpush1.msra.mxu0 %v3305
        %3355 = vmatprep.subr.mxu0 %v3310
        %3356 = vmatpush1.msra.mxu0 %v3309
        %3357 = vmatprep.subr.mxu0 %v3314
        %3358 = vmatpush1.msra.mxu0 %v3313
        %3359 = vmatprep.subr.mxu0 %v3318
        %3360 = vmatpush1.msra.mxu0 %v3317
        %3361 = vmatprep.subr.mxu0 %v3322
        %3362 = vmatpush1.msra.mxu0 %v3321
        %3363 = vmatprep.subr.mxu0 %v3326
        %3364 = vmatpush1.msra.mxu0 %v3325
        %3365 = vmatprep.subr.mxu0 %v3330
        %3366 = vmatpush1.msra.mxu0 %v3329
        %3367 = vmatprep.subr.mxu0 %v3334
        %3368 = vmatpush1.msra.mxu0 %v3333
        %3369 = vmatprep.subr.mxu0 0.0
        %3370 = vmatpush1.msra.mxu0 0.0
        %3371 = vmatprep.subr.mxu0 0.0
        %3372 = vmatpush1.msra.mxu0 0.0
        %3373 = vmatprep.subr.mxu0 0.0
        %3374 = vmatpush1.msra.mxu0 0.0
        %3375 = vmatprep.subr.mxu0 0.0
        %3376 = vmatpush1.msra.mxu0 0.0
        %3377 = vmatprep.subr.mxu0 0.0
        %3378 = vmatpush1.msra.mxu0 0.0
        %3379 = vmatprep.subr.mxu0 0.0
        %3380 = vmatpush1.msra.mxu0 0.0
        %3381 = vmatprep.subr.mxu0 0.0
        %3382 = vmatpush1.msra.mxu0 0.0
        %3383 = vmatprep.subr.mxu0 0.0
        %3384 = vmatpush1.msra.mxu0 0.0
        %3385 = vmatprep.subr.mxu0 0.0
        %3386 = vmatpush1.msra.mxu0 0.0
        %3387 = vmatprep.subr.mxu0 0.0
        %3388 = vmatpush1.msra.mxu0 0.0
        %3389 = vmatprep.subr.mxu0 0.0
        %3390 = vmatpush1.msra.mxu0 0.0
        %3391 = vmatprep.subr.mxu0 0.0
        %3392 = vmatpush1.msra.mxu0 0.0
        %3393 = vmatprep.subr.mxu0 0.0
        %3394 = vmatpush1.msra.mxu0 0.0
        %3395 = vmatprep.subr.mxu0 0.0
        %3396 = vmatpush1.msra.mxu0 0.0
        %3397 = vmatprep.subr.mxu0 0.0
        %3398 = vmatpush1.msra.mxu0 0.0
        %3399 = vmatprep.subr.mxu0 0.0
        %3400 = vmatpush1.msra.mxu0 0.0
        %3401 = vmatprep.mubr.f32.mxu0 0.0
        %3402 = vmatmul.mubr.f32.gmra.mrb[0].mxu0 %v2132
        %v3403 = vpop.f32.mrb[0].mxu0
        %v3404 = vadd.f32 0.0, %v3403
        %v3405 = vpop.f32.mrb[0].mxu0
        %v3406 = vadd.f32 0.0, %v3405
        %3407 = vmatprep.mubr.f32.mxu0 0.0
        %3408 = vmatmul.mubr.f32.gmra.mrb[0].mxu0 %v2133
        %v3409 = vpop.f32.mrb[0].mxu0
        %v3410 = vadd.f32 0.0, %v3409
        %v3411 = vpop.f32.mrb[0].mxu0
        %v3412 = vadd.f32 0.0, %v3411
        %3413 = vdwg.mxu0
        %3414 = vmatprep.subr.mxu0 %v3276
        %3415 = vmatpush1.msra.mxu0 %v3275
        %3416 = vmatprep.subr.mxu0 %v3280
        %3417 = vmatpush1.msra.mxu0 %v3279
        %3418 = vmatprep.subr.mxu0 %v3284
        %3419 = vmatpush1.msra.mxu0 %v3283
        %3420 = vmatprep.subr.mxu0 %v3288
        %3421 = vmatpush1.msra.mxu0 %v3287
        %3422 = vmatprep.subr.mxu0 %v3292
        %3423 = vmatpush1.msra.mxu0 %v3291
        %3424 = vmatprep.subr.mxu0 %v3296
        %3425 = vmatpush1.msra.mxu0 %v3295
        %3426 = vmatprep.subr.mxu0 %v3300
        %3427 = vmatpush1.msra.mxu0 %v3299
        %3428 = vmatprep.subr.mxu0 %v3304
        %3429 = vmatpush1.msra.mxu0 %v3303
        %3430 = vmatprep.subr.mxu0 %v3308
        %3431 = vmatpush1.msra.mxu0 %v3307
        %3432 = vmatprep.subr.mxu0 %v3312
        %3433 = vmatpush1.msra.mxu0 %v3311
        %3434 = vmatprep.subr.mxu0 %v3316
        %3435 = vmatpush1.msra.mxu0 %v3315
        %3436 = vmatprep.subr.mxu0 %v3320
        %3437 = vmatpush1.msra.mxu0 %v3319
        %3438 = vmatprep.subr.mxu0 %v3324
        %3439 = vmatpush1.msra.mxu0 %v3323
        %3440 = vmatprep.subr.mxu0 %v3328
        %3441 = vmatpush1.msra.mxu0 %v3327
        %3442 = vmatprep.subr.mxu0 %v3332
        %3443 = vmatpush1.msra.mxu0 %v3331
        %3444 = vmatprep.subr.mxu0 %v3336
        %3445 = vmatpush1.msra.mxu0 %v3335
        %3446 = vmatprep.subr.mxu0 0.0
        %3447 = vmatpush1.msra.mxu0 0.0
        %3448 = vmatprep.subr.mxu0 0.0
        %3449 = vmatpush1.msra.mxu0 0.0
        %3450 = vmatprep.subr.mxu0 0.0
        %3451 = vmatpush1.msra.mxu0 0.0
        %3452 = vmatprep.subr.mxu0 0.0
        %3453 = vmatpush1.msra.mxu0 0.0
        %3454 = vmatprep.subr.mxu0 0.0
        %3455 = vmatpush1.msra.mxu0 0.0
        %3456 = vmatprep.subr.mxu0 0.0
        %3457 = vmatpush1.msra.mxu0 0.0
        %3458 = vmatprep.subr.mxu0 0.0
        %3459 = vmatpush1.msra.mxu0 0.0
        %3460 = vmatprep.subr.mxu0 0.0
        %3461 = vmatpush1.msra.mxu0 0.0
        %3462 = vmatprep.subr.mxu0 0.0
        %3463 = vmatpush1.msra.mxu0 0.0
        %3464 = vmatprep.subr.mxu0 0.0
        %3465 = vmatpush1.msra.mxu0 0.0
        %3466 = vmatprep.subr.mxu0 0.0
        %3467 = vmatpush1.msra.mxu0 0.0
        %3468 = vmatprep.subr.mxu0 0.0
        %3469 = vmatpush1.msra.mxu0 0.0
        %3470 = vmatprep.subr.mxu0 0.0
        %3471 = vmatpush1.msra.mxu0 0.0
        %3472 = vmatprep.subr.mxu0 0.0
        %3473 = vmatpush1.msra.mxu0 0.0
        %3474 = vmatprep.subr.mxu0 0.0
        %3475 = vmatpush1.msra.mxu0 0.0
        %3476 = vmatprep.subr.mxu0 0.0
        %3477 = vmatpush1.msra.mxu0 0.0
        %3478 = vmatprep.mubr.f32.mxu0 0.0
        %3479 = vmatmul.mubr.f32.gmra.mrb[0].mxu0 %v2132
        %v3480 = vpop.f32.mrb[0].mxu0
        %v3481 = vadd.f32 0.0, %v3480
        %v3482 = vpop.f32.mrb[0].mxu0
        %v3483 = vadd.f32 0.0, %v3482
        %3484 = vmatprep.mubr.f32.mxu0 0.0
        %3485 = vmatmul.mubr.f32.gmra.mrb[0].mxu0 %v2133
        %v3486 = vpop.f32.mrb[0].mxu0
        %v3487 = vadd.f32 0.0, %v3486
        %v3488 = vpop.f32.mrb[0].mxu0
        %v3489 = vadd.f32 0.0, %v3488
        %3490 = vdwg.mxu0
        %v3491 = vadd.f32 %v3264, %v3404
        %v3492 = vadd.f32 %v3265, %v3406
        %v3493 = vadd.f32 %v3266, %v3481
        %v3494 = vadd.f32 %v3267, %v3483
        %v3495 = vadd.f32 %v3268, %v3410
        %v3496 = vadd.f32 %v3269, %v3412
        %v3497 = vadd.f32 %v3270, %v3487
        %v3498 = vadd.f32 %v3271, %v3489
        %s3499 = scalar_lea.vmem [#allocation7], 3072
        %v3500 = vld [vmem:[%s3499] sm:$0xff]
        %v3501 = vld [vmem:[%s3499 + $0x8] sm:$0xff]
        %v3502 = vld [vmem:[%s3499 + $0x10] sm:$0xff]
        %v3503 = vld [vmem:[%s3499 + $0x18] sm:$0xff]
        %v3504 = vld [vmem:[%s3499 + $0x20] sm:$0xff]
        %v3505 = vld [vmem:[%s3499 + $0x28] sm:$0xff]
        %v3506 = vld [vmem:[%s3499 + $0x30] sm:$0xff]
        %v3507 = vld [vmem:[%s3499 + $0x38] sm:$0xff]
        %v3508 = vld [vmem:[%s3499 + $0x40] sm:$0xff]
        %v3509 = vld [vmem:[%s3499 + $0x48] sm:$0xff]
        %v3510 = vld [vmem:[%s3499 + $0x50] sm:$0xff]
        %v3511 = vld [vmem:[%s3499 + $0x58] sm:$0xff]
        %v3512 = vld [vmem:[%s3499 + $0x60] sm:$0xff]
        %v3513 = vld [vmem:[%s3499 + $0x68] sm:$0xff]
        %v3514 = vld [vmem:[%s3499 + $0x70] sm:$0xff]
        %v3515 = vld [vmem:[%s3499 + $0x78] sm:$0xff]
        %v3516 = vld [vmem:[%s3499 + $0x80] sm:$0xff]
        %v3517 = vld [vmem:[%s3499 + $0x88] sm:$0xff]
        %v3518 = vld [vmem:[%s3499 + $0x90] sm:$0xff]
        %v3519 = vld [vmem:[%s3499 + $0x98] sm:$0xff]
        %v3520 = vld [vmem:[%s3499 + $0xa0] sm:$0xff]
        %v3521 = vld [vmem:[%s3499 + $0xa8] sm:$0xff]
        %v3522 = vld [vmem:[%s3499 + $0xb0] sm:$0xff]
        %v3523 = vld [vmem:[%s3499 + $0xb8] sm:$0xff]
        %v3524 = vld [vmem:[%s3499 + $0xc0] sm:$0xff]
        %v3525 = vld [vmem:[%s3499 + $0xc8] sm:$0xff]
        %v3526 = vld [vmem:[%s3499 + $0xd0] sm:$0xff]
        %v3527 = vld [vmem:[%s3499 + $0xd8] sm:$0xff]
        %v3528 = vld [vmem:[%s3499 + $0xe0] sm:$0xff]
        %v3529 = vld [vmem:[%s3499 + $0xe8] sm:$0xff]
        %v3530 = vld [vmem:[%s3499 + $0xf0] sm:$0xff]
        %v3531 = vld [vmem:[%s3499 + $0xf8] sm:$0xff]
        %v3532 = vld [vmem:[%s3499 + $0x100] sm:$0xff]
        %v3533 = vld [vmem:[%s3499 + $0x108] sm:$0xff]
        %v3534 = vld [vmem:[%s3499 + $0x110] sm:$0xff]
        %v3535 = vld [vmem:[%s3499 + $0x118] sm:$0xff]
        %v3536 = vld [vmem:[%s3499 + $0x120] sm:$0xff]
        %v3537 = vld [vmem:[%s3499 + $0x128] sm:$0xff]
        %v3538 = vld [vmem:[%s3499 + $0x130] sm:$0xff]
        %v3539 = vld [vmem:[%s3499 + $0x138] sm:$0xff]
        %v3540 = vld [vmem:[%s3499 + $0x140] sm:$0xff]
        %v3541 = vld [vmem:[%s3499 + $0x148] sm:$0xff]
        %v3542 = vld [vmem:[%s3499 + $0x150] sm:$0xff]
        %v3543 = vld [vmem:[%s3499 + $0x158] sm:$0xff]
        %v3544 = vld [vmem:[%s3499 + $0x160] sm:$0xff]
        %v3545 = vld [vmem:[%s3499 + $0x168] sm:$0xff]
        %v3546 = vld [vmem:[%s3499 + $0x170] sm:$0xff]
        %v3547 = vld [vmem:[%s3499 + $0x178] sm:$0xff]
        %v3548 = vld [vmem:[%s3499 + $0x180] sm:$0xff]
        %v3549 = vld [vmem:[%s3499 + $0x188] sm:$0xff]
        %v3550 = vld [vmem:[%s3499 + $0x190] sm:$0xff]
        %v3551 = vld [vmem:[%s3499 + $0x198] sm:$0xff]
        %v3552 = vld [vmem:[%s3499 + $0x1a0] sm:$0xff]
        %v3553 = vld [vmem:[%s3499 + $0x1a8] sm:$0xff]
        %v3554 = vld [vmem:[%s3499 + $0x1b0] sm:$0xff]
        %v3555 = vld [vmem:[%s3499 + $0x1b8] sm:$0xff]
        %v3556 = vld [vmem:[%s3499 + $0x1c0] sm:$0xff]
        %v3557 = vld [vmem:[%s3499 + $0x1c8] sm:$0xff]
        %v3558 = vld [vmem:[%s3499 + $0x1d0] sm:$0xff]
        %v3559 = vld [vmem:[%s3499 + $0x1d8] sm:$0xff]
        %v3560 = vld [vmem:[%s3499 + $0x1e0] sm:$0xff]
        %v3561 = vld [vmem:[%s3499 + $0x1e8] sm:$0xff]
        %v3562 = vld [vmem:[%s3499 + $0x1f0] sm:$0xff]
        %v3563 = vld [vmem:[%s3499 + $0x1f8] sm:$0xff]
        %3564 = vmatprep.subr.mxu0 %v3501
        %3565 = vmatpush1.msra.mxu0 %v3500
        %3566 = vmatprep.subr.mxu0 %v3505
        %3567 = vmatpush1.msra.mxu0 %v3504
        %3568 = vmatprep.subr.mxu0 %v3509
        %3569 = vmatpush1.msra.mxu0 %v3508
        %3570 = vmatprep.subr.mxu0 %v3513
        %3571 = vmatpush1.msra.mxu0 %v3512
        %3572 = vmatprep.subr.mxu0 %v3517
        %3573 = vmatpush1.msra.mxu0 %v3516
        %3574 = vmatprep.subr.mxu0 %v3521
        %3575 = vmatpush1.msra.mxu0 %v3520
        %3576 = vmatprep.subr.mxu0 %v3525
        %3577 = vmatpush1.msra.mxu0 %v3524
        %3578 = vmatprep.subr.mxu0 %v3529
        %3579 = vmatpush1.msra.mxu0 %v3528
        %3580 = vmatprep.subr.mxu0 %v3533
        %3581 = vmatpush1.msra.mxu0 %v3532
        %3582 = vmatprep.subr.mxu0 %v3537
        %3583 = vmatpush1.msra.mxu0 %v3536
        %3584 = vmatprep.subr.mxu0 %v3541
        %3585 = vmatpush1.msra.mxu0 %v3540
        %3586 = vmatprep.subr.mxu0 %v3545
        %3587 = vmatpush1.msra.mxu0 %v3544
        %3588 = vmatprep.subr.mxu0 %v3549
        %3589 = vmatpush1.msra.mxu0 %v3548
        %3590 = vmatprep.subr.mxu0 %v3553
        %3591 = vmatpush1.msra.mxu0 %v3552
        %3592 = vmatprep.subr.mxu0 %v3557
        %3593 = vmatpush1.msra.mxu0 %v3556
        %3594 = vmatprep.subr.mxu0 %v3561
        %3595 = vmatpush1.msra.mxu0 %v3560
        %3596 = vmatprep.subr.mxu0 0.0
        %3597 = vmatpush1.msra.mxu0 0.0
        %3598 = vmatprep.subr.mxu0 0.0
        %3599 = vmatpush1.msra.mxu0 0.0
        %3600 = vmatprep.subr.mxu0 0.0
        %3601 = vmatpush1.msra.mxu0 0.0
        %3602 = vmatprep.subr.mxu0 0.0
        %3603 = vmatpush1.msra.mxu0 0.0
        %3604 = vmatprep.subr.mxu0 0.0
        %3605 = vmatpush1.msra.mxu0 0.0
        %3606 = vmatprep.subr.mxu0 0.0
        %3607 = vmatpush1.msra.mxu0 0.0
        %3608 = vmatprep.subr.mxu0 0.0
        %3609 = vmatpush1.msra.mxu0 0.0
        %3610 = vmatprep.subr.mxu0 0.0
        %3611 = vmatpush1.msra.mxu0 0.0
        %3612 = vmatprep.subr.mxu0 0.0
        %3613 = vmatpush1.msra.mxu0 0.0
        %3614 = vmatprep.subr.mxu0 0.0
        %3615 = vmatpush1.msra.mxu0 0.0
        %3616 = vmatprep.subr.mxu0 0.0
        %3617 = vmatpush1.msra.mxu0 0.0
        %3618 = vmatprep.subr.mxu0 0.0
        %3619 = vmatpush1.msra.mxu0 0.0
        %3620 = vmatprep.subr.mxu0 0.0
        %3621 = vmatpush1.msra.mxu0 0.0
        %3622 = vmatprep.subr.mxu0 0.0
        %3623 = vmatpush1.msra.mxu0 0.0
        %3624 = vmatprep.subr.mxu0 0.0
        %3625 = vmatpush1.msra.mxu0 0.0
        %3626 = vmatprep.subr.mxu0 0.0
        %3627 = vmatpush1.msra.mxu0 0.0
        %3628 = vmatprep.mubr.f32.mxu0 0.0
        %3629 = vmatmul.mubr.f32.gmra.mrb[0].mxu0 %v2134
        %v3630 = vpop.f32.mrb[0].mxu0
        %v3631 = vadd.f32 0.0, %v3630
        %v3632 = vpop.f32.mrb[0].mxu0
        %v3633 = vadd.f32 0.0, %v3632
        %3634 = vmatprep.mubr.f32.mxu0 0.0
        %3635 = vmatmul.mubr.f32.gmra.mrb[0].mxu0 %v2135
        %v3636 = vpop.f32.mrb[0].mxu0
        %v3637 = vadd.f32 0.0, %v3636
        %v3638 = vpop.f32.mrb[0].mxu0
        %v3639 = vadd.f32 0.0, %v3638
        %3640 = vdwg.mxu0
        %3641 = vmatprep.subr.mxu0 %v3503
        %3642 = vmatpush1.msra.mxu0 %v3502
        %3643 = vmatprep.subr.mxu0 %v3507
        %3644 = vmatpush1.msra.mxu0 %v3506
        %3645 = vmatprep.subr.mxu0 %v3511
        %3646 = vmatpush1.msra.mxu0 %v3510
        %3647 = vmatprep.subr.mxu0 %v3515
        %3648 = vmatpush1.msra.mxu0 %v3514
        %3649 = vmatprep.subr.mxu0 %v3519
        %3650 = vmatpush1.msra.mxu0 %v3518
        %3651 = vmatprep.subr.mxu0 %v3523
        %3652 = vmatpush1.msra.mxu0 %v3522
        %3653 = vmatprep.subr.mxu0 %v3527
        %3654 = vmatpush1.msra.mxu0 %v3526
        %3655 = vmatprep.subr.mxu0 %v3531
        %3656 = vmatpush1.msra.mxu0 %v3530
        %3657 = vmatprep.subr.mxu0 %v3535
        %3658 = vmatpush1.msra.mxu0 %v3534
        %3659 = vmatprep.subr.mxu0 %v3539
        %3660 = vmatpush1.msra.mxu0 %v3538
        %3661 = vmatprep.subr.mxu0 %v3543
        %3662 = vmatpush1.msra.mxu0 %v3542
        %3663 = vmatprep.subr.mxu0 %v3547
        %3664 = vmatpush1.msra.mxu0 %v3546
        %3665 = vmatprep.subr.mxu0 %v3551
        %3666 = vmatpush1.msra.mxu0 %v3550
        %3667 = vmatprep.subr.mxu0 %v3555
        %3668 = vmatpush1.msra.mxu0 %v3554
        %3669 = vmatprep.subr.mxu0 %v3559
        %3670 = vmatpush1.msra.mxu0 %v3558
        %3671 = vmatprep.subr.mxu0 %v3563
        %3672 = vmatpush1.msra.mxu0 %v3562
        %3673 = vmatprep.subr.mxu0 0.0
        %3674 = vmatpush1.msra.mxu0 0.0
        %3675 = vmatprep.subr.mxu0 0.0
        %3676 = vmatpush1.msra.mxu0 0.0
        %3677 = vmatprep.subr.mxu0 0.0
        %3678 = vmatpush1.msra.mxu0 0.0
        %3679 = vmatprep.subr.mxu0 0.0
        %3680 = vmatpush1.msra.mxu0 0.0
        %3681 = vmatprep.subr.mxu0 0.0
        %3682 = vmatpush1.msra.mxu0 0.0
        %3683 = vmatprep.subr.mxu0 0.0
        %3684 = vmatpush1.msra.mxu0 0.0
        %3685 = vmatprep.subr.mxu0 0.0
        %3686 = vmatpush1.msra.mxu0 0.0
        %3687 = vmatprep.subr.mxu0 0.0
        %3688 = vmatpush1.msra.mxu0 0.0
        %3689 = vmatprep.subr.mxu0 0.0
        %3690 = vmatpush1.msra.mxu0 0.0
        %3691 = vmatprep.subr.mxu0 0.0
        %3692 = vmatpush1.msra.mxu0 0.0
        %3693 = vmatprep.subr.mxu0 0.0
        %3694 = vmatpush1.msra.mxu0 0.0
        %3695 = vmatprep.subr.mxu0 0.0
        %3696 = vmatpush1.msra.mxu0 0.0
        %3697 = vmatprep.subr.mxu0 0.0
        %3698 = vmatpush1.msra.mxu0 0.0
        %3699 = vmatprep.subr.mxu0 0.0
        %3700 = vmatpush1.msra.mxu0 0.0
        %3701 = vmatprep.subr.mxu0 0.0
        %3702 = vmatpush1.msra.mxu0 0.0
        %3703 = vmatprep.subr.mxu0 0.0
        %3704 = vmatpush1.msra.mxu0 0.0
        %3705 = vmatprep.mubr.f32.mxu0 0.0
        %3706 = vmatmul.mubr.f32.gmra.mrb[0].mxu0 %v2134
        %v3707 = vpop.f32.mrb[0].mxu0
        %v3708 = vadd.f32 0.0, %v3707
        %v3709 = vpop.f32.mrb[0].mxu0
        %v3710 = vadd.f32 0.0, %v3709
        %3711 = vmatprep.mubr.f32.mxu0 0.0
        %3712 = vmatmul.mubr.f32.gmra.mrb[0].mxu0 %v2135
        %v3713 = vpop.f32.mrb[0].mxu0
        %v3714 = vadd.f32 0.0, %v3713
        %v3715 = vpop.f32.mrb[0].mxu0
        %v3716 = vadd.f32 0.0, %v3715
        %3717 = vdwg.mxu0
        %v3718 = vadd.f32 %v3491, %v3631
        %v3719 = vadd.f32 %v3492, %v3633
        %v3720 = vadd.f32 %v3493, %v3708
        %v3721 = vadd.f32 %v3494, %v3710
        %v3722 = vadd.f32 %v3495, %v3637
        %v3723 = vadd.f32 %v3496, %v3639
        %v3724 = vadd.f32 %v3497, %v3714
        %v3725 = vadd.f32 %v3498, %v3716
        %s3726 = scalar_lea.vmem [#allocation7], 3584
        %v3727 = vld [vmem:[%s3726] sm:$0xff]
        %v3728 = vld [vmem:[%s3726 + $0x8] sm:$0xff]
        %v3729 = vld [vmem:[%s3726 + $0x10] sm:$0xff]
        %v3730 = vld [vmem:[%s3726 + $0x18] sm:$0xff]
        %v3731 = vld [vmem:[%s3726 + $0x20] sm:$0xff]
        %v3732 = vld [vmem:[%s3726 + $0x28] sm:$0xff]
        %v3733 = vld [vmem:[%s3726 + $0x30] sm:$0xff]
        %v3734 = vld [vmem:[%s3726 + $0x38] sm:$0xff]
        %v3735 = vld [vmem:[%s3726 + $0x40] sm:$0xff]
        %v3736 = vld [vmem:[%s3726 + $0x48] sm:$0xff]
        %v3737 = vld [vmem:[%s3726 + $0x50] sm:$0xff]
        %v3738 = vld [vmem:[%s3726 + $0x58] sm:$0xff]
        %v3739 = vld [vmem:[%s3726 + $0x60] sm:$0xff]
        %v3740 = vld [vmem:[%s3726 + $0x68] sm:$0xff]
        %v3741 = vld [vmem:[%s3726 + $0x70] sm:$0xff]
        %v3742 = vld [vmem:[%s3726 + $0x78] sm:$0xff]
        %v3743 = vld [vmem:[%s3726 + $0x80] sm:$0xff]
        %v3744 = vld [vmem:[%s3726 + $0x88] sm:$0xff]
        %v3745 = vld [vmem:[%s3726 + $0x90] sm:$0xff]
        %v3746 = vld [vmem:[%s3726 + $0x98] sm:$0xff]
        %v3747 = vld [vmem:[%s3726 + $0xa0] sm:$0xff]
        %v3748 = vld [vmem:[%s3726 + $0xa8] sm:$0xff]
        %v3749 = vld [vmem:[%s3726 + $0xb0] sm:$0xff]
        %v3750 = vld [vmem:[%s3726 + $0xb8] sm:$0xff]
        %v3751 = vld [vmem:[%s3726 + $0xc0] sm:$0xff]
        %v3752 = vld [vmem:[%s3726 + $0xc8] sm:$0xff]
        %v3753 = vld [vmem:[%s3726 + $0xd0] sm:$0xff]
        %v3754 = vld [vmem:[%s3726 + $0xd8] sm:$0xff]
        %v3755 = vld [vmem:[%s3726 + $0xe0] sm:$0xff]
        %v3756 = vld [vmem:[%s3726 + $0xe8] sm:$0xff]
        %v3757 = vld [vmem:[%s3726 + $0xf0] sm:$0xff]
        %v3758 = vld [vmem:[%s3726 + $0xf8] sm:$0xff]
        %v3759 = vld [vmem:[%s3726 + $0x100] sm:$0xff]
        %v3760 = vld [vmem:[%s3726 + $0x108] sm:$0xff]
        %v3761 = vld [vmem:[%s3726 + $0x110] sm:$0xff]
        %v3762 = vld [vmem:[%s3726 + $0x118] sm:$0xff]
        %v3763 = vld [vmem:[%s3726 + $0x120] sm:$0xff]
        %v3764 = vld [vmem:[%s3726 + $0x128] sm:$0xff]
        %v3765 = vld [vmem:[%s3726 + $0x130] sm:$0xff]
        %v3766 = vld [vmem:[%s3726 + $0x138] sm:$0xff]
        %v3767 = vld [vmem:[%s3726 + $0x140] sm:$0xff]
        %v3768 = vld [vmem:[%s3726 + $0x148] sm:$0xff]
        %v3769 = vld [vmem:[%s3726 + $0x150] sm:$0xff]
        %v3770 = vld [vmem:[%s3726 + $0x158] sm:$0xff]
        %v3771 = vld [vmem:[%s3726 + $0x160] sm:$0xff]
        %v3772 = vld [vmem:[%s3726 + $0x168] sm:$0xff]
        %v3773 = vld [vmem:[%s3726 + $0x170] sm:$0xff]
        %v3774 = vld [vmem:[%s3726 + $0x178] sm:$0xff]
        %v3775 = vld [vmem:[%s3726 + $0x180] sm:$0xff]
        %v3776 = vld [vmem:[%s3726 + $0x188] sm:$0xff]
        %v3777 = vld [vmem:[%s3726 + $0x190] sm:$0xff]
        %v3778 = vld [vmem:[%s3726 + $0x198] sm:$0xff]
        %v3779 = vld [vmem:[%s3726 + $0x1a0] sm:$0xff]
        %v3780 = vld [vmem:[%s3726 + $0x1a8] sm:$0xff]
        %v3781 = vld [vmem:[%s3726 + $0x1b0] sm:$0xff]
        %v3782 = vld [vmem:[%s3726 + $0x1b8] sm:$0xff]
        %v3783 = vld [vmem:[%s3726 + $0x1c0] sm:$0xff]
        %v3784 = vld [vmem:[%s3726 + $0x1c8] sm:$0xff]
        %v3785 = vld [vmem:[%s3726 + $0x1d0] sm:$0xff]
        %v3786 = vld [vmem:[%s3726 + $0x1d8] sm:$0xff]
        %v3787 = vld [vmem:[%s3726 + $0x1e0] sm:$0xff]
        %v3788 = vld [vmem:[%s3726 + $0x1e8] sm:$0xff]
        %v3789 = vld [vmem:[%s3726 + $0x1f0] sm:$0xff]
        %v3790 = vld [vmem:[%s3726 + $0x1f8] sm:$0xff]
        %3791 = vmatprep.subr.mxu0 %v3728
        %3792 = vmatpush1.msra.mxu0 %v3727
        %3793 = vmatprep.subr.mxu0 %v3732
        %3794 = vmatpush1.msra.mxu0 %v3731
        %3795 = vmatprep.subr.mxu0 %v3736
        %3796 = vmatpush1.msra.mxu0 %v3735
        %3797 = vmatprep.subr.mxu0 %v3740
        %3798 = vmatpush1.msra.mxu0 %v3739
        %3799 = vmatprep.subr.mxu0 %v3744
        %3800 = vmatpush1.msra.mxu0 %v3743
        %3801 = vmatprep.subr.mxu0 %v3748
        %3802 = vmatpush1.msra.mxu0 %v3747
        %3803 = vmatprep.subr.mxu0 %v3752
        %3804 = vmatpush1.msra.mxu0 %v3751
        %3805 = vmatprep.subr.mxu0 %v3756
        %3806 = vmatpush1.msra.mxu0 %v3755
        %3807 = vmatprep.subr.mxu0 %v3760
        %3808 = vmatpush1.msra.mxu0 %v3759
        %3809 = vmatprep.subr.mxu0 %v3764
        %3810 = vmatpush1.msra.mxu0 %v3763
        %3811 = vmatprep.subr.mxu0 %v3768
        %3812 = vmatpush1.msra.mxu0 %v3767
        %3813 = vmatprep.subr.mxu0 %v3772
        %3814 = vmatpush1.msra.mxu0 %v3771
        %3815 = vmatprep.subr.mxu0 %v3776
        %3816 = vmatpush1.msra.mxu0 %v3775
        %3817 = vmatprep.subr.mxu0 %v3780
        %3818 = vmatpush1.msra.mxu0 %v3779
        %3819 = vmatprep.subr.mxu0 %v3784
        %3820 = vmatpush1.msra.mxu0 %v3783
        %3821 = vmatprep.subr.mxu0 %v3788
        %3822 = vmatpush1.msra.mxu0 %v3787
        %3823 = vmatprep.subr.mxu0 0.0
        %3824 = vmatpush1.msra.mxu0 0.0
        %3825 = vmatprep.subr.mxu0 0.0
        %3826 = vmatpush1.msra.mxu0 0.0
        %3827 = vmatprep.subr.mxu0 0.0
        %3828 = vmatpush1.msra.mxu0 0.0
        %3829 = vmatprep.subr.mxu0 0.0
        %3830 = vmatpush1.msra.mxu0 0.0
        %3831 = vmatprep.subr.mxu0 0.0
        %3832 = vmatpush1.msra.mxu0 0.0
        %3833 = vmatprep.subr.mxu0 0.0
        %3834 = vmatpush1.msra.mxu0 0.0
        %3835 = vmatprep.subr.mxu0 0.0
        %3836 = vmatpush1.msra.mxu0 0.0
        %3837 = vmatprep.subr.mxu0 0.0
        %3838 = vmatpush1.msra.mxu0 0.0
        %3839 = vmatprep.subr.mxu0 0.0
        %3840 = vmatpush1.msra.mxu0 0.0
        %3841 = vmatprep.subr.mxu0 0.0
        %3842 = vmatpush1.msra.mxu0 0.0
        %3843 = vmatprep.subr.mxu0 0.0
        %3844 = vmatpush1.msra.mxu0 0.0
        %3845 = vmatprep.subr.mxu0 0.0
        %3846 = vmatpush1.msra.mxu0 0.0
        %3847 = vmatprep.subr.mxu0 0.0
        %3848 = vmatpush1.msra.mxu0 0.0
        %3849 = vmatprep.subr.mxu0 0.0
        %3850 = vmatpush1.msra.mxu0 0.0
        %3851 = vmatprep.subr.mxu0 0.0
        %3852 = vmatpush1.msra.mxu0 0.0
        %3853 = vmatprep.subr.mxu0 0.0
        %3854 = vmatpush1.msra.mxu0 0.0
        %3855 = vmatprep.mubr.f32.mxu0 0.0
        %3856 = vmatmul.mubr.f32.gmra.mrb[0].mxu0 %v2136
        %v3857 = vpop.f32.mrb[0].mxu0
        %v3858 = vadd.f32 0.0, %v3857
        %v3859 = vpop.f32.mrb[0].mxu0
        %v3860 = vadd.f32 0.0, %v3859
        %3861 = vmatprep.mubr.f32.mxu0 0.0
        %3862 = vmatmul.mubr.f32.gmra.mrb[0].mxu0 %v2137
        %v3863 = vpop.f32.mrb[0].mxu0
        %v3864 = vadd.f32 0.0, %v3863
        %v3865 = vpop.f32.mrb[0].mxu0
        %v3866 = vadd.f32 0.0, %v3865
        %3867 = vdwg.mxu0
        %3868 = vmatprep.subr.mxu0 %v3730
        %3869 = vmatpush1.msra.mxu0 %v3729
        %3870 = vmatprep.subr.mxu0 %v3734
        %3871 = vmatpush1.msra.mxu0 %v3733
        %3872 = vmatprep.subr.mxu0 %v3738
        %3873 = vmatpush1.msra.mxu0 %v3737
        %3874 = vmatprep.subr.mxu0 %v3742
        %3875 = vmatpush1.msra.mxu0 %v3741
        %3876 = vmatprep.subr.mxu0 %v3746
        %3877 = vmatpush1.msra.mxu0 %v3745
        %3878 = vmatprep.subr.mxu0 %v3750
        %3879 = vmatpush1.msra.mxu0 %v3749
        %3880 = vmatprep.subr.mxu0 %v3754
        %3881 = vmatpush1.msra.mxu0 %v3753
        %3882 = vmatprep.subr.mxu0 %v3758
        %3883 = vmatpush1.msra.mxu0 %v3757
        %3884 = vmatprep.subr.mxu0 %v3762
        %3885 = vmatpush1.msra.mxu0 %v3761
        %3886 = vmatprep.subr.mxu0 %v3766
        %3887 = vmatpush1.msra.mxu0 %v3765
        %3888 = vmatprep.subr.mxu0 %v3770
        %3889 = vmatpush1.msra.mxu0 %v3769
        %3890 = vmatprep.subr.mxu0 %v3774
        %3891 = vmatpush1.msra.mxu0 %v3773
        %3892 = vmatprep.subr.mxu0 %v3778
        %3893 = vmatpush1.msra.mxu0 %v3777
        %3894 = vmatprep.subr.mxu0 %v3782
        %3895 = vmatpush1.msra.mxu0 %v3781
        %3896 = vmatprep.subr.mxu0 %v3786
        %3897 = vmatpush1.msra.mxu0 %v3785
        %3898 = vmatprep.subr.mxu0 %v3790
        %3899 = vmatpush1.msra.mxu0 %v3789
        %3900 = vmatprep.subr.mxu0 0.0
        %3901 = vmatpush1.msra.mxu0 0.0
        %3902 = vmatprep.subr.mxu0 0.0
        %3903 = vmatpush1.msra.mxu0 0.0
        %3904 = vmatprep.subr.mxu0 0.0
        %3905 = vmatpush1.msra.mxu0 0.0
        %3906 = vmatprep.subr.mxu0 0.0
        %3907 = vmatpush1.msra.mxu0 0.0
        %3908 = vmatprep.subr.mxu0 0.0
        %3909 = vmatpush1.msra.mxu0 0.0
        %3910 = vmatprep.subr.mxu0 0.0
        %3911 = vmatpush1.msra.mxu0 0.0
        %3912 = vmatprep.subr.mxu0 0.0
        %3913 = vmatpush1.msra.mxu0 0.0
        %3914 = vmatprep.subr.mxu0 0.0
        %3915 = vmatpush1.msra.mxu0 0.0
        %3916 = vmatprep.subr.mxu0 0.0
        %3917 = vmatpush1.msra.mxu0 0.0
        %3918 = vmatprep.subr.mxu0 0.0
        %3919 = vmatpush1.msra.mxu0 0.0
        %3920 = vmatprep.subr.mxu0 0.0
        %3921 = vmatpush1.msra.mxu0 0.0
        %3922 = vmatprep.subr.mxu0 0.0
        %3923 = vmatpush1.msra.mxu0 0.0
        %3924 = vmatprep.subr.mxu0 0.0
        %3925 = vmatpush1.msra.mxu0 0.0
        %3926 = vmatprep.subr.mxu0 0.0
        %3927 = vmatpush1.msra.mxu0 0.0
        %3928 = vmatprep.subr.mxu0 0.0
        %3929 = vmatpush1.msra.mxu0 0.0
        %3930 = vmatprep.subr.mxu0 0.0
        %3931 = vmatpush1.msra.mxu0 0.0
        %3932 = vmatprep.mubr.f32.mxu0 0.0
        %3933 = vmatmul.mubr.f32.gmra.mrb[0].mxu0 %v2136
        %v3934 = vpop.f32.mrb[0].mxu0
        %v3935 = vadd.f32 0.0, %v3934
        %v3936 = vpop.f32.mrb[0].mxu0
        %v3937 = vadd.f32 0.0, %v3936
        %3938 = vmatprep.mubr.f32.mxu0 0.0
        %3939 = vmatmul.mubr.f32.gmra.mrb[0].mxu0 %v2137
        %v3940 = vpop.f32.mrb[0].mxu0
        %v3941 = vadd.f32 0.0, %v3940
        %v3942 = vpop.f32.mrb[0].mxu0
        %v3943 = vadd.f32 0.0, %v3942
        %3944 = vdwg.mxu0
        %v3945 = vadd.f32 %v3718, %v3858
        %v3946 = vadd.f32 %v3719, %v3860
        %v3947 = vadd.f32 %v3720, %v3935
        %v3948 = vadd.f32 %v3721, %v3937
        %v3949 = vadd.f32 %v3722, %v3864
        %v3950 = vadd.f32 %v3723, %v3866
        %v3951 = vadd.f32 %v3724, %v3941
        %v3952 = vadd.f32 %v3725, %v3943
        %s3953 = scalar_lea.vmem [#allocation7], 4096
        %v3954 = vld [vmem:[%s3953] sm:$0xff]
        %v3955 = vld [vmem:[%s3953 + $0x8] sm:$0xff]
        %v3956 = vld [vmem:[%s3953 + $0x10] sm:$0xff]
        %v3957 = vld [vmem:[%s3953 + $0x18] sm:$0xff]
        %v3958 = vld [vmem:[%s3953 + $0x20] sm:$0xff]
        %v3959 = vld [vmem:[%s3953 + $0x28] sm:$0xff]
        %v3960 = vld [vmem:[%s3953 + $0x30] sm:$0xff]
        %v3961 = vld [vmem:[%s3953 + $0x38] sm:$0xff]
        %v3962 = vld [vmem:[%s3953 + $0x40] sm:$0xff]
        %v3963 = vld [vmem:[%s3953 + $0x48] sm:$0xff]
        %v3964 = vld [vmem:[%s3953 + $0x50] sm:$0xff]
        %v3965 = vld [vmem:[%s3953 + $0x58] sm:$0xff]
        %v3966 = vld [vmem:[%s3953 + $0x60] sm:$0xff]
        %v3967 = vld [vmem:[%s3953 + $0x68] sm:$0xff]
        %v3968 = vld [vmem:[%s3953 + $0x70] sm:$0xff]
        %v3969 = vld [vmem:[%s3953 + $0x78] sm:$0xff]
        %v3970 = vld [vmem:[%s3953 + $0x80] sm:$0xff]
        %v3971 = vld [vmem:[%s3953 + $0x88] sm:$0xff]
        %v3972 = vld [vmem:[%s3953 + $0x90] sm:$0xff]
        %v3973 = vld [vmem:[%s3953 + $0x98] sm:$0xff]
        %v3974 = vld [vmem:[%s3953 + $0xa0] sm:$0xff]
        %v3975 = vld [vmem:[%s3953 + $0xa8] sm:$0xff]
        %v3976 = vld [vmem:[%s3953 + $0xb0] sm:$0xff]
        %v3977 = vld [vmem:[%s3953 + $0xb8] sm:$0xff]
        %v3978 = vld [vmem:[%s3953 + $0xc0] sm:$0xff]
        %v3979 = vld [vmem:[%s3953 + $0xc8] sm:$0xff]
        %v3980 = vld [vmem:[%s3953 + $0xd0] sm:$0xff]
        %v3981 = vld [vmem:[%s3953 + $0xd8] sm:$0xff]
        %v3982 = vld [vmem:[%s3953 + $0xe0] sm:$0xff]
        %v3983 = vld [vmem:[%s3953 + $0xe8] sm:$0xff]
        %v3984 = vld [vmem:[%s3953 + $0xf0] sm:$0xff]
        %v3985 = vld [vmem:[%s3953 + $0xf8] sm:$0xff]
        %v3986 = vld [vmem:[%s3953 + $0x100] sm:$0xff]
        %v3987 = vld [vmem:[%s3953 + $0x108] sm:$0xff]
        %v3988 = vld [vmem:[%s3953 + $0x110] sm:$0xff]
        %v3989 = vld [vmem:[%s3953 + $0x118] sm:$0xff]
        %v3990 = vld [vmem:[%s3953 + $0x120] sm:$0xff]
        %v3991 = vld [vmem:[%s3953 + $0x128] sm:$0xff]
        %v3992 = vld [vmem:[%s3953 + $0x130] sm:$0xff]
        %v3993 = vld [vmem:[%s3953 + $0x138] sm:$0xff]
        %v3994 = vld [vmem:[%s3953 + $0x140] sm:$0xff]
        %v3995 = vld [vmem:[%s3953 + $0x148] sm:$0xff]
        %v3996 = vld [vmem:[%s3953 + $0x150] sm:$0xff]
        %v3997 = vld [vmem:[%s3953 + $0x158] sm:$0xff]
        %v3998 = vld [vmem:[%s3953 + $0x160] sm:$0xff]
        %v3999 = vld [vmem:[%s3953 + $0x168] sm:$0xff]
        %v4000 = vld [vmem:[%s3953 + $0x170] sm:$0xff]
        %v4001 = vld [vmem:[%s3953 + $0x178] sm:$0xff]
        %v4002 = vld [vmem:[%s3953 + $0x180] sm:$0xff]
        %v4003 = vld [vmem:[%s3953 + $0x188] sm:$0xff]
        %v4004 = vld [vmem:[%s3953 + $0x190] sm:$0xff]
        %v4005 = vld [vmem:[%s3953 + $0x198] sm:$0xff]
        %v4006 = vld [vmem:[%s3953 + $0x1a0] sm:$0xff]
        %v4007 = vld [vmem:[%s3953 + $0x1a8] sm:$0xff]
        %v4008 = vld [vmem:[%s3953 + $0x1b0] sm:$0xff]
        %v4009 = vld [vmem:[%s3953 + $0x1b8] sm:$0xff]
        %v4010 = vld [vmem:[%s3953 + $0x1c0] sm:$0xff]
        %v4011 = vld [vmem:[%s3953 + $0x1c8] sm:$0xff]
        %v4012 = vld [vmem:[%s3953 + $0x1d0] sm:$0xff]
        %v4013 = vld [vmem:[%s3953 + $0x1d8] sm:$0xff]
        %v4014 = vld [vmem:[%s3953 + $0x1e0] sm:$0xff]
        %v4015 = vld [vmem:[%s3953 + $0x1e8] sm:$0xff]
        %v4016 = vld [vmem:[%s3953 + $0x1f0] sm:$0xff]
        %v4017 = vld [vmem:[%s3953 + $0x1f8] sm:$0xff]
        %4018 = vmatprep.subr.mxu0 %v3955
        %4019 = vmatpush1.msra.mxu0 %v3954
        %4020 = vmatprep.subr.mxu0 %v3959
        %4021 = vmatpush1.msra.mxu0 %v3958
        %4022 = vmatprep.subr.mxu0 %v3963
        %4023 = vmatpush1.msra.mxu0 %v3962
        %4024 = vmatprep.subr.mxu0 %v3967
        %4025 = vmatpush1.msra.mxu0 %v3966
        %4026 = vmatprep.subr.mxu0 %v3971
        %4027 = vmatpush1.msra.mxu0 %v3970
        %4028 = vmatprep.subr.mxu0 %v3975
        %4029 = vmatpush1.msra.mxu0 %v3974
        %4030 = vmatprep.subr.mxu0 %v3979
        %4031 = vmatpush1.msra.mxu0 %v3978
        %4032 = vmatprep.subr.mxu0 %v3983
        %4033 = vmatpush1.msra.mxu0 %v3982
        %4034 = vmatprep.subr.mxu0 %v3987
        %4035 = vmatpush1.msra.mxu0 %v3986
        %4036 = vmatprep.subr.mxu0 %v3991
        %4037 = vmatpush1.msra.mxu0 %v3990
        %4038 = vmatprep.subr.mxu0 %v3995
        %4039 = vmatpush1.msra.mxu0 %v3994
        %4040 = vmatprep.subr.mxu0 %v3999
        %4041 = vmatpush1.msra.mxu0 %v3998
        %4042 = vmatprep.subr.mxu0 %v4003
        %4043 = vmatpush1.msra.mxu0 %v4002
        %4044 = vmatprep.subr.mxu0 %v4007
        %4045 = vmatpush1.msra.mxu0 %v4006
        %4046 = vmatprep.subr.mxu0 %v4011
        %4047 = vmatpush1.msra.mxu0 %v4010
        %4048 = vmatprep.subr.mxu0 %v4015
        %4049 = vmatpush1.msra.mxu0 %v4014
        %4050 = vmatprep.subr.mxu0 0.0
        %4051 = vmatpush1.msra.mxu0 0.0
        %4052 = vmatprep.subr.mxu0 0.0
        %4053 = vmatpush1.msra.mxu0 0.0
        %4054 = vmatprep.subr.mxu0 0.0
        %4055 = vmatpush1.msra.mxu0 0.0
        %4056 = vmatprep.subr.mxu0 0.0
        %4057 = vmatpush1.msra.mxu0 0.0
        %4058 = vmatprep.subr.mxu0 0.0
        %4059 = vmatpush1.msra.mxu0 0.0
        %4060 = vmatprep.subr.mxu0 0.0
        %4061 = vmatpush1.msra.mxu0 0.0
        %4062 = vmatprep.subr.mxu0 0.0
        %4063 = vmatpush1.msra.mxu0 0.0
        %4064 = vmatprep.subr.mxu0 0.0
        %4065 = vmatpush1.msra.mxu0 0.0
        %4066 = vmatprep.subr.mxu0 0.0
        %4067 = vmatpush1.msra.mxu0 0.0
        %4068 = vmatprep.subr.mxu0 0.0
        %4069 = vmatpush1.msra.mxu0 0.0
        %4070 = vmatprep.subr.mxu0 0.0
        %4071 = vmatpush1.msra.mxu0 0.0
        %4072 = vmatprep.subr.mxu0 0.0
        %4073 = vmatpush1.msra.mxu0 0.0
        %4074 = vmatprep.subr.mxu0 0.0
        %4075 = vmatpush1.msra.mxu0 0.0
        %4076 = vmatprep.subr.mxu0 0.0
        %4077 = vmatpush1.msra.mxu0 0.0
        %4078 = vmatprep.subr.mxu0 0.0
        %4079 = vmatpush1.msra.mxu0 0.0
        %4080 = vmatprep.subr.mxu0 0.0
        %4081 = vmatpush1.msra.mxu0 0.0
        %4082 = vmatprep.mubr.f32.mxu0 0.0
        %4083 = vmatmul.mubr.f32.gmra.mrb[0].mxu0 %v2138
        %v4084 = vpop.f32.mrb[0].mxu0
        %v4085 = vadd.f32 0.0, %v4084
        %v4086 = vpop.f32.mrb[0].mxu0
        %v4087 = vadd.f32 0.0, %v4086
        %4088 = vmatprep.mubr.f32.mxu0 0.0
        %4089 = vmatmul.mubr.f32.gmra.mrb[0].mxu0 %v2139
        %v4090 = vpop.f32.mrb[0].mxu0
        %v4091 = vadd.f32 0.0, %v4090
        %v4092 = vpop.f32.mrb[0].mxu0
        %v4093 = vadd.f32 0.0, %v4092
        %4094 = vdwg.mxu0
        %4095 = vmatprep.subr.mxu0 %v3957
        %4096 = vmatpush1.msra.mxu0 %v3956
        %4097 = vmatprep.subr.mxu0 %v3961
        %4098 = vmatpush1.msra.mxu0 %v3960
        %4099 = vmatprep.subr.mxu0 %v3965
        %4100 = vmatpush1.msra.mxu0 %v3964
        %4101 = vmatprep.subr.mxu0 %v3969
        %4102 = vmatpush1.msra.mxu0 %v3968
        %4103 = vmatprep.subr.mxu0 %v3973
        %4104 = vmatpush1.msra.mxu0 %v3972
        %4105 = vmatprep.subr.mxu0 %v3977
        %4106 = vmatpush1.msra.mxu0 %v3976
        %4107 = vmatprep.subr.mxu0 %v3981
        %4108 = vmatpush1.msra.mxu0 %v3980
        %4109 = vmatprep.subr.mxu0 %v3985
        %4110 = vmatpush1.msra.mxu0 %v3984
        %4111 = vmatprep.subr.mxu0 %v3989
        %4112 = vmatpush1.msra.mxu0 %v3988
        %4113 = vmatprep.subr.mxu0 %v3993
        %4114 = vmatpush1.msra.mxu0 %v3992
        %4115 = vmatprep.subr.mxu0 %v3997
        %4116 = vmatpush1.msra.mxu0 %v3996
        %4117 = vmatprep.subr.mxu0 %v4001
        %4118 = vmatpush1.msra.mxu0 %v4000
        %4119 = vmatprep.subr.mxu0 %v4005
        %4120 = vmatpush1.msra.mxu0 %v4004
        %4121 = vmatprep.subr.mxu0 %v4009
        %4122 = vmatpush1.msra.mxu0 %v4008
        %4123 = vmatprep.subr.mxu0 %v4013
        %4124 = vmatpush1.msra.mxu0 %v4012
        %4125 = vmatprep.subr.mxu0 %v4017
        %4126 = vmatpush1.msra.mxu0 %v4016
        %4127 = vmatprep.subr.mxu0 0.0
        %4128 = vmatpush1.msra.mxu0 0.0
        %4129 = vmatprep.subr.mxu0 0.0
        %4130 = vmatpush1.msra.mxu0 0.0
        %4131 = vmatprep.subr.mxu0 0.0
        %4132 = vmatpush1.msra.mxu0 0.0
        %4133 = vmatprep.subr.mxu0 0.0
        %4134 = vmatpush1.msra.mxu0 0.0
        %4135 = vmatprep.subr.mxu0 0.0
        %4136 = vmatpush1.msra.mxu0 0.0
        %4137 = vmatprep.subr.mxu0 0.0
        %4138 = vmatpush1.msra.mxu0 0.0
        %4139 = vmatprep.subr.mxu0 0.0
        %4140 = vmatpush1.msra.mxu0 0.0
        %4141 = vmatprep.subr.mxu0 0.0
        %4142 = vmatpush1.msra.mxu0 0.0
        %4143 = vmatprep.subr.mxu0 0.0
        %4144 = vmatpush1.msra.mxu0 0.0
        %4145 = vmatprep.subr.mxu0 0.0
        %4146 = vmatpush1.msra.mxu0 0.0
        %4147 = vmatprep.subr.mxu0 0.0
        %4148 = vmatpush1.msra.mxu0 0.0
        %4149 = vmatprep.subr.mxu0 0.0
        %4150 = vmatpush1.msra.mxu0 0.0
        %4151 = vmatprep.subr.mxu0 0.0
        %4152 = vmatpush1.msra.mxu0 0.0
        %4153 = vmatprep.subr.mxu0 0.0
        %4154 = vmatpush1.msra.mxu0 0.0
        %4155 = vmatprep.subr.mxu0 0.0
        %4156 = vmatpush1.msra.mxu0 0.0
        %4157 = vmatprep.subr.mxu0 0.0
        %4158 = vmatpush1.msra.mxu0 0.0
        %4159 = vmatprep.mubr.f32.mxu0 0.0
        %4160 = vmatmul.mubr.f32.gmra.mrb[0].mxu0 %v2138
        %v4161 = vpop.f32.mrb[0].mxu0
        %v4162 = vadd.f32 0.0, %v4161
        %v4163 = vpop.f32.mrb[0].mxu0
        %v4164 = vadd.f32 0.0, %v4163
        %4165 = vmatprep.mubr.f32.mxu0 0.0
        %4166 = vmatmul.mubr.f32.gmra.mrb[0].mxu0 %v2139
        %v4167 = vpop.f32.mrb[0].mxu0
        %v4168 = vadd.f32 0.0, %v4167
        %v4169 = vpop.f32.mrb[0].mxu0
        %v4170 = vadd.f32 0.0, %v4169
        %4171 = vdwg.mxu0
        %v4172 = vadd.f32 %v3945, %v4085
        %v4173 = vadd.f32 %v3946, %v4087
        %v4174 = vadd.f32 %v3947, %v4162
        %v4175 = vadd.f32 %v3948, %v4164
        %v4176 = vadd.f32 %v3949, %v4091
        %v4177 = vadd.f32 %v3950, %v4093
        %v4178 = vadd.f32 %v3951, %v4168
        %v4179 = vadd.f32 %v3952, %v4170
        %s4180 = scalar_lea.vmem [#allocation7], 4608
        %v4181 = vld [vmem:[%s4180] sm:$0xff]
        %v4182 = vld [vmem:[%s4180 + $0x8] sm:$0xff]
        %v4183 = vld [vmem:[%s4180 + $0x10] sm:$0xff]
        %v4184 = vld [vmem:[%s4180 + $0x18] sm:$0xff]
        %v4185 = vld [vmem:[%s4180 + $0x20] sm:$0xff]
        %v4186 = vld [vmem:[%s4180 + $0x28] sm:$0xff]
        %v4187 = vld [vmem:[%s4180 + $0x30] sm:$0xff]
        %v4188 = vld [vmem:[%s4180 + $0x38] sm:$0xff]
        %v4189 = vld [vmem:[%s4180 + $0x40] sm:$0xff]
        %v4190 = vld [vmem:[%s4180 + $0x48] sm:$0xff]
        %v4191 = vld [vmem:[%s4180 + $0x50] sm:$0xff]
        %v4192 = vld [vmem:[%s4180 + $0x58] sm:$0xff]
        %v4193 = vld [vmem:[%s4180 + $0x60] sm:$0xff]
        %v4194 = vld [vmem:[%s4180 + $0x68] sm:$0xff]
        %v4195 = vld [vmem:[%s4180 + $0x70] sm:$0xff]
        %v4196 = vld [vmem:[%s4180 + $0x78] sm:$0xff]
        %v4197 = vld [vmem:[%s4180 + $0x80] sm:$0xff]
        %v4198 = vld [vmem:[%s4180 + $0x88] sm:$0xff]
        %v4199 = vld [vmem:[%s4180 + $0x90] sm:$0xff]
        %v4200 = vld [vmem:[%s4180 + $0x98] sm:$0xff]
        %v4201 = vld [vmem:[%s4180 + $0xa0] sm:$0xff]
        %v4202 = vld [vmem:[%s4180 + $0xa8] sm:$0xff]
        %v4203 = vld [vmem:[%s4180 + $0xb0] sm:$0xff]
        %v4204 = vld [vmem:[%s4180 + $0xb8] sm:$0xff]
        %v4205 = vld [vmem:[%s4180 + $0xc0] sm:$0xff]
        %v4206 = vld [vmem:[%s4180 + $0xc8] sm:$0xff]
        %v4207 = vld [vmem:[%s4180 + $0xd0] sm:$0xff]
        %v4208 = vld [vmem:[%s4180 + $0xd8] sm:$0xff]
        %v4209 = vld [vmem:[%s4180 + $0xe0] sm:$0xff]
        %v4210 = vld [vmem:[%s4180 + $0xe8] sm:$0xff]
        %v4211 = vld [vmem:[%s4180 + $0xf0] sm:$0xff]
        %v4212 = vld [vmem:[%s4180 + $0xf8] sm:$0xff]
        %v4213 = vld [vmem:[%s4180 + $0x100] sm:$0xff]
        %v4214 = vld [vmem:[%s4180 + $0x108] sm:$0xff]
        %v4215 = vld [vmem:[%s4180 + $0x110] sm:$0xff]
        %v4216 = vld [vmem:[%s4180 + $0x118] sm:$0xff]
        %v4217 = vld [vmem:[%s4180 + $0x120] sm:$0xff]
        %v4218 = vld [vmem:[%s4180 + $0x128] sm:$0xff]
        %v4219 = vld [vmem:[%s4180 + $0x130] sm:$0xff]
        %v4220 = vld [vmem:[%s4180 + $0x138] sm:$0xff]
        %v4221 = vld [vmem:[%s4180 + $0x140] sm:$0xff]
        %v4222 = vld [vmem:[%s4180 + $0x148] sm:$0xff]
        %v4223 = vld [vmem:[%s4180 + $0x150] sm:$0xff]
        %v4224 = vld [vmem:[%s4180 + $0x158] sm:$0xff]
        %v4225 = vld [vmem:[%s4180 + $0x160] sm:$0xff]
        %v4226 = vld [vmem:[%s4180 + $0x168] sm:$0xff]
        %v4227 = vld [vmem:[%s4180 + $0x170] sm:$0xff]
        %v4228 = vld [vmem:[%s4180 + $0x178] sm:$0xff]
        %v4229 = vld [vmem:[%s4180 + $0x180] sm:$0xff]
        %v4230 = vld [vmem:[%s4180 + $0x188] sm:$0xff]
        %v4231 = vld [vmem:[%s4180 + $0x190] sm:$0xff]
        %v4232 = vld [vmem:[%s4180 + $0x198] sm:$0xff]
        %v4233 = vld [vmem:[%s4180 + $0x1a0] sm:$0xff]
        %v4234 = vld [vmem:[%s4180 + $0x1a8] sm:$0xff]
        %v4235 = vld [vmem:[%s4180 + $0x1b0] sm:$0xff]
        %v4236 = vld [vmem:[%s4180 + $0x1b8] sm:$0xff]
        %v4237 = vld [vmem:[%s4180 + $0x1c0] sm:$0xff]
        %v4238 = vld [vmem:[%s4180 + $0x1c8] sm:$0xff]
        %v4239 = vld [vmem:[%s4180 + $0x1d0] sm:$0xff]
        %v4240 = vld [vmem:[%s4180 + $0x1d8] sm:$0xff]
        %v4241 = vld [vmem:[%s4180 + $0x1e0] sm:$0xff]
        %v4242 = vld [vmem:[%s4180 + $0x1e8] sm:$0xff]
        %v4243 = vld [vmem:[%s4180 + $0x1f0] sm:$0xff]
        %v4244 = vld [vmem:[%s4180 + $0x1f8] sm:$0xff]
        %4245 = vmatprep.subr.mxu0 %v4182
        %4246 = vmatpush1.msra.mxu0 %v4181
        %4247 = vmatprep.subr.mxu0 %v4186
        %4248 = vmatpush1.msra.mxu0 %v4185
        %4249 = vmatprep.subr.mxu0 %v4190
        %4250 = vmatpush1.msra.mxu0 %v4189
        %4251 = vmatprep.subr.mxu0 %v4194
        %4252 = vmatpush1.msra.mxu0 %v4193
        %4253 = vmatprep.subr.mxu0 %v4198
        %4254 = vmatpush1.msra.mxu0 %v4197
        %4255 = vmatprep.subr.mxu0 %v4202
        %4256 = vmatpush1.msra.mxu0 %v4201
        %4257 = vmatprep.subr.mxu0 %v4206
        %4258 = vmatpush1.msra.mxu0 %v4205
        %4259 = vmatprep.subr.mxu0 %v4210
        %4260 = vmatpush1.msra.mxu0 %v4209
        %4261 = vmatprep.subr.mxu0 %v4214
        %4262 = vmatpush1.msra.mxu0 %v4213
        %4263 = vmatprep.subr.mxu0 %v4218
        %4264 = vmatpush1.msra.mxu0 %v4217
        %4265 = vmatprep.subr.mxu0 %v4222
        %4266 = vmatpush1.msra.mxu0 %v4221
        %4267 = vmatprep.subr.mxu0 %v4226
        %4268 = vmatpush1.msra.mxu0 %v4225
        %4269 = vmatprep.subr.mxu0 %v4230
        %4270 = vmatpush1.msra.mxu0 %v4229
        %4271 = vmatprep.subr.mxu0 %v4234
        %4272 = vmatpush1.msra.mxu0 %v4233
        %4273 = vmatprep.subr.mxu0 %v4238
        %4274 = vmatpush1.msra.mxu0 %v4237
        %4275 = vmatprep.subr.mxu0 %v4242
        %4276 = vmatpush1.msra.mxu0 %v4241
        %4277 = vmatprep.subr.mxu0 0.0
        %4278 = vmatpush1.msra.mxu0 0.0
        %4279 = vmatprep.subr.mxu0 0.0
        %4280 = vmatpush1.msra.mxu0 0.0
        %4281 = vmatprep.subr.mxu0 0.0
        %4282 = vmatpush1.msra.mxu0 0.0
        %4283 = vmatprep.subr.mxu0 0.0
        %4284 = vmatpush1.msra.mxu0 0.0
        %4285 = vmatprep.subr.mxu0 0.0
        %4286 = vmatpush1.msra.mxu0 0.0
        %4287 = vmatprep.subr.mxu0 0.0
        %4288 = vmatpush1.msra.mxu0 0.0
        %4289 = vmatprep.subr.mxu0 0.0
        %4290 = vmatpush1.msra.mxu0 0.0
        %4291 = vmatprep.subr.mxu0 0.0
        %4292 = vmatpush1.msra.mxu0 0.0
        %4293 = vmatprep.subr.mxu0 0.0
        %4294 = vmatpush1.msra.mxu0 0.0
        %4295 = vmatprep.subr.mxu0 0.0
        %4296 = vmatpush1.msra.mxu0 0.0
        %4297 = vmatprep.subr.mxu0 0.0
        %4298 = vmatpush1.msra.mxu0 0.0
        %4299 = vmatprep.subr.mxu0 0.0
        %4300 = vmatpush1.msra.mxu0 0.0
        %4301 = vmatprep.subr.mxu0 0.0
        %4302 = vmatpush1.msra.mxu0 0.0
        %4303 = vmatprep.subr.mxu0 0.0
        %4304 = vmatpush1.msra.mxu0 0.0
        %4305 = vmatprep.subr.mxu0 0.0
        %4306 = vmatpush1.msra.mxu0 0.0
        %4307 = vmatprep.subr.mxu0 0.0
        %4308 = vmatpush1.msra.mxu0 0.0
        %4309 = vmatprep.mubr.f32.mxu0 0.0
        %4310 = vmatmul.mubr.f32.gmra.mrb[0].mxu0 %v2140
        %v4311 = vpop.f32.mrb[0].mxu0
        %v4312 = vadd.f32 0.0, %v4311
        %v4313 = vpop.f32.mrb[0].mxu0
        %v4314 = vadd.f32 0.0, %v4313
        %4315 = vmatprep.mubr.f32.mxu0 0.0
        %4316 = vmatmul.mubr.f32.gmra.mrb[0].mxu0 %v2141
        %v4317 = vpop.f32.mrb[0].mxu0
        %v4318 = vadd.f32 0.0, %v4317
        %v4319 = vpop.f32.mrb[0].mxu0
        %v4320 = vadd.f32 0.0, %v4319
        %4321 = vdwg.mxu0
        %4322 = vmatprep.subr.mxu0 %v4184
        %4323 = vmatpush1.msra.mxu0 %v4183
        %4324 = vmatprep.subr.mxu0 %v4188
        %4325 = vmatpush1.msra.mxu0 %v4187
        %4326 = vmatprep.subr.mxu0 %v4192
        %4327 = vmatpush1.msra.mxu0 %v4191
        %4328 = vmatprep.subr.mxu0 %v4196
        %4329 = vmatpush1.msra.mxu0 %v4195
        %4330 = vmatprep.subr.mxu0 %v4200
        %4331 = vmatpush1.msra.mxu0 %v4199
        %4332 = vmatprep.subr.mxu0 %v4204
        %4333 = vmatpush1.msra.mxu0 %v4203
        %4334 = vmatprep.subr.mxu0 %v4208
        %4335 = vmatpush1.msra.mxu0 %v4207
        %4336 = vmatprep.subr.mxu0 %v4212
        %4337 = vmatpush1.msra.mxu0 %v4211
        %4338 = vmatprep.subr.mxu0 %v4216
        %4339 = vmatpush1.msra.mxu0 %v4215
        %4340 = vmatprep.subr.mxu0 %v4220
        %4341 = vmatpush1.msra.mxu0 %v4219
        %4342 = vmatprep.subr.mxu0 %v4224
        %4343 = vmatpush1.msra.mxu0 %v4223
        %4344 = vmatprep.subr.mxu0 %v4228
        %4345 = vmatpush1.msra.mxu0 %v4227
        %4346 = vmatprep.subr.mxu0 %v4232
        %4347 = vmatpush1.msra.mxu0 %v4231
        %4348 = vmatprep.subr.mxu0 %v4236
        %4349 = vmatpush1.msra.mxu0 %v4235
        %4350 = vmatprep.subr.mxu0 %v4240
        %4351 = vmatpush1.msra.mxu0 %v4239
        %4352 = vmatprep.subr.mxu0 %v4244
        %4353 = vmatpush1.msra.mxu0 %v4243
        %4354 = vmatprep.subr.mxu0 0.0
        %4355 = vmatpush1.msra.mxu0 0.0
        %4356 = vmatprep.subr.mxu0 0.0
        %4357 = vmatpush1.msra.mxu0 0.0
        %4358 = vmatprep.subr.mxu0 0.0
        %4359 = vmatpush1.msra.mxu0 0.0
        %4360 = vmatprep.subr.mxu0 0.0
        %4361 = vmatpush1.msra.mxu0 0.0
        %4362 = vmatprep.subr.mxu0 0.0
        %4363 = vmatpush1.msra.mxu0 0.0
        %4364 = vmatprep.subr.mxu0 0.0
        %4365 = vmatpush1.msra.mxu0 0.0
        %4366 = vmatprep.subr.mxu0 0.0
        %4367 = vmatpush1.msra.mxu0 0.0
        %4368 = vmatprep.subr.mxu0 0.0
        %4369 = vmatpush1.msra.mxu0 0.0
        %4370 = vmatprep.subr.mxu0 0.0
        %4371 = vmatpush1.msra.mxu0 0.0
        %4372 = vmatprep.subr.mxu0 0.0
        %4373 = vmatpush1.msra.mxu0 0.0
        %4374 = vmatprep.subr.mxu0 0.0
        %4375 = vmatpush1.msra.mxu0 0.0
        %4376 = vmatprep.subr.mxu0 0.0
        %4377 = vmatpush1.msra.mxu0 0.0
        %4378 = vmatprep.subr.mxu0 0.0
        %4379 = vmatpush1.msra.mxu0 0.0
        %4380 = vmatprep.subr.mxu0 0.0
        %4381 = vmatpush1.msra.mxu0 0.0
        %4382 = vmatprep.subr.mxu0 0.0
        %4383 = vmatpush1.msra.mxu0 0.0
        %4384 = vmatprep.subr.mxu0 0.0
        %4385 = vmatpush1.msra.mxu0 0.0
        %4386 = vmatprep.mubr.f32.mxu0 0.0
        %4387 = vmatmul.mubr.f32.gmra.mrb[0].mxu0 %v2140
        %v4388 = vpop.f32.mrb[0].mxu0
        %v4389 = vadd.f32 0.0, %v4388
        %v4390 = vpop.f32.mrb[0].mxu0
        %v4391 = vadd.f32 0.0, %v4390
        %4392 = vmatprep.mubr.f32.mxu0 0.0
        %4393 = vmatmul.mubr.f32.gmra.mrb[0].mxu0 %v2141
        %v4394 = vpop.f32.mrb[0].mxu0
        %v4395 = vadd.f32 0.0, %v4394
        %v4396 = vpop.f32.mrb[0].mxu0
        %v4397 = vadd.f32 0.0, %v4396
        %4398 = vdwg.mxu0
        %v4399 = vadd.f32 %v4172, %v4312
        %v4400 = vadd.f32 %v4173, %v4314
        %v4401 = vadd.f32 %v4174, %v4389
        %v4402 = vadd.f32 %v4175, %v4391
        %v4403 = vadd.f32 %v4176, %v4318
        %v4404 = vadd.f32 %v4177, %v4320
        %v4405 = vadd.f32 %v4178, %v4395
        %v4406 = vadd.f32 %v4179, %v4397
        %s4407 = scalar_lea.vmem [#allocation7], 5120
        %v4408 = vld [vmem:[%s4407] sm:$0xff]
        %v4409 = vld [vmem:[%s4407 + $0x8] sm:$0xff]
        %v4410 = vld [vmem:[%s4407 + $0x10] sm:$0xff]
        %v4411 = vld [vmem:[%s4407 + $0x18] sm:$0xff]
        %v4412 = vld [vmem:[%s4407 + $0x20] sm:$0xff]
        %v4413 = vld [vmem:[%s4407 + $0x28] sm:$0xff]
        %v4414 = vld [vmem:[%s4407 + $0x30] sm:$0xff]
        %v4415 = vld [vmem:[%s4407 + $0x38] sm:$0xff]
        %v4416 = vld [vmem:[%s4407 + $0x40] sm:$0xff]
        %v4417 = vld [vmem:[%s4407 + $0x48] sm:$0xff]
        %v4418 = vld [vmem:[%s4407 + $0x50] sm:$0xff]
        %v4419 = vld [vmem:[%s4407 + $0x58] sm:$0xff]
        %v4420 = vld [vmem:[%s4407 + $0x60] sm:$0xff]
        %v4421 = vld [vmem:[%s4407 + $0x68] sm:$0xff]
        %v4422 = vld [vmem:[%s4407 + $0x70] sm:$0xff]
        %v4423 = vld [vmem:[%s4407 + $0x78] sm:$0xff]
        %v4424 = vld [vmem:[%s4407 + $0x80] sm:$0xff]
        %v4425 = vld [vmem:[%s4407 + $0x88] sm:$0xff]
        %v4426 = vld [vmem:[%s4407 + $0x90] sm:$0xff]
        %v4427 = vld [vmem:[%s4407 + $0x98] sm:$0xff]
        %v4428 = vld [vmem:[%s4407 + $0xa0] sm:$0xff]
        %v4429 = vld [vmem:[%s4407 + $0xa8] sm:$0xff]
        %v4430 = vld [vmem:[%s4407 + $0xb0] sm:$0xff]
        %v4431 = vld [vmem:[%s4407 + $0xb8] sm:$0xff]
        %v4432 = vld [vmem:[%s4407 + $0xc0] sm:$0xff]
        %v4433 = vld [vmem:[%s4407 + $0xc8] sm:$0xff]
        %v4434 = vld [vmem:[%s4407 + $0xd0] sm:$0xff]
        %v4435 = vld [vmem:[%s4407 + $0xd8] sm:$0xff]
        %v4436 = vld [vmem:[%s4407 + $0xe0] sm:$0xff]
        %v4437 = vld [vmem:[%s4407 + $0xe8] sm:$0xff]
        %v4438 = vld [vmem:[%s4407 + $0xf0] sm:$0xff]
        %v4439 = vld [vmem:[%s4407 + $0xf8] sm:$0xff]
        %v4440 = vld [vmem:[%s4407 + $0x100] sm:$0xff]
        %v4441 = vld [vmem:[%s4407 + $0x108] sm:$0xff]
        %v4442 = vld [vmem:[%s4407 + $0x110] sm:$0xff]
        %v4443 = vld [vmem:[%s4407 + $0x118] sm:$0xff]
        %v4444 = vld [vmem:[%s4407 + $0x120] sm:$0xff]
        %v4445 = vld [vmem:[%s4407 + $0x128] sm:$0xff]
        %v4446 = vld [vmem:[%s4407 + $0x130] sm:$0xff]
        %v4447 = vld [vmem:[%s4407 + $0x138] sm:$0xff]
        %v4448 = vld [vmem:[%s4407 + $0x140] sm:$0xff]
        %v4449 = vld [vmem:[%s4407 + $0x148] sm:$0xff]
        %v4450 = vld [vmem:[%s4407 + $0x150] sm:$0xff]
        %v4451 = vld [vmem:[%s4407 + $0x158] sm:$0xff]
        %v4452 = vld [vmem:[%s4407 + $0x160] sm:$0xff]
        %v4453 = vld [vmem:[%s4407 + $0x168] sm:$0xff]
        %v4454 = vld [vmem:[%s4407 + $0x170] sm:$0xff]
        %v4455 = vld [vmem:[%s4407 + $0x178] sm:$0xff]
        %v4456 = vld [vmem:[%s4407 + $0x180] sm:$0xff]
        %v4457 = vld [vmem:[%s4407 + $0x188] sm:$0xff]
        %v4458 = vld [vmem:[%s4407 + $0x190] sm:$0xff]
        %v4459 = vld [vmem:[%s4407 + $0x198] sm:$0xff]
        %v4460 = vld [vmem:[%s4407 + $0x1a0] sm:$0xff]
        %v4461 = vld [vmem:[%s4407 + $0x1a8] sm:$0xff]
        %v4462 = vld [vmem:[%s4407 + $0x1b0] sm:$0xff]
        %v4463 = vld [vmem:[%s4407 + $0x1b8] sm:$0xff]
        %v4464 = vld [vmem:[%s4407 + $0x1c0] sm:$0xff]
        %v4465 = vld [vmem:[%s4407 + $0x1c8] sm:$0xff]
        %v4466 = vld [vmem:[%s4407 + $0x1d0] sm:$0xff]
        %v4467 = vld [vmem:[%s4407 + $0x1d8] sm:$0xff]
        %v4468 = vld [vmem:[%s4407 + $0x1e0] sm:$0xff]
        %v4469 = vld [vmem:[%s4407 + $0x1e8] sm:$0xff]
        %v4470 = vld [vmem:[%s4407 + $0x1f0] sm:$0xff]
        %v4471 = vld [vmem:[%s4407 + $0x1f8] sm:$0xff]
        %4472 = vmatprep.subr.mxu0 %v4409
        %4473 = vmatpush1.msra.mxu0 %v4408
        %4474 = vmatprep.subr.mxu0 %v4413
        %4475 = vmatpush1.msra.mxu0 %v4412
        %4476 = vmatprep.subr.mxu0 %v4417
        %4477 = vmatpush1.msra.mxu0 %v4416
        %4478 = vmatprep.subr.mxu0 %v4421
        %4479 = vmatpush1.msra.mxu0 %v4420
        %4480 = vmatprep.subr.mxu0 %v4425
        %4481 = vmatpush1.msra.mxu0 %v4424
        %4482 = vmatprep.subr.mxu0 %v4429
        %4483 = vmatpush1.msra.mxu0 %v4428
        %4484 = vmatprep.subr.mxu0 %v4433
        %4485 = vmatpush1.msra.mxu0 %v4432
        %4486 = vmatprep.subr.mxu0 %v4437
        %4487 = vmatpush1.msra.mxu0 %v4436
        %4488 = vmatprep.subr.mxu0 %v4441
        %4489 = vmatpush1.msra.mxu0 %v4440
        %4490 = vmatprep.subr.mxu0 %v4445
        %4491 = vmatpush1.msra.mxu0 %v4444
        %4492 = vmatprep.subr.mxu0 %v4449
        %4493 = vmatpush1.msra.mxu0 %v4448
        %4494 = vmatprep.subr.mxu0 %v4453
        %4495 = vmatpush1.msra.mxu0 %v4452
        %4496 = vmatprep.subr.mxu0 %v4457
        %4497 = vmatpush1.msra.mxu0 %v4456
        %4498 = vmatprep.subr.mxu0 %v4461
        %4499 = vmatpush1.msra.mxu0 %v4460
        %4500 = vmatprep.subr.mxu0 %v4465
        %4501 = vmatpush1.msra.mxu0 %v4464
        %4502 = vmatprep.subr.mxu0 %v4469
        %4503 = vmatpush1.msra.mxu0 %v4468
        %4504 = vmatprep.subr.mxu0 0.0
        %4505 = vmatpush1.msra.mxu0 0.0
        %4506 = vmatprep.subr.mxu0 0.0
        %4507 = vmatpush1.msra.mxu0 0.0
        %4508 = vmatprep.subr.mxu0 0.0
        %4509 = vmatpush1.msra.mxu0 0.0
        %4510 = vmatprep.subr.mxu0 0.0
        %4511 = vmatpush1.msra.mxu0 0.0
        %4512 = vmatprep.subr.mxu0 0.0
        %4513 = vmatpush1.msra.mxu0 0.0
        %4514 = vmatprep.subr.mxu0 0.0
        %4515 = vmatpush1.msra.mxu0 0.0
        %4516 = vmatprep.subr.mxu0 0.0
        %4517 = vmatpush1.msra.mxu0 0.0
        %4518 = vmatprep.subr.mxu0 0.0
        %4519 = vmatpush1.msra.mxu0 0.0
        %4520 = vmatprep.subr.mxu0 0.0
        %4521 = vmatpush1.msra.mxu0 0.0
        %4522 = vmatprep.subr.mxu0 0.0
        %4523 = vmatpush1.msra.mxu0 0.0
        %4524 = vmatprep.subr.mxu0 0.0
        %4525 = vmatpush1.msra.mxu0 0.0
        %4526 = vmatprep.subr.mxu0 0.0
        %4527 = vmatpush1.msra.mxu0 0.0
        %4528 = vmatprep.subr.mxu0 0.0
        %4529 = vmatpush1.msra.mxu0 0.0
        %4530 = vmatprep.subr.mxu0 0.0
        %4531 = vmatpush1.msra.mxu0 0.0
        %4532 = vmatprep.subr.mxu0 0.0
        %4533 = vmatpush1.msra.mxu0 0.0
        %4534 = vmatprep.subr.mxu0 0.0
        %4535 = vmatpush1.msra.mxu0 0.0
        %4536 = vmatprep.mubr.f32.mxu0 0.0
        %4537 = vmatmul.mubr.f32.gmra.mrb[0].mxu0 %v2142
        %v4538 = vpop.f32.mrb[0].mxu0
        %v4539 = vadd.f32 0.0, %v4538
        %v4540 = vpop.f32.mrb[0].mxu0
        %v4541 = vadd.f32 0.0, %v4540
        %4542 = vmatprep.mubr.f32.mxu0 0.0
        %4543 = vmatmul.mubr.f32.gmra.mrb[0].mxu0 %v2143
        %v4544 = vpop.f32.mrb[0].mxu0
        %v4545 = vadd.f32 0.0, %v4544
        %v4546 = vpop.f32.mrb[0].mxu0
        %v4547 = vadd.f32 0.0, %v4546
        %4548 = vdwg.mxu0
        %4549 = vmatprep.subr.mxu0 %v4411
        %4550 = vmatpush1.msra.mxu0 %v4410
        %4551 = vmatprep.subr.mxu0 %v4415
        %4552 = vmatpush1.msra.mxu0 %v4414
        %4553 = vmatprep.subr.mxu0 %v4419
        %4554 = vmatpush1.msra.mxu0 %v4418
        %4555 = vmatprep.subr.mxu0 %v4423
        %4556 = vmatpush1.msra.mxu0 %v4422
        %4557 = vmatprep.subr.mxu0 %v4427
        %4558 = vmatpush1.msra.mxu0 %v4426
        %4559 = vmatprep.subr.mxu0 %v4431
        %4560 = vmatpush1.msra.mxu0 %v4430
        %4561 = vmatprep.subr.mxu0 %v4435
        %4562 = vmatpush1.msra.mxu0 %v4434
        %4563 = vmatprep.subr.mxu0 %v4439
        %4564 = vmatpush1.msra.mxu0 %v4438
        %4565 = vmatprep.subr.mxu0 %v4443
        %4566 = vmatpush1.msra.mxu0 %v4442
        %4567 = vmatprep.subr.mxu0 %v4447
        %4568 = vmatpush1.msra.mxu0 %v4446
        %4569 = vmatprep.subr.mxu0 %v4451
        %4570 = vmatpush1.msra.mxu0 %v4450
        %4571 = vmatprep.subr.mxu0 %v4455
        %4572 = vmatpush1.msra.mxu0 %v4454
        %4573 = vmatprep.subr.mxu0 %v4459
        %4574 = vmatpush1.msra.mxu0 %v4458
        %4575 = vmatprep.subr.mxu0 %v4463
        %4576 = vmatpush1.msra.mxu0 %v4462
        %4577 = vmatprep.subr.mxu0 %v4467
        %4578 = vmatpush1.msra.mxu0 %v4466
        %4579 = vmatprep.subr.mxu0 %v4471
        %4580 = vmatpush1.msra.mxu0 %v4470
        %4581 = vmatprep.subr.mxu0 0.0
        %4582 = vmatpush1.msra.mxu0 0.0
        %4583 = vmatprep.subr.mxu0 0.0
        %4584 = vmatpush1.msra.mxu0 0.0
        %4585 = vmatprep.subr.mxu0 0.0
        %4586 = vmatpush1.msra.mxu0 0.0
        %4587 = vmatprep.subr.mxu0 0.0
        %4588 = vmatpush1.msra.mxu0 0.0
        %4589 = vmatprep.subr.mxu0 0.0
        %4590 = vmatpush1.msra.mxu0 0.0
        %4591 = vmatprep.subr.mxu0 0.0
        %4592 = vmatpush1.msra.mxu0 0.0
        %4593 = vmatprep.subr.mxu0 0.0
        %4594 = vmatpush1.msra.mxu0 0.0
        %4595 = vmatprep.subr.mxu0 0.0
        %4596 = vmatpush1.msra.mxu0 0.0
        %4597 = vmatprep.subr.mxu0 0.0
        %4598 = vmatpush1.msra.mxu0 0.0
        %4599 = vmatprep.subr.mxu0 0.0
        %4600 = vmatpush1.msra.mxu0 0.0
        %4601 = vmatprep.subr.mxu0 0.0
        %4602 = vmatpush1.msra.mxu0 0.0
        %4603 = vmatprep.subr.mxu0 0.0
        %4604 = vmatpush1.msra.mxu0 0.0
        %4605 = vmatprep.subr.mxu0 0.0
        %4606 = vmatpush1.msra.mxu0 0.0
        %4607 = vmatprep.subr.mxu0 0.0
        %4608 = vmatpush1.msra.mxu0 0.0
        %4609 = vmatprep.subr.mxu0 0.0
        %4610 = vmatpush1.msra.mxu0 0.0
        %4611 = vmatprep.subr.mxu0 0.0
        %4612 = vmatpush1.msra.mxu0 0.0
        %4613 = vmatprep.mubr.f32.mxu0 0.0
        %4614 = vmatmul.mubr.f32.gmra.mrb[0].mxu0 %v2142
        %v4615 = vpop.f32.mrb[0].mxu0
        %v4616 = vadd.f32 0.0, %v4615
        %v4617 = vpop.f32.mrb[0].mxu0
        %v4618 = vadd.f32 0.0, %v4617
        %4619 = vmatprep.mubr.f32.mxu0 0.0
        %4620 = vmatmul.mubr.f32.gmra.mrb[0].mxu0 %v2143
        %v4621 = vpop.f32.mrb[0].mxu0
        %v4622 = vadd.f32 0.0, %v4621
        %v4623 = vpop.f32.mrb[0].mxu0
        %v4624 = vadd.f32 0.0, %v4623
        %4625 = vdwg.mxu0
        %v4626 = vadd.f32 %v4399, %v4539
        %v4627 = vadd.f32 %v4400, %v4541
        %v4628 = vadd.f32 %v4401, %v4616
        %v4629 = vadd.f32 %v4402, %v4618
        %v4630 = vadd.f32 %v4403, %v4545
        %v4631 = vadd.f32 %v4404, %v4547
        %v4632 = vadd.f32 %v4405, %v4622
        %v4633 = vadd.f32 %v4406, %v4624
        %s4634 = scalar_lea.vmem [#allocation7], 5632
        %v4635 = vld [vmem:[%s4634] sm:$0xff]
        %v4636 = vld [vmem:[%s4634 + $0x8] sm:$0xff]
        %v4637 = vld [vmem:[%s4634 + $0x10] sm:$0xff]
        %v4638 = vld [vmem:[%s4634 + $0x18] sm:$0xff]
        %v4639 = vld [vmem:[%s4634 + $0x20] sm:$0xff]
        %v4640 = vld [vmem:[%s4634 + $0x28] sm:$0xff]
        %v4641 = vld [vmem:[%s4634 + $0x30] sm:$0xff]
        %v4642 = vld [vmem:[%s4634 + $0x38] sm:$0xff]
        %v4643 = vld [vmem:[%s4634 + $0x40] sm:$0xff]
        %v4644 = vld [vmem:[%s4634 + $0x48] sm:$0xff]
        %v4645 = vld [vmem:[%s4634 + $0x50] sm:$0xff]
        %v4646 = vld [vmem:[%s4634 + $0x58] sm:$0xff]
        %v4647 = vld [vmem:[%s4634 + $0x60] sm:$0xff]
        %v4648 = vld [vmem:[%s4634 + $0x68] sm:$0xff]
        %v4649 = vld [vmem:[%s4634 + $0x70] sm:$0xff]
        %v4650 = vld [vmem:[%s4634 + $0x78] sm:$0xff]
        %v4651 = vld [vmem:[%s4634 + $0x80] sm:$0xff]
        %v4652 = vld [vmem:[%s4634 + $0x88] sm:$0xff]
        %v4653 = vld [vmem:[%s4634 + $0x90] sm:$0xff]
        %v4654 = vld [vmem:[%s4634 + $0x98] sm:$0xff]
        %v4655 = vld [vmem:[%s4634 + $0xa0] sm:$0xff]
        %v4656 = vld [vmem:[%s4634 + $0xa8] sm:$0xff]
        %v4657 = vld [vmem:[%s4634 + $0xb0] sm:$0xff]
        %v4658 = vld [vmem:[%s4634 + $0xb8] sm:$0xff]
        %v4659 = vld [vmem:[%s4634 + $0xc0] sm:$0xff]
        %v4660 = vld [vmem:[%s4634 + $0xc8] sm:$0xff]
        %v4661 = vld [vmem:[%s4634 + $0xd0] sm:$0xff]
        %v4662 = vld [vmem:[%s4634 + $0xd8] sm:$0xff]
        %v4663 = vld [vmem:[%s4634 + $0xe0] sm:$0xff]
        %v4664 = vld [vmem:[%s4634 + $0xe8] sm:$0xff]
        %v4665 = vld [vmem:[%s4634 + $0xf0] sm:$0xff]
        %v4666 = vld [vmem:[%s4634 + $0xf8] sm:$0xff]
        %v4667 = vld [vmem:[%s4634 + $0x100] sm:$0xff]
        %v4668 = vld [vmem:[%s4634 + $0x108] sm:$0xff]
        %v4669 = vld [vmem:[%s4634 + $0x110] sm:$0xff]
        %v4670 = vld [vmem:[%s4634 + $0x118] sm:$0xff]
        %v4671 = vld [vmem:[%s4634 + $0x120] sm:$0xff]
        %v4672 = vld [vmem:[%s4634 + $0x128] sm:$0xff]
        %v4673 = vld [vmem:[%s4634 + $0x130] sm:$0xff]
        %v4674 = vld [vmem:[%s4634 + $0x138] sm:$0xff]
        %v4675 = vld [vmem:[%s4634 + $0x140] sm:$0xff]
        %v4676 = vld [vmem:[%s4634 + $0x148] sm:$0xff]
        %v4677 = vld [vmem:[%s4634 + $0x150] sm:$0xff]
        %v4678 = vld [vmem:[%s4634 + $0x158] sm:$0xff]
        %v4679 = vld [vmem:[%s4634 + $0x160] sm:$0xff]
        %v4680 = vld [vmem:[%s4634 + $0x168] sm:$0xff]
        %v4681 = vld [vmem:[%s4634 + $0x170] sm:$0xff]
        %v4682 = vld [vmem:[%s4634 + $0x178] sm:$0xff]
        %v4683 = vld [vmem:[%s4634 + $0x180] sm:$0xff]
        %v4684 = vld [vmem:[%s4634 + $0x188] sm:$0xff]
        %v4685 = vld [vmem:[%s4634 + $0x190] sm:$0xff]
        %v4686 = vld [vmem:[%s4634 + $0x198] sm:$0xff]
        %v4687 = vld [vmem:[%s4634 + $0x1a0] sm:$0xff]
        %v4688 = vld [vmem:[%s4634 + $0x1a8] sm:$0xff]
        %v4689 = vld [vmem:[%s4634 + $0x1b0] sm:$0xff]
        %v4690 = vld [vmem:[%s4634 + $0x1b8] sm:$0xff]
        %v4691 = vld [vmem:[%s4634 + $0x1c0] sm:$0xff]
        %v4692 = vld [vmem:[%s4634 + $0x1c8] sm:$0xff]
        %v4693 = vld [vmem:[%s4634 + $0x1d0] sm:$0xff]
        %v4694 = vld [vmem:[%s4634 + $0x1d8] sm:$0xff]
        %v4695 = vld [vmem:[%s4634 + $0x1e0] sm:$0xff]
        %v4696 = vld [vmem:[%s4634 + $0x1e8] sm:$0xff]
        %v4697 = vld [vmem:[%s4634 + $0x1f0] sm:$0xff]
        %v4698 = vld [vmem:[%s4634 + $0x1f8] sm:$0xff]
        %4699 = vmatprep.subr.mxu0 %v4636
        %4700 = vmatpush1.msra.mxu0 %v4635
        %4701 = vmatprep.subr.mxu0 %v4640
        %4702 = vmatpush1.msra.mxu0 %v4639
        %4703 = vmatprep.subr.mxu0 %v4644
        %4704 = vmatpush1.msra.mxu0 %v4643
        %4705 = vmatprep.subr.mxu0 %v4648
        %4706 = vmatpush1.msra.mxu0 %v4647
        %4707 = vmatprep.subr.mxu0 %v4652
        %4708 = vmatpush1.msra.mxu0 %v4651
        %4709 = vmatprep.subr.mxu0 %v4656
        %4710 = vmatpush1.msra.mxu0 %v4655
        %4711 = vmatprep.subr.mxu0 %v4660
        %4712 = vmatpush1.msra.mxu0 %v4659
        %4713 = vmatprep.subr.mxu0 %v4664
        %4714 = vmatpush1.msra.mxu0 %v4663
        %4715 = vmatprep.subr.mxu0 %v4668
        %4716 = vmatpush1.msra.mxu0 %v4667
        %4717 = vmatprep.subr.mxu0 %v4672
        %4718 = vmatpush1.msra.mxu0 %v4671
        %4719 = vmatprep.subr.mxu0 %v4676
        %4720 = vmatpush1.msra.mxu0 %v4675
        %4721 = vmatprep.subr.mxu0 %v4680
        %4722 = vmatpush1.msra.mxu0 %v4679
        %4723 = vmatprep.subr.mxu0 %v4684
        %4724 = vmatpush1.msra.mxu0 %v4683
        %4725 = vmatprep.subr.mxu0 %v4688
        %4726 = vmatpush1.msra.mxu0 %v4687
        %4727 = vmatprep.subr.mxu0 %v4692
        %4728 = vmatpush1.msra.mxu0 %v4691
        %4729 = vmatprep.subr.mxu0 %v4696
        %4730 = vmatpush1.msra.mxu0 %v4695
        %4731 = vmatprep.subr.mxu0 0.0
        %4732 = vmatpush1.msra.mxu0 0.0
        %4733 = vmatprep.subr.mxu0 0.0
        %4734 = vmatpush1.msra.mxu0 0.0
        %4735 = vmatprep.subr.mxu0 0.0
        %4736 = vmatpush1.msra.mxu0 0.0
        %4737 = vmatprep.subr.mxu0 0.0
        %4738 = vmatpush1.msra.mxu0 0.0
        %4739 = vmatprep.subr.mxu0 0.0
        %4740 = vmatpush1.msra.mxu0 0.0
        %4741 = vmatprep.subr.mxu0 0.0
        %4742 = vmatpush1.msra.mxu0 0.0
        %4743 = vmatprep.subr.mxu0 0.0
        %4744 = vmatpush1.msra.mxu0 0.0
        %4745 = vmatprep.subr.mxu0 0.0
        %4746 = vmatpush1.msra.mxu0 0.0
        %4747 = vmatprep.subr.mxu0 0.0
        %4748 = vmatpush1.msra.mxu0 0.0
        %4749 = vmatprep.subr.mxu0 0.0
        %4750 = vmatpush1.msra.mxu0 0.0
        %4751 = vmatprep.subr.mxu0 0.0
        %4752 = vmatpush1.msra.mxu0 0.0
        %4753 = vmatprep.subr.mxu0 0.0
        %4754 = vmatpush1.msra.mxu0 0.0
        %4755 = vmatprep.subr.mxu0 0.0
        %4756 = vmatpush1.msra.mxu0 0.0
        %4757 = vmatprep.subr.mxu0 0.0
        %4758 = vmatpush1.msra.mxu0 0.0
        %4759 = vmatprep.subr.mxu0 0.0
        %4760 = vmatpush1.msra.mxu0 0.0
        %4761 = vmatprep.subr.mxu0 0.0
        %4762 = vmatpush1.msra.mxu0 0.0
        %4763 = vmatprep.mubr.f32.mxu0 0.0
        %4764 = vmatmul.mubr.f32.gmra.mrb[0].mxu0 %v2144
        %v4765 = vpop.f32.mrb[0].mxu0
        %v4766 = vadd.f32 0.0, %v4765
        %v4767 = vpop.f32.mrb[0].mxu0
        %v4768 = vadd.f32 0.0, %v4767
        %4769 = vmatprep.mubr.f32.mxu0 0.0
        %4770 = vmatmul.mubr.f32.gmra.mrb[0].mxu0 %v2145
        %v4771 = vpop.f32.mrb[0].mxu0
        %v4772 = vadd.f32 0.0, %v4771
        %v4773 = vpop.f32.mrb[0].mxu0
        %v4774 = vadd.f32 0.0, %v4773
        %4775 = vdwg.mxu0
        %4776 = vmatprep.subr.mxu0 %v4638
        %4777 = vmatpush1.msra.mxu0 %v4637
        %4778 = vmatprep.subr.mxu0 %v4642
        %4779 = vmatpush1.msra.mxu0 %v4641
        %4780 = vmatprep.subr.mxu0 %v4646
        %4781 = vmatpush1.msra.mxu0 %v4645
        %4782 = vmatprep.subr.mxu0 %v4650
        %4783 = vmatpush1.msra.mxu0 %v4649
        %4784 = vmatprep.subr.mxu0 %v4654
        %4785 = vmatpush1.msra.mxu0 %v4653
        %4786 = vmatprep.subr.mxu0 %v4658
        %4787 = vmatpush1.msra.mxu0 %v4657
        %4788 = vmatprep.subr.mxu0 %v4662
        %4789 = vmatpush1.msra.mxu0 %v4661
        %4790 = vmatprep.subr.mxu0 %v4666
        %4791 = vmatpush1.msra.mxu0 %v4665
        %4792 = vmatprep.subr.mxu0 %v4670
        %4793 = vmatpush1.msra.mxu0 %v4669
        %4794 = vmatprep.subr.mxu0 %v4674
        %4795 = vmatpush1.msra.mxu0 %v4673
        %4796 = vmatprep.subr.mxu0 %v4678
        %4797 = vmatpush1.msra.mxu0 %v4677
        %4798 = vmatprep.subr.mxu0 %v4682
        %4799 = vmatpush1.msra.mxu0 %v4681
        %4800 = vmatprep.subr.mxu0 %v4686
        %4801 = vmatpush1.msra.mxu0 %v4685
        %4802 = vmatprep.subr.mxu0 %v4690
        %4803 = vmatpush1.msra.mxu0 %v4689
        %4804 = vmatprep.subr.mxu0 %v4694
        %4805 = vmatpush1.msra.mxu0 %v4693
        %4806 = vmatprep.subr.mxu0 %v4698
        %4807 = vmatpush1.msra.mxu0 %v4697
        %4808 = vmatprep.subr.mxu0 0.0
        %4809 = vmatpush1.msra.mxu0 0.0
        %4810 = vmatprep.subr.mxu0 0.0
        %4811 = vmatpush1.msra.mxu0 0.0
        %4812 = vmatprep.subr.mxu0 0.0
        %4813 = vmatpush1.msra.mxu0 0.0
        %4814 = vmatprep.subr.mxu0 0.0
        %4815 = vmatpush1.msra.mxu0 0.0
        %4816 = vmatprep.subr.mxu0 0.0
        %4817 = vmatpush1.msra.mxu0 0.0
        %4818 = vmatprep.subr.mxu0 0.0
        %4819 = vmatpush1.msra.mxu0 0.0
        %4820 = vmatprep.subr.mxu0 0.0
        %4821 = vmatpush1.msra.mxu0 0.0
        %4822 = vmatprep.subr.mxu0 0.0
        %4823 = vmatpush1.msra.mxu0 0.0
        %4824 = vmatprep.subr.mxu0 0.0
        %4825 = vmatpush1.msra.mxu0 0.0
        %4826 = vmatprep.subr.mxu0 0.0
        %4827 = vmatpush1.msra.mxu0 0.0
        %4828 = vmatprep.subr.mxu0 0.0
        %4829 = vmatpush1.msra.mxu0 0.0
        %4830 = vmatprep.subr.mxu0 0.0
        %4831 = vmatpush1.msra.mxu0 0.0
        %4832 = vmatprep.subr.mxu0 0.0
        %4833 = vmatpush1.msra.mxu0 0.0
        %4834 = vmatprep.subr.mxu0 0.0
        %4835 = vmatpush1.msra.mxu0 0.0
        %4836 = vmatprep.subr.mxu0 0.0
        %4837 = vmatpush1.msra.mxu0 0.0
        %4838 = vmatprep.subr.mxu0 0.0
        %4839 = vmatpush1.msra.mxu0 0.0
        %4840 = vmatprep.mubr.f32.mxu0 0.0
        %4841 = vmatmul.mubr.f32.gmra.mrb[0].mxu0 %v2144
        %v4842 = vpop.f32.mrb[0].mxu0
        %v4843 = vadd.f32 0.0, %v4842
        %v4844 = vpop.f32.mrb[0].mxu0
        %v4845 = vadd.f32 0.0, %v4844
        %4846 = vmatprep.mubr.f32.mxu0 0.0
        %4847 = vmatmul.mubr.f32.gmra.mrb[0].mxu0 %v2145
        %v4848 = vpop.f32.mrb[0].mxu0
        %v4849 = vadd.f32 0.0, %v4848
        %v4850 = vpop.f32.mrb[0].mxu0
        %v4851 = vadd.f32 0.0, %v4850
        %4852 = vdwg.mxu0
        %v4853 = vadd.f32 %v4626, %v4766
        %v4854 = vadd.f32 %v4627, %v4768
        %v4855 = vadd.f32 %v4628, %v4843
        %v4856 = vadd.f32 %v4629, %v4845
        %v4857 = vadd.f32 %v4630, %v4772
        %v4858 = vadd.f32 %v4631, %v4774
        %v4859 = vadd.f32 %v4632, %v4849
        %v4860 = vadd.f32 %v4633, %v4851
        %s4861 = scalar_lea.vmem [#allocation7], 6144
        %v4862 = vld [vmem:[%s4861] sm:$0xff]
        %v4863 = vld [vmem:[%s4861 + $0x8] sm:$0xff]
        %v4864 = vld [vmem:[%s4861 + $0x10] sm:$0xff]
        %v4865 = vld [vmem:[%s4861 + $0x18] sm:$0xff]
        %v4866 = vld [vmem:[%s4861 + $0x20] sm:$0xff]
        %v4867 = vld [vmem:[%s4861 + $0x28] sm:$0xff]
        %v4868 = vld [vmem:[%s4861 + $0x30] sm:$0xff]
        %v4869 = vld [vmem:[%s4861 + $0x38] sm:$0xff]
        %v4870 = vld [vmem:[%s4861 + $0x40] sm:$0xff]
        %v4871 = vld [vmem:[%s4861 + $0x48] sm:$0xff]
        %v4872 = vld [vmem:[%s4861 + $0x50] sm:$0xff]
        %v4873 = vld [vmem:[%s4861 + $0x58] sm:$0xff]
        %v4874 = vld [vmem:[%s4861 + $0x60] sm:$0xff]
        %v4875 = vld [vmem:[%s4861 + $0x68] sm:$0xff]
        %v4876 = vld [vmem:[%s4861 + $0x70] sm:$0xff]
        %v4877 = vld [vmem:[%s4861 + $0x78] sm:$0xff]
        %v4878 = vld [vmem:[%s4861 + $0x80] sm:$0xff]
        %v4879 = vld [vmem:[%s4861 + $0x88] sm:$0xff]
        %v4880 = vld [vmem:[%s4861 + $0x90] sm:$0xff]
        %v4881 = vld [vmem:[%s4861 + $0x98] sm:$0xff]
        %v4882 = vld [vmem:[%s4861 + $0xa0] sm:$0xff]
        %v4883 = vld [vmem:[%s4861 + $0xa8] sm:$0xff]
        %v4884 = vld [vmem:[%s4861 + $0xb0] sm:$0xff]
        %v4885 = vld [vmem:[%s4861 + $0xb8] sm:$0xff]
        %v4886 = vld [vmem:[%s4861 + $0xc0] sm:$0xff]
        %v4887 = vld [vmem:[%s4861 + $0xc8] sm:$0xff]
        %v4888 = vld [vmem:[%s4861 + $0xd0] sm:$0xff]
        %v4889 = vld [vmem:[%s4861 + $0xd8] sm:$0xff]
        %v4890 = vld [vmem:[%s4861 + $0xe0] sm:$0xff]
        %v4891 = vld [vmem:[%s4861 + $0xe8] sm:$0xff]
        %v4892 = vld [vmem:[%s4861 + $0xf0] sm:$0xff]
        %v4893 = vld [vmem:[%s4861 + $0xf8] sm:$0xff]
        %v4894 = vld [vmem:[%s4861 + $0x100] sm:$0xff]
        %v4895 = vld [vmem:[%s4861 + $0x108] sm:$0xff]
        %v4896 = vld [vmem:[%s4861 + $0x110] sm:$0xff]
        %v4897 = vld [vmem:[%s4861 + $0x118] sm:$0xff]
        %v4898 = vld [vmem:[%s4861 + $0x120] sm:$0xff]
        %v4899 = vld [vmem:[%s4861 + $0x128] sm:$0xff]
        %v4900 = vld [vmem:[%s4861 + $0x130] sm:$0xff]
        %v4901 = vld [vmem:[%s4861 + $0x138] sm:$0xff]
        %v4902 = vld [vmem:[%s4861 + $0x140] sm:$0xff]
        %v4903 = vld [vmem:[%s4861 + $0x148] sm:$0xff]
        %v4904 = vld [vmem:[%s4861 + $0x150] sm:$0xff]
        %v4905 = vld [vmem:[%s4861 + $0x158] sm:$0xff]
        %v4906 = vld [vmem:[%s4861 + $0x160] sm:$0xff]
        %v4907 = vld [vmem:[%s4861 + $0x168] sm:$0xff]
        %v4908 = vld [vmem:[%s4861 + $0x170] sm:$0xff]
        %v4909 = vld [vmem:[%s4861 + $0x178] sm:$0xff]
        %v4910 = vld [vmem:[%s4861 + $0x180] sm:$0xff]
        %v4911 = vld [vmem:[%s4861 + $0x188] sm:$0xff]
        %v4912 = vld [vmem:[%s4861 + $0x190] sm:$0xff]
        %v4913 = vld [vmem:[%s4861 + $0x198] sm:$0xff]
        %v4914 = vld [vmem:[%s4861 + $0x1a0] sm:$0xff]
        %v4915 = vld [vmem:[%s4861 + $0x1a8] sm:$0xff]
        %v4916 = vld [vmem:[%s4861 + $0x1b0] sm:$0xff]
        %v4917 = vld [vmem:[%s4861 + $0x1b8] sm:$0xff]
        %v4918 = vld [vmem:[%s4861 + $0x1c0] sm:$0xff]
        %v4919 = vld [vmem:[%s4861 + $0x1c8] sm:$0xff]
        %v4920 = vld [vmem:[%s4861 + $0x1d0] sm:$0xff]
        %v4921 = vld [vmem:[%s4861 + $0x1d8] sm:$0xff]
        %v4922 = vld [vmem:[%s4861 + $0x1e0] sm:$0xff]
        %v4923 = vld [vmem:[%s4861 + $0x1e8] sm:$0xff]
        %v4924 = vld [vmem:[%s4861 + $0x1f0] sm:$0xff]
        %v4925 = vld [vmem:[%s4861 + $0x1f8] sm:$0xff]
        %4926 = vmatprep.subr.mxu0 %v4863
        %4927 = vmatpush1.msra.mxu0 %v4862
        %4928 = vmatprep.subr.mxu0 %v4867
        %4929 = vmatpush1.msra.mxu0 %v4866
        %4930 = vmatprep.subr.mxu0 %v4871
        %4931 = vmatpush1.msra.mxu0 %v4870
        %4932 = vmatprep.subr.mxu0 %v4875
        %4933 = vmatpush1.msra.mxu0 %v4874
        %4934 = vmatprep.subr.mxu0 %v4879
        %4935 = vmatpush1.msra.mxu0 %v4878
        %4936 = vmatprep.subr.mxu0 %v4883
        %4937 = vmatpush1.msra.mxu0 %v4882
        %4938 = vmatprep.subr.mxu0 %v4887
        %4939 = vmatpush1.msra.mxu0 %v4886
        %4940 = vmatprep.subr.mxu0 %v4891
        %4941 = vmatpush1.msra.mxu0 %v4890
        %4942 = vmatprep.subr.mxu0 %v4895
        %4943 = vmatpush1.msra.mxu0 %v4894
        %4944 = vmatprep.subr.mxu0 %v4899
        %4945 = vmatpush1.msra.mxu0 %v4898
        %4946 = vmatprep.subr.mxu0 %v4903
        %4947 = vmatpush1.msra.mxu0 %v4902
        %4948 = vmatprep.subr.mxu0 %v4907
        %4949 = vmatpush1.msra.mxu0 %v4906
        %4950 = vmatprep.subr.mxu0 %v4911
        %4951 = vmatpush1.msra.mxu0 %v4910
        %4952 = vmatprep.subr.mxu0 %v4915
        %4953 = vmatpush1.msra.mxu0 %v4914
        %4954 = vmatprep.subr.mxu0 %v4919
        %4955 = vmatpush1.msra.mxu0 %v4918
        %4956 = vmatprep.subr.mxu0 %v4923
        %4957 = vmatpush1.msra.mxu0 %v4922
        %4958 = vmatprep.subr.mxu0 0.0
        %4959 = vmatpush1.msra.mxu0 0.0
        %4960 = vmatprep.subr.mxu0 0.0
        %4961 = vmatpush1.msra.mxu0 0.0
        %4962 = vmatprep.subr.mxu0 0.0
        %4963 = vmatpush1.msra.mxu0 0.0
        %4964 = vmatprep.subr.mxu0 0.0
        %4965 = vmatpush1.msra.mxu0 0.0
        %4966 = vmatprep.subr.mxu0 0.0
        %4967 = vmatpush1.msra.mxu0 0.0
        %4968 = vmatprep.subr.mxu0 0.0
        %4969 = vmatpush1.msra.mxu0 0.0
        %4970 = vmatprep.subr.mxu0 0.0
        %4971 = vmatpush1.msra.mxu0 0.0
        %4972 = vmatprep.subr.mxu0 0.0
        %4973 = vmatpush1.msra.mxu0 0.0
        %4974 = vmatprep.subr.mxu0 0.0
        %4975 = vmatpush1.msra.mxu0 0.0
        %4976 = vmatprep.subr.mxu0 0.0
        %4977 = vmatpush1.msra.mxu0 0.0
        %4978 = vmatprep.subr.mxu0 0.0
        %4979 = vmatpush1.msra.mxu0 0.0
        %4980 = vmatprep.subr.mxu0 0.0
        %4981 = vmatpush1.msra.mxu0 0.0
        %4982 = vmatprep.subr.mxu0 0.0
        %4983 = vmatpush1.msra.mxu0 0.0
        %4984 = vmatprep.subr.mxu0 0.0
        %4985 = vmatpush1.msra.mxu0 0.0
        %4986 = vmatprep.subr.mxu0 0.0
        %4987 = vmatpush1.msra.mxu0 0.0
        %4988 = vmatprep.subr.mxu0 0.0
        %4989 = vmatpush1.msra.mxu0 0.0
        %4990 = vmatprep.mubr.f32.mxu0 0.0
        %4991 = vmatmul.mubr.f32.gmra.mrb[0].mxu0 %v2146
        %v4992 = vpop.f32.mrb[0].mxu0
        %v4993 = vadd.f32 0.0, %v4992
        %v4994 = vpop.f32.mrb[0].mxu0
        %v4995 = vadd.f32 0.0, %v4994
        %4996 = vmatprep.mubr.f32.mxu0 0.0
        %4997 = vmatmul.mubr.f32.gmra.mrb[0].mxu0 %v2147
        %v4998 = vpop.f32.mrb[0].mxu0
        %v4999 = vadd.f32 0.0, %v4998
        %v5000 = vpop.f32.mrb[0].mxu0
        %v5001 = vadd.f32 0.0, %v5000
        %5002 = vdwg.mxu0
        %5003 = vmatprep.subr.mxu0 %v4865
        %5004 = vmatpush1.msra.mxu0 %v4864
        %5005 = vmatprep.subr.mxu0 %v4869
        %5006 = vmatpush1.msra.mxu0 %v4868
        %5007 = vmatprep.subr.mxu0 %v4873
        %5008 = vmatpush1.msra.mxu0 %v4872
        %5009 = vmatprep.subr.mxu0 %v4877
        %5010 = vmatpush1.msra.mxu0 %v4876
        %5011 = vmatprep.subr.mxu0 %v4881
        %5012 = vmatpush1.msra.mxu0 %v4880
        %5013 = vmatprep.subr.mxu0 %v4885
        %5014 = vmatpush1.msra.mxu0 %v4884
        %5015 = vmatprep.subr.mxu0 %v4889
        %5016 = vmatpush1.msra.mxu0 %v4888
        %5017 = vmatprep.subr.mxu0 %v4893
        %5018 = vmatpush1.msra.mxu0 %v4892
        %5019 = vmatprep.subr.mxu0 %v4897
        %5020 = vmatpush1.msra.mxu0 %v4896
        %5021 = vmatprep.subr.mxu0 %v4901
        %5022 = vmatpush1.msra.mxu0 %v4900
        %5023 = vmatprep.subr.mxu0 %v4905
        %5024 = vmatpush1.msra.mxu0 %v4904
        %5025 = vmatprep.subr.mxu0 %v4909
        %5026 = vmatpush1.msra.mxu0 %v4908
        %5027 = vmatprep.subr.mxu0 %v4913
        %5028 = vmatpush1.msra.mxu0 %v4912
        %5029 = vmatprep.subr.mxu0 %v4917
        %5030 = vmatpush1.msra.mxu0 %v4916
        %5031 = vmatprep.subr.mxu0 %v4921
        %5032 = vmatpush1.msra.mxu0 %v4920
        %5033 = vmatprep.subr.mxu0 %v4925
        %5034 = vmatpush1.msra.mxu0 %v4924
        %5035 = vmatprep.subr.mxu0 0.0
        %5036 = vmatpush1.msra.mxu0 0.0
        %5037 = vmatprep.subr.mxu0 0.0
        %5038 = vmatpush1.msra.mxu0 0.0
        %5039 = vmatprep.subr.mxu0 0.0
        %5040 = vmatpush1.msra.mxu0 0.0
        %5041 = vmatprep.subr.mxu0 0.0
        %5042 = vmatpush1.msra.mxu0 0.0
        %5043 = vmatprep.subr.mxu0 0.0
        %5044 = vmatpush1.msra.mxu0 0.0
        %5045 = vmatprep.subr.mxu0 0.0
        %5046 = vmatpush1.msra.mxu0 0.0
        %5047 = vmatprep.subr.mxu0 0.0
        %5048 = vmatpush1.msra.mxu0 0.0
        %5049 = vmatprep.subr.mxu0 0.0
        %5050 = vmatpush1.msra.mxu0 0.0
        %5051 = vmatprep.subr.mxu0 0.0
        %5052 = vmatpush1.msra.mxu0 0.0
        %5053 = vmatprep.subr.mxu0 0.0
        %5054 = vmatpush1.msra.mxu0 0.0
        %5055 = vmatprep.subr.mxu0 0.0
        %5056 = vmatpush1.msra.mxu0 0.0
        %5057 = vmatprep.subr.mxu0 0.0
        %5058 = vmatpush1.msra.mxu0 0.0
        %5059 = vmatprep.subr.mxu0 0.0
        %5060 = vmatpush1.msra.mxu0 0.0
        %5061 = vmatprep.subr.mxu0 0.0
        %5062 = vmatpush1.msra.mxu0 0.0
        %5063 = vmatprep.subr.mxu0 0.0
        %5064 = vmatpush1.msra.mxu0 0.0
        %5065 = vmatprep.subr.mxu0 0.0
        %5066 = vmatpush1.msra.mxu0 0.0
        %5067 = vmatprep.mubr.f32.mxu0 0.0
        %5068 = vmatmul.mubr.f32.gmra.mrb[0].mxu0 %v2146
        %v5069 = vpop.f32.mrb[0].mxu0
        %v5070 = vadd.f32 0.0, %v5069
        %v5071 = vpop.f32.mrb[0].mxu0
        %v5072 = vadd.f32 0.0, %v5071
        %5073 = vmatprep.mubr.f32.mxu0 0.0
        %5074 = vmatmul.mubr.f32.gmra.mrb[0].mxu0 %v2147
        %v5075 = vpop.f32.mrb[0].mxu0
        %v5076 = vadd.f32 0.0, %v5075
        %v5077 = vpop.f32.mrb[0].mxu0
        %v5078 = vadd.f32 0.0, %v5077
        %5079 = vdwg.mxu0
        %v5080 = vadd.f32 %v4853, %v4993
        %v5081 = vadd.f32 %v4854, %v4995
        %v5082 = vadd.f32 %v4855, %v5070
        %v5083 = vadd.f32 %v4856, %v5072
        %v5084 = vadd.f32 %v4857, %v4999
        %v5085 = vadd.f32 %v4858, %v5001
        %v5086 = vadd.f32 %v4859, %v5076
        %v5087 = vadd.f32 %v4860, %v5078
        %s5088 = scalar_lea.vmem [#allocation7], 6656
        %v5089 = vld [vmem:[%s5088] sm:$0xff]
        %v5090 = vld [vmem:[%s5088 + $0x8] sm:$0xff]
        %v5091 = vld [vmem:[%s5088 + $0x10] sm:$0xff]
        %v5092 = vld [vmem:[%s5088 + $0x18] sm:$0xff]
        %v5093 = vld [vmem:[%s5088 + $0x20] sm:$0xff]
        %v5094 = vld [vmem:[%s5088 + $0x28] sm:$0xff]
        %v5095 = vld [vmem:[%s5088 + $0x30] sm:$0xff]
        %v5096 = vld [vmem:[%s5088 + $0x38] sm:$0xff]
        %v5097 = vld [vmem:[%s5088 + $0x40] sm:$0xff]
        %v5098 = vld [vmem:[%s5088 + $0x48] sm:$0xff]
        %v5099 = vld [vmem:[%s5088 + $0x50] sm:$0xff]
        %v5100 = vld [vmem:[%s5088 + $0x58] sm:$0xff]
        %v5101 = vld [vmem:[%s5088 + $0x60] sm:$0xff]
        %v5102 = vld [vmem:[%s5088 + $0x68] sm:$0xff]
        %v5103 = vld [vmem:[%s5088 + $0x70] sm:$0xff]
        %v5104 = vld [vmem:[%s5088 + $0x78] sm:$0xff]
        %v5105 = vld [vmem:[%s5088 + $0x80] sm:$0xff]
        %v5106 = vld [vmem:[%s5088 + $0x88] sm:$0xff]
        %v5107 = vld [vmem:[%s5088 + $0x90] sm:$0xff]
        %v5108 = vld [vmem:[%s5088 + $0x98] sm:$0xff]
        %v5109 = vld [vmem:[%s5088 + $0xa0] sm:$0xff]
        %v5110 = vld [vmem:[%s5088 + $0xa8] sm:$0xff]
        %v5111 = vld [vmem:[%s5088 + $0xb0] sm:$0xff]
        %v5112 = vld [vmem:[%s5088 + $0xb8] sm:$0xff]
        %v5113 = vld [vmem:[%s5088 + $0xc0] sm:$0xff]
        %v5114 = vld [vmem:[%s5088 + $0xc8] sm:$0xff]
        %v5115 = vld [vmem:[%s5088 + $0xd0] sm:$0xff]
        %v5116 = vld [vmem:[%s5088 + $0xd8] sm:$0xff]
        %v5117 = vld [vmem:[%s5088 + $0xe0] sm:$0xff]
        %v5118 = vld [vmem:[%s5088 + $0xe8] sm:$0xff]
        %v5119 = vld [vmem:[%s5088 + $0xf0] sm:$0xff]
        %v5120 = vld [vmem:[%s5088 + $0xf8] sm:$0xff]
        %v5121 = vld [vmem:[%s5088 + $0x100] sm:$0xff]
        %v5122 = vld [vmem:[%s5088 + $0x108] sm:$0xff]
        %v5123 = vld [vmem:[%s5088 + $0x110] sm:$0xff]
        %v5124 = vld [vmem:[%s5088 + $0x118] sm:$0xff]
        %v5125 = vld [vmem:[%s5088 + $0x120] sm:$0xff]
        %v5126 = vld [vmem:[%s5088 + $0x128] sm:$0xff]
        %v5127 = vld [vmem:[%s5088 + $0x130] sm:$0xff]
        %v5128 = vld [vmem:[%s5088 + $0x138] sm:$0xff]
        %v5129 = vld [vmem:[%s5088 + $0x140] sm:$0xff]
        %v5130 = vld [vmem:[%s5088 + $0x148] sm:$0xff]
        %v5131 = vld [vmem:[%s5088 + $0x150] sm:$0xff]
        %v5132 = vld [vmem:[%s5088 + $0x158] sm:$0xff]
        %v5133 = vld [vmem:[%s5088 + $0x160] sm:$0xff]
        %v5134 = vld [vmem:[%s5088 + $0x168] sm:$0xff]
        %v5135 = vld [vmem:[%s5088 + $0x170] sm:$0xff]
        %v5136 = vld [vmem:[%s5088 + $0x178] sm:$0xff]
        %v5137 = vld [vmem:[%s5088 + $0x180] sm:$0xff]
        %v5138 = vld [vmem:[%s5088 + $0x188] sm:$0xff]
        %v5139 = vld [vmem:[%s5088 + $0x190] sm:$0xff]
        %v5140 = vld [vmem:[%s5088 + $0x198] sm:$0xff]
        %v5141 = vld [vmem:[%s5088 + $0x1a0] sm:$0xff]
        %v5142 = vld [vmem:[%s5088 + $0x1a8] sm:$0xff]
        %v5143 = vld [vmem:[%s5088 + $0x1b0] sm:$0xff]
        %v5144 = vld [vmem:[%s5088 + $0x1b8] sm:$0xff]
        %v5145 = vld [vmem:[%s5088 + $0x1c0] sm:$0xff]
        %v5146 = vld [vmem:[%s5088 + $0x1c8] sm:$0xff]
        %v5147 = vld [vmem:[%s5088 + $0x1d0] sm:$0xff]
        %v5148 = vld [vmem:[%s5088 + $0x1d8] sm:$0xff]
        %v5149 = vld [vmem:[%s5088 + $0x1e0] sm:$0xff]
        %v5150 = vld [vmem:[%s5088 + $0x1e8] sm:$0xff]
        %v5151 = vld [vmem:[%s5088 + $0x1f0] sm:$0xff]
        %v5152 = vld [vmem:[%s5088 + $0x1f8] sm:$0xff]
        %5153 = vmatprep.subr.mxu0 %v5090
        %5154 = vmatpush1.msra.mxu0 %v5089
        %5155 = vmatprep.subr.mxu0 %v5094
        %5156 = vmatpush1.msra.mxu0 %v5093
        %5157 = vmatprep.subr.mxu0 %v5098
        %5158 = vmatpush1.msra.mxu0 %v5097
        %5159 = vmatprep.subr.mxu0 %v5102
        %5160 = vmatpush1.msra.mxu0 %v5101
        %5161 = vmatprep.subr.mxu0 %v5106
        %5162 = vmatpush1.msra.mxu0 %v5105
        %5163 = vmatprep.subr.mxu0 %v5110
        %5164 = vmatpush1.msra.mxu0 %v5109
        %5165 = vmatprep.subr.mxu0 %v5114
        %5166 = vmatpush1.msra.mxu0 %v5113
        %5167 = vmatprep.subr.mxu0 %v5118
        %5168 = vmatpush1.msra.mxu0 %v5117
        %5169 = vmatprep.subr.mxu0 %v5122
        %5170 = vmatpush1.msra.mxu0 %v5121
        %5171 = vmatprep.subr.mxu0 %v5126
        %5172 = vmatpush1.msra.mxu0 %v5125
        %5173 = vmatprep.subr.mxu0 %v5130
        %5174 = vmatpush1.msra.mxu0 %v5129
        %5175 = vmatprep.subr.mxu0 %v5134
        %5176 = vmatpush1.msra.mxu0 %v5133
        %5177 = vmatprep.subr.mxu0 %v5138
        %5178 = vmatpush1.msra.mxu0 %v5137
        %5179 = vmatprep.subr.mxu0 %v5142
        %5180 = vmatpush1.msra.mxu0 %v5141
        %5181 = vmatprep.subr.mxu0 %v5146
        %5182 = vmatpush1.msra.mxu0 %v5145
        %5183 = vmatprep.subr.mxu0 %v5150
        %5184 = vmatpush1.msra.mxu0 %v5149
        %5185 = vmatprep.subr.mxu0 0.0
        %5186 = vmatpush1.msra.mxu0 0.0
        %5187 = vmatprep.subr.mxu0 0.0
        %5188 = vmatpush1.msra.mxu0 0.0
        %5189 = vmatprep.subr.mxu0 0.0
        %5190 = vmatpush1.msra.mxu0 0.0
        %5191 = vmatprep.subr.mxu0 0.0
        %5192 = vmatpush1.msra.mxu0 0.0
        %5193 = vmatprep.subr.mxu0 0.0
        %5194 = vmatpush1.msra.mxu0 0.0
        %5195 = vmatprep.subr.mxu0 0.0
        %5196 = vmatpush1.msra.mxu0 0.0
        %5197 = vmatprep.subr.mxu0 0.0
        %5198 = vmatpush1.msra.mxu0 0.0
        %5199 = vmatprep.subr.mxu0 0.0
        %5200 = vmatpush1.msra.mxu0 0.0
        %5201 = vmatprep.subr.mxu0 0.0
        %5202 = vmatpush1.msra.mxu0 0.0
        %5203 = vmatprep.subr.mxu0 0.0
        %5204 = vmatpush1.msra.mxu0 0.0
        %5205 = vmatprep.subr.mxu0 0.0
        %5206 = vmatpush1.msra.mxu0 0.0
        %5207 = vmatprep.subr.mxu0 0.0
        %5208 = vmatpush1.msra.mxu0 0.0
        %5209 = vmatprep.subr.mxu0 0.0
        %5210 = vmatpush1.msra.mxu0 0.0
        %5211 = vmatprep.subr.mxu0 0.0
        %5212 = vmatpush1.msra.mxu0 0.0
        %5213 = vmatprep.subr.mxu0 0.0
        %5214 = vmatpush1.msra.mxu0 0.0
        %5215 = vmatprep.subr.mxu0 0.0
        %5216 = vmatpush1.msra.mxu0 0.0
        %5217 = vmatprep.mubr.f32.mxu0 0.0
        %5218 = vmatmul.mubr.f32.gmra.mrb[0].mxu0 %v2148
        %v5219 = vpop.f32.mrb[0].mxu0
        %v5220 = vadd.f32 0.0, %v5219
        %v5221 = vpop.f32.mrb[0].mxu0
        %v5222 = vadd.f32 0.0, %v5221
        %5223 = vmatprep.mubr.f32.mxu0 0.0
        %5224 = vmatmul.mubr.f32.gmra.mrb[0].mxu0 %v2149
        %v5225 = vpop.f32.mrb[0].mxu0
        %v5226 = vadd.f32 0.0, %v5225
        %v5227 = vpop.f32.mrb[0].mxu0
        %v5228 = vadd.f32 0.0, %v5227
        %5229 = vdwg.mxu0
        %5230 = vmatprep.subr.mxu0 %v5092
        %5231 = vmatpush1.msra.mxu0 %v5091
        %5232 = vmatprep.subr.mxu0 %v5096
        %5233 = vmatpush1.msra.mxu0 %v5095
        %5234 = vmatprep.subr.mxu0 %v5100
        %5235 = vmatpush1.msra.mxu0 %v5099
        %5236 = vmatprep.subr.mxu0 %v5104
        %5237 = vmatpush1.msra.mxu0 %v5103
        %5238 = vmatprep.subr.mxu0 %v5108
        %5239 = vmatpush1.msra.mxu0 %v5107
        %5240 = vmatprep.subr.mxu0 %v5112
        %5241 = vmatpush1.msra.mxu0 %v5111
        %5242 = vmatprep.subr.mxu0 %v5116
        %5243 = vmatpush1.msra.mxu0 %v5115
        %5244 = vmatprep.subr.mxu0 %v5120
        %5245 = vmatpush1.msra.mxu0 %v5119
        %5246 = vmatprep.subr.mxu0 %v5124
        %5247 = vmatpush1.msra.mxu0 %v5123
        %5248 = vmatprep.subr.mxu0 %v5128
        %5249 = vmatpush1.msra.mxu0 %v5127
        %5250 = vmatprep.subr.mxu0 %v5132
        %5251 = vmatpush1.msra.mxu0 %v5131
        %5252 = vmatprep.subr.mxu0 %v5136
        %5253 = vmatpush1.msra.mxu0 %v5135
        %5254 = vmatprep.subr.mxu0 %v5140
        %5255 = vmatpush1.msra.mxu0 %v5139
        %5256 = vmatprep.subr.mxu0 %v5144
        %5257 = vmatpush1.msra.mxu0 %v5143
        %5258 = vmatprep.subr.mxu0 %v5148
        %5259 = vmatpush1.msra.mxu0 %v5147
        %5260 = vmatprep.subr.mxu0 %v5152
        %5261 = vmatpush1.msra.mxu0 %v5151
        %5262 = vmatprep.subr.mxu0 0.0
        %5263 = vmatpush1.msra.mxu0 0.0
        %5264 = vmatprep.subr.mxu0 0.0
        %5265 = vmatpush1.msra.mxu0 0.0
        %5266 = vmatprep.subr.mxu0 0.0
        %5267 = vmatpush1.msra.mxu0 0.0
        %5268 = vmatprep.subr.mxu0 0.0
        %5269 = vmatpush1.msra.mxu0 0.0
        %5270 = vmatprep.subr.mxu0 0.0
        %5271 = vmatpush1.msra.mxu0 0.0
        %5272 = vmatprep.subr.mxu0 0.0
        %5273 = vmatpush1.msra.mxu0 0.0
        %5274 = vmatprep.subr.mxu0 0.0
        %5275 = vmatpush1.msra.mxu0 0.0
        %5276 = vmatprep.subr.mxu0 0.0
        %5277 = vmatpush1.msra.mxu0 0.0
        %5278 = vmatprep.subr.mxu0 0.0
        %5279 = vmatpush1.msra.mxu0 0.0
        %5280 = vmatprep.subr.mxu0 0.0
        %5281 = vmatpush1.msra.mxu0 0.0
        %5282 = vmatprep.subr.mxu0 0.0
        %5283 = vmatpush1.msra.mxu0 0.0
        %5284 = vmatprep.subr.mxu0 0.0
        %5285 = vmatpush1.msra.mxu0 0.0
        %5286 = vmatprep.subr.mxu0 0.0
        %5287 = vmatpush1.msra.mxu0 0.0
        %5288 = vmatprep.subr.mxu0 0.0
        %5289 = vmatpush1.msra.mxu0 0.0
        %5290 = vmatprep.subr.mxu0 0.0
        %5291 = vmatpush1.msra.mxu0 0.0
        %5292 = vmatprep.subr.mxu0 0.0
        %5293 = vmatpush1.msra.mxu0 0.0
        %5294 = vmatprep.mubr.f32.mxu0 0.0
        %5295 = vmatmul.mubr.f32.gmra.mrb[0].mxu0 %v2148
        %v5296 = vpop.f32.mrb[0].mxu0
        %v5297 = vadd.f32 0.0, %v5296
        %v5298 = vpop.f32.mrb[0].mxu0
        %v5299 = vadd.f32 0.0, %v5298
        %5300 = vmatprep.mubr.f32.mxu0 0.0
        %5301 = vmatmul.mubr.f32.gmra.mrb[0].mxu0 %v2149
        %v5302 = vpop.f32.mrb[0].mxu0
        %v5303 = vadd.f32 0.0, %v5302
        %v5304 = vpop.f32.mrb[0].mxu0
        %v5305 = vadd.f32 0.0, %v5304
        %5306 = vdwg.mxu0
        %v5307 = vadd.f32 %v5080, %v5220
        %v5308 = vadd.f32 %v5081, %v5222
        %v5309 = vadd.f32 %v5082, %v5297
        %v5310 = vadd.f32 %v5083, %v5299
        %v5311 = vadd.f32 %v5084, %v5226
        %v5312 = vadd.f32 %v5085, %v5228
        %v5313 = vadd.f32 %v5086, %v5303
        %v5314 = vadd.f32 %v5087, %v5305
        %s5315 = scalar_lea.vmem [#allocation7], 7168
        %v5316 = vld [vmem:[%s5315] sm:$0xff]
        %v5317 = vld [vmem:[%s5315 + $0x8] sm:$0xff]
        %v5318 = vld [vmem:[%s5315 + $0x10] sm:$0xff]
        %v5319 = vld [vmem:[%s5315 + $0x18] sm:$0xff]
        %v5320 = vld [vmem:[%s5315 + $0x20] sm:$0xff]
        %v5321 = vld [vmem:[%s5315 + $0x28] sm:$0xff]
        %v5322 = vld [vmem:[%s5315 + $0x30] sm:$0xff]
        %v5323 = vld [vmem:[%s5315 + $0x38] sm:$0xff]
        %v5324 = vld [vmem:[%s5315 + $0x40] sm:$0xff]
        %v5325 = vld [vmem:[%s5315 + $0x48] sm:$0xff]
        %v5326 = vld [vmem:[%s5315 + $0x50] sm:$0xff]
        %v5327 = vld [vmem:[%s5315 + $0x58] sm:$0xff]
        %v5328 = vld [vmem:[%s5315 + $0x60] sm:$0xff]
        %v5329 = vld [vmem:[%s5315 + $0x68] sm:$0xff]
        %v5330 = vld [vmem:[%s5315 + $0x70] sm:$0xff]
        %v5331 = vld [vmem:[%s5315 + $0x78] sm:$0xff]
        %v5332 = vld [vmem:[%s5315 + $0x80] sm:$0xff]
        %v5333 = vld [vmem:[%s5315 + $0x88] sm:$0xff]
        %v5334 = vld [vmem:[%s5315 + $0x90] sm:$0xff]
        %v5335 = vld [vmem:[%s5315 + $0x98] sm:$0xff]
        %v5336 = vld [vmem:[%s5315 + $0xa0] sm:$0xff]
        %v5337 = vld [vmem:[%s5315 + $0xa8] sm:$0xff]
        %v5338 = vld [vmem:[%s5315 + $0xb0] sm:$0xff]
        %v5339 = vld [vmem:[%s5315 + $0xb8] sm:$0xff]
        %v5340 = vld [vmem:[%s5315 + $0xc0] sm:$0xff]
        %v5341 = vld [vmem:[%s5315 + $0xc8] sm:$0xff]
        %v5342 = vld [vmem:[%s5315 + $0xd0] sm:$0xff]
        %v5343 = vld [vmem:[%s5315 + $0xd8] sm:$0xff]
        %v5344 = vld [vmem:[%s5315 + $0xe0] sm:$0xff]
        %v5345 = vld [vmem:[%s5315 + $0xe8] sm:$0xff]
        %v5346 = vld [vmem:[%s5315 + $0xf0] sm:$0xff]
        %v5347 = vld [vmem:[%s5315 + $0xf8] sm:$0xff]
        %v5348 = vld [vmem:[%s5315 + $0x100] sm:$0xff]
        %v5349 = vld [vmem:[%s5315 + $0x108] sm:$0xff]
        %v5350 = vld [vmem:[%s5315 + $0x110] sm:$0xff]
        %v5351 = vld [vmem:[%s5315 + $0x118] sm:$0xff]
        %v5352 = vld [vmem:[%s5315 + $0x120] sm:$0xff]
        %v5353 = vld [vmem:[%s5315 + $0x128] sm:$0xff]
        %v5354 = vld [vmem:[%s5315 + $0x130] sm:$0xff]
        %v5355 = vld [vmem:[%s5315 + $0x138] sm:$0xff]
        %v5356 = vld [vmem:[%s5315 + $0x140] sm:$0xff]
        %v5357 = vld [vmem:[%s5315 + $0x148] sm:$0xff]
        %v5358 = vld [vmem:[%s5315 + $0x150] sm:$0xff]
        %v5359 = vld [vmem:[%s5315 + $0x158] sm:$0xff]
        %v5360 = vld [vmem:[%s5315 + $0x160] sm:$0xff]
        %v5361 = vld [vmem:[%s5315 + $0x168] sm:$0xff]
        %v5362 = vld [vmem:[%s5315 + $0x170] sm:$0xff]
        %v5363 = vld [vmem:[%s5315 + $0x178] sm:$0xff]
        %v5364 = vld [vmem:[%s5315 + $0x180] sm:$0xff]
        %v5365 = vld [vmem:[%s5315 + $0x188] sm:$0xff]
        %v5366 = vld [vmem:[%s5315 + $0x190] sm:$0xff]
        %v5367 = vld [vmem:[%s5315 + $0x198] sm:$0xff]
        %v5368 = vld [vmem:[%s5315 + $0x1a0] sm:$0xff]
        %v5369 = vld [vmem:[%s5315 + $0x1a8] sm:$0xff]
        %v5370 = vld [vmem:[%s5315 + $0x1b0] sm:$0xff]
        %v5371 = vld [vmem:[%s5315 + $0x1b8] sm:$0xff]
        %v5372 = vld [vmem:[%s5315 + $0x1c0] sm:$0xff]
        %v5373 = vld [vmem:[%s5315 + $0x1c8] sm:$0xff]
        %v5374 = vld [vmem:[%s5315 + $0x1d0] sm:$0xff]
        %v5375 = vld [vmem:[%s5315 + $0x1d8] sm:$0xff]
        %v5376 = vld [vmem:[%s5315 + $0x1e0] sm:$0xff]
        %v5377 = vld [vmem:[%s5315 + $0x1e8] sm:$0xff]
        %v5378 = vld [vmem:[%s5315 + $0x1f0] sm:$0xff]
        %v5379 = vld [vmem:[%s5315 + $0x1f8] sm:$0xff]
        %5380 = vmatprep.subr.mxu0 %v5317
        %5381 = vmatpush1.msra.mxu0 %v5316
        %5382 = vmatprep.subr.mxu0 %v5321
        %5383 = vmatpush1.msra.mxu0 %v5320
        %5384 = vmatprep.subr.mxu0 %v5325
        %5385 = vmatpush1.msra.mxu0 %v5324
        %5386 = vmatprep.subr.mxu0 %v5329
        %5387 = vmatpush1.msra.mxu0 %v5328
        %5388 = vmatprep.subr.mxu0 %v5333
        %5389 = vmatpush1.msra.mxu0 %v5332
        %5390 = vmatprep.subr.mxu0 %v5337
        %5391 = vmatpush1.msra.mxu0 %v5336
        %5392 = vmatprep.subr.mxu0 %v5341
        %5393 = vmatpush1.msra.mxu0 %v5340
        %5394 = vmatprep.subr.mxu0 %v5345
        %5395 = vmatpush1.msra.mxu0 %v5344
        %5396 = vmatprep.subr.mxu0 %v5349
        %5397 = vmatpush1.msra.mxu0 %v5348
        %5398 = vmatprep.subr.mxu0 %v5353
        %5399 = vmatpush1.msra.mxu0 %v5352
        %5400 = vmatprep.subr.mxu0 %v5357
        %5401 = vmatpush1.msra.mxu0 %v5356
        %5402 = vmatprep.subr.mxu0 %v5361
        %5403 = vmatpush1.msra.mxu0 %v5360
        %5404 = vmatprep.subr.mxu0 %v5365
        %5405 = vmatpush1.msra.mxu0 %v5364
        %5406 = vmatprep.subr.mxu0 %v5369
        %5407 = vmatpush1.msra.mxu0 %v5368
        %5408 = vmatprep.subr.mxu0 %v5373
        %5409 = vmatpush1.msra.mxu0 %v5372
        %5410 = vmatprep.subr.mxu0 %v5377
        %5411 = vmatpush1.msra.mxu0 %v5376
        %5412 = vmatprep.subr.mxu0 0.0
        %5413 = vmatpush1.msra.mxu0 0.0
        %5414 = vmatprep.subr.mxu0 0.0
        %5415 = vmatpush1.msra.mxu0 0.0
        %5416 = vmatprep.subr.mxu0 0.0
        %5417 = vmatpush1.msra.mxu0 0.0
        %5418 = vmatprep.subr.mxu0 0.0
        %5419 = vmatpush1.msra.mxu0 0.0
        %5420 = vmatprep.subr.mxu0 0.0
        %5421 = vmatpush1.msra.mxu0 0.0
        %5422 = vmatprep.subr.mxu0 0.0
        %5423 = vmatpush1.msra.mxu0 0.0
        %5424 = vmatprep.subr.mxu0 0.0
        %5425 = vmatpush1.msra.mxu0 0.0
        %5426 = vmatprep.subr.mxu0 0.0
        %5427 = vmatpush1.msra.mxu0 0.0
        %5428 = vmatprep.subr.mxu0 0.0
        %5429 = vmatpush1.msra.mxu0 0.0
        %5430 = vmatprep.subr.mxu0 0.0
        %5431 = vmatpush1.msra.mxu0 0.0
        %5432 = vmatprep.subr.mxu0 0.0
        %5433 = vmatpush1.msra.mxu0 0.0
        %5434 = vmatprep.subr.mxu0 0.0
        %5435 = vmatpush1.msra.mxu0 0.0
        %5436 = vmatprep.subr.mxu0 0.0
        %5437 = vmatpush1.msra.mxu0 0.0
        %5438 = vmatprep.subr.mxu0 0.0
        %5439 = vmatpush1.msra.mxu0 0.0
        %5440 = vmatprep.subr.mxu0 0.0
        %5441 = vmatpush1.msra.mxu0 0.0
        %5442 = vmatprep.subr.mxu0 0.0
        %5443 = vmatpush1.msra.mxu0 0.0
        %5444 = vmatprep.mubr.f32.mxu0 0.0
        %5445 = vmatmul.mubr.f32.gmra.mrb[0].mxu0 %v2150
        %v5446 = vpop.f32.mrb[0].mxu0
        %v5447 = vadd.f32 0.0, %v5446
        %v5448 = vpop.f32.mrb[0].mxu0
        %v5449 = vadd.f32 0.0, %v5448
        %5450 = vmatprep.mubr.f32.mxu0 0.0
        %5451 = vmatmul.mubr.f32.gmra.mrb[0].mxu0 %v2151
        %v5452 = vpop.f32.mrb[0].mxu0
        %v5453 = vadd.f32 0.0, %v5452
        %v5454 = vpop.f32.mrb[0].mxu0
        %v5455 = vadd.f32 0.0, %v5454
        %5456 = vdwg.mxu0
        %5457 = vmatprep.subr.mxu0 %v5319
        %5458 = vmatpush1.msra.mxu0 %v5318
        %5459 = vmatprep.subr.mxu0 %v5323
        %5460 = vmatpush1.msra.mxu0 %v5322
        %5461 = vmatprep.subr.mxu0 %v5327
        %5462 = vmatpush1.msra.mxu0 %v5326
        %5463 = vmatprep.subr.mxu0 %v5331
        %5464 = vmatpush1.msra.mxu0 %v5330
        %5465 = vmatprep.subr.mxu0 %v5335
        %5466 = vmatpush1.msra.mxu0 %v5334
        %5467 = vmatprep.subr.mxu0 %v5339
        %5468 = vmatpush1.msra.mxu0 %v5338
        %5469 = vmatprep.subr.mxu0 %v5343
        %5470 = vmatpush1.msra.mxu0 %v5342
        %5471 = vmatprep.subr.mxu0 %v5347
        %5472 = vmatpush1.msra.mxu0 %v5346
        %5473 = vmatprep.subr.mxu0 %v5351
        %5474 = vmatpush1.msra.mxu0 %v5350
        %5475 = vmatprep.subr.mxu0 %v5355
        %5476 = vmatpush1.msra.mxu0 %v5354
        %5477 = vmatprep.subr.mxu0 %v5359
        %5478 = vmatpush1.msra.mxu0 %v5358
        %5479 = vmatprep.subr.mxu0 %v5363
        %5480 = vmatpush1.msra.mxu0 %v5362
        %5481 = vmatprep.subr.mxu0 %v5367
        %5482 = vmatpush1.msra.mxu0 %v5366
        %5483 = vmatprep.subr.mxu0 %v5371
        %5484 = vmatpush1.msra.mxu0 %v5370
        %5485 = vmatprep.subr.mxu0 %v5375
        %5486 = vmatpush1.msra.mxu0 %v5374
        %5487 = vmatprep.subr.mxu0 %v5379
        %5488 = vmatpush1.msra.mxu0 %v5378
        %5489 = vmatprep.subr.mxu0 0.0
        %5490 = vmatpush1.msra.mxu0 0.0
        %5491 = vmatprep.subr.mxu0 0.0
        %5492 = vmatpush1.msra.mxu0 0.0
        %5493 = vmatprep.subr.mxu0 0.0
        %5494 = vmatpush1.msra.mxu0 0.0
        %5495 = vmatprep.subr.mxu0 0.0
        %5496 = vmatpush1.msra.mxu0 0.0
        %5497 = vmatprep.subr.mxu0 0.0
        %5498 = vmatpush1.msra.mxu0 0.0
        %5499 = vmatprep.subr.mxu0 0.0
        %5500 = vmatpush1.msra.mxu0 0.0
        %5501 = vmatprep.subr.mxu0 0.0
        %5502 = vmatpush1.msra.mxu0 0.0
        %5503 = vmatprep.subr.mxu0 0.0
        %5504 = vmatpush1.msra.mxu0 0.0
        %5505 = vmatprep.subr.mxu0 0.0
        %5506 = vmatpush1.msra.mxu0 0.0
        %5507 = vmatprep.subr.mxu0 0.0
        %5508 = vmatpush1.msra.mxu0 0.0
        %5509 = vmatprep.subr.mxu0 0.0
        %5510 = vmatpush1.msra.mxu0 0.0
        %5511 = vmatprep.subr.mxu0 0.0
        %5512 = vmatpush1.msra.mxu0 0.0
        %5513 = vmatprep.subr.mxu0 0.0
        %5514 = vmatpush1.msra.mxu0 0.0
        %5515 = vmatprep.subr.mxu0 0.0
        %5516 = vmatpush1.msra.mxu0 0.0
        %5517 = vmatprep.subr.mxu0 0.0
        %5518 = vmatpush1.msra.mxu0 0.0
        %5519 = vmatprep.subr.mxu0 0.0
        %5520 = vmatpush1.msra.mxu0 0.0
        %5521 = vmatprep.mubr.f32.mxu0 0.0
        %5522 = vmatmul.mubr.f32.gmra.mrb[0].mxu0 %v2150
        %v5523 = vpop.f32.mrb[0].mxu0
        %v5524 = vadd.f32 0.0, %v5523
        %v5525 = vpop.f32.mrb[0].mxu0
        %v5526 = vadd.f32 0.0, %v5525
        %5527 = vmatprep.mubr.f32.mxu0 0.0
        %5528 = vmatmul.mubr.f32.gmra.mrb[0].mxu0 %v2151
        %v5529 = vpop.f32.mrb[0].mxu0
        %v5530 = vadd.f32 0.0, %v5529
        %v5531 = vpop.f32.mrb[0].mxu0
        %v5532 = vadd.f32 0.0, %v5531
        %5533 = vdwg.mxu0
        %v5534 = vadd.f32 %v5307, %v5447
        %v5535 = vadd.f32 %v5308, %v5449
        %v5536 = vadd.f32 %v5309, %v5524
        %v5537 = vadd.f32 %v5310, %v5526
        %v5538 = vadd.f32 %v5311, %v5453
        %v5539 = vadd.f32 %v5312, %v5455
        %v5540 = vadd.f32 %v5313, %v5530
        %v5541 = vadd.f32 %v5314, %v5532
        %s5542 = scalar_lea.vmem [#allocation7], 7680
        %v5543 = vld [vmem:[%s5542] sm:$0xff]
        %v5544 = vld [vmem:[%s5542 + $0x8] sm:$0xff]
        %v5545 = vld [vmem:[%s5542 + $0x10] sm:$0xff]
        %v5546 = vld [vmem:[%s5542 + $0x18] sm:$0xff]
        %v5547 = vld [vmem:[%s5542 + $0x20] sm:$0xff]
        %v5548 = vld [vmem:[%s5542 + $0x28] sm:$0xff]
        %v5549 = vld [vmem:[%s5542 + $0x30] sm:$0xff]
        %v5550 = vld [vmem:[%s5542 + $0x38] sm:$0xff]
        %v5551 = vld [vmem:[%s5542 + $0x40] sm:$0xff]
        %v5552 = vld [vmem:[%s5542 + $0x48] sm:$0xff]
        %v5553 = vld [vmem:[%s5542 + $0x50] sm:$0xff]
        %v5554 = vld [vmem:[%s5542 + $0x58] sm:$0xff]
        %v5555 = vld [vmem:[%s5542 + $0x60] sm:$0xff]
        %v5556 = vld [vmem:[%s5542 + $0x68] sm:$0xff]
        %v5557 = vld [vmem:[%s5542 + $0x70] sm:$0xff]
        %v5558 = vld [vmem:[%s5542 + $0x78] sm:$0xff]
        %v5559 = vld [vmem:[%s5542 + $0x80] sm:$0xff]
        %v5560 = vld [vmem:[%s5542 + $0x88] sm:$0xff]
        %v5561 = vld [vmem:[%s5542 + $0x90] sm:$0xff]
        %v5562 = vld [vmem:[%s5542 + $0x98] sm:$0xff]
        %v5563 = vld [vmem:[%s5542 + $0xa0] sm:$0xff]
        %v5564 = vld [vmem:[%s5542 + $0xa8] sm:$0xff]
        %v5565 = vld [vmem:[%s5542 + $0xb0] sm:$0xff]
        %v5566 = vld [vmem:[%s5542 + $0xb8] sm:$0xff]
        %v5567 = vld [vmem:[%s5542 + $0xc0] sm:$0xff]
        %v5568 = vld [vmem:[%s5542 + $0xc8] sm:$0xff]
        %v5569 = vld [vmem:[%s5542 + $0xd0] sm:$0xff]
        %v5570 = vld [vmem:[%s5542 + $0xd8] sm:$0xff]
        %v5571 = vld [vmem:[%s5542 + $0xe0] sm:$0xff]
        %v5572 = vld [vmem:[%s5542 + $0xe8] sm:$0xff]
        %v5573 = vld [vmem:[%s5542 + $0xf0] sm:$0xff]
        %v5574 = vld [vmem:[%s5542 + $0xf8] sm:$0xff]
        %v5575 = vld [vmem:[%s5542 + $0x100] sm:$0xff]
        %v5576 = vld [vmem:[%s5542 + $0x108] sm:$0xff]
        %v5577 = vld [vmem:[%s5542 + $0x110] sm:$0xff]
        %v5578 = vld [vmem:[%s5542 + $0x118] sm:$0xff]
        %v5579 = vld [vmem:[%s5542 + $0x120] sm:$0xff]
        %v5580 = vld [vmem:[%s5542 + $0x128] sm:$0xff]
        %v5581 = vld [vmem:[%s5542 + $0x130] sm:$0xff]
        %v5582 = vld [vmem:[%s5542 + $0x138] sm:$0xff]
        %v5583 = vld [vmem:[%s5542 + $0x140] sm:$0xff]
        %v5584 = vld [vmem:[%s5542 + $0x148] sm:$0xff]
        %v5585 = vld [vmem:[%s5542 + $0x150] sm:$0xff]
        %v5586 = vld [vmem:[%s5542 + $0x158] sm:$0xff]
        %v5587 = vld [vmem:[%s5542 + $0x160] sm:$0xff]
        %v5588 = vld [vmem:[%s5542 + $0x168] sm:$0xff]
        %v5589 = vld [vmem:[%s5542 + $0x170] sm:$0xff]
        %v5590 = vld [vmem:[%s5542 + $0x178] sm:$0xff]
        %v5591 = vld [vmem:[%s5542 + $0x180] sm:$0xff]
        %v5592 = vld [vmem:[%s5542 + $0x188] sm:$0xff]
        %v5593 = vld [vmem:[%s5542 + $0x190] sm:$0xff]
        %v5594 = vld [vmem:[%s5542 + $0x198] sm:$0xff]
        %v5595 = vld [vmem:[%s5542 + $0x1a0] sm:$0xff]
        %v5596 = vld [vmem:[%s5542 + $0x1a8] sm:$0xff]
        %v5597 = vld [vmem:[%s5542 + $0x1b0] sm:$0xff]
        %v5598 = vld [vmem:[%s5542 + $0x1b8] sm:$0xff]
        %v5599 = vld [vmem:[%s5542 + $0x1c0] sm:$0xff]
        %v5600 = vld [vmem:[%s5542 + $0x1c8] sm:$0xff]
        %v5601 = vld [vmem:[%s5542 + $0x1d0] sm:$0xff]
        %v5602 = vld [vmem:[%s5542 + $0x1d8] sm:$0xff]
        %v5603 = vld [vmem:[%s5542 + $0x1e0] sm:$0xff]
        %v5604 = vld [vmem:[%s5542 + $0x1e8] sm:$0xff]
        %v5605 = vld [vmem:[%s5542 + $0x1f0] sm:$0xff]
        %v5606 = vld [vmem:[%s5542 + $0x1f8] sm:$0xff]
        %5607 = vmatprep.subr.mxu0 %v5544
        %5608 = vmatpush1.msra.mxu0 %v5543
        %5609 = vmatprep.subr.mxu0 %v5548
        %5610 = vmatpush1.msra.mxu0 %v5547
        %5611 = vmatprep.subr.mxu0 %v5552
        %5612 = vmatpush1.msra.mxu0 %v5551
        %5613 = vmatprep.subr.mxu0 %v5556
        %5614 = vmatpush1.msra.mxu0 %v5555
        %5615 = vmatprep.subr.mxu0 %v5560
        %5616 = vmatpush1.msra.mxu0 %v5559
        %5617 = vmatprep.subr.mxu0 %v5564
        %5618 = vmatpush1.msra.mxu0 %v5563
        %5619 = vmatprep.subr.mxu0 %v5568
        %5620 = vmatpush1.msra.mxu0 %v5567
        %5621 = vmatprep.subr.mxu0 %v5572
        %5622 = vmatpush1.msra.mxu0 %v5571
        %5623 = vmatprep.subr.mxu0 %v5576
        %5624 = vmatpush1.msra.mxu0 %v5575
        %5625 = vmatprep.subr.mxu0 %v5580
        %5626 = vmatpush1.msra.mxu0 %v5579
        %5627 = vmatprep.subr.mxu0 %v5584
        %5628 = vmatpush1.msra.mxu0 %v5583
        %5629 = vmatprep.subr.mxu0 %v5588
        %5630 = vmatpush1.msra.mxu0 %v5587
        %5631 = vmatprep.subr.mxu0 %v5592
        %5632 = vmatpush1.msra.mxu0 %v5591
        %5633 = vmatprep.subr.mxu0 %v5596
        %5634 = vmatpush1.msra.mxu0 %v5595
        %5635 = vmatprep.subr.mxu0 %v5600
        %5636 = vmatpush1.msra.mxu0 %v5599
        %5637 = vmatprep.subr.mxu0 %v5604
        %5638 = vmatpush1.msra.mxu0 %v5603
        %5639 = vmatprep.subr.mxu0 0.0
        %5640 = vmatpush1.msra.mxu0 0.0
        %5641 = vmatprep.subr.mxu0 0.0
        %5642 = vmatpush1.msra.mxu0 0.0
        %5643 = vmatprep.subr.mxu0 0.0
        %5644 = vmatpush1.msra.mxu0 0.0
        %5645 = vmatprep.subr.mxu0 0.0
        %5646 = vmatpush1.msra.mxu0 0.0
        %5647 = vmatprep.subr.mxu0 0.0
        %5648 = vmatpush1.msra.mxu0 0.0
        %5649 = vmatprep.subr.mxu0 0.0
        %5650 = vmatpush1.msra.mxu0 0.0
        %5651 = vmatprep.subr.mxu0 0.0
        %5652 = vmatpush1.msra.mxu0 0.0
        %5653 = vmatprep.subr.mxu0 0.0
        %5654 = vmatpush1.msra.mxu0 0.0
        %5655 = vmatprep.subr.mxu0 0.0
        %5656 = vmatpush1.msra.mxu0 0.0
        %5657 = vmatprep.subr.mxu0 0.0
        %5658 = vmatpush1.msra.mxu0 0.0
        %5659 = vmatprep.subr.mxu0 0.0
        %5660 = vmatpush1.msra.mxu0 0.0
        %5661 = vmatprep.subr.mxu0 0.0
        %5662 = vmatpush1.msra.mxu0 0.0
        %5663 = vmatprep.subr.mxu0 0.0
        %5664 = vmatpush1.msra.mxu0 0.0
        %5665 = vmatprep.subr.mxu0 0.0
        %5666 = vmatpush1.msra.mxu0 0.0
        %5667 = vmatprep.subr.mxu0 0.0
        %5668 = vmatpush1.msra.mxu0 0.0
        %5669 = vmatprep.subr.mxu0 0.0
        %5670 = vmatpush1.msra.mxu0 0.0
        %5671 = vmatprep.mubr.f32.mxu0 0.0
        %5672 = vmatmul.mubr.f32.gmra.mrb[0].mxu0 %v2152
        %v5673 = vpop.f32.mrb[0].mxu0
        %v5674 = vadd.f32 0.0, %v5673
        %v5675 = vpop.f32.mrb[0].mxu0
        %v5676 = vadd.f32 0.0, %v5675
        %5677 = vmatprep.mubr.f32.mxu0 0.0
        %5678 = vmatmul.mubr.f32.gmra.mrb[0].mxu0 %v2153
        %v5679 = vpop.f32.mrb[0].mxu0
        %v5680 = vadd.f32 0.0, %v5679
        %v5681 = vpop.f32.mrb[0].mxu0
        %v5682 = vadd.f32 0.0, %v5681
        %5683 = vdwg.mxu0
        %5684 = vmatprep.subr.mxu0 %v5546
        %5685 = vmatpush1.msra.mxu0 %v5545
        %5686 = vmatprep.subr.mxu0 %v5550
        %5687 = vmatpush1.msra.mxu0 %v5549
        %5688 = vmatprep.subr.mxu0 %v5554
        %5689 = vmatpush1.msra.mxu0 %v5553
        %5690 = vmatprep.subr.mxu0 %v5558
        %5691 = vmatpush1.msra.mxu0 %v5557
        %5692 = vmatprep.subr.mxu0 %v5562
        %5693 = vmatpush1.msra.mxu0 %v5561
        %5694 = vmatprep.subr.mxu0 %v5566
        %5695 = vmatpush1.msra.mxu0 %v5565
        %5696 = vmatprep.subr.mxu0 %v5570
        %5697 = vmatpush1.msra.mxu0 %v5569
        %5698 = vmatprep.subr.mxu0 %v5574
        %5699 = vmatpush1.msra.mxu0 %v5573
        %5700 = vmatprep.subr.mxu0 %v5578
        %5701 = vmatpush1.msra.mxu0 %v5577
        %5702 = vmatprep.subr.mxu0 %v5582
        %5703 = vmatpush1.msra.mxu0 %v5581
        %5704 = vmatprep.subr.mxu0 %v5586
        %5705 = vmatpush1.msra.mxu0 %v5585
        %5706 = vmatprep.subr.mxu0 %v5590
        %5707 = vmatpush1.msra.mxu0 %v5589
        %5708 = vmatprep.subr.mxu0 %v5594
        %5709 = vmatpush1.msra.mxu0 %v5593
        %5710 = vmatprep.subr.mxu0 %v5598
        %5711 = vmatpush1.msra.mxu0 %v5597
        %5712 = vmatprep.subr.mxu0 %v5602
        %5713 = vmatpush1.msra.mxu0 %v5601
        %5714 = vmatprep.subr.mxu0 %v5606
        %5715 = vmatpush1.msra.mxu0 %v5605
        %5716 = vmatprep.subr.mxu0 0.0
        %5717 = vmatpush1.msra.mxu0 0.0
        %5718 = vmatprep.subr.mxu0 0.0
        %5719 = vmatpush1.msra.mxu0 0.0
        %5720 = vmatprep.subr.mxu0 0.0
        %5721 = vmatpush1.msra.mxu0 0.0
        %5722 = vmatprep.subr.mxu0 0.0
        %5723 = vmatpush1.msra.mxu0 0.0
        %5724 = vmatprep.subr.mxu0 0.0
        %5725 = vmatpush1.msra.mxu0 0.0
        %5726 = vmatprep.subr.mxu0 0.0
        %5727 = vmatpush1.msra.mxu0 0.0
        %5728 = vmatprep.subr.mxu0 0.0
        %5729 = vmatpush1.msra.mxu0 0.0
        %5730 = vmatprep.subr.mxu0 0.0
        %5731 = vmatpush1.msra.mxu0 0.0
        %5732 = vmatprep.subr.mxu0 0.0
        %5733 = vmatpush1.msra.mxu0 0.0
        %5734 = vmatprep.subr.mxu0 0.0
        %5735 = vmatpush1.msra.mxu0 0.0
        %5736 = vmatprep.subr.mxu0 0.0
        %5737 = vmatpush1.msra.mxu0 0.0
        %5738 = vmatprep.subr.mxu0 0.0
        %5739 = vmatpush1.msra.mxu0 0.0
        %5740 = vmatprep.subr.mxu0 0.0
        %5741 = vmatpush1.msra.mxu0 0.0
        %5742 = vmatprep.subr.mxu0 0.0
        %5743 = vmatpush1.msra.mxu0 0.0
        %5744 = vmatprep.subr.mxu0 0.0
        %5745 = vmatpush1.msra.mxu0 0.0
        %5746 = vmatprep.subr.mxu0 0.0
        %5747 = vmatpush1.msra.mxu0 0.0
        %5748 = vmatprep.mubr.f32.mxu0 0.0
        %5749 = vmatmul.mubr.f32.gmra.mrb[0].mxu0 %v2152
        %v5750 = vpop.f32.mrb[0].mxu0
        %v5751 = vadd.f32 0.0, %v5750
        %v5752 = vpop.f32.mrb[0].mxu0
        %v5753 = vadd.f32 0.0, %v5752
        %5754 = vmatprep.mubr.f32.mxu0 0.0
        %5755 = vmatmul.mubr.f32.gmra.mrb[0].mxu0 %v2153
        %v5756 = vpop.f32.mrb[0].mxu0
        %v5757 = vadd.f32 0.0, %v5756
        %v5758 = vpop.f32.mrb[0].mxu0
        %v5759 = vadd.f32 0.0, %v5758
        %5760 = vdwg.mxu0
        %v5761 = vadd.f32 %v5534, %v5674
        %v5762 = vadd.f32 %v5535, %v5676
        %v5763 = vadd.f32 %v5536, %v5751
        %v5764 = vadd.f32 %v5537, %v5753
        %v5765 = vadd.f32 %v5538, %v5680
        %v5766 = vadd.f32 %v5539, %v5682
        %v5767 = vadd.f32 %v5540, %v5757
        %v5768 = vadd.f32 %v5541, %v5759
        %v5769 = vld [vmem:[#allocation9] sm:$0xf]
        %v5771 = vlaneseq
        %v5772 = vshrl.u32 %v5771, 7
        %v5773 = vsub.s32 0, %v5772
        %v5774 = vrot.slane %v5769, %v5773
        %v5775 = vlaneseq
        %v5776 = vshrl.u32 %v5775, 7
        %v5777 = vsub.s32 1, %v5776
        %v5778 = vrot.slane %v5769, %v5777
        %v5779 = vlaneseq
        %v5780 = vshrl.u32 %v5779, 7
        %v5781 = vsub.s32 2, %v5780
        %v5782 = vrot.slane %v5769, %v5781
        %v5783 = vlaneseq
        %v5784 = vshrl.u32 %v5783, 7
        %v5785 = vsub.s32 3, %v5784
        %v5786 = vrot.slane %v5769, %v5785
        %v5791 = vadd.f32 %v5761, %v5774
        %v5792 = vadd.f32 %v5762, %v5778
        %v5793 = vadd.f32 %v5763, %v5782
        %v5794 = vadd.f32 %v5764, %v5786
        %v5795 = vadd.f32 %v5765, %v5774
        %v5796 = vadd.f32 %v5766, %v5778
        %v5797 = vadd.f32 %v5767, %v5782
        %v5798 = vadd.f32 %v5768, %v5786
        %vm5799 = vcmp.gt.f32.partialorder %v5791, 0.0
        %vm5800 = vcmp.gt.f32.partialorder %v5792, 0.0
        %vm5801 = vcmp.gt.f32.partialorder %v5793, 0.0
        %vm5802 = vcmp.gt.f32.partialorder %v5794, 0.0
        %vm5803 = vcmp.gt.f32.partialorder %v5795, 0.0
        %vm5804 = vcmp.gt.f32.partialorder %v5796, 0.0
        %vm5805 = vcmp.gt.f32.partialorder %v5797, 0.0
        %vm5806 = vcmp.gt.f32.partialorder %v5798, 0.0
        %v5807 = vmin.f32 %v5791, 0.0
        %v5808 = vmin.f32 %v5792, 0.0
        %v5809 = vmin.f32 %v5793, 0.0
        %v5810 = vmin.f32 %v5794, 0.0
        %v5811 = vmin.f32 %v5795, 0.0
        %v5812 = vmin.f32 %v5796, 0.0
        %v5813 = vmin.f32 %v5797, 0.0
        %v5814 = vmin.f32 %v5798, 0.0
        %v5815 = vmul.f32 %v5807, 1.442695
        %v5816 = vpow.pop %v5815
        %v5817 = vmul.f32 %v5808, 1.442695
        %v5818 = vpow.pop %v5817
        %v5819 = vmul.f32 %v5809, 1.442695
        %v5820 = vpow.pop %v5819
        %v5821 = vmul.f32 %v5810, 1.442695
        %v5822 = vpow.pop %v5821
        %v5823 = vmul.f32 %v5811, 1.442695
        %v5824 = vpow.pop %v5823
        %v5825 = vmul.f32 %v5812, 1.442695
        %v5826 = vpow.pop %v5825
        %v5827 = vmul.f32 %v5813, 1.442695
        %v5828 = vpow.pop %v5827
        %v5829 = vmul.f32 %v5814, 1.442695
        %v5830 = vpow.pop %v5829
        %v5831 = vsub.f32 %v5816, 1.0
        %v5832 = vsub.f32 %v5818, 1.0
        %v5833 = vsub.f32 %v5820, 1.0
        %v5834 = vsub.f32 %v5822, 1.0
        %v5835 = vsub.f32 %v5824, 1.0
        %v5836 = vsub.f32 %v5826, 1.0
        %v5837 = vsub.f32 %v5828, 1.0
        %v5838 = vsub.f32 %v5830, 1.0
        %v5839 = vsel %vm5799, %v5791, %v5831
        %v5840 = vsel %vm5800, %v5792, %v5832
        %v5841 = vsel %vm5801, %v5793, %v5833
        %v5842 = vsel %vm5802, %v5794, %v5834
        %v5843 = vsel %vm5803, %v5795, %v5835
        %v5844 = vsel %vm5804, %v5796, %v5836
        %v5845 = vsel %vm5805, %v5797, %v5837
        %v5846 = vsel %vm5806, %v5798, %v5838
        %v5847 = vld [vmem:[%s6] sm:$0xff]
        %v5848 = vld [vmem:[%s6 + $0x8] sm:$0xff]
        %v5849 = vld [vmem:[%s6 + $0x10] sm:$0xff]
        %v5850 = vld [vmem:[%s6 + $0x18] sm:$0xff]
        %v5851 = vld [vmem:[%s6 + $0x20] sm:$0xff]
        %v5852 = vld [vmem:[%s6 + $0x28] sm:$0xff]
        %v5853 = vld [vmem:[%s6 + $0x30] sm:$0xff]
        %v5854 = vld [vmem:[%s6 + $0x38] sm:$0xff]
        %v5855 = vld [vmem:[%s6 + $0x40] sm:$0xff]
        %v5856 = vld [vmem:[%s6 + $0x48] sm:$0xff]
        %v5857 = vld [vmem:[%s6 + $0x50] sm:$0xff]
        %v5858 = vld [vmem:[%s6 + $0x58] sm:$0xff]
        %v5859 = vld [vmem:[%s6 + $0x60] sm:$0xff]
        %v5860 = vld [vmem:[%s6 + $0x68] sm:$0xff]
        %v5861 = vld [vmem:[%s6 + $0x70] sm:$0xff]
        %v5862 = vld [vmem:[%s6 + $0x78] sm:$0xff]
        %v5863 = vld [vmem:[%s6 + $0x80] sm:$0xff]
        %v5864 = vld [vmem:[%s6 + $0x88] sm:$0xff]
        %v5865 = vld [vmem:[%s6 + $0x90] sm:$0xff]
        %v5866 = vld [vmem:[%s6 + $0x98] sm:$0xff]
        %v5867 = vld [vmem:[%s6 + $0xa0] sm:$0xff]
        %v5868 = vld [vmem:[%s6 + $0xa8] sm:$0xff]
        %v5869 = vld [vmem:[%s6 + $0xb0] sm:$0xff]
        %v5870 = vld [vmem:[%s6 + $0xb8] sm:$0xff]
        %v5871 = vld [vmem:[%s6 + $0xc0] sm:$0xff]
        %v5872 = vld [vmem:[%s6 + $0xc8] sm:$0xff]
        %v5873 = vld [vmem:[%s6 + $0xd0] sm:$0xff]
        %v5874 = vld [vmem:[%s6 + $0xd8] sm:$0xff]
        %v5875 = vld [vmem:[%s6 + $0xe0] sm:$0xff]
        %v5876 = vld [vmem:[%s6 + $0xe8] sm:$0xff]
        %v5877 = vld [vmem:[%s6 + $0xf0] sm:$0xff]
        %v5878 = vld [vmem:[%s6 + $0xf8] sm:$0xff]
        %v5879 = vld [vmem:[%s6 + $0x100] sm:$0xff]
        %v5880 = vld [vmem:[%s6 + $0x108] sm:$0xff]
        %v5881 = vld [vmem:[%s6 + $0x110] sm:$0xff]
        %v5882 = vld [vmem:[%s6 + $0x118] sm:$0xff]
        %v5883 = vld [vmem:[%s6 + $0x120] sm:$0xff]
        %v5884 = vld [vmem:[%s6 + $0x128] sm:$0xff]
        %v5885 = vld [vmem:[%s6 + $0x130] sm:$0xff]
        %v5886 = vld [vmem:[%s6 + $0x138] sm:$0xff]
        %v5887 = vld [vmem:[%s6 + $0x140] sm:$0xff]
        %v5888 = vld [vmem:[%s6 + $0x148] sm:$0xff]
        %v5889 = vld [vmem:[%s6 + $0x150] sm:$0xff]
        %v5890 = vld [vmem:[%s6 + $0x158] sm:$0xff]
        %v5891 = vld [vmem:[%s6 + $0x160] sm:$0xff]
        %v5892 = vld [vmem:[%s6 + $0x168] sm:$0xff]
        %v5893 = vld [vmem:[%s6 + $0x170] sm:$0xff]
        %v5894 = vld [vmem:[%s6 + $0x178] sm:$0xff]
        %v5895 = vld [vmem:[%s6 + $0x180] sm:$0xff]
        %v5896 = vld [vmem:[%s6 + $0x188] sm:$0xff]
        %v5897 = vld [vmem:[%s6 + $0x190] sm:$0xff]
        %v5898 = vld [vmem:[%s6 + $0x198] sm:$0xff]
        %v5899 = vld [vmem:[%s6 + $0x1a0] sm:$0xff]
        %v5900 = vld [vmem:[%s6 + $0x1a8] sm:$0xff]
        %v5901 = vld [vmem:[%s6 + $0x1b0] sm:$0xff]
        %v5902 = vld [vmem:[%s6 + $0x1b8] sm:$0xff]
        %v5903 = vld [vmem:[%s6 + $0x1c0] sm:$0xff]
        %v5904 = vld [vmem:[%s6 + $0x1c8] sm:$0xff]
        %v5905 = vld [vmem:[%s6 + $0x1d0] sm:$0xff]
        %v5906 = vld [vmem:[%s6 + $0x1d8] sm:$0xff]
        %v5907 = vld [vmem:[%s6 + $0x1e0] sm:$0xff]
        %v5908 = vld [vmem:[%s6 + $0x1e8] sm:$0xff]
        %v5909 = vld [vmem:[%s6 + $0x1f0] sm:$0xff]
        %v5910 = vld [vmem:[%s6 + $0x1f8] sm:$0xff]
        %5911 = vmatprep.subr.mxu0 0.0
        %5912 = vmatpush1.msra.mxu0 %v5847
        %5913 = vmatprep.subr.mxu0 0.0
        %5914 = vmatpush1.msra.mxu0 %v5848
        %5915 = vmatprep.subr.mxu0 0.0
        %5916 = vmatpush1.msra.mxu0 %v5849
        %5917 = vmatprep.subr.mxu0 0.0
        %5918 = vmatpush1.msra.mxu0 %v5850
        %5919 = vmatprep.subr.mxu0 0.0
        %5920 = vmatpush1.msra.mxu0 %v5851
        %5921 = vmatprep.subr.mxu0 0.0
        %5922 = vmatpush1.msra.mxu0 %v5852
        %5923 = vmatprep.subr.mxu0 0.0
        %5924 = vmatpush1.msra.mxu0 %v5853
        %5925 = vmatprep.subr.mxu0 0.0
        %5926 = vmatpush1.msra.mxu0 %v5854
        %5927 = vmatprep.subr.mxu0 0.0
        %5928 = vmatpush1.msra.mxu0 %v5855
        %5929 = vmatprep.subr.mxu0 0.0
        %5930 = vmatpush1.msra.mxu0 %v5856
        %5931 = vmatprep.subr.mxu0 0.0
        %5932 = vmatpush1.msra.mxu0 %v5857
        %5933 = vmatprep.subr.mxu0 0.0
        %5934 = vmatpush1.msra.mxu0 %v5858
        %5935 = vmatprep.subr.mxu0 0.0
        %5936 = vmatpush1.msra.mxu0 %v5859
        %5937 = vmatprep.subr.mxu0 0.0
        %5938 = vmatpush1.msra.mxu0 %v5860
        %5939 = vmatprep.subr.mxu0 0.0
        %5940 = vmatpush1.msra.mxu0 %v5861
        %5941 = vmatprep.subr.mxu0 0.0
        %5942 = vmatpush1.msra.mxu0 %v5862
        %5943 = vmatprep.subr.mxu0 0.0
        %5944 = vmatpush1.msra.mxu0 %v5863
        %5945 = vmatprep.subr.mxu0 0.0
        %5946 = vmatpush1.msra.mxu0 %v5864
        %5947 = vmatprep.subr.mxu0 0.0
        %5948 = vmatpush1.msra.mxu0 %v5865
        %5949 = vmatprep.subr.mxu0 0.0
        %5950 = vmatpush1.msra.mxu0 %v5866
        %5951 = vmatprep.subr.mxu0 0.0
        %5952 = vmatpush1.msra.mxu0 %v5867
        %5953 = vmatprep.subr.mxu0 0.0
        %5954 = vmatpush1.msra.mxu0 %v5868
        %5955 = vmatprep.subr.mxu0 0.0
        %5956 = vmatpush1.msra.mxu0 %v5869
        %5957 = vmatprep.subr.mxu0 0.0
        %5958 = vmatpush1.msra.mxu0 %v5870
        %5959 = vmatprep.subr.mxu0 0.0
        %5960 = vmatpush1.msra.mxu0 %v5871
        %5961 = vmatprep.subr.mxu0 0.0
        %5962 = vmatpush1.msra.mxu0 %v5872
        %5963 = vmatprep.subr.mxu0 0.0
        %5964 = vmatpush1.msra.mxu0 %v5873
        %5965 = vmatprep.subr.mxu0 0.0
        %5966 = vmatpush1.msra.mxu0 %v5874
        %5967 = vmatprep.subr.mxu0 0.0
        %5968 = vmatpush1.msra.mxu0 %v5875
        %5969 = vmatprep.subr.mxu0 0.0
        %5970 = vmatpush1.msra.mxu0 %v5876
        %5971 = vmatprep.subr.mxu0 0.0
        %5972 = vmatpush1.msra.mxu0 %v5877
        %5973 = vmatprep.subr.mxu0 0.0
        %5974 = vmatpush1.msra.mxu0 %v5878
        %5975 = vmatprep.mubr.f32.mxu0 %v5840
        %5976 = vmatmul.mubr.f32.gmra.mrb[0].mxu0 %v5839
        %v5977 = vpop.f32.mrb[0].mxu0
        %v5978 = vadd.f32 0.0, %v5977
        %v5979 = vpop.f32.mrb[0].mxu0
        %5980 = vmatprep.mubr.f32.mxu0 %v5844
        %5981 = vmatmul.mubr.f32.gmra.mrb[0].mxu0 %v5843
        %v5982 = vpop.f32.mrb[0].mxu0
        %v5983 = vadd.f32 0.0, %v5982
        %v5984 = vpop.f32.mrb[0].mxu0
        %5985 = vdwg.mxu0
        %5986 = vmatprep.subr.mxu0 0.0
        %5987 = vmatpush1.msra.mxu0 %v5879
        %5988 = vmatprep.subr.mxu0 0.0
        %5989 = vmatpush1.msra.mxu0 %v5880
        %5990 = vmatprep.subr.mxu0 0.0
        %5991 = vmatpush1.msra.mxu0 %v5881
        %5992 = vmatprep.subr.mxu0 0.0
        %5993 = vmatpush1.msra.mxu0 %v5882
        %5994 = vmatprep.subr.mxu0 0.0
        %5995 = vmatpush1.msra.mxu0 %v5883
        %5996 = vmatprep.subr.mxu0 0.0
        %5997 = vmatpush1.msra.mxu0 %v5884
        %5998 = vmatprep.subr.mxu0 0.0
        %5999 = vmatpush1.msra.mxu0 %v5885
        %6000 = vmatprep.subr.mxu0 0.0
        %6001 = vmatpush1.msra.mxu0 %v5886
        %6002 = vmatprep.subr.mxu0 0.0
        %6003 = vmatpush1.msra.mxu0 %v5887
        %6004 = vmatprep.subr.mxu0 0.0
        %6005 = vmatpush1.msra.mxu0 %v5888
        %6006 = vmatprep.subr.mxu0 0.0
        %6007 = vmatpush1.msra.mxu0 %v5889
        %6008 = vmatprep.subr.mxu0 0.0
        %6009 = vmatpush1.msra.mxu0 %v5890
        %6010 = vmatprep.subr.mxu0 0.0
        %6011 = vmatpush1.msra.mxu0 %v5891
        %6012 = vmatprep.subr.mxu0 0.0
        %6013 = vmatpush1.msra.mxu0 %v5892
        %6014 = vmatprep.subr.mxu0 0.0
        %6015 = vmatpush1.msra.mxu0 %v5893
        %6016 = vmatprep.subr.mxu0 0.0
        %6017 = vmatpush1.msra.mxu0 %v5894
        %6018 = vmatprep.subr.mxu0 0.0
        %6019 = vmatpush1.msra.mxu0 %v5895
        %6020 = vmatprep.subr.mxu0 0.0
        %6021 = vmatpush1.msra.mxu0 %v5896
        %6022 = vmatprep.subr.mxu0 0.0
        %6023 = vmatpush1.msra.mxu0 %v5897
        %6024 = vmatprep.subr.mxu0 0.0
        %6025 = vmatpush1.msra.mxu0 %v5898
        %6026 = vmatprep.subr.mxu0 0.0
        %6027 = vmatpush1.msra.mxu0 %v5899
        %6028 = vmatprep.subr.mxu0 0.0
        %6029 = vmatpush1.msra.mxu0 %v5900
        %6030 = vmatprep.subr.mxu0 0.0
        %6031 = vmatpush1.msra.mxu0 %v5901
        %6032 = vmatprep.subr.mxu0 0.0
        %6033 = vmatpush1.msra.mxu0 %v5902
        %6034 = vmatprep.subr.mxu0 0.0
        %6035 = vmatpush1.msra.mxu0 %v5903
        %6036 = vmatprep.subr.mxu0 0.0
        %6037 = vmatpush1.msra.mxu0 %v5904
        %6038 = vmatprep.subr.mxu0 0.0
        %6039 = vmatpush1.msra.mxu0 %v5905
        %6040 = vmatprep.subr.mxu0 0.0
        %6041 = vmatpush1.msra.mxu0 %v5906
        %6042 = vmatprep.subr.mxu0 0.0
        %6043 = vmatpush1.msra.mxu0 %v5907
        %6044 = vmatprep.subr.mxu0 0.0
        %6045 = vmatpush1.msra.mxu0 %v5908
        %6046 = vmatprep.subr.mxu0 0.0
        %6047 = vmatpush1.msra.mxu0 %v5909
        %6048 = vmatprep.subr.mxu0 0.0
        %6049 = vmatpush1.msra.mxu0 %v5910
        %6050 = vmatprep.mubr.f32.mxu0 %v5842
        %6051 = vmatmul.mubr.f32.gmra.mrb[0].mxu0 %v5841
        %v6052 = vpop.f32.mrb[0].mxu0
        %v6053 = vadd.f32 %v5978, %v6052
        %v6054 = vpop.f32.mrb[0].mxu0
        %6055 = vmatprep.mubr.f32.mxu0 %v5846
        %6056 = vmatmul.mubr.f32.gmra.mrb[0].mxu0 %v5845
        %v6057 = vpop.f32.mrb[0].mxu0
        %v6058 = vadd.f32 %v5983, %v6057
        %v6059 = vpop.f32.mrb[0].mxu0
        %6060 = vdwg.mxu0
        %vm6061 = vcmask 15360
        %6062 = vst.msk [vmem:[%s356] sm:$0xff] %vm6061, %v6053
        %6063 = vst.msk [vmem:[%s356 + $0x8] sm:$0xff] %vm6061, %v6058
        %p6064 = scmp.lt.s32.totalorder %s23, 1
        %s6065 = scalar_select %p6064, %s23, 1
        %s6066 = smul.addr %s6065, 2
        %s6067 = smul.addr %s6066, 8
        %s6068 = scalar_lea.vmem %s7, %s6067
        // Predicated region
        $region69: #{tpu_custom_call.1} parent=47 // pred_check
          %p6069 = pneg %p193
        $region70: #{tpu_custom_call.1} parent=47 // pred_check_branch
          %6071 = sbr.rel (%p6069) target = $region72
        $region71: #{tpu_custom_call.1} parent=47 // pred_region
          _
        $region72: #{tpu_custom_call.1} parent=47 // pred_fallthru
          _
      $region48: #{tpu_custom_call.1} parent=5 // pred_fallthru
        _
      %p6072 = scmp.le.s32.totalorder 2, %s18
      // Predicated region
      $region73: #{tpu_custom_call.1} parent=5 // pred_check
        %p6073 = pneg %p6072
      $region74: #{tpu_custom_call.1} parent=5 // pred_check_branch
        %6075 = sbr.rel (%p6073) target = $region76
      $region75: #{tpu_custom_call.1} parent=5 // pred_region
        %s6076 = ssub.s32 %s18, 2
        // Predicated region
        $region77: #{tpu_custom_call.1} parent=75 // pred_check
          %p6077 = pneg %p199
        $region78: #{tpu_custom_call.1} parent=75 // pred_check_branch
          %6079 = sbr.rel (%p6077) target = $region80
        $region79: #{tpu_custom_call.1} parent=75 // pred_region
          %p6080 = scmp.lt.s32.totalorder %s24, 1
          %s6081 = scalar_select %p6080, %s24, 1
          %s6082 = smul.addr %s6081, 2
          %s6083 = smul.addr %s6082, 8
          %s6084 = scalar_lea.vmem %s7, %s6083
        $region80: #{tpu_custom_call.1} parent=75 // pred_fallthru
          _
      $region76: #{tpu_custom_call.1} parent=5 // pred_fallthru
        _
    $region6: #{tpu_custom_call.1} parent=1 // loop_footer
      %s22 = sadd.s32 1, %s18
    $region7: #{tpu_custom_call.1} parent=1 // loop_footer_branch
      %17 = sbr.rel target = $region3
    $region8: #{tpu_custom_call.1} parent=1 // loop_exit
      _
    %6085 = vsyncpa [#allocation3], 1
    %s6086 = scalar_lea.sflag [#allocation3], 1
    %6087 = vsyncpa %s6086, 1
    %6088 = vsyncpa [#allocation5], 1
    %6089 = vsyncpa [#allocation8], 1

</llo_original>
